<compile_context>
chip_gen: v5e
topology: v5e:2x2
jax: 0.10.0
libtpu: 0.0.40
codegen_flags: <defaults>
</compile_context>

<pallas_src>
import functools

import jax
import jax.numpy as jnp
import numpy as np
from jax.experimental import pallas as pl
from jax.experimental.pallas import tpu as pltpu  # noqa: F401  (no grid/BlockSpec needed for the fused kernel)

# ----------------------------- model dims -----------------------------------
BATCH = 4
PAD_BATCH = 8              # pad batch to a full sublane tile
INPUT_DIM = 32
OUTPUT_DIM = 10
OUT_PAD = 128              # lane-dense output head (sliced back to OUTPUT_DIM)
HIDDEN_DIM = 289           # must be 17*17 for the conv view, as in the module
FEATURE_MAPS = 19
CONV_OUT = FEATURE_MAPS * 15 * 15   # 4275
LSTM_HIDDEN = 300
GATE_PAD = 384             # per-gate lane pad (3 * 128) so gate slices are tile aligned


# ----------------------------- fused kernel ----------------------------------
def _fused_forward_kernel(x_ref, w0_ref, b0_ref, wc_ref, bc_ref, w2_ref, b2_ref,
                          wg_ref, bg_ref, wo_ref, bo_ref, out_ref):
    """Whole NNConvLSTM forward for one (padded) batch tile; everything in VMEM."""

    def dense(act, w_ref, b_ref, relu):
        # bf16 x bf16 MXU matmul with f32 accumulation; bias / activations stay f32.
        z = jnp.dot(act.astype(jnp.bfloat16), w_ref[...],
                    preferred_element_type=jnp.float32) + b_ref[...]
        return jnp.maximum(z, 0.0) if relu else z

    h = dense(x_ref[...], w0_ref, b0_ref, relu=True)             # (8, 289)

    # Conv2d(1->19, 3x3, valid) + relu + NCHW flatten, pre-folded into one dense matmul
    # whose columns already follow PyTorch's x.view(B, -1) order (c*225 + i*15 + j).
    flat = dense(h, wc_ref, bc_ref, relu=True)                   # (8, 4275)

    h2 = dense(flat, w2_ref, b2_ref, relu=True)                  # (8, 289)

    # Single-timestep LSTM with h0 = c0 = 0:
    #   c1 = f*c0 + i*g = i*g ; h1 = o * tanh(c1)   (forget gate drops out)
    # Gates [i, g, o] fused into one matmul; each gate padded to 384 lanes (zeros), so
    # the padded lanes give sigmoid(0)*tanh(sigmoid(0)*tanh(0)) == 0 in hl.
    gates = dense(h2, wg_ref, bg_ref, relu=False)                # (8, 1152) = [i | g | o]
    i_g = jax.nn.sigmoid(gates[:, 0:GATE_PAD])
    g_g = jnp.tanh(gates[:, GATE_PAD:2 * GATE_PAD])
    o_g = jax.nn.sigmoid(gates[:, 2 * GATE_PAD:3 * GATE_PAD])
    hl = o_g * jnp.tanh(i_g * g_g)                               # (8, 384); lanes >= 300 are 0

    out_ref[...] = dense(hl, wo_ref, bo_ref, relu=False).astype(out_ref.dtype)  # (8, 128)


# ----------------------------- wrapper ----------------------------------------
@functools.partial(jax.jit, static_argnames=())
def nn_conv_lstm_forward(x, kp):
    B = x.shape[0]
    assert B <= PAD_BATCH
    xp = jnp.pad(x, ((0, PAD_BATCH - B), (0, 0)))                # batch 4 -> 8 sublanes
    out = pl.pallas_call(
        _fused_forward_kernel,
        # No grid / BlockSpecs: single invocation, every operand fully resident in VMEM
        # (total ~7 MiB incl. layout padding — fits the default scoped VMEM on v5e/v6e/v7x).
        out_shape=jax.ShapeDtypeStruct((PAD_BATCH, OUT_PAD), jnp.float32),
    )(xp, kp["w0"], kp["b0"], kp["w_conv"], kp["b_conv"], kp["w2"], kp["b2"],
      kp["w_igo"], kp["b_igo"], kp["w_out"], kp["b_out"])
    return out[:B, :OUTPUT_DIM]


# ----------------------------- params -----------------------------------------
def init_params(key):
    """'Natural' PyTorch-like parameters (weights quantized to bf16, biases f32)."""
    def uniform(k, shape, fan_in):
        bound = 1.0 / np.sqrt(fan_in)
        return jax.random.uniform(k, shape, jnp.float32, -bound, bound)

    ks = jax.random.split(key, 12)
    p = {
        # Linear(input_dim -> 289), weight stored as (in, out)
        "w0": uniform(ks[0], (INPUT_DIM, HIDDEN_DIM), INPUT_DIM),
        "b0": uniform(ks[1], (HIDDEN_DIM,), INPUT_DIM),
        # Conv2d(1 -> 19, 3x3): taps as (9, C), row = di*3 + dj ; fan_in = 9
        "wc": uniform(ks[2], (9, FEATURE_MAPS), 9),
        "bc": uniform(ks[3], (FEATURE_MAPS,), 9),
        # Linear(19*15*15 -> 289)
        "w2": uniform(ks[4], (CONV_OUT, HIDDEN_DIM), CONV_OUT),
        "b2": uniform(ks[5], (HIDDEN_DIM,), CONV_OUT),
        # LSTM input weights W_ih^T per gate (PyTorch order i, f, g, o); bias = b_ih + b_hh.
        # W_hh is mathematically irrelevant here (h0 == 0, seq_len == 1).
        "w_lstm": uniform(ks[6], (4, HIDDEN_DIM, LSTM_HIDDEN), LSTM_HIDDEN),
        "b_lstm": (uniform(ks[7], (4, LSTM_HIDDEN), LSTM_HIDDEN)
                   + uniform(ks[8], (4, LSTM_HIDDEN), LSTM_HIDDEN)),
        # Linear(300 -> output_dim)
        "w_out": uniform(ks[9], (LSTM_HIDDEN, OUTPUT_DIM), LSTM_HIDDEN),
        "b_out": uniform(ks[10], (OUTPUT_DIM,), LSTM_HIDDEN),
    }
    for name in ("w0", "wc", "w2", "w_lstm", "w_out"):   # weight DMA dominates -> bf16
        p[name] = p[name].astype(jnp.bfloat16)
    return p


def pack_params(p):
    """Host-side, one-time re-layout of the natural params for the fused kernel."""
    f32, bf16 = jnp.float32, jnp.bfloat16

    # --- fold the 3x3 valid conv (linear in h) into a dense (289, C*225) matrix whose
    #     columns follow PyTorch's NCHW flatten order: col = c*225 + i*15 + j, and whose
    #     rows are the 17x17 image pixels k_in = ki*17 + kj.
    wc = np.asarray(p["wc"].astype(f32))                     # (9, C), bf16 values exactly
    C = wc.shape[1]
    Wd = np.zeros((C, 15, 15, 17, 17), np.float32)           # (c, i, j, ki, kj)
    idx = np.arange(15)
    for di in range(3):
        for dj in range(3):
            Wd[:, idx[:, None], idx[None, :], (idx + di)[:, None], (idx + dj)[None, :]] = \
                wc[di * 3 + dj][:, None, None]
    w_conv = Wd.reshape(C * 225, HIDDEN_DIM).T               # (289, 4275)
    b_conv = np.repeat(np.asarray(p["bc"]), 225)             # (4275,)  bias c repeated per pixel

    # --- fuse live LSTM gates [i, g, o] into one (289, 3*384) matrix; forget gate dropped.
    w_igo = np.zeros((HIDDEN_DIM, 3 * GATE_PAD), np.float32)
    b_igo = np.zeros((3 * GATE_PAD,), np.float32)
    wl = np.asarray(p["w_lstm"].astype(f32))
    bl = np.asarray(p["b_lstm"])
    for slot, gate in enumerate((0, 2, 3)):                  # i, g, o
        w_igo[:, slot * GATE_PAD: slot * GATE_PAD + LSTM_HIDDEN] = wl[gate]
        b_igo[slot * GATE_PAD: slot * GATE_PAD + LSTM_HIDDEN] = bl[gate]

    # --- output head padded to (384, 128); rows >= 300 multiply exactly-zero hl lanes.
    w_out = np.zeros((GATE_PAD, OUT_PAD), np.float32)
    w_out[:LSTM_HIDDEN, :OUTPUT_DIM] = np.asarray(p["w_out"].astype(f32))
    b_out = np.zeros((OUT_PAD,), np.float32)
    b_out[:OUTPUT_DIM] = np.asarray(p["b_out"])

    return {
        "w0": p["w0"],                                           # (32, 289) bf16
        "b0": p["b0"].astype(f32).reshape(1, -1),
        "w_conv": jnp.asarray(w_conv, bf16),                     # (289, 4275) bf16
        "b_conv": jnp.asarray(b_conv, f32).reshape(1, -1),
        "w2": p["w2"],                                           # (4275, 289) bf16
        "b2": p["b2"].astype(f32).reshape(1, -1),
        "w_igo": jnp.asarray(w_igo, bf16),                       # (289, 1152) bf16
        "b_igo": jnp.asarray(b_igo, f32).reshape(1, -1),
        "w_out": jnp.asarray(w_out, bf16),                       # (384, 128) bf16
        "b_out": jnp.asarray(b_out, f32).reshape(1, -1),
    }


# ----------------------------- reference (pure JAX) ----------------------------
def reference_forward(x, p):
    """Unfolded / unfused reference on the NATURAL params (direct conv taps, NCHW
    flatten, per-gate LSTM math).  Mirrors the kernel's bf16-weight / bf16-matmul-input
    / f32-accumulate numerics so the comparison isolates layout & folding correctness."""
    f32, bf16 = jnp.float32, jnp.bfloat16

    def dense(a, w, b, relu):
        z = jnp.dot(a.astype(bf16), w.astype(bf16), preferred_element_type=f32) + b
        return jax.nn.relu(z) if relu else z

    B = x.shape[0]
    h = dense(x, p["w0"], p["b0"], True)                                 # (B, 289)
    img = h.reshape(B, 17, 17)
    wc = p["wc"].astype(f32)
    acc = jnp.zeros((B, 15, 15, FEATURE_MAPS), f32)
    for di in range(3):
        for dj in range(3):
            patch = img[:, di:di + 15, dj:dj + 15].astype(bf16).astype(f32)
            acc = acc + patch[..., None] * wc[di * 3 + dj][None, None, None, :]
    conv = jax.nn.relu(acc + p["bc"][None, None, None, :])
    flat = jnp.transpose(conv, (0, 3, 1, 2)).reshape(B, -1)              # NCHW flatten
    h2 = dense(flat, p["w2"], p["b2"], True)                             # (B, 289)

    gate = lambda g: dense(h2, p["w_lstm"][g], p["b_lstm"][g], False)    # i,f,g,o order
    i_g = jax.nn.sigmoid(gate(0))
    g_g = jnp.tanh(gate(2))
    o_g = jax.nn.sigmoid(gate(3))
    hl = o_g * jnp.tanh(i_g * g_g)                                       # (B, 300)
    return dense(hl, p["w_out"], p["b_out"], False)                      # (B, out)


# ----------------------------- main --------------------------------------------
if __name__ == "__main__":
    key = jax.random.PRNGKey(0)
    k_x, k_p = jax.random.split(key)
    x = jax.random.normal(k_x, (BATCH, INPUT_DIM), jnp.float32)

    params = init_params(k_p)
    packed = pack_params(params)

    out = jax.block_until_ready(nn_conv_lstm_forward(x, packed))
    ref = jax.block_until_ready(reference_forward(x, params))

    assert out.shape == (BATCH, OUTPUT_DIM), out.shape
    np.testing.assert_allclose(np.asarray(out), np.asarray(ref), rtol=1e-2, atol=1e-2)
    print("KERNEL_OK")
</pallas_src>

<mosaic_0001>
module attributes {stable_mosaic.version = 11 : i64} {
  func.func @_fused_forward_kernel(%arg0: memref<8x32xf32, #tpu.memory_space<vmem>>, %arg1: memref<32x289xbf16, #tpu.memory_space<vmem>>, %arg2: memref<1x289xf32, #tpu.memory_space<vmem>>, %arg3: memref<289x4275xbf16, #tpu.memory_space<vmem>>, %arg4: memref<1x4275xf32, #tpu.memory_space<vmem>>, %arg5: memref<4275x289xbf16, #tpu.memory_space<vmem>>, %arg6: memref<1x289xf32, #tpu.memory_space<vmem>>, %arg7: memref<289x1152xbf16, #tpu.memory_space<vmem>>, %arg8: memref<1x1152xf32, #tpu.memory_space<vmem>>, %arg9: memref<384x128xbf16, #tpu.memory_space<vmem>>, %arg10: memref<1x128xf32, #tpu.memory_space<vmem>>, %arg11: memref<8x128xf32, #tpu.memory_space<vmem>>) attributes {dimension_semantics = [], scalar_prefetch = 0 : i64, scratch_operands = 0 : i64, tpu.core_type = #tpu.core_type<tc>} {
    %c0 = arith.constant 0 : index
    %c0_0 = arith.constant 0 : index
    %0 = vector.load %arg0[%c0, %c0_0] : memref<8x32xf32, #tpu.memory_space<vmem>>, vector<8x32xf32>
    %1 = arith.truncf %0 : vector<8x32xf32> to vector<8x32xbf16>
    %c0_1 = arith.constant 0 : index
    %c0_2 = arith.constant 0 : index
    %2 = vector.load %arg1[%c0_1, %c0_2] : memref<32x289xbf16, #tpu.memory_space<vmem>>, vector<32x289xbf16>
    %cst = arith.constant dense<0.000000e+00> : vector<8x289xf32>
    %3 = tpu.matmul %1, %2, %cst {dimension_numbers = #tpu.dot_dimension_numbers<[1], [0], [0], [1], [0, 0, 1, 1], [], []>} : vector<8x32xbf16>, vector<32x289xbf16>, vector<8x289xf32> -> vector<8x289xf32>
    %c0_3 = arith.constant 0 : index
    %c0_4 = arith.constant 0 : index
    %4 = vector.load %arg2[%c0_3, %c0_4] : memref<1x289xf32, #tpu.memory_space<vmem>>, vector<1x289xf32>
    %5 = vector.broadcast %4 : vector<1x289xf32> to vector<8x289xf32>
    %6 = arith.addf %3, %5 : vector<8x289xf32>
    %cst_5 = arith.constant 0.000000e+00 : f32
    %7 = vector.broadcast %cst_5 : f32 to vector<8x289xf32>
    %8 = arith.maximumf %6, %7 : vector<8x289xf32>
    %9 = arith.truncf %8 : vector<8x289xf32> to vector<8x289xbf16>
    %c0_6 = arith.constant 0 : index
    %c0_7 = arith.constant 0 : index
    %10 = vector.load %arg3[%c0_6, %c0_7] : memref<289x4275xbf16, #tpu.memory_space<vmem>>, vector<289x4275xbf16>
    %cst_8 = arith.constant dense<0.000000e+00> : vector<8x4275xf32>
    %11 = tpu.matmul %9, %10, %cst_8 {dimension_numbers = #tpu.dot_dimension_numbers<[1], [0], [0], [1], [0, 0, 1, 1], [], []>} : vector<8x289xbf16>, vector<289x4275xbf16>, vector<8x4275xf32> -> vector<8x4275xf32>
    %c0_9 = arith.constant 0 : index
    %c0_10 = arith.constant 0 : index
    %12 = vector.load %arg4[%c0_9, %c0_10] : memref<1x4275xf32, #tpu.memory_space<vmem>>, vector<1x4275xf32>
    %13 = vector.broadcast %12 : vector<1x4275xf32> to vector<8x4275xf32>
    %14 = arith.addf %11, %13 : vector<8x4275xf32>
    %cst_11 = arith.constant 0.000000e+00 : f32
    %15 = vector.broadcast %cst_11 : f32 to vector<8x4275xf32>
    %16 = arith.maximumf %14, %15 : vector<8x4275xf32>
    %17 = arith.truncf %16 : vector<8x4275xf32> to vector<8x4275xbf16>
    %c0_12 = arith.constant 0 : index
    %c0_13 = arith.constant 0 : index
    %18 = vector.load %arg5[%c0_12, %c0_13] : memref<4275x289xbf16, #tpu.memory_space<vmem>>, vector<4275x289xbf16>
    %cst_14 = arith.constant dense<0.000000e+00> : vector<8x289xf32>
    %19 = tpu.matmul %17, %18, %cst_14 {dimension_numbers = #tpu.dot_dimension_numbers<[1], [0], [0], [1], [0, 0, 1, 1], [], []>} : vector<8x4275xbf16>, vector<4275x289xbf16>, vector<8x289xf32> -> vector<8x289xf32>
    %c0_15 = arith.constant 0 : index
    %c0_16 = arith.constant 0 : index
    %20 = vector.load %arg6[%c0_15, %c0_16] : memref<1x289xf32, #tpu.memory_space<vmem>>, vector<1x289xf32>
    %21 = vector.broadcast %20 : vector<1x289xf32> to vector<8x289xf32>
    %22 = arith.addf %19, %21 : vector<8x289xf32>
    %cst_17 = arith.constant 0.000000e+00 : f32
    %23 = vector.broadcast %cst_17 : f32 to vector<8x289xf32>
    %24 = arith.maximumf %22, %23 : vector<8x289xf32>
    %25 = arith.truncf %24 : vector<8x289xf32> to vector<8x289xbf16>
    %c0_18 = arith.constant 0 : index
    %c0_19 = arith.constant 0 : index
    %26 = vector.load %arg7[%c0_18, %c0_19] : memref<289x1152xbf16, #tpu.memory_space<vmem>>, vector<289x1152xbf16>
    %cst_20 = arith.constant dense<0.000000e+00> : vector<8x1152xf32>
    %27 = tpu.matmul %25, %26, %cst_20 {dimension_numbers = #tpu.dot_dimension_numbers<[1], [0], [0], [1], [0, 0, 1, 1], [], []>} : vector<8x289xbf16>, vector<289x1152xbf16>, vector<8x1152xf32> -> vector<8x1152xf32>
    %c0_21 = arith.constant 0 : index
    %c0_22 = arith.constant 0 : index
    %28 = vector.load %arg8[%c0_21, %c0_22] : memref<1x1152xf32, #tpu.memory_space<vmem>>, vector<1x1152xf32>
    %29 = vector.broadcast %28 : vector<1x1152xf32> to vector<8x1152xf32>
    %30 = arith.addf %27, %29 : vector<8x1152xf32>
    %31 = vector.extract_strided_slice %30 {offsets = [0, 0], sizes = [8, 384], strides = [1, 1]} : vector<8x1152xf32> to vector<8x384xf32>
    %32 = arith.negf %31 : vector<8x384xf32>
    %33 = math.exp %32 : vector<8x384xf32>
    %cst_23 = arith.constant 1.000000e+00 : f32
    %34 = vector.broadcast %cst_23 : f32 to vector<8x384xf32>
    %35 = arith.addf %34, %33 : vector<8x384xf32>
    %36 = arith.divf %34, %35 : vector<8x384xf32>
    %37 = vector.extract_strided_slice %30 {offsets = [0, 384], sizes = [8, 384], strides = [1, 1]} : vector<8x1152xf32> to vector<8x384xf32>
    %38 = math.tanh %37 : vector<8x384xf32>
    %39 = vector.extract_strided_slice %30 {offsets = [0, 768], sizes = [8, 384], strides = [1, 1]} : vector<8x1152xf32> to vector<8x384xf32>
    %40 = arith.negf %39 : vector<8x384xf32>
    %41 = math.exp %40 : vector<8x384xf32>
    %cst_24 = arith.constant 1.000000e+00 : f32
    %42 = vector.broadcast %cst_24 : f32 to vector<8x384xf32>
    %43 = arith.addf %42, %41 : vector<8x384xf32>
    %44 = arith.divf %42, %43 : vector<8x384xf32>
    %45 = arith.mulf %36, %38 : vector<8x384xf32>
    %46 = math.tanh %45 : vector<8x384xf32>
    %47 = arith.mulf %44, %46 : vector<8x384xf32>
    %48 = arith.truncf %47 : vector<8x384xf32> to vector<8x384xbf16>
    %c0_25 = arith.constant 0 : index
    %c0_26 = arith.constant 0 : index
    %49 = vector.load %arg9[%c0_25, %c0_26] : memref<384x128xbf16, #tpu.memory_space<vmem>>, vector<384x128xbf16>
    %cst_27 = arith.constant dense<0.000000e+00> : vector<8x128xf32>
    %50 = tpu.matmul %48, %49, %cst_27 {dimension_numbers = #tpu.dot_dimension_numbers<[1], [0], [0], [1], [0, 0, 1, 1], [], []>} : vector<8x384xbf16>, vector<384x128xbf16>, vector<8x128xf32> -> vector<8x128xf32>
    %c0_28 = arith.constant 0 : index
    %c0_29 = arith.constant 0 : index
    %51 = vector.load %arg10[%c0_28, %c0_29] : memref<1x128xf32, #tpu.memory_space<vmem>>, vector<1x128xf32>
    %52 = vector.broadcast %51 : vector<1x128xf32> to vector<8x128xf32>
    %53 = arith.addf %50, %52 : vector<8x128xf32>
    %c0_30 = arith.constant 0 : index
    %c0_31 = arith.constant 0 : index
    %54 = vector.load %arg11[%c0_30, %c0_31] : memref<8x128xf32, #tpu.memory_space<vmem>>, vector<8x128xf32>
    tpu.vector_store %arg11[%c0_30, %c0_31], %53 {strides = array<i32>} : memref<8x128xf32, #tpu.memory_space<vmem>>, vector<8x128xf32>,
    return
  }
}

</mosaic_0001>

<llo_original>
// kernel: nn_conv_lstm_forward.1
$region0: #{nn_conv_lstm_forward.1}
  #allocation0 [shape = 'u32[]', space=smem, size = 0x4, offset = 0x4, fixed_abs, tag = 'smem constant byte address 0x4 - core index']
  #allocation1 [shape = 'u32[72,128]{1,0:T(1,128)}', space=vmem, size = 0x9000, scoped, tag = 'internal scratch']
  %s0 = inlined_call_operand.vmem [shape: f32[8,32], index: 0, kind: input, shape index: {}]
  %s1 = inlined_call_operand.vmem [shape: bf16[32,289], index: 1, kind: input, shape index: {}]
  %s2 = inlined_call_operand.vmem [shape: f32[1,289], index: 2, kind: input, shape index: {}]
  %s3 = inlined_call_operand.vmem [shape: bf16[289,4275], index: 3, kind: input, shape index: {}]
  %s4 = inlined_call_operand.vmem [shape: f32[1,4275], index: 4, kind: input, shape index: {}]
  %s5 = inlined_call_operand.vmem [shape: bf16[4275,289], index: 5, kind: input, shape index: {}]
  %s6 = inlined_call_operand.vmem [shape: f32[1,289], index: 6, kind: input, shape index: {}]
  %s7 = inlined_call_operand.vmem [shape: bf16[289,1152], index: 7, kind: input, shape index: {}]
  %s8 = inlined_call_operand.vmem [shape: f32[1,1152], index: 8, kind: input, shape index: {}]
  %s9 = inlined_call_operand.vmem [shape: bf16[384,128], index: 9, kind: input, shape index: {}]
  %s10 = inlined_call_operand.vmem [shape: f32[1,128], index: 10, kind: input, shape index: {}]
  %s11 = inlined_call_operand.vmem [shape: f32[8,128], index: 11, kind: output, shape index: {}]
  %s12 = sld [smem:[#allocation0]]
  $region54: #{nn_conv_lstm_forward.1} parent=0
    _
  %s14 = ssub.s32 1, %s12
  %s15 = scalar_select 0, %s14, %s12
  // Predicated region
  $region2: #{nn_conv_lstm_forward.1} parent=0 // pred_check
    _
  $region3: #{nn_conv_lstm_forward.1} parent=0 // pred_check_branch
    %17 = sbr.rel (0) target = $region5
  $region4: #{nn_conv_lstm_forward.1} parent=0 // pred_region
    _
  $region5: #{nn_conv_lstm_forward.1} parent=0 // pred_fallthru
    _
  // Predicated region
  $region6: #{nn_conv_lstm_forward.1} parent=0 // pred_check
    _
  $region7: #{nn_conv_lstm_forward.1} parent=0 // pred_check_branch
    %19 = sbr.rel (0) target = $region9
  $region8: #{nn_conv_lstm_forward.1} parent=0 // pred_region
    _
  $region9: #{nn_conv_lstm_forward.1} parent=0 // pred_fallthru
    _
  // Predicated region
  $region10: #{nn_conv_lstm_forward.1} parent=0 // pred_check
    _
  $region11: #{nn_conv_lstm_forward.1} parent=0 // pred_check_branch
    %21 = sbr.rel (0) target = $region13
  $region12: #{nn_conv_lstm_forward.1} parent=0 // pred_region
    _
  $region13: #{nn_conv_lstm_forward.1} parent=0 // pred_fallthru
    _
  // Predicated region
  $region14: #{nn_conv_lstm_forward.1} parent=0 // pred_check
    _
  $region15: #{nn_conv_lstm_forward.1} parent=0 // pred_check_branch
    %23 = sbr.rel (0) target = $region17
  $region16: #{nn_conv_lstm_forward.1} parent=0 // pred_region
    _
  $region17: #{nn_conv_lstm_forward.1} parent=0 // pred_fallthru
    _
  // Predicated region
  $region18: #{nn_conv_lstm_forward.1} parent=0 // pred_check
    _
  $region19: #{nn_conv_lstm_forward.1} parent=0 // pred_check_branch
    %25 = sbr.rel (0) target = $region21
  $region20: #{nn_conv_lstm_forward.1} parent=0 // pred_region
    _
  $region21: #{nn_conv_lstm_forward.1} parent=0 // pred_fallthru
    _
  // Predicated region
  $region22: #{nn_conv_lstm_forward.1} parent=0 // pred_check
    _
  $region23: #{nn_conv_lstm_forward.1} parent=0 // pred_check_branch
    %27 = sbr.rel (0) target = $region25
  $region24: #{nn_conv_lstm_forward.1} parent=0 // pred_region
    _
  $region25: #{nn_conv_lstm_forward.1} parent=0 // pred_fallthru
    _
  // Predicated region
  $region26: #{nn_conv_lstm_forward.1} parent=0 // pred_check
    _
  $region27: #{nn_conv_lstm_forward.1} parent=0 // pred_check_branch
    %29 = sbr.rel (0) target = $region29
  $region28: #{nn_conv_lstm_forward.1} parent=0 // pred_region
    _
  $region29: #{nn_conv_lstm_forward.1} parent=0 // pred_fallthru
    _
  // Predicated region
  $region30: #{nn_conv_lstm_forward.1} parent=0 // pred_check
    _
  $region31: #{nn_conv_lstm_forward.1} parent=0 // pred_check_branch
    %31 = sbr.rel (0) target = $region33
  $region32: #{nn_conv_lstm_forward.1} parent=0 // pred_region
    _
  $region33: #{nn_conv_lstm_forward.1} parent=0 // pred_fallthru
    _
  // Predicated region
  $region34: #{nn_conv_lstm_forward.1} parent=0 // pred_check
    _
  $region35: #{nn_conv_lstm_forward.1} parent=0 // pred_check_branch
    %33 = sbr.rel (0) target = $region37
  $region36: #{nn_conv_lstm_forward.1} parent=0 // pred_region
    _
  $region37: #{nn_conv_lstm_forward.1} parent=0 // pred_fallthru
    _
  // Predicated region
  $region38: #{nn_conv_lstm_forward.1} parent=0 // pred_check
    _
  $region39: #{nn_conv_lstm_forward.1} parent=0 // pred_check_branch
    %35 = sbr.rel (0) target = $region41
  $region40: #{nn_conv_lstm_forward.1} parent=0 // pred_region
    _
  $region41: #{nn_conv_lstm_forward.1} parent=0 // pred_fallthru
    _
  // Predicated region
  $region42: #{nn_conv_lstm_forward.1} parent=0 // pred_check
    _
  $region43: #{nn_conv_lstm_forward.1} parent=0 // pred_check_branch
    %37 = sbr.rel (0) target = $region45
  $region44: #{nn_conv_lstm_forward.1} parent=0 // pred_region
    _
  $region45: #{nn_conv_lstm_forward.1} parent=0 // pred_fallthru
    _
  %v39 = vld [vmem:[%s0] sm:$0xff]
  %v40 = vpack.c.bf16 %v39, %v39
  %v41 = vld [vmem:[%s1] sm:$0xff]
  %v42 = vld [vmem:[%s1 + $0x8] sm:$0xf]
  %v43 = vld [vmem:[%s1 + $0xc] sm:$0xff]
  %v44 = vld [vmem:[%s1 + $0x14] sm:$0xf]
  %v45 = vld [vmem:[%s1 + $0x18] sm:$0xff]
  %v46 = vld [vmem:[%s1 + $0x20] sm:$0xf]
  %v47 = vld [vmem:[%s1 + $0x24] sm:$0xff]
  %v48 = vld [vmem:[%s1 + $0x2c] sm:$0xf]
  %v49 = vld [vmem:[%s2] sm:$0x7]
  %v51 = vperm.slane %v49, 0
  %v52 = vperm.slane %v49, 1
  %v53 = vperm.slane %v49, 2
  %v65 = vunpack.c.l.b16 %v41
  %v66 = vunpack.c.h.b16 %v41
  %v67 = vunpack.c.l.b16 %v42
  %v68 = vunpack.c.l.b16 %v43
  %v69 = vunpack.c.h.b16 %v43
  %v70 = vunpack.c.l.b16 %v44
  %v71 = vunpack.c.l.b16 %v45
  %v72 = vunpack.c.h.b16 %v45
  %v73 = vunpack.c.l.b16 %v46
  %v74 = vunpack.c.l.b16 %v47
  %v75 = vunpack.c.h.b16 %v47
  %v76 = vunpack.c.l.b16 %v48
  %v77 = vpack.c.b16 %v68, %v65
  %v78 = vpack.c.b16 %v69, %v66
  %v79 = vpack.c.b16 %v70, %v67
  %v80 = vpack.c.b16 %v74, %v71
  %v81 = vpack.c.b16 %v75, %v72
  %v82 = vpack.c.b16 %v76, %v73
  %vm89 = vcmask 261120
  %v91 = vsel %vm89, %v40, 0
  %93 = vmatpush.bf16.msra.mxu0 0
  %94 = vmatpush.bf16.msra.mxu0 0
  %95 = vmatpush.bf16.msra.mxu0 0
  %96 = vmatpush.bf16.msra.mxu0 0
  %97 = vmatpush.bf16.msra.mxu0 0
  %98 = vmatpush.bf16.msra.mxu0 0
  %99 = vmatpush.bf16.msra.mxu0 %v80
  %100 = vmatpush.bf16.msra.mxu0 %v77
  %101 = vmatmul.bf16.gmra.mxu0 %v91
  %v102 = vpop.f32.mrf.mxu0
  %v103 = vadd.f32 %v51, %v102
  %v104 = vpop.f32.mrf.mxu0
  %105 = vdwg.mxu0
  %106 = vmatpush.bf16.msra.mxu0 0
  %107 = vmatpush.bf16.msra.mxu0 0
  %108 = vmatpush.bf16.msra.mxu0 0
  %109 = vmatpush.bf16.msra.mxu0 0
  %110 = vmatpush.bf16.msra.mxu0 0
  %111 = vmatpush.bf16.msra.mxu0 0
  %112 = vmatpush.bf16.msra.mxu0 %v81
  %113 = vmatpush.bf16.msra.mxu0 %v78
  %114 = vmatmul.bf16.gmra.mxu0 %v91
  %v115 = vpop.f32.mrf.mxu0
  %v116 = vadd.f32 %v52, %v115
  %v117 = vpop.f32.mrf.mxu0
  %118 = vdwg.mxu0
  %119 = vmatpush.bf16.msra.mxu0 0
  %120 = vmatpush.bf16.msra.mxu0 0
  %121 = vmatpush.bf16.msra.mxu0 0
  %122 = vmatpush.bf16.msra.mxu0 0
  %123 = vmatpush.bf16.msra.mxu0 0
  %124 = vmatpush.bf16.msra.mxu0 0
  %125 = vmatpush.bf16.msra.mxu0 %v82
  %126 = vmatpush.bf16.msra.mxu0 %v79
  %127 = vmatmul.bf16.gmra.mxu0 %v91
  %v128 = vpop.f32.mrf.mxu0
  %v129 = vadd.f32 %v53, %v128
  %v130 = vpop.f32.mrf.mxu0
  %131 = vdwg.mxu0
  %v132 = vmax.f32 %v103, 0.0
  %v133 = vmax.f32 %v116, 0.0
  %v134 = vmax.f32 %v129, 0.0
  %v135 = vpack.c.bf16 %v132, %v132
  %v136 = vpack.c.bf16 %v133, %v133
  %v137 = vpack.c.bf16 %v134, %v134
  %v138 = vld [vmem:[%s3] sm:$0xff]
  %v139 = vld [vmem:[%s3 + $0x8] sm:$0xff]
  %v140 = vld [vmem:[%s3 + $0x10] sm:$0xff]
  %v141 = vld [vmem:[%s3 + $0x18] sm:$0xff]
  %v142 = vld [vmem:[%s3 + $0x20] sm:$0xff]
  %v143 = vld [vmem:[%s3 + $0x28] sm:$0xff]
  %v144 = vld [vmem:[%s3 + $0x30] sm:$0xff]
  %v145 = vld [vmem:[%s3 + $0x38] sm:$0xff]
  %v146 = vld [vmem:[%s3 + $0x40] sm:$0xff]
  %v147 = vld [vmem:[%s3 + $0x48] sm:$0xff]
  %v148 = vld [vmem:[%s3 + $0x50] sm:$0xff]
  %v149 = vld [vmem:[%s3 + $0x58] sm:$0xff]
  %v150 = vld [vmem:[%s3 + $0x60] sm:$0xff]
  %v151 = vld [vmem:[%s3 + $0x68] sm:$0xff]
  %v152 = vld [vmem:[%s3 + $0x70] sm:$0xff]
  %v153 = vld [vmem:[%s3 + $0x78] sm:$0xff]
  %v154 = vld [vmem:[%s3 + $0x80] sm:$0xff]
  %v155 = vld [vmem:[%s3 + $0x88] sm:$0xff]
  %v156 = vld [vmem:[%s3 + $0x90] sm:$0xff]
  %v157 = vld [vmem:[%s3 + $0x98] sm:$0xff]
  %v158 = vld [vmem:[%s3 + $0xa0] sm:$0xff]
  %v159 = vld [vmem:[%s3 + $0xa8] sm:$0xff]
  %v160 = vld [vmem:[%s3 + $0xb0] sm:$0xff]
  %v161 = vld [vmem:[%s3 + $0xb8] sm:$0xff]
  %v162 = vld [vmem:[%s3 + $0xc0] sm:$0xff]
  %v163 = vld [vmem:[%s3 + $0xc8] sm:$0xff]
  %v164 = vld [vmem:[%s3 + $0xd0] sm:$0xff]
  %v165 = vld [vmem:[%s3 + $0xd8] sm:$0xff]
  %v166 = vld [vmem:[%s3 + $0xe0] sm:$0xff]
  %v167 = vld [vmem:[%s3 + $0xe8] sm:$0xff]
  %v168 = vld [vmem:[%s3 + $0xf0] sm:$0xff]
  %v169 = vld [vmem:[%s3 + $0xf8] sm:$0xff]
  %v170 = vld [vmem:[%s3 + $0x100] sm:$0xff]
  %v171 = vld [vmem:[%s3 + $0x108] sm:$0xff]
  %v172 = vld [vmem:[%s3 + $0x110] sm:$0xff]
  %v173 = vld [vmem:[%s3 + $0x118] sm:$0xff]
  %v174 = vld [vmem:[%s3 + $0x120] sm:$0xff]
  %v175 = vld [vmem:[%s3 + $0x128] sm:$0xff]
  %v176 = vld [vmem:[%s3 + $0x130] sm:$0xff]
  %v177 = vld [vmem:[%s3 + $0x138] sm:$0xff]
  %v178 = vld [vmem:[%s3 + $0x140] sm:$0xff]
  %v179 = vld [vmem:[%s3 + $0x148] sm:$0xff]
  %v180 = vld [vmem:[%s3 + $0x150] sm:$0xff]
  %v181 = vld [vmem:[%s3 + $0x158] sm:$0xff]
  %v182 = vld [vmem:[%s3 + $0x160] sm:$0xff]
  %v183 = vld [vmem:[%s3 + $0x168] sm:$0xff]
  %v184 = vld [vmem:[%s3 + $0x170] sm:$0xff]
  %v185 = vld [vmem:[%s3 + $0x178] sm:$0xff]
  %v186 = vld [vmem:[%s3 + $0x180] sm:$0xff]
  %v187 = vld [vmem:[%s3 + $0x188] sm:$0xff]
  %v188 = vld [vmem:[%s3 + $0x190] sm:$0xff]
  %v189 = vld [vmem:[%s3 + $0x198] sm:$0xff]
  %v190 = vld [vmem:[%s3 + $0x1a0] sm:$0xff]
  %v191 = vld [vmem:[%s3 + $0x1a8] sm:$0xff]
  %v192 = vld [vmem:[%s3 + $0x1b0] sm:$0xff]
  %v193 = vld [vmem:[%s3 + $0x1b8] sm:$0xff]
  %v194 = vld [vmem:[%s3 + $0x1c0] sm:$0xff]
  %v195 = vld [vmem:[%s3 + $0x1c8] sm:$0xff]
  %v196 = vld [vmem:[%s3 + $0x1d0] sm:$0xff]
  %v197 = vld [vmem:[%s3 + $0x1d8] sm:$0xff]
  %v198 = vld [vmem:[%s3 + $0x1e0] sm:$0xff]
  %v199 = vld [vmem:[%s3 + $0x1e8] sm:$0xff]
  %v200 = vld [vmem:[%s3 + $0x1f0] sm:$0xff]
  %v201 = vld [vmem:[%s3 + $0x1f8] sm:$0xff]
  %v202 = vld [vmem:[%s3 + $0x200] sm:$0xff]
  %v203 = vld [vmem:[%s3 + $0x208] sm:$0xff]
  %v204 = vld [vmem:[%s3 + $0x210] sm:$0xff]
  %v205 = vld [vmem:[%s3 + $0x218] sm:$0xff]
  %v206 = vld [vmem:[%s3 + $0x220] sm:$0xff]
  %v207 = vld [vmem:[%s3 + $0x228] sm:$0xff]
  %v208 = vld [vmem:[%s3 + $0x230] sm:$0xff]
  %v209 = vld [vmem:[%s3 + $0x238] sm:$0xff]
  %v210 = vld [vmem:[%s3 + $0x240] sm:$0xff]
  %v211 = vld [vmem:[%s3 + $0x248] sm:$0xff]
  %v212 = vld [vmem:[%s3 + $0x250] sm:$0xff]
  %v213 = vld [vmem:[%s3 + $0x258] sm:$0xff]
  %v214 = vld [vmem:[%s3 + $0x260] sm:$0xff]
  %v215 = vld [vmem:[%s3 + $0x268] sm:$0xff]
  %v216 = vld [vmem:[%s3 + $0x270] sm:$0xff]
  %v217 = vld [vmem:[%s3 + $0x278] sm:$0xff]
  %v218 = vld [vmem:[%s3 + $0x280] sm:$0xff]
  %v219 = vld [vmem:[%s3 + $0x288] sm:$0xff]
  %v220 = vld [vmem:[%s3 + $0x290] sm:$0xff]
  %v221 = vld [vmem:[%s3 + $0x298] sm:$0xff]
  %v222 = vld [vmem:[%s3 + $0x2a0] sm:$0xff]
  %v223 = vld [vmem:[%s3 + $0x2a8] sm:$0xff]
  %v224 = vld [vmem:[%s3 + $0x2b0] sm:$0xff]
  %v225 = vld [vmem:[%s3 + $0x2b8] sm:$0xff]
  %v226 = vld [vmem:[%s3 + $0x2c0] sm:$0xff]
  %v227 = vld [vmem:[%s3 + $0x2c8] sm:$0xff]
  %v228 = vld [vmem:[%s3 + $0x2d0] sm:$0xff]
  %v229 = vld [vmem:[%s3 + $0x2d8] sm:$0xff]
  %v230 = vld [vmem:[%s3 + $0x2e0] sm:$0xff]
  %v231 = vld [vmem:[%s3 + $0x2e8] sm:$0xff]
  %v232 = vld [vmem:[%s3 + $0x2f0] sm:$0xff]
  %v233 = vld [vmem:[%s3 + $0x2f8] sm:$0xff]
  %v234 = vld [vmem:[%s3 + $0x300] sm:$0xff]
  %v235 = vld [vmem:[%s3 + $0x308] sm:$0xff]
  %v236 = vld [vmem:[%s3 + $0x310] sm:$0xff]
  %v237 = vld [vmem:[%s3 + $0x318] sm:$0xff]
  %v238 = vld [vmem:[%s3 + $0x320] sm:$0xff]
  %v239 = vld [vmem:[%s3 + $0x328] sm:$0xff]
  %v240 = vld [vmem:[%s3 + $0x330] sm:$0xff]
  %v241 = vld [vmem:[%s3 + $0x338] sm:$0xff]
  %v242 = vld [vmem:[%s3 + $0x340] sm:$0xff]
  %v243 = vld [vmem:[%s3 + $0x348] sm:$0xff]
  %v244 = vld [vmem:[%s3 + $0x350] sm:$0xff]
  %v245 = vld [vmem:[%s3 + $0x358] sm:$0xff]
  %v246 = vld [vmem:[%s3 + $0x360] sm:$0xff]
  %v247 = vld [vmem:[%s3 + $0x368] sm:$0xff]
  %v248 = vld [vmem:[%s3 + $0x370] sm:$0xff]
  %v249 = vld [vmem:[%s3 + $0x378] sm:$0xff]
  %v250 = vld [vmem:[%s3 + $0x380] sm:$0xff]
  %v251 = vld [vmem:[%s3 + $0x388] sm:$0xff]
  %v252 = vld [vmem:[%s3 + $0x390] sm:$0xff]
  %v253 = vld [vmem:[%s3 + $0x398] sm:$0xff]
  %v254 = vld [vmem:[%s3 + $0x3a0] sm:$0xff]
  %v255 = vld [vmem:[%s3 + $0x3a8] sm:$0xff]
  %v256 = vld [vmem:[%s3 + $0x3b0] sm:$0xff]
  %v257 = vld [vmem:[%s3 + $0x3b8] sm:$0xff]
  %v258 = vld [vmem:[%s3 + $0x3c0] sm:$0xff]
  %v259 = vld [vmem:[%s3 + $0x3c8] sm:$0xff]
  %v260 = vld [vmem:[%s3 + $0x3d0] sm:$0xff]
  %v261 = vld [vmem:[%s3 + $0x3d8] sm:$0xff]
  %v262 = vld [vmem:[%s3 + $0x3e0] sm:$0xff]
  %v263 = vld [vmem:[%s3 + $0x3e8] sm:$0xff]
  %v264 = vld [vmem:[%s3 + $0x3f0] sm:$0xff]
  %v265 = vld [vmem:[%s3 + $0x3f8] sm:$0xff]
  %v266 = vld [vmem:[%s3 + $0x400] sm:$0xff]
  %v267 = vld [vmem:[%s3 + $0x408] sm:$0xff]
  %v268 = vld [vmem:[%s3 + $0x410] sm:$0xff]
  %v269 = vld [vmem:[%s3 + $0x418] sm:$0xff]
  %v270 = vld [vmem:[%s3 + $0x420] sm:$0xff]
  %v271 = vld [vmem:[%s3 + $0x428] sm:$0xff]
  %v272 = vld [vmem:[%s3 + $0x430] sm:$0xff]
  %v273 = vld [vmem:[%s3 + $0x438] sm:$0xff]
  %v274 = vld [vmem:[%s3 + $0x440] sm:$0xff]
  %v275 = vld [vmem:[%s3 + $0x448] sm:$0xff]
  %v276 = vld [vmem:[%s3 + $0x450] sm:$0xff]
  %v277 = vld [vmem:[%s3 + $0x458] sm:$0xff]
  %v278 = vld [vmem:[%s3 + $0x460] sm:$0xff]
  %v279 = vld [vmem:[%s3 + $0x468] sm:$0xff]
  %v280 = vld [vmem:[%s3 + $0x470] sm:$0xff]
  %v281 = vld [vmem:[%s3 + $0x478] sm:$0xff]
  %v282 = vld [vmem:[%s3 + $0x480] sm:$0xff]
  %v283 = vld [vmem:[%s3 + $0x488] sm:$0xff]
  %v284 = vld [vmem:[%s3 + $0x490] sm:$0xff]
  %v285 = vld [vmem:[%s3 + $0x498] sm:$0xff]
  %v286 = vld [vmem:[%s3 + $0x4a0] sm:$0xff]
  %v287 = vld [vmem:[%s3 + $0x4a8] sm:$0xff]
  %v288 = vld [vmem:[%s3 + $0x4b0] sm:$0xff]
  %v289 = vld [vmem:[%s3 + $0x4b8] sm:$0xff]
  %v290 = vld [vmem:[%s3 + $0x4c0] sm:$0xff]
  %v291 = vld [vmem:[%s3 + $0x4c8] sm:$0xff]
  %v292 = vld [vmem:[%s3 + $0x4d0] sm:$0xff]
  %v293 = vld [vmem:[%s3 + $0x4d8] sm:$0xff]
  %v294 = vld [vmem:[%s3 + $0x4e0] sm:$0xff]
  %v295 = vld [vmem:[%s3 + $0x4e8] sm:$0xff]
  %v296 = vld [vmem:[%s3 + $0x4f0] sm:$0xff]
  %v297 = vld [vmem:[%s3 + $0x4f8] sm:$0xff]
  %v298 = vld [vmem:[%s3 + $0x500] sm:$0xff]
  %v299 = vld [vmem:[%s3 + $0x508] sm:$0xff]
  %v300 = vld [vmem:[%s3 + $0x510] sm:$0xff]
  %v301 = vld [vmem:[%s3 + $0x518] sm:$0xff]
  %v302 = vld [vmem:[%s3 + $0x520] sm:$0xff]
  %v303 = vld [vmem:[%s3 + $0x528] sm:$0xff]
  %v304 = vld [vmem:[%s3 + $0x530] sm:$0xff]
  %v305 = vld [vmem:[%s3 + $0x538] sm:$0xff]
  %v306 = vld [vmem:[%s3 + $0x540] sm:$0xff]
  %v307 = vld [vmem:[%s3 + $0x548] sm:$0xff]
  %v308 = vld [vmem:[%s3 + $0x550] sm:$0xff]
  %v309 = vld [vmem:[%s3 + $0x558] sm:$0xff]
  %v310 = vld [vmem:[%s3 + $0x560] sm:$0xff]
  %v311 = vld [vmem:[%s3 + $0x568] sm:$0xff]
  %v312 = vld [vmem:[%s3 + $0x570] sm:$0xff]
  %v313 = vld [vmem:[%s3 + $0x578] sm:$0xff]
  %v314 = vld [vmem:[%s3 + $0x580] sm:$0xff]
  %v315 = vld [vmem:[%s3 + $0x588] sm:$0xff]
  %v316 = vld [vmem:[%s3 + $0x590] sm:$0xff]
  %v317 = vld [vmem:[%s3 + $0x598] sm:$0xff]
  %v318 = vld [vmem:[%s3 + $0x5a0] sm:$0xff]
  %v319 = vld [vmem:[%s3 + $0x5a8] sm:$0xff]
  %v320 = vld [vmem:[%s3 + $0x5b0] sm:$0xff]
  %v321 = vld [vmem:[%s3 + $0x5b8] sm:$0xff]
  %v322 = vld [vmem:[%s3 + $0x5c0] sm:$0xff]
  %v323 = vld [vmem:[%s3 + $0x5c8] sm:$0xff]
  %v324 = vld [vmem:[%s3 + $0x5d0] sm:$0xff]
  %v325 = vld [vmem:[%s3 + $0x5d8] sm:$0xff]
  %v326 = vld [vmem:[%s3 + $0x5e0] sm:$0xff]
  %v327 = vld [vmem:[%s3 + $0x5e8] sm:$0xff]
  %v328 = vld [vmem:[%s3 + $0x5f0] sm:$0xff]
  %v329 = vld [vmem:[%s3 + $0x5f8] sm:$0xff]
  %v330 = vld [vmem:[%s3 + $0x600] sm:$0xff]
  %v331 = vld [vmem:[%s3 + $0x608] sm:$0xff]
  %v332 = vld [vmem:[%s3 + $0x610] sm:$0xff]
  %v333 = vld [vmem:[%s3 + $0x618] sm:$0xff]
  %v334 = vld [vmem:[%s3 + $0x620] sm:$0xff]
  %v335 = vld [vmem:[%s3 + $0x628] sm:$0xff]
  %v336 = vld [vmem:[%s3 + $0x630] sm:$0xff]
  %v337 = vld [vmem:[%s3 + $0x638] sm:$0xff]
  %v338 = vld [vmem:[%s3 + $0x640] sm:$0xff]
  %v339 = vld [vmem:[%s3 + $0x648] sm:$0xff]
  %v340 = vld [vmem:[%s3 + $0x650] sm:$0xff]
  %v341 = vld [vmem:[%s3 + $0x658] sm:$0xff]
  %v342 = vld [vmem:[%s3 + $0x660] sm:$0xff]
  %v343 = vld [vmem:[%s3 + $0x668] sm:$0xff]
  %v344 = vld [vmem:[%s3 + $0x670] sm:$0xff]
  %v345 = vld [vmem:[%s3 + $0x678] sm:$0xff]
  %v346 = vld [vmem:[%s3 + $0x680] sm:$0xff]
  %v347 = vld [vmem:[%s3 + $0x688] sm:$0xff]
  %v348 = vld [vmem:[%s3 + $0x690] sm:$0xff]
  %v349 = vld [vmem:[%s3 + $0x698] sm:$0xff]
  %v350 = vld [vmem:[%s3 + $0x6a0] sm:$0xff]
  %v351 = vld [vmem:[%s3 + $0x6a8] sm:$0xff]
  %v352 = vld [vmem:[%s3 + $0x6b0] sm:$0xff]
  %v353 = vld [vmem:[%s3 + $0x6b8] sm:$0xff]
  %v354 = vld [vmem:[%s3 + $0x6c0] sm:$0xff]
  %v355 = vld [vmem:[%s3 + $0x6c8] sm:$0xff]
  %v356 = vld [vmem:[%s3 + $0x6d0] sm:$0xff]
  %v357 = vld [vmem:[%s3 + $0x6d8] sm:$0xff]
  %v358 = vld [vmem:[%s3 + $0x6e0] sm:$0xff]
  %v359 = vld [vmem:[%s3 + $0x6e8] sm:$0xff]
  %v360 = vld [vmem:[%s3 + $0x6f0] sm:$0xff]
  %v361 = vld [vmem:[%s3 + $0x6f8] sm:$0xff]
  %v362 = vld [vmem:[%s3 + $0x700] sm:$0xff]
  %v363 = vld [vmem:[%s3 + $0x708] sm:$0xff]
  %v364 = vld [vmem:[%s3 + $0x710] sm:$0xff]
  %v365 = vld [vmem:[%s3 + $0x718] sm:$0xff]
  %v366 = vld [vmem:[%s3 + $0x720] sm:$0xff]
  %v367 = vld [vmem:[%s3 + $0x728] sm:$0xff]
  %v368 = vld [vmem:[%s3 + $0x730] sm:$0xff]
  %v369 = vld [vmem:[%s3 + $0x738] sm:$0xff]
  %v370 = vld [vmem:[%s3 + $0x740] sm:$0xff]
  %v371 = vld [vmem:[%s3 + $0x748] sm:$0xff]
  %v372 = vld [vmem:[%s3 + $0x750] sm:$0xff]
  %v373 = vld [vmem:[%s3 + $0x758] sm:$0xff]
  %v374 = vld [vmem:[%s3 + $0x760] sm:$0xff]
  %v375 = vld [vmem:[%s3 + $0x768] sm:$0xff]
  %v376 = vld [vmem:[%s3 + $0x770] sm:$0xff]
  %v377 = vld [vmem:[%s3 + $0x778] sm:$0xff]
  %v378 = vld [vmem:[%s3 + $0x780] sm:$0xff]
  %v379 = vld [vmem:[%s3 + $0x788] sm:$0xff]
  %v380 = vld [vmem:[%s3 + $0x790] sm:$0xff]
  %v381 = vld [vmem:[%s3 + $0x798] sm:$0xff]
  %v382 = vld [vmem:[%s3 + $0x7a0] sm:$0xff]
  %v383 = vld [vmem:[%s3 + $0x7a8] sm:$0xff]
  %v384 = vld [vmem:[%s3 + $0x7b0] sm:$0xff]
  %v385 = vld [vmem:[%s3 + $0x7b8] sm:$0xff]
  %v386 = vld [vmem:[%s3 + $0x7c0] sm:$0xff]
  %v387 = vld [vmem:[%s3 + $0x7c8] sm:$0xff]
  %v388 = vld [vmem:[%s3 + $0x7d0] sm:$0xff]
  %v389 = vld [vmem:[%s3 + $0x7d8] sm:$0xff]
  %v390 = vld [vmem:[%s3 + $0x7e0] sm:$0xff]
  %v391 = vld [vmem:[%s3 + $0x7e8] sm:$0xff]
  %v392 = vld [vmem:[%s3 + $0x7f0] sm:$0xff]
  %v393 = vld [vmem:[%s3 + $0x7f8] sm:$0xff]
  %v394 = vld [vmem:[%s3 + $0x800] sm:$0xff]
  %v395 = vld [vmem:[%s3 + $0x808] sm:$0xff]
  %v396 = vld [vmem:[%s3 + $0x810] sm:$0xff]
  %v397 = vld [vmem:[%s3 + $0x818] sm:$0xff]
  %v398 = vld [vmem:[%s3 + $0x820] sm:$0xff]
  %v399 = vld [vmem:[%s3 + $0x828] sm:$0xff]
  %v400 = vld [vmem:[%s3 + $0x830] sm:$0xff]
  %v401 = vld [vmem:[%s3 + $0x838] sm:$0xff]
  %v402 = vld [vmem:[%s3 + $0x840] sm:$0xff]
  %v403 = vld [vmem:[%s3 + $0x848] sm:$0xff]
  %v404 = vld [vmem:[%s3 + $0x850] sm:$0xff]
  %v405 = vld [vmem:[%s3 + $0x858] sm:$0xff]
  %v406 = vld [vmem:[%s3 + $0x860] sm:$0xff]
  %v407 = vld [vmem:[%s3 + $0x868] sm:$0xff]
  %v408 = vld [vmem:[%s3 + $0x870] sm:$0xff]
  %v409 = vld [vmem:[%s3 + $0x878] sm:$0xff]
  %v410 = vld [vmem:[%s3 + $0x880] sm:$0xff]
  %v411 = vld [vmem:[%s3 + $0x888] sm:$0xff]
  %v412 = vld [vmem:[%s3 + $0x890] sm:$0xff]
  %v413 = vld [vmem:[%s3 + $0x898] sm:$0xff]
  %v414 = vld [vmem:[%s3 + $0x8a0] sm:$0xff]
  %v415 = vld [vmem:[%s3 + $0x8a8] sm:$0xff]
  %v416 = vld [vmem:[%s3 + $0x8b0] sm:$0xff]
  %v417 = vld [vmem:[%s3 + $0x8b8] sm:$0xff]
  %v418 = vld [vmem:[%s3 + $0x8c0] sm:$0xff]
  %v419 = vld [vmem:[%s3 + $0x8c8] sm:$0xff]
  %v420 = vld [vmem:[%s3 + $0x8d0] sm:$0xff]
  %v421 = vld [vmem:[%s3 + $0x8d8] sm:$0xff]
  %v422 = vld [vmem:[%s3 + $0x8e0] sm:$0xff]
  %v423 = vld [vmem:[%s3 + $0x8e8] sm:$0xff]
  %v424 = vld [vmem:[%s3 + $0x8f0] sm:$0xff]
  %v425 = vld [vmem:[%s3 + $0x8f8] sm:$0xff]
  %v426 = vld [vmem:[%s3 + $0x900] sm:$0xff]
  %v427 = vld [vmem:[%s3 + $0x908] sm:$0xff]
  %v428 = vld [vmem:[%s3 + $0x910] sm:$0xff]
  %v429 = vld [vmem:[%s3 + $0x918] sm:$0xff]
  %v430 = vld [vmem:[%s3 + $0x920] sm:$0xff]
  %v431 = vld [vmem:[%s3 + $0x928] sm:$0xff]
  %v432 = vld [vmem:[%s3 + $0x930] sm:$0xff]
  %v433 = vld [vmem:[%s3 + $0x938] sm:$0xff]
  %v434 = vld [vmem:[%s3 + $0x940] sm:$0xff]
  %v435 = vld [vmem:[%s3 + $0x948] sm:$0xff]
  %v436 = vld [vmem:[%s3 + $0x950] sm:$0xff]
  %v437 = vld [vmem:[%s3 + $0x958] sm:$0xff]
  %v438 = vld [vmem:[%s3 + $0x960] sm:$0xff]
  %v439 = vld [vmem:[%s3 + $0x968] sm:$0xff]
  %v440 = vld [vmem:[%s3 + $0x970] sm:$0xff]
  %v441 = vld [vmem:[%s3 + $0x978] sm:$0xff]
  %v442 = vld [vmem:[%s3 + $0x980] sm:$0xff]
  %v443 = vld [vmem:[%s3 + $0x988] sm:$0xff]
  %v444 = vld [vmem:[%s3 + $0x990] sm:$0xff]
  %v445 = vld [vmem:[%s3 + $0x998] sm:$0xff]
  %v446 = vld [vmem:[%s3 + $0x9a0] sm:$0xff]
  %v447 = vld [vmem:[%s3 + $0x9a8] sm:$0xff]
  %v448 = vld [vmem:[%s3 + $0x9b0] sm:$0xff]
  %v449 = vld [vmem:[%s3 + $0x9b8] sm:$0xff]
  %v450 = vld [vmem:[%s3 + $0x9c0] sm:$0xff]
  %v451 = vld [vmem:[%s3 + $0x9c8] sm:$0xff]
  %v452 = vld [vmem:[%s3 + $0x9d0] sm:$0xff]
  %v453 = vld [vmem:[%s3 + $0x9d8] sm:$0xff]
  %v454 = vld [vmem:[%s3 + $0x9e0] sm:$0xff]
  %v455 = vld [vmem:[%s3 + $0x9e8] sm:$0xff]
  %v456 = vld [vmem:[%s3 + $0x9f0] sm:$0xff]
  %v457 = vld [vmem:[%s3 + $0x9f8] sm:$0xff]
  %v458 = vld [vmem:[%s3 + $0xa00] sm:$0xff]
  %v459 = vld [vmem:[%s3 + $0xa08] sm:$0xff]
  %v460 = vld [vmem:[%s3 + $0xa10] sm:$0xff]
  %v461 = vld [vmem:[%s3 + $0xa18] sm:$0xff]
  %v462 = vld [vmem:[%s3 + $0xa20] sm:$0xff]
  %v463 = vld [vmem:[%s3 + $0xa28] sm:$0xff]
  %v464 = vld [vmem:[%s3 + $0xa30] sm:$0xff]
  %v465 = vld [vmem:[%s3 + $0xa38] sm:$0xff]
  %v466 = vld [vmem:[%s3 + $0xa40] sm:$0xff]
  %v467 = vld [vmem:[%s3 + $0xa48] sm:$0xff]
  %v468 = vld [vmem:[%s3 + $0xa50] sm:$0xff]
  %v469 = vld [vmem:[%s3 + $0xa58] sm:$0xff]
  %v470 = vld [vmem:[%s3 + $0xa60] sm:$0xff]
  %v471 = vld [vmem:[%s3 + $0xa68] sm:$0xff]
  %v472 = vld [vmem:[%s3 + $0xa70] sm:$0xff]
  %v473 = vld [vmem:[%s3 + $0xa78] sm:$0xff]
  %v474 = vld [vmem:[%s3 + $0xa80] sm:$0xff]
  %v475 = vld [vmem:[%s3 + $0xa88] sm:$0xff]
  %v476 = vld [vmem:[%s3 + $0xa90] sm:$0xff]
  %v477 = vld [vmem:[%s3 + $0xa98] sm:$0xff]
  %v478 = vld [vmem:[%s3 + $0xaa0] sm:$0xff]
  %v479 = vld [vmem:[%s3 + $0xaa8] sm:$0xff]
  %v480 = vld [vmem:[%s3 + $0xab0] sm:$0xff]
  %v481 = vld [vmem:[%s3 + $0xab8] sm:$0xff]
  %v482 = vld [vmem:[%s3 + $0xac0] sm:$0xff]
  %v483 = vld [vmem:[%s3 + $0xac8] sm:$0xff]
  %v484 = vld [vmem:[%s3 + $0xad0] sm:$0xff]
  %v485 = vld [vmem:[%s3 + $0xad8] sm:$0xff]
  %v486 = vld [vmem:[%s3 + $0xae0] sm:$0xff]
  %v487 = vld [vmem:[%s3 + $0xae8] sm:$0xff]
  %v488 = vld [vmem:[%s3 + $0xaf0] sm:$0xff]
  %v489 = vld [vmem:[%s3 + $0xaf8] sm:$0xff]
  %v490 = vld [vmem:[%s3 + $0xb00] sm:$0xff]
  %v491 = vld [vmem:[%s3 + $0xb08] sm:$0xff]
  %v492 = vld [vmem:[%s3 + $0xb10] sm:$0xff]
  %v493 = vld [vmem:[%s3 + $0xb18] sm:$0xff]
  %v494 = vld [vmem:[%s3 + $0xb20] sm:$0xff]
  %v495 = vld [vmem:[%s3 + $0xb28] sm:$0xff]
  %v496 = vld [vmem:[%s3 + $0xb30] sm:$0xff]
  %v497 = vld [vmem:[%s3 + $0xb38] sm:$0xff]
  %v498 = vld [vmem:[%s3 + $0xb40] sm:$0xff]
  %v499 = vld [vmem:[%s3 + $0xb48] sm:$0xff]
  %v500 = vld [vmem:[%s3 + $0xb50] sm:$0xff]
  %v501 = vld [vmem:[%s3 + $0xb58] sm:$0xff]
  %v502 = vld [vmem:[%s3 + $0xb60] sm:$0xff]
  %v503 = vld [vmem:[%s3 + $0xb68] sm:$0xff]
  %v504 = vld [vmem:[%s3 + $0xb70] sm:$0xff]
  %v505 = vld [vmem:[%s3 + $0xb78] sm:$0xff]
  %v506 = vld [vmem:[%s3 + $0xb80] sm:$0xff]
  %v507 = vld [vmem:[%s3 + $0xb88] sm:$0xff]
  %v508 = vld [vmem:[%s3 + $0xb90] sm:$0xff]
  %v509 = vld [vmem:[%s3 + $0xb98] sm:$0xff]
  %v510 = vld [vmem:[%s3 + $0xba0] sm:$0xff]
  %v511 = vld [vmem:[%s3 + $0xba8] sm:$0xff]
  %v512 = vld [vmem:[%s3 + $0xbb0] sm:$0xff]
  %v513 = vld [vmem:[%s3 + $0xbb8] sm:$0xff]
  %v514 = vld [vmem:[%s3 + $0xbc0] sm:$0xff]
  %v515 = vld [vmem:[%s3 + $0xbc8] sm:$0xff]
  %v516 = vld [vmem:[%s3 + $0xbd0] sm:$0xff]
  %v517 = vld [vmem:[%s3 + $0xbd8] sm:$0xff]
  %v518 = vld [vmem:[%s3 + $0xbe0] sm:$0xff]
  %v519 = vld [vmem:[%s3 + $0xbe8] sm:$0xff]
  %v520 = vld [vmem:[%s3 + $0xbf0] sm:$0xff]
  %v521 = vld [vmem:[%s3 + $0xbf8] sm:$0xff]
  %v522 = vld [vmem:[%s3 + $0xc00] sm:$0xff]
  %v523 = vld [vmem:[%s3 + $0xc08] sm:$0xff]
  %v524 = vld [vmem:[%s3 + $0xc10] sm:$0xff]
  %v525 = vld [vmem:[%s3 + $0xc18] sm:$0xff]
  %v526 = vld [vmem:[%s3 + $0xc20] sm:$0xff]
  %v527 = vld [vmem:[%s3 + $0xc28] sm:$0xff]
  %v528 = vld [vmem:[%s3 + $0xc30] sm:$0xff]
  %v529 = vld [vmem:[%s3 + $0xc38] sm:$0xff]
  %v530 = vld [vmem:[%s3 + $0xc40] sm:$0xff]
  %v531 = vld [vmem:[%s3 + $0xc48] sm:$0xff]
  %v532 = vld [vmem:[%s3 + $0xc50] sm:$0xff]
  %v533 = vld [vmem:[%s3 + $0xc58] sm:$0xff]
  %v534 = vld [vmem:[%s3 + $0xc60] sm:$0xff]
  %v535 = vld [vmem:[%s3 + $0xc68] sm:$0xff]
  %v536 = vld [vmem:[%s3 + $0xc70] sm:$0xff]
  %v537 = vld [vmem:[%s3 + $0xc78] sm:$0xff]
  %v538 = vld [vmem:[%s3 + $0xc80] sm:$0xff]
  %v539 = vld [vmem:[%s3 + $0xc88] sm:$0xff]
  %v540 = vld [vmem:[%s3 + $0xc90] sm:$0xff]
  %v541 = vld [vmem:[%s3 + $0xc98] sm:$0xff]
  %v542 = vld [vmem:[%s3 + $0xca0] sm:$0xff]
  %v543 = vld [vmem:[%s3 + $0xca8] sm:$0xff]
  %v544 = vld [vmem:[%s3 + $0xcb0] sm:$0xff]
  %v545 = vld [vmem:[%s3 + $0xcb8] sm:$0xff]
  %v546 = vld [vmem:[%s3 + $0xcc0] sm:$0xff]
  %v547 = vld [vmem:[%s3 + $0xcc8] sm:$0xff]
  %v548 = vld [vmem:[%s3 + $0xcd0] sm:$0xff]
  %v549 = vld [vmem:[%s3 + $0xcd8] sm:$0xff]
  %v550 = vld [vmem:[%s3 + $0xce0] sm:$0xff]
  %v551 = vld [vmem:[%s3 + $0xce8] sm:$0xff]
  %v552 = vld [vmem:[%s3 + $0xcf0] sm:$0xff]
  %v553 = vld [vmem:[%s3 + $0xcf8] sm:$0xff]
  %v554 = vld [vmem:[%s3 + $0xd00] sm:$0xff]
  %v555 = vld [vmem:[%s3 + $0xd08] sm:$0xff]
  %v556 = vld [vmem:[%s3 + $0xd10] sm:$0xff]
  %v557 = vld [vmem:[%s3 + $0xd18] sm:$0xff]
  %v558 = vld [vmem:[%s3 + $0xd20] sm:$0xff]
  %v559 = vld [vmem:[%s3 + $0xd28] sm:$0xff]
  %v560 = vld [vmem:[%s3 + $0xd30] sm:$0xff]
  %v561 = vld [vmem:[%s3 + $0xd38] sm:$0xff]
  %v562 = vld [vmem:[%s3 + $0xd40] sm:$0xff]
  %v563 = vld [vmem:[%s3 + $0xd48] sm:$0xff]
  %v564 = vld [vmem:[%s3 + $0xd50] sm:$0xff]
  %v565 = vld [vmem:[%s3 + $0xd58] sm:$0xff]
  %v566 = vld [vmem:[%s3 + $0xd60] sm:$0xff]
  %v567 = vld [vmem:[%s3 + $0xd68] sm:$0xff]
  %v568 = vld [vmem:[%s3 + $0xd70] sm:$0xff]
  %v569 = vld [vmem:[%s3 + $0xd78] sm:$0xff]
  %v570 = vld [vmem:[%s3 + $0xd80] sm:$0xff]
  %v571 = vld [vmem:[%s3 + $0xd88] sm:$0xff]
  %v572 = vld [vmem:[%s3 + $0xd90] sm:$0xff]
  %v573 = vld [vmem:[%s3 + $0xd98] sm:$0xff]
  %v574 = vld [vmem:[%s3 + $0xda0] sm:$0xff]
  %v575 = vld [vmem:[%s3 + $0xda8] sm:$0xff]
  %v576 = vld [vmem:[%s3 + $0xdb0] sm:$0xff]
  %v577 = vld [vmem:[%s3 + $0xdb8] sm:$0xff]
  %v578 = vld [vmem:[%s3 + $0xdc0] sm:$0xff]
  %v579 = vld [vmem:[%s3 + $0xdc8] sm:$0xff]
  %v580 = vld [vmem:[%s3 + $0xdd0] sm:$0xff]
  %v581 = vld [vmem:[%s3 + $0xdd8] sm:$0xff]
  %v582 = vld [vmem:[%s3 + $0xde0] sm:$0xff]
  %v583 = vld [vmem:[%s3 + $0xde8] sm:$0xff]
  %v584 = vld [vmem:[%s3 + $0xdf0] sm:$0xff]
  %v585 = vld [vmem:[%s3 + $0xdf8] sm:$0xff]
  %v586 = vld [vmem:[%s3 + $0xe00] sm:$0xff]
  %v587 = vld [vmem:[%s3 + $0xe08] sm:$0xff]
  %v588 = vld [vmem:[%s3 + $0xe10] sm:$0xff]
  %v589 = vld [vmem:[%s3 + $0xe18] sm:$0xff]
  %v590 = vld [vmem:[%s3 + $0xe20] sm:$0xff]
  %v591 = vld [vmem:[%s3 + $0xe28] sm:$0xff]
  %v592 = vld [vmem:[%s3 + $0xe30] sm:$0xff]
  %v593 = vld [vmem:[%s3 + $0xe38] sm:$0xff]
  %v594 = vld [vmem:[%s3 + $0xe40] sm:$0xff]
  %v595 = vld [vmem:[%s3 + $0xe48] sm:$0xff]
  %v596 = vld [vmem:[%s3 + $0xe50] sm:$0xff]
  %v597 = vld [vmem:[%s3 + $0xe58] sm:$0xff]
  %v598 = vld [vmem:[%s3 + $0xe60] sm:$0xff]
  %v599 = vld [vmem:[%s3 + $0xe68] sm:$0xff]
  %v600 = vld [vmem:[%s3 + $0xe70] sm:$0xff]
  %v601 = vld [vmem:[%s3 + $0xe78] sm:$0xff]
  %v602 = vld [vmem:[%s3 + $0xe80] sm:$0xff]
  %v603 = vld [vmem:[%s3 + $0xe88] sm:$0xff]
  %v604 = vld [vmem:[%s3 + $0xe90] sm:$0xff]
  %v605 = vld [vmem:[%s3 + $0xe98] sm:$0xff]
  %v606 = vld [vmem:[%s3 + $0xea0] sm:$0xff]
  %v607 = vld [vmem:[%s3 + $0xea8] sm:$0xff]
  %v608 = vld [vmem:[%s3 + $0xeb0] sm:$0xff]
  %v609 = vld [vmem:[%s3 + $0xeb8] sm:$0xff]
  %v610 = vld [vmem:[%s3 + $0xec0] sm:$0xff]
  %v611 = vld [vmem:[%s3 + $0xec8] sm:$0xff]
  %v612 = vld [vmem:[%s3 + $0xed0] sm:$0xff]
  %v613 = vld [vmem:[%s3 + $0xed8] sm:$0xff]
  %v614 = vld [vmem:[%s3 + $0xee0] sm:$0xff]
  %v615 = vld [vmem:[%s3 + $0xee8] sm:$0xff]
  %v616 = vld [vmem:[%s3 + $0xef0] sm:$0xff]
  %v617 = vld [vmem:[%s3 + $0xef8] sm:$0xff]
  %v618 = vld [vmem:[%s3 + $0xf00] sm:$0xff]
  %v619 = vld [vmem:[%s3 + $0xf08] sm:$0xff]
  %v620 = vld [vmem:[%s3 + $0xf10] sm:$0xff]
  %v621 = vld [vmem:[%s3 + $0xf18] sm:$0xff]
  %v622 = vld [vmem:[%s3 + $0xf20] sm:$0xff]
  %v623 = vld [vmem:[%s3 + $0xf28] sm:$0xff]
  %v624 = vld [vmem:[%s3 + $0xf30] sm:$0xff]
  %v625 = vld [vmem:[%s3 + $0xf38] sm:$0xff]
  %v626 = vld [vmem:[%s3 + $0xf40] sm:$0xff]
  %v627 = vld [vmem:[%s3 + $0xf48] sm:$0xff]
  %v628 = vld [vmem:[%s3 + $0xf50] sm:$0xff]
  %v629 = vld [vmem:[%s3 + $0xf58] sm:$0xff]
  %v630 = vld [vmem:[%s3 + $0xf60] sm:$0xff]
  %v631 = vld [vmem:[%s3 + $0xf68] sm:$0xff]
  %v632 = vld [vmem:[%s3 + $0xf70] sm:$0xff]
  %v633 = vld [vmem:[%s3 + $0xf78] sm:$0xff]
  %v634 = vld [vmem:[%s3 + $0xf80] sm:$0xff]
  %v635 = vld [vmem:[%s3 + $0xf88] sm:$0xff]
  %v636 = vld [vmem:[%s3 + $0xf90] sm:$0xff]
  %v637 = vld [vmem:[%s3 + $0xf98] sm:$0xff]
  %v638 = vld [vmem:[%s3 + $0xfa0] sm:$0xff]
  %v639 = vld [vmem:[%s3 + $0xfa8] sm:$0xff]
  %v640 = vld [vmem:[%s3 + $0xfb0] sm:$0xff]
  %v641 = vld [vmem:[%s3 + $0xfb8] sm:$0xff]
  %v642 = vld [vmem:[%s3 + $0xfc0] sm:$0xff]
  %v643 = vld [vmem:[%s3 + $0xfc8] sm:$0xff]
  %v644 = vld [vmem:[%s3 + $0xfd0] sm:$0xff]
  %v645 = vld [vmem:[%s3 + $0xfd8] sm:$0xff]
  %v646 = vld [vmem:[%s3 + $0xfe0] sm:$0xff]
  %v647 = vld [vmem:[%s3 + $0xfe8] sm:$0xff]
  %v648 = vld [vmem:[%s3 + $0xff0] sm:$0xff]
  %v649 = vld [vmem:[%s3 + $0xff8] sm:$0xff]
  %v650 = vld [vmem:[%s3 + $0x1000] sm:$0xff]
  %v651 = vld [vmem:[%s3 + $0x1008] sm:$0xff]
  %v652 = vld [vmem:[%s3 + $0x1010] sm:$0xff]
  %v653 = vld [vmem:[%s3 + $0x1018] sm:$0xff]
  %v654 = vld [vmem:[%s3 + $0x1020] sm:$0xff]
  %v655 = vld [vmem:[%s3 + $0x1028] sm:$0xff]
  %v656 = vld [vmem:[%s3 + $0x1030] sm:$0xff]
  %v657 = vld [vmem:[%s3 + $0x1038] sm:$0xff]
  %v658 = vld [vmem:[%s3 + $0x1040] sm:$0xff]
  %v659 = vld [vmem:[%s3 + $0x1048] sm:$0xff]
  %v660 = vld [vmem:[%s3 + $0x1050] sm:$0xff]
  %v661 = vld [vmem:[%s3 + $0x1058] sm:$0xff]
  %v662 = vld [vmem:[%s3 + $0x1060] sm:$0xff]
  %v663 = vld [vmem:[%s3 + $0x1068] sm:$0xff]
  %v664 = vld [vmem:[%s3 + $0x1070] sm:$0xff]
  %v665 = vld [vmem:[%s3 + $0x1078] sm:$0xff]
  %v666 = vld [vmem:[%s3 + $0x1080] sm:$0xff]
  %v667 = vld [vmem:[%s3 + $0x1088] sm:$0xff]
  %v668 = vld [vmem:[%s3 + $0x1090] sm:$0xff]
  %v669 = vld [vmem:[%s3 + $0x1098] sm:$0xff]
  %v670 = vld [vmem:[%s3 + $0x10a0] sm:$0xff]
  %v671 = vld [vmem:[%s3 + $0x10a8] sm:$0xff]
  %v672 = vld [vmem:[%s3 + $0x10b0] sm:$0xff]
  %v673 = vld [vmem:[%s3 + $0x10b8] sm:$0xff]
  %v674 = vld [vmem:[%s3 + $0x10c0] sm:$0xff]
  %v675 = vld [vmem:[%s3 + $0x10c8] sm:$0xff]
  %v676 = vld [vmem:[%s3 + $0x10d0] sm:$0xff]
  %v677 = vld [vmem:[%s3 + $0x10d8] sm:$0xff]
  %v678 = vld [vmem:[%s3 + $0x10e0] sm:$0xff]
  %v679 = vld [vmem:[%s3 + $0x10e8] sm:$0xff]
  %v680 = vld [vmem:[%s3 + $0x10f0] sm:$0xff]
  %v681 = vld [vmem:[%s3 + $0x10f8] sm:$0xff]
  %v682 = vld [vmem:[%s3 + $0x1100] sm:$0xff]
  %v683 = vld [vmem:[%s3 + $0x1108] sm:$0xff]
  %v684 = vld [vmem:[%s3 + $0x1110] sm:$0xff]
  %v685 = vld [vmem:[%s3 + $0x1118] sm:$0xff]
  %v686 = vld [vmem:[%s3 + $0x1120] sm:$0xff]
  %v687 = vld [vmem:[%s3 + $0x1128] sm:$0xff]
  %v688 = vld [vmem:[%s3 + $0x1130] sm:$0xff]
  %v689 = vld [vmem:[%s3 + $0x1138] sm:$0xff]
  %v690 = vld [vmem:[%s3 + $0x1140] sm:$0xff]
  %v691 = vld [vmem:[%s3 + $0x1148] sm:$0xff]
  %v692 = vld [vmem:[%s3 + $0x1150] sm:$0xff]
  %v693 = vld [vmem:[%s3 + $0x1158] sm:$0xff]
  %v694 = vld [vmem:[%s3 + $0x1160] sm:$0xff]
  %v695 = vld [vmem:[%s3 + $0x1168] sm:$0xff]
  %v696 = vld [vmem:[%s3 + $0x1170] sm:$0xff]
  %v697 = vld [vmem:[%s3 + $0x1178] sm:$0xff]
  %v698 = vld [vmem:[%s3 + $0x1180] sm:$0xff]
  %v699 = vld [vmem:[%s3 + $0x1188] sm:$0xff]
  %v700 = vld [vmem:[%s3 + $0x1190] sm:$0xff]
  %v701 = vld [vmem:[%s3 + $0x1198] sm:$0xff]
  %v702 = vld [vmem:[%s3 + $0x11a0] sm:$0xff]
  %v703 = vld [vmem:[%s3 + $0x11a8] sm:$0xff]
  %v704 = vld [vmem:[%s3 + $0x11b0] sm:$0xff]
  %v705 = vld [vmem:[%s3 + $0x11b8] sm:$0xff]
  %v706 = vld [vmem:[%s3 + $0x11c0] sm:$0xff]
  %v707 = vld [vmem:[%s3 + $0x11c8] sm:$0xff]
  %v708 = vld [vmem:[%s3 + $0x11d0] sm:$0xff]
  %v709 = vld [vmem:[%s3 + $0x11d8] sm:$0xff]
  %v710 = vld [vmem:[%s3 + $0x11e0] sm:$0xff]
  %v711 = vld [vmem:[%s3 + $0x11e8] sm:$0xff]
  %v712 = vld [vmem:[%s3 + $0x11f0] sm:$0xff]
  %v713 = vld [vmem:[%s3 + $0x11f8] sm:$0xff]
  %v714 = vld [vmem:[%s3 + $0x1200] sm:$0xff]
  %v715 = vld [vmem:[%s3 + $0x1208] sm:$0xff]
  %v716 = vld [vmem:[%s3 + $0x1210] sm:$0xff]
  %v717 = vld [vmem:[%s3 + $0x1218] sm:$0xff]
  %v718 = vld [vmem:[%s3 + $0x1220] sm:$0xff]
  %v719 = vld [vmem:[%s3 + $0x1228] sm:$0xff]
  %v720 = vld [vmem:[%s3 + $0x1230] sm:$0xff]
  %v721 = vld [vmem:[%s3 + $0x1238] sm:$0xff]
  %v722 = vld [vmem:[%s3 + $0x1240] sm:$0xff]
  %v723 = vld [vmem:[%s3 + $0x1248] sm:$0xff]
  %v724 = vld [vmem:[%s3 + $0x1250] sm:$0xff]
  %v725 = vld [vmem:[%s3 + $0x1258] sm:$0xff]
  %v726 = vld [vmem:[%s3 + $0x1260] sm:$0xff]
  %v727 = vld [vmem:[%s3 + $0x1268] sm:$0xff]
  %v728 = vld [vmem:[%s3 + $0x1270] sm:$0xff]
  %v729 = vld [vmem:[%s3 + $0x1278] sm:$0xff]
  %v730 = vld [vmem:[%s3 + $0x1280] sm:$0xff]
  %v731 = vld [vmem:[%s3 + $0x1288] sm:$0xff]
  %v732 = vld [vmem:[%s3 + $0x1290] sm:$0xff]
  %v733 = vld [vmem:[%s3 + $0x1298] sm:$0xff]
  %v734 = vld [vmem:[%s3 + $0x12a0] sm:$0xff]
  %v735 = vld [vmem:[%s3 + $0x12a8] sm:$0xff]
  %v736 = vld [vmem:[%s3 + $0x12b0] sm:$0xff]
  %v737 = vld [vmem:[%s3 + $0x12b8] sm:$0xff]
  %v738 = vld [vmem:[%s3 + $0x12c0] sm:$0xff]
  %v739 = vld [vmem:[%s3 + $0x12c8] sm:$0xff]
  %v740 = vld [vmem:[%s3 + $0x12d0] sm:$0xff]
  %v741 = vld [vmem:[%s3 + $0x12d8] sm:$0xff]
  %v742 = vld [vmem:[%s3 + $0x12e0] sm:$0xff]
  %v743 = vld [vmem:[%s3 + $0x12e8] sm:$0xff]
  %v744 = vld [vmem:[%s3 + $0x12f0] sm:$0xff]
  %v745 = vld [vmem:[%s3 + $0x12f8] sm:$0xff]
  %v746 = vld [vmem:[%s3 + $0x1300] sm:$0xff]
  %v747 = vld [vmem:[%s3 + $0x1308] sm:$0xff]
  %v748 = vld [vmem:[%s3 + $0x1310] sm:$0xff]
  %v749 = vld [vmem:[%s3 + $0x1318] sm:$0xff]
  %v750 = vld [vmem:[%s3 + $0x1320] sm:$0x11]
  %v751 = vld [vmem:[%s3 + $0x1328] sm:$0x11]
  %v752 = vld [vmem:[%s3 + $0x1330] sm:$0x11]
  %v753 = vld [vmem:[%s3 + $0x1338] sm:$0x11]
  %v754 = vld [vmem:[%s3 + $0x1340] sm:$0x11]
  %v755 = vld [vmem:[%s3 + $0x1348] sm:$0x11]
  %v756 = vld [vmem:[%s3 + $0x1350] sm:$0x11]
  %v757 = vld [vmem:[%s3 + $0x1358] sm:$0x11]
  %v758 = vld [vmem:[%s3 + $0x1360] sm:$0x11]
  %v759 = vld [vmem:[%s3 + $0x1368] sm:$0x11]
  %v760 = vld [vmem:[%s3 + $0x1370] sm:$0x11]
  %v761 = vld [vmem:[%s3 + $0x1378] sm:$0x11]
  %v762 = vld [vmem:[%s3 + $0x1380] sm:$0x11]
  %v763 = vld [vmem:[%s3 + $0x1388] sm:$0x11]
  %v764 = vld [vmem:[%s3 + $0x1390] sm:$0x11]
  %v765 = vld [vmem:[%s3 + $0x1398] sm:$0x11]
  %v766 = vld [vmem:[%s3 + $0x13a0] sm:$0x11]
  %v767 = vld [vmem:[%s4] sm:$0xff]
  %v768 = vld [vmem:[%s4 + $0x8] sm:$0xff]
  %v769 = vld [vmem:[%s4 + $0x10] sm:$0xff]
  %v770 = vld [vmem:[%s4 + $0x18] sm:$0xff]
  %v771 = vld [vmem:[%s4 + $0x20] sm:$0x3]
  %v777 = vperm.slane %v767, 0
  %v778 = vperm.slane %v767, 1
  %v779 = vperm.slane %v767, 2
  %v780 = vperm.slane %v767, 3
  %v781 = vperm.slane %v767, 4
  %v782 = vperm.slane %v767, 5
  %v783 = vperm.slane %v767, 6
  %v784 = vperm.slane %v767, 7
  %v785 = vperm.slane %v768, 0
  %v786 = vperm.slane %v768, 1
  %v787 = vperm.slane %v768, 2
  %v788 = vperm.slane %v768, 3
  %v789 = vperm.slane %v768, 4
  %v790 = vperm.slane %v768, 5
  %v791 = vperm.slane %v768, 6
  %v792 = vperm.slane %v768, 7
  %v793 = vperm.slane %v769, 0
  %v794 = vperm.slane %v769, 1
  %v795 = vperm.slane %v769, 2
  %v796 = vperm.slane %v769, 3
  %v797 = vperm.slane %v769, 4
  %v798 = vperm.slane %v769, 5
  %v799 = vperm.slane %v769, 6
  %v800 = vperm.slane %v769, 7
  %v801 = vperm.slane %v770, 0
  %v802 = vperm.slane %v770, 1
  %v803 = vperm.slane %v770, 2
  %v804 = vperm.slane %v770, 3
  %v805 = vperm.slane %v770, 4
  %v806 = vperm.slane %v770, 5
  %v807 = vperm.slane %v770, 6
  %v808 = vperm.slane %v770, 7
  %v809 = vperm.slane %v771, 0
  %v810 = vperm.slane %v771, 1
  %v1474 = vunpack.c.l.b16 %v138
  %v1475 = vunpack.c.h.b16 %v138
  %v1476 = vunpack.c.l.b16 %v139
  %v1477 = vunpack.c.h.b16 %v139
  %v1478 = vunpack.c.l.b16 %v140
  %v1479 = vunpack.c.h.b16 %v140
  %v1480 = vunpack.c.l.b16 %v141
  %v1481 = vunpack.c.h.b16 %v141
  %v1482 = vunpack.c.l.b16 %v142
  %v1483 = vunpack.c.h.b16 %v142
  %v1484 = vunpack.c.l.b16 %v143
  %v1485 = vunpack.c.h.b16 %v143
  %v1486 = vunpack.c.l.b16 %v144
  %v1487 = vunpack.c.h.b16 %v144
  %v1488 = vunpack.c.l.b16 %v145
  %v1489 = vunpack.c.h.b16 %v145
  %v1490 = vunpack.c.l.b16 %v146
  %v1491 = vunpack.c.h.b16 %v146
  %v1492 = vunpack.c.l.b16 %v147
  %v1493 = vunpack.c.h.b16 %v147
  %v1494 = vunpack.c.l.b16 %v148
  %v1495 = vunpack.c.h.b16 %v148
  %v1496 = vunpack.c.l.b16 %v149
  %v1497 = vunpack.c.h.b16 %v149
  %v1498 = vunpack.c.l.b16 %v150
  %v1499 = vunpack.c.h.b16 %v150
  %v1500 = vunpack.c.l.b16 %v151
  %v1501 = vunpack.c.h.b16 %v151
  %v1502 = vunpack.c.l.b16 %v152
  %v1503 = vunpack.c.h.b16 %v152
  %v1504 = vunpack.c.l.b16 %v153
  %v1505 = vunpack.c.h.b16 %v153
  %v1506 = vunpack.c.l.b16 %v154
  %v1507 = vunpack.c.h.b16 %v154
  %v1508 = vunpack.c.l.b16 %v155
  %v1509 = vunpack.c.h.b16 %v155
  %v1510 = vunpack.c.l.b16 %v156
  %v1511 = vunpack.c.h.b16 %v156
  %v1512 = vunpack.c.l.b16 %v157
  %v1513 = vunpack.c.h.b16 %v157
  %v1514 = vunpack.c.l.b16 %v158
  %v1515 = vunpack.c.h.b16 %v158
  %v1516 = vunpack.c.l.b16 %v159
  %v1517 = vunpack.c.h.b16 %v159
  %v1518 = vunpack.c.l.b16 %v160
  %v1519 = vunpack.c.h.b16 %v160
  %v1520 = vunpack.c.l.b16 %v161
  %v1521 = vunpack.c.h.b16 %v161
  %v1522 = vunpack.c.l.b16 %v162
  %v1523 = vunpack.c.h.b16 %v162
  %v1524 = vunpack.c.l.b16 %v163
  %v1525 = vunpack.c.h.b16 %v163
  %v1526 = vunpack.c.l.b16 %v164
  %v1527 = vunpack.c.h.b16 %v164
  %v1528 = vunpack.c.l.b16 %v165
  %v1529 = vunpack.c.h.b16 %v165
  %v1530 = vunpack.c.l.b16 %v166
  %v1531 = vunpack.c.h.b16 %v166
  %v1532 = vunpack.c.l.b16 %v167
  %v1533 = vunpack.c.h.b16 %v167
  %v1534 = vunpack.c.l.b16 %v168
  %v1535 = vunpack.c.h.b16 %v168
  %v1536 = vunpack.c.l.b16 %v169
  %v1537 = vunpack.c.h.b16 %v169
  %v1538 = vunpack.c.l.b16 %v170
  %v1539 = vunpack.c.h.b16 %v170
  %v1540 = vunpack.c.l.b16 %v171
  %v1541 = vunpack.c.h.b16 %v171
  %v1542 = vunpack.c.l.b16 %v172
  %v1543 = vunpack.c.h.b16 %v172
  %v1544 = vunpack.c.l.b16 %v173
  %v1545 = vunpack.c.h.b16 %v173
  %v1546 = vunpack.c.l.b16 %v174
  %v1547 = vunpack.c.h.b16 %v174
  %v1548 = vunpack.c.l.b16 %v175
  %v1549 = vunpack.c.h.b16 %v175
  %v1550 = vunpack.c.l.b16 %v176
  %v1551 = vunpack.c.h.b16 %v176
  %v1552 = vunpack.c.l.b16 %v177
  %v1553 = vunpack.c.h.b16 %v177
  %v1554 = vunpack.c.l.b16 %v178
  %v1555 = vunpack.c.h.b16 %v178
  %v1556 = vunpack.c.l.b16 %v179
  %v1557 = vunpack.c.h.b16 %v179
  %v1558 = vunpack.c.l.b16 %v180
  %v1559 = vunpack.c.h.b16 %v180
  %v1560 = vunpack.c.l.b16 %v181
  %v1561 = vunpack.c.h.b16 %v181
  %v1562 = vunpack.c.l.b16 %v182
  %v1563 = vunpack.c.h.b16 %v182
  %v1564 = vunpack.c.l.b16 %v183
  %v1565 = vunpack.c.h.b16 %v183
  %v1566 = vunpack.c.l.b16 %v184
  %v1567 = vunpack.c.h.b16 %v184
  %v1568 = vunpack.c.l.b16 %v185
  %v1569 = vunpack.c.h.b16 %v185
  %v1570 = vunpack.c.l.b16 %v186
  %v1571 = vunpack.c.h.b16 %v186
  %v1572 = vunpack.c.l.b16 %v187
  %v1573 = vunpack.c.h.b16 %v187
  %v1574 = vunpack.c.l.b16 %v188
  %v1575 = vunpack.c.h.b16 %v188
  %v1576 = vunpack.c.l.b16 %v189
  %v1577 = vunpack.c.h.b16 %v189
  %v1578 = vunpack.c.l.b16 %v190
  %v1579 = vunpack.c.h.b16 %v190
  %v1580 = vunpack.c.l.b16 %v191
  %v1581 = vunpack.c.h.b16 %v191
  %v1582 = vunpack.c.l.b16 %v192
  %v1583 = vunpack.c.h.b16 %v192
  %v1584 = vunpack.c.l.b16 %v193
  %v1585 = vunpack.c.h.b16 %v193
  %v1586 = vunpack.c.l.b16 %v194
  %v1587 = vunpack.c.h.b16 %v194
  %v1588 = vunpack.c.l.b16 %v195
  %v1589 = vunpack.c.h.b16 %v195
  %v1590 = vunpack.c.l.b16 %v196
  %v1591 = vunpack.c.h.b16 %v196
  %v1592 = vunpack.c.l.b16 %v197
  %v1593 = vunpack.c.h.b16 %v197
  %v1594 = vunpack.c.l.b16 %v198
  %v1595 = vunpack.c.h.b16 %v198
  %v1596 = vunpack.c.l.b16 %v199
  %v1597 = vunpack.c.h.b16 %v199
  %v1598 = vunpack.c.l.b16 %v200
  %v1599 = vunpack.c.h.b16 %v200
  %v1600 = vunpack.c.l.b16 %v201
  %v1601 = vunpack.c.h.b16 %v201
  %v1602 = vunpack.c.l.b16 %v202
  %v1603 = vunpack.c.h.b16 %v202
  %v1604 = vunpack.c.l.b16 %v203
  %v1605 = vunpack.c.h.b16 %v203
  %v1606 = vunpack.c.l.b16 %v204
  %v1607 = vunpack.c.h.b16 %v204
  %v1608 = vunpack.c.l.b16 %v205
  %v1609 = vunpack.c.h.b16 %v205
  %v1610 = vunpack.c.l.b16 %v206
  %v1611 = vunpack.c.h.b16 %v206
  %v1612 = vunpack.c.l.b16 %v207
  %v1613 = vunpack.c.h.b16 %v207
  %v1614 = vunpack.c.l.b16 %v208
  %v1615 = vunpack.c.h.b16 %v208
  %v1616 = vunpack.c.l.b16 %v209
  %v1617 = vunpack.c.h.b16 %v209
  %v1618 = vunpack.c.l.b16 %v210
  %v1619 = vunpack.c.h.b16 %v210
  %v1620 = vunpack.c.l.b16 %v211
  %v1621 = vunpack.c.h.b16 %v211
  %v1622 = vunpack.c.l.b16 %v212
  %v1623 = vunpack.c.h.b16 %v212
  %v1624 = vunpack.c.l.b16 %v213
  %v1625 = vunpack.c.h.b16 %v213
  %v1626 = vunpack.c.l.b16 %v214
  %v1627 = vunpack.c.h.b16 %v214
  %v1628 = vunpack.c.l.b16 %v215
  %v1629 = vunpack.c.h.b16 %v215
  %v1630 = vunpack.c.l.b16 %v216
  %v1631 = vunpack.c.h.b16 %v216
  %v1632 = vunpack.c.l.b16 %v217
  %v1633 = vunpack.c.h.b16 %v217
  %v1634 = vunpack.c.l.b16 %v218
  %v1635 = vunpack.c.h.b16 %v218
  %v1636 = vunpack.c.l.b16 %v219
  %v1637 = vunpack.c.h.b16 %v219
  %v1638 = vunpack.c.l.b16 %v220
  %v1639 = vunpack.c.h.b16 %v220
  %v1640 = vunpack.c.l.b16 %v221
  %v1641 = vunpack.c.h.b16 %v221
  %v1642 = vunpack.c.l.b16 %v222
  %v1643 = vunpack.c.h.b16 %v222
  %v1644 = vunpack.c.l.b16 %v223
  %v1645 = vunpack.c.h.b16 %v223
  %v1646 = vunpack.c.l.b16 %v224
  %v1647 = vunpack.c.h.b16 %v224
  %v1648 = vunpack.c.l.b16 %v225
  %v1649 = vunpack.c.h.b16 %v225
  %v1650 = vunpack.c.l.b16 %v226
  %v1651 = vunpack.c.h.b16 %v226
  %v1652 = vunpack.c.l.b16 %v227
  %v1653 = vunpack.c.h.b16 %v227
  %v1654 = vunpack.c.l.b16 %v228
  %v1655 = vunpack.c.h.b16 %v228
  %v1656 = vunpack.c.l.b16 %v229
  %v1657 = vunpack.c.h.b16 %v229
  %v1658 = vunpack.c.l.b16 %v230
  %v1659 = vunpack.c.h.b16 %v230
  %v1660 = vunpack.c.l.b16 %v231
  %v1661 = vunpack.c.h.b16 %v231
  %v1662 = vunpack.c.l.b16 %v232
  %v1663 = vunpack.c.h.b16 %v232
  %v1664 = vunpack.c.l.b16 %v233
  %v1665 = vunpack.c.h.b16 %v233
  %v1666 = vunpack.c.l.b16 %v234
  %v1667 = vunpack.c.h.b16 %v234
  %v1668 = vunpack.c.l.b16 %v235
  %v1669 = vunpack.c.h.b16 %v235
  %v1670 = vunpack.c.l.b16 %v236
  %v1671 = vunpack.c.h.b16 %v236
  %v1672 = vunpack.c.l.b16 %v237
  %v1673 = vunpack.c.h.b16 %v237
  %v1674 = vunpack.c.l.b16 %v238
  %v1675 = vunpack.c.h.b16 %v238
  %v1676 = vunpack.c.l.b16 %v239
  %v1677 = vunpack.c.h.b16 %v239
  %v1678 = vunpack.c.l.b16 %v240
  %v1679 = vunpack.c.h.b16 %v240
  %v1680 = vunpack.c.l.b16 %v241
  %v1681 = vunpack.c.h.b16 %v241
  %v1682 = vunpack.c.l.b16 %v242
  %v1683 = vunpack.c.h.b16 %v242
  %v1684 = vunpack.c.l.b16 %v243
  %v1685 = vunpack.c.h.b16 %v243
  %v1686 = vunpack.c.l.b16 %v244
  %v1687 = vunpack.c.h.b16 %v244
  %v1688 = vunpack.c.l.b16 %v245
  %v1689 = vunpack.c.h.b16 %v245
  %v1690 = vunpack.c.l.b16 %v246
  %v1691 = vunpack.c.h.b16 %v246
  %v1692 = vunpack.c.l.b16 %v247
  %v1693 = vunpack.c.h.b16 %v247
  %v1694 = vunpack.c.l.b16 %v248
  %v1695 = vunpack.c.h.b16 %v248
  %v1696 = vunpack.c.l.b16 %v249
  %v1697 = vunpack.c.h.b16 %v249
  %v1698 = vunpack.c.l.b16 %v250
  %v1699 = vunpack.c.h.b16 %v250
  %v1700 = vunpack.c.l.b16 %v251
  %v1701 = vunpack.c.h.b16 %v251
  %v1702 = vunpack.c.l.b16 %v252
  %v1703 = vunpack.c.h.b16 %v252
  %v1704 = vunpack.c.l.b16 %v253
  %v1705 = vunpack.c.h.b16 %v253
  %v1706 = vunpack.c.l.b16 %v254
  %v1707 = vunpack.c.h.b16 %v254
  %v1708 = vunpack.c.l.b16 %v255
  %v1709 = vunpack.c.h.b16 %v255
  %v1710 = vunpack.c.l.b16 %v256
  %v1711 = vunpack.c.h.b16 %v256
  %v1712 = vunpack.c.l.b16 %v257
  %v1713 = vunpack.c.h.b16 %v257
  %v1714 = vunpack.c.l.b16 %v258
  %v1715 = vunpack.c.h.b16 %v258
  %v1716 = vunpack.c.l.b16 %v259
  %v1717 = vunpack.c.h.b16 %v259
  %v1718 = vunpack.c.l.b16 %v260
  %v1719 = vunpack.c.h.b16 %v260
  %v1720 = vunpack.c.l.b16 %v261
  %v1721 = vunpack.c.h.b16 %v261
  %v1722 = vunpack.c.l.b16 %v262
  %v1723 = vunpack.c.h.b16 %v262
  %v1724 = vunpack.c.l.b16 %v263
  %v1725 = vunpack.c.h.b16 %v263
  %v1726 = vunpack.c.l.b16 %v264
  %v1727 = vunpack.c.h.b16 %v264
  %v1728 = vunpack.c.l.b16 %v265
  %v1729 = vunpack.c.h.b16 %v265
  %v1730 = vunpack.c.l.b16 %v266
  %v1731 = vunpack.c.h.b16 %v266
  %v1732 = vunpack.c.l.b16 %v267
  %v1733 = vunpack.c.h.b16 %v267
  %v1734 = vunpack.c.l.b16 %v268
  %v1735 = vunpack.c.h.b16 %v268
  %v1736 = vunpack.c.l.b16 %v269
  %v1737 = vunpack.c.h.b16 %v269
  %v1738 = vunpack.c.l.b16 %v270
  %v1739 = vunpack.c.h.b16 %v270
  %v1740 = vunpack.c.l.b16 %v271
  %v1741 = vunpack.c.h.b16 %v271
  %v1742 = vunpack.c.l.b16 %v272
  %v1743 = vunpack.c.h.b16 %v272
  %v1744 = vunpack.c.l.b16 %v273
  %v1745 = vunpack.c.h.b16 %v273
  %v1746 = vunpack.c.l.b16 %v274
  %v1747 = vunpack.c.h.b16 %v274
  %v1748 = vunpack.c.l.b16 %v275
  %v1749 = vunpack.c.h.b16 %v275
  %v1750 = vunpack.c.l.b16 %v276
  %v1751 = vunpack.c.h.b16 %v276
  %v1752 = vunpack.c.l.b16 %v277
  %v1753 = vunpack.c.h.b16 %v277
  %v1754 = vunpack.c.l.b16 %v278
  %v1755 = vunpack.c.h.b16 %v278
  %v1756 = vunpack.c.l.b16 %v279
  %v1757 = vunpack.c.h.b16 %v279
  %v1758 = vunpack.c.l.b16 %v280
  %v1759 = vunpack.c.h.b16 %v280
  %v1760 = vunpack.c.l.b16 %v281
  %v1761 = vunpack.c.h.b16 %v281
  %v1762 = vunpack.c.l.b16 %v282
  %v1763 = vunpack.c.h.b16 %v282
  %v1764 = vunpack.c.l.b16 %v283
  %v1765 = vunpack.c.h.b16 %v283
  %v1766 = vunpack.c.l.b16 %v284
  %v1767 = vunpack.c.h.b16 %v284
  %v1768 = vunpack.c.l.b16 %v285
  %v1769 = vunpack.c.h.b16 %v285
  %v1770 = vunpack.c.l.b16 %v286
  %v1771 = vunpack.c.h.b16 %v286
  %v1772 = vunpack.c.l.b16 %v287
  %v1773 = vunpack.c.h.b16 %v287
  %v1774 = vunpack.c.l.b16 %v288
  %v1775 = vunpack.c.h.b16 %v288
  %v1776 = vunpack.c.l.b16 %v289
  %v1777 = vunpack.c.h.b16 %v289
  %v1778 = vunpack.c.l.b16 %v290
  %v1779 = vunpack.c.h.b16 %v290
  %v1780 = vunpack.c.l.b16 %v291
  %v1781 = vunpack.c.h.b16 %v291
  %v1782 = vunpack.c.l.b16 %v292
  %v1783 = vunpack.c.h.b16 %v292
  %v1784 = vunpack.c.l.b16 %v293
  %v1785 = vunpack.c.h.b16 %v293
  %v1786 = vunpack.c.l.b16 %v294
  %v1787 = vunpack.c.h.b16 %v294
  %v1788 = vunpack.c.l.b16 %v295
  %v1789 = vunpack.c.h.b16 %v295
  %v1790 = vunpack.c.l.b16 %v296
  %v1791 = vunpack.c.h.b16 %v296
  %v1792 = vunpack.c.l.b16 %v297
  %v1793 = vunpack.c.h.b16 %v297
  %v1794 = vunpack.c.l.b16 %v298
  %v1795 = vunpack.c.h.b16 %v298
  %v1796 = vunpack.c.l.b16 %v299
  %v1797 = vunpack.c.h.b16 %v299
  %v1798 = vunpack.c.l.b16 %v300
  %v1799 = vunpack.c.h.b16 %v300
  %v1800 = vunpack.c.l.b16 %v301
  %v1801 = vunpack.c.h.b16 %v301
  %v1802 = vunpack.c.l.b16 %v302
  %v1803 = vunpack.c.h.b16 %v302
  %v1804 = vunpack.c.l.b16 %v303
  %v1805 = vunpack.c.h.b16 %v303
  %v1806 = vunpack.c.l.b16 %v304
  %v1807 = vunpack.c.h.b16 %v304
  %v1808 = vunpack.c.l.b16 %v305
  %v1809 = vunpack.c.h.b16 %v305
  %v1810 = vunpack.c.l.b16 %v306
  %v1811 = vunpack.c.h.b16 %v306
  %v1812 = vunpack.c.l.b16 %v307
  %v1813 = vunpack.c.h.b16 %v307
  %v1814 = vunpack.c.l.b16 %v308
  %v1815 = vunpack.c.h.b16 %v308
  %v1816 = vunpack.c.l.b16 %v309
  %v1817 = vunpack.c.h.b16 %v309
  %v1818 = vunpack.c.l.b16 %v310
  %v1819 = vunpack.c.h.b16 %v310
  %v1820 = vunpack.c.l.b16 %v311
  %v1821 = vunpack.c.h.b16 %v311
  %v1822 = vunpack.c.l.b16 %v312
  %v1823 = vunpack.c.h.b16 %v312
  %v1824 = vunpack.c.l.b16 %v313
  %v1825 = vunpack.c.h.b16 %v313
  %v1826 = vunpack.c.l.b16 %v314
  %v1827 = vunpack.c.h.b16 %v314
  %v1828 = vunpack.c.l.b16 %v315
  %v1829 = vunpack.c.h.b16 %v315
  %v1830 = vunpack.c.l.b16 %v316
  %v1831 = vunpack.c.h.b16 %v316
  %v1832 = vunpack.c.l.b16 %v317
  %v1833 = vunpack.c.h.b16 %v317
  %v1834 = vunpack.c.l.b16 %v318
  %v1835 = vunpack.c.h.b16 %v318
  %v1836 = vunpack.c.l.b16 %v319
  %v1837 = vunpack.c.h.b16 %v319
  %v1838 = vunpack.c.l.b16 %v320
  %v1839 = vunpack.c.h.b16 %v320
  %v1840 = vunpack.c.l.b16 %v321
  %v1841 = vunpack.c.h.b16 %v321
  %v1842 = vunpack.c.l.b16 %v322
  %v1843 = vunpack.c.h.b16 %v322
  %v1844 = vunpack.c.l.b16 %v323
  %v1845 = vunpack.c.h.b16 %v323
  %v1846 = vunpack.c.l.b16 %v324
  %v1847 = vunpack.c.h.b16 %v324
  %v1848 = vunpack.c.l.b16 %v325
  %v1849 = vunpack.c.h.b16 %v325
  %v1850 = vunpack.c.l.b16 %v326
  %v1851 = vunpack.c.h.b16 %v326
  %v1852 = vunpack.c.l.b16 %v327
  %v1853 = vunpack.c.h.b16 %v327
  %v1854 = vunpack.c.l.b16 %v328
  %v1855 = vunpack.c.h.b16 %v328
  %v1856 = vunpack.c.l.b16 %v329
  %v1857 = vunpack.c.h.b16 %v329
  %v1858 = vunpack.c.l.b16 %v330
  %v1859 = vunpack.c.h.b16 %v330
  %v1860 = vunpack.c.l.b16 %v331
  %v1861 = vunpack.c.h.b16 %v331
  %v1862 = vunpack.c.l.b16 %v332
  %v1863 = vunpack.c.h.b16 %v332
  %v1864 = vunpack.c.l.b16 %v333
  %v1865 = vunpack.c.h.b16 %v333
  %v1866 = vunpack.c.l.b16 %v334
  %v1867 = vunpack.c.h.b16 %v334
  %v1868 = vunpack.c.l.b16 %v335
  %v1869 = vunpack.c.h.b16 %v335
  %v1870 = vunpack.c.l.b16 %v336
  %v1871 = vunpack.c.h.b16 %v336
  %v1872 = vunpack.c.l.b16 %v337
  %v1873 = vunpack.c.h.b16 %v337
  %v1874 = vunpack.c.l.b16 %v338
  %v1875 = vunpack.c.h.b16 %v338
  %v1876 = vunpack.c.l.b16 %v339
  %v1877 = vunpack.c.h.b16 %v339
  %v1878 = vunpack.c.l.b16 %v340
  %v1879 = vunpack.c.h.b16 %v340
  %v1880 = vunpack.c.l.b16 %v341
  %v1881 = vunpack.c.h.b16 %v341
  %v1882 = vunpack.c.l.b16 %v342
  %v1883 = vunpack.c.h.b16 %v342
  %v1884 = vunpack.c.l.b16 %v343
  %v1885 = vunpack.c.h.b16 %v343
  %v1886 = vunpack.c.l.b16 %v344
  %v1887 = vunpack.c.h.b16 %v344
  %v1888 = vunpack.c.l.b16 %v345
  %v1889 = vunpack.c.h.b16 %v345
  %v1890 = vunpack.c.l.b16 %v346
  %v1891 = vunpack.c.h.b16 %v346
  %v1892 = vunpack.c.l.b16 %v347
  %v1893 = vunpack.c.h.b16 %v347
  %v1894 = vunpack.c.l.b16 %v348
  %v1895 = vunpack.c.h.b16 %v348
  %v1896 = vunpack.c.l.b16 %v349
  %v1897 = vunpack.c.h.b16 %v349
  %v1898 = vunpack.c.l.b16 %v350
  %v1899 = vunpack.c.h.b16 %v350
  %v1900 = vunpack.c.l.b16 %v351
  %v1901 = vunpack.c.h.b16 %v351
  %v1902 = vunpack.c.l.b16 %v352
  %v1903 = vunpack.c.h.b16 %v352
  %v1904 = vunpack.c.l.b16 %v353
  %v1905 = vunpack.c.h.b16 %v353
  %v1906 = vunpack.c.l.b16 %v354
  %v1907 = vunpack.c.h.b16 %v354
  %v1908 = vunpack.c.l.b16 %v355
  %v1909 = vunpack.c.h.b16 %v355
  %v1910 = vunpack.c.l.b16 %v356
  %v1911 = vunpack.c.h.b16 %v356
  %v1912 = vunpack.c.l.b16 %v357
  %v1913 = vunpack.c.h.b16 %v357
  %v1914 = vunpack.c.l.b16 %v358
  %v1915 = vunpack.c.h.b16 %v358
  %v1916 = vunpack.c.l.b16 %v359
  %v1917 = vunpack.c.h.b16 %v359
  %v1918 = vunpack.c.l.b16 %v360
  %v1919 = vunpack.c.h.b16 %v360
  %v1920 = vunpack.c.l.b16 %v361
  %v1921 = vunpack.c.h.b16 %v361
  %v1922 = vunpack.c.l.b16 %v362
  %v1923 = vunpack.c.h.b16 %v362
  %v1924 = vunpack.c.l.b16 %v363
  %v1925 = vunpack.c.h.b16 %v363
  %v1926 = vunpack.c.l.b16 %v364
  %v1927 = vunpack.c.h.b16 %v364
  %v1928 = vunpack.c.l.b16 %v365
  %v1929 = vunpack.c.h.b16 %v365
  %v1930 = vunpack.c.l.b16 %v366
  %v1931 = vunpack.c.h.b16 %v366
  %v1932 = vunpack.c.l.b16 %v367
  %v1933 = vunpack.c.h.b16 %v367
  %v1934 = vunpack.c.l.b16 %v368
  %v1935 = vunpack.c.h.b16 %v368
  %v1936 = vunpack.c.l.b16 %v369
  %v1937 = vunpack.c.h.b16 %v369
  %v1938 = vunpack.c.l.b16 %v370
  %v1939 = vunpack.c.h.b16 %v370
  %v1940 = vunpack.c.l.b16 %v371
  %v1941 = vunpack.c.h.b16 %v371
  %v1942 = vunpack.c.l.b16 %v372
  %v1943 = vunpack.c.h.b16 %v372
  %v1944 = vunpack.c.l.b16 %v373
  %v1945 = vunpack.c.h.b16 %v373
  %v1946 = vunpack.c.l.b16 %v374
  %v1947 = vunpack.c.h.b16 %v374
  %v1948 = vunpack.c.l.b16 %v375
  %v1949 = vunpack.c.h.b16 %v375
  %v1950 = vunpack.c.l.b16 %v376
  %v1951 = vunpack.c.h.b16 %v376
  %v1952 = vunpack.c.l.b16 %v377
  %v1953 = vunpack.c.h.b16 %v377
  %v1954 = vunpack.c.l.b16 %v378
  %v1955 = vunpack.c.h.b16 %v378
  %v1956 = vunpack.c.l.b16 %v379
  %v1957 = vunpack.c.h.b16 %v379
  %v1958 = vunpack.c.l.b16 %v380
  %v1959 = vunpack.c.h.b16 %v380
  %v1960 = vunpack.c.l.b16 %v381
  %v1961 = vunpack.c.h.b16 %v381
  %v1962 = vunpack.c.l.b16 %v382
  %v1963 = vunpack.c.h.b16 %v382
  %v1964 = vunpack.c.l.b16 %v383
  %v1965 = vunpack.c.h.b16 %v383
  %v1966 = vunpack.c.l.b16 %v384
  %v1967 = vunpack.c.h.b16 %v384
  %v1968 = vunpack.c.l.b16 %v385
  %v1969 = vunpack.c.h.b16 %v385
  %v1970 = vunpack.c.l.b16 %v386
  %v1971 = vunpack.c.h.b16 %v386
  %v1972 = vunpack.c.l.b16 %v387
  %v1973 = vunpack.c.h.b16 %v387
  %v1974 = vunpack.c.l.b16 %v388
  %v1975 = vunpack.c.h.b16 %v388
  %v1976 = vunpack.c.l.b16 %v389
  %v1977 = vunpack.c.h.b16 %v389
  %v1978 = vunpack.c.l.b16 %v390
  %v1979 = vunpack.c.h.b16 %v390
  %v1980 = vunpack.c.l.b16 %v391
  %v1981 = vunpack.c.h.b16 %v391
  %v1982 = vunpack.c.l.b16 %v392
  %v1983 = vunpack.c.h.b16 %v392
  %v1984 = vunpack.c.l.b16 %v393
  %v1985 = vunpack.c.h.b16 %v393
  %v1986 = vunpack.c.l.b16 %v394
  %v1987 = vunpack.c.h.b16 %v394
  %v1988 = vunpack.c.l.b16 %v395
  %v1989 = vunpack.c.h.b16 %v395
  %v1990 = vunpack.c.l.b16 %v396
  %v1991 = vunpack.c.h.b16 %v396
  %v1992 = vunpack.c.l.b16 %v397
  %v1993 = vunpack.c.h.b16 %v397
  %v1994 = vunpack.c.l.b16 %v398
  %v1995 = vunpack.c.h.b16 %v398
  %v1996 = vunpack.c.l.b16 %v399
  %v1997 = vunpack.c.h.b16 %v399
  %v1998 = vunpack.c.l.b16 %v400
  %v1999 = vunpack.c.h.b16 %v400
  %v2000 = vunpack.c.l.b16 %v401
  %v2001 = vunpack.c.h.b16 %v401
  %v2002 = vunpack.c.l.b16 %v402
  %v2003 = vunpack.c.h.b16 %v402
  %v2004 = vunpack.c.l.b16 %v403
  %v2005 = vunpack.c.h.b16 %v403
  %v2006 = vunpack.c.l.b16 %v404
  %v2007 = vunpack.c.h.b16 %v404
  %v2008 = vunpack.c.l.b16 %v405
  %v2009 = vunpack.c.h.b16 %v405
  %v2010 = vunpack.c.l.b16 %v406
  %v2011 = vunpack.c.h.b16 %v406
  %v2012 = vunpack.c.l.b16 %v407
  %v2013 = vunpack.c.h.b16 %v407
  %v2014 = vunpack.c.l.b16 %v408
  %v2015 = vunpack.c.h.b16 %v408
  %v2016 = vunpack.c.l.b16 %v409
  %v2017 = vunpack.c.h.b16 %v409
  %v2018 = vunpack.c.l.b16 %v410
  %v2019 = vunpack.c.h.b16 %v410
  %v2020 = vunpack.c.l.b16 %v411
  %v2021 = vunpack.c.h.b16 %v411
  %v2022 = vunpack.c.l.b16 %v412
  %v2023 = vunpack.c.h.b16 %v412
  %v2024 = vunpack.c.l.b16 %v413
  %v2025 = vunpack.c.h.b16 %v413
  %v2026 = vunpack.c.l.b16 %v414
  %v2027 = vunpack.c.h.b16 %v414
  %v2028 = vunpack.c.l.b16 %v415
  %v2029 = vunpack.c.h.b16 %v415
  %v2030 = vunpack.c.l.b16 %v416
  %v2031 = vunpack.c.h.b16 %v416
  %v2032 = vunpack.c.l.b16 %v417
  %v2033 = vunpack.c.h.b16 %v417
  %v2034 = vunpack.c.l.b16 %v418
  %v2035 = vunpack.c.h.b16 %v418
  %v2036 = vunpack.c.l.b16 %v419
  %v2037 = vunpack.c.h.b16 %v419
  %v2038 = vunpack.c.l.b16 %v420
  %v2039 = vunpack.c.h.b16 %v420
  %v2040 = vunpack.c.l.b16 %v421
  %v2041 = vunpack.c.h.b16 %v421
  %v2042 = vunpack.c.l.b16 %v422
  %v2043 = vunpack.c.h.b16 %v422
  %v2044 = vunpack.c.l.b16 %v423
  %v2045 = vunpack.c.h.b16 %v423
  %v2046 = vunpack.c.l.b16 %v424
  %v2047 = vunpack.c.h.b16 %v424
  %v2048 = vunpack.c.l.b16 %v425
  %v2049 = vunpack.c.h.b16 %v425
  %v2050 = vunpack.c.l.b16 %v426
  %v2051 = vunpack.c.h.b16 %v426
  %v2052 = vunpack.c.l.b16 %v427
  %v2053 = vunpack.c.h.b16 %v427
  %v2054 = vunpack.c.l.b16 %v428
  %v2055 = vunpack.c.h.b16 %v428
  %v2056 = vunpack.c.l.b16 %v429
  %v2057 = vunpack.c.h.b16 %v429
  %v2058 = vunpack.c.l.b16 %v430
  %v2059 = vunpack.c.h.b16 %v430
  %v2060 = vunpack.c.l.b16 %v431
  %v2061 = vunpack.c.h.b16 %v431
  %v2062 = vunpack.c.l.b16 %v432
  %v2063 = vunpack.c.h.b16 %v432
  %v2064 = vunpack.c.l.b16 %v433
  %v2065 = vunpack.c.h.b16 %v433
  %v2066 = vunpack.c.l.b16 %v434
  %v2067 = vunpack.c.h.b16 %v434
  %v2068 = vunpack.c.l.b16 %v435
  %v2069 = vunpack.c.h.b16 %v435
  %v2070 = vunpack.c.l.b16 %v436
  %v2071 = vunpack.c.h.b16 %v436
  %v2072 = vunpack.c.l.b16 %v437
  %v2073 = vunpack.c.h.b16 %v437
  %v2074 = vunpack.c.l.b16 %v438
  %v2075 = vunpack.c.h.b16 %v438
  %v2076 = vunpack.c.l.b16 %v439
  %v2077 = vunpack.c.h.b16 %v439
  %v2078 = vunpack.c.l.b16 %v440
  %v2079 = vunpack.c.h.b16 %v440
  %v2080 = vunpack.c.l.b16 %v441
  %v2081 = vunpack.c.h.b16 %v441
  %v2082 = vunpack.c.l.b16 %v442
  %v2083 = vunpack.c.h.b16 %v442
  %v2084 = vunpack.c.l.b16 %v443
  %v2085 = vunpack.c.h.b16 %v443
  %v2086 = vunpack.c.l.b16 %v444
  %v2087 = vunpack.c.h.b16 %v444
  %v2088 = vunpack.c.l.b16 %v445
  %v2089 = vunpack.c.h.b16 %v445
  %v2090 = vunpack.c.l.b16 %v446
  %v2091 = vunpack.c.h.b16 %v446
  %v2092 = vunpack.c.l.b16 %v447
  %v2093 = vunpack.c.h.b16 %v447
  %v2094 = vunpack.c.l.b16 %v448
  %v2095 = vunpack.c.h.b16 %v448
  %v2096 = vunpack.c.l.b16 %v449
  %v2097 = vunpack.c.h.b16 %v449
  %v2098 = vunpack.c.l.b16 %v450
  %v2099 = vunpack.c.h.b16 %v450
  %v2100 = vunpack.c.l.b16 %v451
  %v2101 = vunpack.c.h.b16 %v451
  %v2102 = vunpack.c.l.b16 %v452
  %v2103 = vunpack.c.h.b16 %v452
  %v2104 = vunpack.c.l.b16 %v453
  %v2105 = vunpack.c.h.b16 %v453
  %v2106 = vunpack.c.l.b16 %v454
  %v2107 = vunpack.c.h.b16 %v454
  %v2108 = vunpack.c.l.b16 %v455
  %v2109 = vunpack.c.h.b16 %v455
  %v2110 = vunpack.c.l.b16 %v456
  %v2111 = vunpack.c.h.b16 %v456
  %v2112 = vunpack.c.l.b16 %v457
  %v2113 = vunpack.c.h.b16 %v457
  %v2114 = vunpack.c.l.b16 %v458
  %v2115 = vunpack.c.h.b16 %v458
  %v2116 = vunpack.c.l.b16 %v459
  %v2117 = vunpack.c.h.b16 %v459
  %v2118 = vunpack.c.l.b16 %v460
  %v2119 = vunpack.c.h.b16 %v460
  %v2120 = vunpack.c.l.b16 %v461
  %v2121 = vunpack.c.h.b16 %v461
  %v2122 = vunpack.c.l.b16 %v462
  %v2123 = vunpack.c.h.b16 %v462
  %v2124 = vunpack.c.l.b16 %v463
  %v2125 = vunpack.c.h.b16 %v463
  %v2126 = vunpack.c.l.b16 %v464
  %v2127 = vunpack.c.h.b16 %v464
  %v2128 = vunpack.c.l.b16 %v465
  %v2129 = vunpack.c.h.b16 %v465
  %v2130 = vunpack.c.l.b16 %v466
  %v2131 = vunpack.c.h.b16 %v466
  %v2132 = vunpack.c.l.b16 %v467
  %v2133 = vunpack.c.h.b16 %v467
  %v2134 = vunpack.c.l.b16 %v468
  %v2135 = vunpack.c.h.b16 %v468
  %v2136 = vunpack.c.l.b16 %v469
  %v2137 = vunpack.c.h.b16 %v469
  %v2138 = vunpack.c.l.b16 %v470
  %v2139 = vunpack.c.h.b16 %v470
  %v2140 = vunpack.c.l.b16 %v471
  %v2141 = vunpack.c.h.b16 %v471
  %v2142 = vunpack.c.l.b16 %v472
  %v2143 = vunpack.c.h.b16 %v472
  %v2144 = vunpack.c.l.b16 %v473
  %v2145 = vunpack.c.h.b16 %v473
  %v2146 = vunpack.c.l.b16 %v474
  %v2147 = vunpack.c.h.b16 %v474
  %v2148 = vunpack.c.l.b16 %v475
  %v2149 = vunpack.c.h.b16 %v475
  %v2150 = vunpack.c.l.b16 %v476
  %v2151 = vunpack.c.h.b16 %v476
  %v2152 = vunpack.c.l.b16 %v477
  %v2153 = vunpack.c.h.b16 %v477
  %v2154 = vunpack.c.l.b16 %v478
  %v2155 = vunpack.c.h.b16 %v478
  %v2156 = vunpack.c.l.b16 %v479
  %v2157 = vunpack.c.h.b16 %v479
  %v2158 = vunpack.c.l.b16 %v480
  %v2159 = vunpack.c.h.b16 %v480
  %v2160 = vunpack.c.l.b16 %v481
  %v2161 = vunpack.c.h.b16 %v481
  %v2162 = vunpack.c.l.b16 %v482
  %v2163 = vunpack.c.h.b16 %v482
  %v2164 = vunpack.c.l.b16 %v483
  %v2165 = vunpack.c.h.b16 %v483
  %v2166 = vunpack.c.l.b16 %v484
  %v2167 = vunpack.c.h.b16 %v484
  %v2168 = vunpack.c.l.b16 %v485
  %v2169 = vunpack.c.h.b16 %v485
  %v2170 = vunpack.c.l.b16 %v486
  %v2171 = vunpack.c.h.b16 %v486
  %v2172 = vunpack.c.l.b16 %v487
  %v2173 = vunpack.c.h.b16 %v487
  %v2174 = vunpack.c.l.b16 %v488
  %v2175 = vunpack.c.h.b16 %v488
  %v2176 = vunpack.c.l.b16 %v489
  %v2177 = vunpack.c.h.b16 %v489
  %v2178 = vunpack.c.l.b16 %v490
  %v2179 = vunpack.c.h.b16 %v490
  %v2180 = vunpack.c.l.b16 %v491
  %v2181 = vunpack.c.h.b16 %v491
  %v2182 = vunpack.c.l.b16 %v492
  %v2183 = vunpack.c.h.b16 %v492
  %v2184 = vunpack.c.l.b16 %v493
  %v2185 = vunpack.c.h.b16 %v493
  %v2186 = vunpack.c.l.b16 %v494
  %v2187 = vunpack.c.h.b16 %v494
  %v2188 = vunpack.c.l.b16 %v495
  %v2189 = vunpack.c.h.b16 %v495
  %v2190 = vunpack.c.l.b16 %v496
  %v2191 = vunpack.c.h.b16 %v496
  %v2192 = vunpack.c.l.b16 %v497
  %v2193 = vunpack.c.h.b16 %v497
  %v2194 = vunpack.c.l.b16 %v498
  %v2195 = vunpack.c.h.b16 %v498
  %v2196 = vunpack.c.l.b16 %v499
  %v2197 = vunpack.c.h.b16 %v499
  %v2198 = vunpack.c.l.b16 %v500
  %v2199 = vunpack.c.h.b16 %v500
  %v2200 = vunpack.c.l.b16 %v501
  %v2201 = vunpack.c.h.b16 %v501
  %v2202 = vunpack.c.l.b16 %v502
  %v2203 = vunpack.c.h.b16 %v502
  %v2204 = vunpack.c.l.b16 %v503
  %v2205 = vunpack.c.h.b16 %v503
  %v2206 = vunpack.c.l.b16 %v504
  %v2207 = vunpack.c.h.b16 %v504
  %v2208 = vunpack.c.l.b16 %v505
  %v2209 = vunpack.c.h.b16 %v505
  %v2210 = vunpack.c.l.b16 %v506
  %v2211 = vunpack.c.h.b16 %v506
  %v2212 = vunpack.c.l.b16 %v507
  %v2213 = vunpack.c.h.b16 %v507
  %v2214 = vunpack.c.l.b16 %v508
  %v2215 = vunpack.c.h.b16 %v508
  %v2216 = vunpack.c.l.b16 %v509
  %v2217 = vunpack.c.h.b16 %v509
  %v2218 = vunpack.c.l.b16 %v510
  %v2219 = vunpack.c.h.b16 %v510
  %v2220 = vunpack.c.l.b16 %v511
  %v2221 = vunpack.c.h.b16 %v511
  %v2222 = vunpack.c.l.b16 %v512
  %v2223 = vunpack.c.h.b16 %v512
  %v2224 = vunpack.c.l.b16 %v513
  %v2225 = vunpack.c.h.b16 %v513
  %v2226 = vunpack.c.l.b16 %v514
  %v2227 = vunpack.c.h.b16 %v514
  %v2228 = vunpack.c.l.b16 %v515
  %v2229 = vunpack.c.h.b16 %v515
  %v2230 = vunpack.c.l.b16 %v516
  %v2231 = vunpack.c.h.b16 %v516
  %v2232 = vunpack.c.l.b16 %v517
  %v2233 = vunpack.c.h.b16 %v517
  %v2234 = vunpack.c.l.b16 %v518
  %v2235 = vunpack.c.h.b16 %v518
  %v2236 = vunpack.c.l.b16 %v519
  %v2237 = vunpack.c.h.b16 %v519
  %v2238 = vunpack.c.l.b16 %v520
  %v2239 = vunpack.c.h.b16 %v520
  %v2240 = vunpack.c.l.b16 %v521
  %v2241 = vunpack.c.h.b16 %v521
  %v2242 = vunpack.c.l.b16 %v522
  %v2243 = vunpack.c.h.b16 %v522
  %v2244 = vunpack.c.l.b16 %v523
  %v2245 = vunpack.c.h.b16 %v523
  %v2246 = vunpack.c.l.b16 %v524
  %v2247 = vunpack.c.h.b16 %v524
  %v2248 = vunpack.c.l.b16 %v525
  %v2249 = vunpack.c.h.b16 %v525
  %v2250 = vunpack.c.l.b16 %v526
  %v2251 = vunpack.c.h.b16 %v526
  %v2252 = vunpack.c.l.b16 %v527
  %v2253 = vunpack.c.h.b16 %v527
  %v2254 = vunpack.c.l.b16 %v528
  %v2255 = vunpack.c.h.b16 %v528
  %v2256 = vunpack.c.l.b16 %v529
  %v2257 = vunpack.c.h.b16 %v529
  %v2258 = vunpack.c.l.b16 %v530
  %v2259 = vunpack.c.h.b16 %v530
  %v2260 = vunpack.c.l.b16 %v531
  %v2261 = vunpack.c.h.b16 %v531
  %v2262 = vunpack.c.l.b16 %v532
  %v2263 = vunpack.c.h.b16 %v532
  %v2264 = vunpack.c.l.b16 %v533
  %v2265 = vunpack.c.h.b16 %v533
  %v2266 = vunpack.c.l.b16 %v534
  %v2267 = vunpack.c.h.b16 %v534
  %v2268 = vunpack.c.l.b16 %v535
  %v2269 = vunpack.c.h.b16 %v535
  %v2270 = vunpack.c.l.b16 %v536
  %v2271 = vunpack.c.h.b16 %v536
  %v2272 = vunpack.c.l.b16 %v537
  %v2273 = vunpack.c.h.b16 %v537
  %v2274 = vunpack.c.l.b16 %v538
  %v2275 = vunpack.c.h.b16 %v538
  %v2276 = vunpack.c.l.b16 %v539
  %v2277 = vunpack.c.h.b16 %v539
  %v2278 = vunpack.c.l.b16 %v540
  %v2279 = vunpack.c.h.b16 %v540
  %v2280 = vunpack.c.l.b16 %v541
  %v2281 = vunpack.c.h.b16 %v541
  %v2282 = vunpack.c.l.b16 %v542
  %v2283 = vunpack.c.h.b16 %v542
  %v2284 = vunpack.c.l.b16 %v543
  %v2285 = vunpack.c.h.b16 %v543
  %v2286 = vunpack.c.l.b16 %v544
  %v2287 = vunpack.c.h.b16 %v544
  %v2288 = vunpack.c.l.b16 %v545
  %v2289 = vunpack.c.h.b16 %v545
  %v2290 = vunpack.c.l.b16 %v546
  %v2291 = vunpack.c.h.b16 %v546
  %v2292 = vunpack.c.l.b16 %v547
  %v2293 = vunpack.c.h.b16 %v547
  %v2294 = vunpack.c.l.b16 %v548
  %v2295 = vunpack.c.h.b16 %v548
  %v2296 = vunpack.c.l.b16 %v549
  %v2297 = vunpack.c.h.b16 %v549
  %v2298 = vunpack.c.l.b16 %v550
  %v2299 = vunpack.c.h.b16 %v550
  %v2300 = vunpack.c.l.b16 %v551
  %v2301 = vunpack.c.h.b16 %v551
  %v2302 = vunpack.c.l.b16 %v552
  %v2303 = vunpack.c.h.b16 %v552
  %v2304 = vunpack.c.l.b16 %v553
  %v2305 = vunpack.c.h.b16 %v553
  %v2306 = vunpack.c.l.b16 %v554
  %v2307 = vunpack.c.h.b16 %v554
  %v2308 = vunpack.c.l.b16 %v555
  %v2309 = vunpack.c.h.b16 %v555
  %v2310 = vunpack.c.l.b16 %v556
  %v2311 = vunpack.c.h.b16 %v556
  %v2312 = vunpack.c.l.b16 %v557
  %v2313 = vunpack.c.h.b16 %v557
  %v2314 = vunpack.c.l.b16 %v558
  %v2315 = vunpack.c.h.b16 %v558
  %v2316 = vunpack.c.l.b16 %v559
  %v2317 = vunpack.c.h.b16 %v559
  %v2318 = vunpack.c.l.b16 %v560
  %v2319 = vunpack.c.h.b16 %v560
  %v2320 = vunpack.c.l.b16 %v561
  %v2321 = vunpack.c.h.b16 %v561
  %v2322 = vunpack.c.l.b16 %v562
  %v2323 = vunpack.c.h.b16 %v562
  %v2324 = vunpack.c.l.b16 %v563
  %v2325 = vunpack.c.h.b16 %v563
  %v2326 = vunpack.c.l.b16 %v564
  %v2327 = vunpack.c.h.b16 %v564
  %v2328 = vunpack.c.l.b16 %v565
  %v2329 = vunpack.c.h.b16 %v565
  %v2330 = vunpack.c.l.b16 %v566
  %v2331 = vunpack.c.h.b16 %v566
  %v2332 = vunpack.c.l.b16 %v567
  %v2333 = vunpack.c.h.b16 %v567
  %v2334 = vunpack.c.l.b16 %v568
  %v2335 = vunpack.c.h.b16 %v568
  %v2336 = vunpack.c.l.b16 %v569
  %v2337 = vunpack.c.h.b16 %v569
  %v2338 = vunpack.c.l.b16 %v570
  %v2339 = vunpack.c.h.b16 %v570
  %v2340 = vunpack.c.l.b16 %v571
  %v2341 = vunpack.c.h.b16 %v571
  %v2342 = vunpack.c.l.b16 %v572
  %v2343 = vunpack.c.h.b16 %v572
  %v2344 = vunpack.c.l.b16 %v573
  %v2345 = vunpack.c.h.b16 %v573
  %v2346 = vunpack.c.l.b16 %v574
  %v2347 = vunpack.c.h.b16 %v574
  %v2348 = vunpack.c.l.b16 %v575
  %v2349 = vunpack.c.h.b16 %v575
  %v2350 = vunpack.c.l.b16 %v576
  %v2351 = vunpack.c.h.b16 %v576
  %v2352 = vunpack.c.l.b16 %v577
  %v2353 = vunpack.c.h.b16 %v577
  %v2354 = vunpack.c.l.b16 %v578
  %v2355 = vunpack.c.h.b16 %v578
  %v2356 = vunpack.c.l.b16 %v579
  %v2357 = vunpack.c.h.b16 %v579
  %v2358 = vunpack.c.l.b16 %v580
  %v2359 = vunpack.c.h.b16 %v580
  %v2360 = vunpack.c.l.b16 %v581
  %v2361 = vunpack.c.h.b16 %v581
  %v2362 = vunpack.c.l.b16 %v582
  %v2363 = vunpack.c.h.b16 %v582
  %v2364 = vunpack.c.l.b16 %v583
  %v2365 = vunpack.c.h.b16 %v583
  %v2366 = vunpack.c.l.b16 %v584
  %v2367 = vunpack.c.h.b16 %v584
  %v2368 = vunpack.c.l.b16 %v585
  %v2369 = vunpack.c.h.b16 %v585
  %v2370 = vunpack.c.l.b16 %v586
  %v2371 = vunpack.c.h.b16 %v586
  %v2372 = vunpack.c.l.b16 %v587
  %v2373 = vunpack.c.h.b16 %v587
  %v2374 = vunpack.c.l.b16 %v588
  %v2375 = vunpack.c.h.b16 %v588
  %v2376 = vunpack.c.l.b16 %v589
  %v2377 = vunpack.c.h.b16 %v589
  %v2378 = vunpack.c.l.b16 %v590
  %v2379 = vunpack.c.h.b16 %v590
  %v2380 = vunpack.c.l.b16 %v591
  %v2381 = vunpack.c.h.b16 %v591
  %v2382 = vunpack.c.l.b16 %v592
  %v2383 = vunpack.c.h.b16 %v592
  %v2384 = vunpack.c.l.b16 %v593
  %v2385 = vunpack.c.h.b16 %v593
  %v2386 = vunpack.c.l.b16 %v594
  %v2387 = vunpack.c.h.b16 %v594
  %v2388 = vunpack.c.l.b16 %v595
  %v2389 = vunpack.c.h.b16 %v595
  %v2390 = vunpack.c.l.b16 %v596
  %v2391 = vunpack.c.h.b16 %v596
  %v2392 = vunpack.c.l.b16 %v597
  %v2393 = vunpack.c.h.b16 %v597
  %v2394 = vunpack.c.l.b16 %v598
  %v2395 = vunpack.c.h.b16 %v598
  %v2396 = vunpack.c.l.b16 %v599
  %v2397 = vunpack.c.h.b16 %v599
  %v2398 = vunpack.c.l.b16 %v600
  %v2399 = vunpack.c.h.b16 %v600
  %v2400 = vunpack.c.l.b16 %v601
  %v2401 = vunpack.c.h.b16 %v601
  %v2402 = vunpack.c.l.b16 %v602
  %v2403 = vunpack.c.h.b16 %v602
  %v2404 = vunpack.c.l.b16 %v603
  %v2405 = vunpack.c.h.b16 %v603
  %v2406 = vunpack.c.l.b16 %v604
  %v2407 = vunpack.c.h.b16 %v604
  %v2408 = vunpack.c.l.b16 %v605
  %v2409 = vunpack.c.h.b16 %v605
  %v2410 = vunpack.c.l.b16 %v606
  %v2411 = vunpack.c.h.b16 %v606
  %v2412 = vunpack.c.l.b16 %v607
  %v2413 = vunpack.c.h.b16 %v607
  %v2414 = vunpack.c.l.b16 %v608
  %v2415 = vunpack.c.h.b16 %v608
  %v2416 = vunpack.c.l.b16 %v609
  %v2417 = vunpack.c.h.b16 %v609
  %v2418 = vunpack.c.l.b16 %v610
  %v2419 = vunpack.c.h.b16 %v610
  %v2420 = vunpack.c.l.b16 %v611
  %v2421 = vunpack.c.h.b16 %v611
  %v2422 = vunpack.c.l.b16 %v612
  %v2423 = vunpack.c.h.b16 %v612
  %v2424 = vunpack.c.l.b16 %v613
  %v2425 = vunpack.c.h.b16 %v613
  %v2426 = vunpack.c.l.b16 %v614
  %v2427 = vunpack.c.h.b16 %v614
  %v2428 = vunpack.c.l.b16 %v615
  %v2429 = vunpack.c.h.b16 %v615
  %v2430 = vunpack.c.l.b16 %v616
  %v2431 = vunpack.c.h.b16 %v616
  %v2432 = vunpack.c.l.b16 %v617
  %v2433 = vunpack.c.h.b16 %v617
  %v2434 = vunpack.c.l.b16 %v618
  %v2435 = vunpack.c.h.b16 %v618
  %v2436 = vunpack.c.l.b16 %v619
  %v2437 = vunpack.c.h.b16 %v619
  %v2438 = vunpack.c.l.b16 %v620
  %v2439 = vunpack.c.h.b16 %v620
  %v2440 = vunpack.c.l.b16 %v621
  %v2441 = vunpack.c.h.b16 %v621
  %v2442 = vunpack.c.l.b16 %v622
  %v2443 = vunpack.c.h.b16 %v622
  %v2444 = vunpack.c.l.b16 %v623
  %v2445 = vunpack.c.h.b16 %v623
  %v2446 = vunpack.c.l.b16 %v624
  %v2447 = vunpack.c.h.b16 %v624
  %v2448 = vunpack.c.l.b16 %v625
  %v2449 = vunpack.c.h.b16 %v625
  %v2450 = vunpack.c.l.b16 %v626
  %v2451 = vunpack.c.h.b16 %v626
  %v2452 = vunpack.c.l.b16 %v627
  %v2453 = vunpack.c.h.b16 %v627
  %v2454 = vunpack.c.l.b16 %v628
  %v2455 = vunpack.c.h.b16 %v628
  %v2456 = vunpack.c.l.b16 %v629
  %v2457 = vunpack.c.h.b16 %v629
  %v2458 = vunpack.c.l.b16 %v630
  %v2459 = vunpack.c.h.b16 %v630
  %v2460 = vunpack.c.l.b16 %v631
  %v2461 = vunpack.c.h.b16 %v631
  %v2462 = vunpack.c.l.b16 %v632
  %v2463 = vunpack.c.h.b16 %v632
  %v2464 = vunpack.c.l.b16 %v633
  %v2465 = vunpack.c.h.b16 %v633
  %v2466 = vunpack.c.l.b16 %v634
  %v2467 = vunpack.c.h.b16 %v634
  %v2468 = vunpack.c.l.b16 %v635
  %v2469 = vunpack.c.h.b16 %v635
  %v2470 = vunpack.c.l.b16 %v636
  %v2471 = vunpack.c.h.b16 %v636
  %v2472 = vunpack.c.l.b16 %v637
  %v2473 = vunpack.c.h.b16 %v637
  %v2474 = vunpack.c.l.b16 %v638
  %v2475 = vunpack.c.h.b16 %v638
  %v2476 = vunpack.c.l.b16 %v639
  %v2477 = vunpack.c.h.b16 %v639
  %v2478 = vunpack.c.l.b16 %v640
  %v2479 = vunpack.c.h.b16 %v640
  %v2480 = vunpack.c.l.b16 %v641
  %v2481 = vunpack.c.h.b16 %v641
  %v2482 = vunpack.c.l.b16 %v642
  %v2483 = vunpack.c.h.b16 %v642
  %v2484 = vunpack.c.l.b16 %v643
  %v2485 = vunpack.c.h.b16 %v643
  %v2486 = vunpack.c.l.b16 %v644
  %v2487 = vunpack.c.h.b16 %v644
  %v2488 = vunpack.c.l.b16 %v645
  %v2489 = vunpack.c.h.b16 %v645
  %v2490 = vunpack.c.l.b16 %v646
  %v2491 = vunpack.c.h.b16 %v646
  %v2492 = vunpack.c.l.b16 %v647
  %v2493 = vunpack.c.h.b16 %v647
  %v2494 = vunpack.c.l.b16 %v648
  %v2495 = vunpack.c.h.b16 %v648
  %v2496 = vunpack.c.l.b16 %v649
  %v2497 = vunpack.c.h.b16 %v649
  %v2498 = vunpack.c.l.b16 %v650
  %v2499 = vunpack.c.h.b16 %v650
  %v2500 = vunpack.c.l.b16 %v651
  %v2501 = vunpack.c.h.b16 %v651
  %v2502 = vunpack.c.l.b16 %v652
  %v2503 = vunpack.c.h.b16 %v652
  %v2504 = vunpack.c.l.b16 %v653
  %v2505 = vunpack.c.h.b16 %v653
  %v2506 = vunpack.c.l.b16 %v654
  %v2507 = vunpack.c.h.b16 %v654
  %v2508 = vunpack.c.l.b16 %v655
  %v2509 = vunpack.c.h.b16 %v655
  %v2510 = vunpack.c.l.b16 %v656
  %v2511 = vunpack.c.h.b16 %v656
  %v2512 = vunpack.c.l.b16 %v657
  %v2513 = vunpack.c.h.b16 %v657
  %v2514 = vunpack.c.l.b16 %v658
  %v2515 = vunpack.c.h.b16 %v658
  %v2516 = vunpack.c.l.b16 %v659
  %v2517 = vunpack.c.h.b16 %v659
  %v2518 = vunpack.c.l.b16 %v660
  %v2519 = vunpack.c.h.b16 %v660
  %v2520 = vunpack.c.l.b16 %v661
  %v2521 = vunpack.c.h.b16 %v661
  %v2522 = vunpack.c.l.b16 %v662
  %v2523 = vunpack.c.h.b16 %v662
  %v2524 = vunpack.c.l.b16 %v663
  %v2525 = vunpack.c.h.b16 %v663
  %v2526 = vunpack.c.l.b16 %v664
  %v2527 = vunpack.c.h.b16 %v664
  %v2528 = vunpack.c.l.b16 %v665
  %v2529 = vunpack.c.h.b16 %v665
  %v2530 = vunpack.c.l.b16 %v666
  %v2531 = vunpack.c.h.b16 %v666
  %v2532 = vunpack.c.l.b16 %v667
  %v2533 = vunpack.c.h.b16 %v667
  %v2534 = vunpack.c.l.b16 %v668
  %v2535 = vunpack.c.h.b16 %v668
  %v2536 = vunpack.c.l.b16 %v669
  %v2537 = vunpack.c.h.b16 %v669
  %v2538 = vunpack.c.l.b16 %v670
  %v2539 = vunpack.c.h.b16 %v670
  %v2540 = vunpack.c.l.b16 %v671
  %v2541 = vunpack.c.h.b16 %v671
  %v2542 = vunpack.c.l.b16 %v672
  %v2543 = vunpack.c.h.b16 %v672
  %v2544 = vunpack.c.l.b16 %v673
  %v2545 = vunpack.c.h.b16 %v673
  %v2546 = vunpack.c.l.b16 %v674
  %v2547 = vunpack.c.h.b16 %v674
  %v2548 = vunpack.c.l.b16 %v675
  %v2549 = vunpack.c.h.b16 %v675
  %v2550 = vunpack.c.l.b16 %v676
  %v2551 = vunpack.c.h.b16 %v676
  %v2552 = vunpack.c.l.b16 %v677
  %v2553 = vunpack.c.h.b16 %v677
  %v2554 = vunpack.c.l.b16 %v678
  %v2555 = vunpack.c.h.b16 %v678
  %v2556 = vunpack.c.l.b16 %v679
  %v2557 = vunpack.c.h.b16 %v679
  %v2558 = vunpack.c.l.b16 %v680
  %v2559 = vunpack.c.h.b16 %v680
  %v2560 = vunpack.c.l.b16 %v681
  %v2561 = vunpack.c.h.b16 %v681
  %v2562 = vunpack.c.l.b16 %v682
  %v2563 = vunpack.c.h.b16 %v682
  %v2564 = vunpack.c.l.b16 %v683
  %v2565 = vunpack.c.h.b16 %v683
  %v2566 = vunpack.c.l.b16 %v684
  %v2567 = vunpack.c.h.b16 %v684
  %v2568 = vunpack.c.l.b16 %v685
  %v2569 = vunpack.c.h.b16 %v685
  %v2570 = vunpack.c.l.b16 %v686
  %v2571 = vunpack.c.h.b16 %v686
  %v2572 = vunpack.c.l.b16 %v687
  %v2573 = vunpack.c.h.b16 %v687
  %v2574 = vunpack.c.l.b16 %v688
  %v2575 = vunpack.c.h.b16 %v688
  %v2576 = vunpack.c.l.b16 %v689
  %v2577 = vunpack.c.h.b16 %v689
  %v2578 = vunpack.c.l.b16 %v690
  %v2579 = vunpack.c.h.b16 %v690
  %v2580 = vunpack.c.l.b16 %v691
  %v2581 = vunpack.c.h.b16 %v691
  %v2582 = vunpack.c.l.b16 %v692
  %v2583 = vunpack.c.h.b16 %v692
  %v2584 = vunpack.c.l.b16 %v693
  %v2585 = vunpack.c.h.b16 %v693
  %v2586 = vunpack.c.l.b16 %v694
  %v2587 = vunpack.c.h.b16 %v694
  %v2588 = vunpack.c.l.b16 %v695
  %v2589 = vunpack.c.h.b16 %v695
  %v2590 = vunpack.c.l.b16 %v696
  %v2591 = vunpack.c.h.b16 %v696
  %v2592 = vunpack.c.l.b16 %v697
  %v2593 = vunpack.c.h.b16 %v697
  %v2594 = vunpack.c.l.b16 %v698
  %v2595 = vunpack.c.h.b16 %v698
  %v2596 = vunpack.c.l.b16 %v699
  %v2597 = vunpack.c.h.b16 %v699
  %v2598 = vunpack.c.l.b16 %v700
  %v2599 = vunpack.c.h.b16 %v700
  %v2600 = vunpack.c.l.b16 %v701
  %v2601 = vunpack.c.h.b16 %v701
  %v2602 = vunpack.c.l.b16 %v702
  %v2603 = vunpack.c.h.b16 %v702
  %v2604 = vunpack.c.l.b16 %v703
  %v2605 = vunpack.c.h.b16 %v703
  %v2606 = vunpack.c.l.b16 %v704
  %v2607 = vunpack.c.h.b16 %v704
  %v2608 = vunpack.c.l.b16 %v705
  %v2609 = vunpack.c.h.b16 %v705
  %v2610 = vunpack.c.l.b16 %v706
  %v2611 = vunpack.c.h.b16 %v706
  %v2612 = vunpack.c.l.b16 %v707
  %v2613 = vunpack.c.h.b16 %v707
  %v2614 = vunpack.c.l.b16 %v708
  %v2615 = vunpack.c.h.b16 %v708
  %v2616 = vunpack.c.l.b16 %v709
  %v2617 = vunpack.c.h.b16 %v709
  %v2618 = vunpack.c.l.b16 %v710
  %v2619 = vunpack.c.h.b16 %v710
  %v2620 = vunpack.c.l.b16 %v711
  %v2621 = vunpack.c.h.b16 %v711
  %v2622 = vunpack.c.l.b16 %v712
  %v2623 = vunpack.c.h.b16 %v712
  %v2624 = vunpack.c.l.b16 %v713
  %v2625 = vunpack.c.h.b16 %v713
  %v2626 = vunpack.c.l.b16 %v714
  %v2627 = vunpack.c.h.b16 %v714
  %v2628 = vunpack.c.l.b16 %v715
  %v2629 = vunpack.c.h.b16 %v715
  %v2630 = vunpack.c.l.b16 %v716
  %v2631 = vunpack.c.h.b16 %v716
  %v2632 = vunpack.c.l.b16 %v717
  %v2633 = vunpack.c.h.b16 %v717
  %v2634 = vunpack.c.l.b16 %v718
  %v2635 = vunpack.c.h.b16 %v718
  %v2636 = vunpack.c.l.b16 %v719
  %v2637 = vunpack.c.h.b16 %v719
  %v2638 = vunpack.c.l.b16 %v720
  %v2639 = vunpack.c.h.b16 %v720
  %v2640 = vunpack.c.l.b16 %v721
  %v2641 = vunpack.c.h.b16 %v721
  %v2642 = vunpack.c.l.b16 %v722
  %v2643 = vunpack.c.h.b16 %v722
  %v2644 = vunpack.c.l.b16 %v723
  %v2645 = vunpack.c.h.b16 %v723
  %v2646 = vunpack.c.l.b16 %v724
  %v2647 = vunpack.c.h.b16 %v724
  %v2648 = vunpack.c.l.b16 %v725
  %v2649 = vunpack.c.h.b16 %v725
  %v2650 = vunpack.c.l.b16 %v726
  %v2651 = vunpack.c.h.b16 %v726
  %v2652 = vunpack.c.l.b16 %v727
  %v2653 = vunpack.c.h.b16 %v727
  %v2654 = vunpack.c.l.b16 %v728
  %v2655 = vunpack.c.h.b16 %v728
  %v2656 = vunpack.c.l.b16 %v729
  %v2657 = vunpack.c.h.b16 %v729
  %v2658 = vunpack.c.l.b16 %v730
  %v2659 = vunpack.c.h.b16 %v730
  %v2660 = vunpack.c.l.b16 %v731
  %v2661 = vunpack.c.h.b16 %v731
  %v2662 = vunpack.c.l.b16 %v732
  %v2663 = vunpack.c.h.b16 %v732
  %v2664 = vunpack.c.l.b16 %v733
  %v2665 = vunpack.c.h.b16 %v733
  %v2666 = vunpack.c.l.b16 %v734
  %v2667 = vunpack.c.h.b16 %v734
  %v2668 = vunpack.c.l.b16 %v735
  %v2669 = vunpack.c.h.b16 %v735
  %v2670 = vunpack.c.l.b16 %v736
  %v2671 = vunpack.c.h.b16 %v736
  %v2672 = vunpack.c.l.b16 %v737
  %v2673 = vunpack.c.h.b16 %v737
  %v2674 = vunpack.c.l.b16 %v738
  %v2675 = vunpack.c.h.b16 %v738
  %v2676 = vunpack.c.l.b16 %v739
  %v2677 = vunpack.c.h.b16 %v739
  %v2678 = vunpack.c.l.b16 %v740
  %v2679 = vunpack.c.h.b16 %v740
  %v2680 = vunpack.c.l.b16 %v741
  %v2681 = vunpack.c.h.b16 %v741
  %v2682 = vunpack.c.l.b16 %v742
  %v2683 = vunpack.c.h.b16 %v742
  %v2684 = vunpack.c.l.b16 %v743
  %v2685 = vunpack.c.h.b16 %v743
  %v2686 = vunpack.c.l.b16 %v744
  %v2687 = vunpack.c.h.b16 %v744
  %v2688 = vunpack.c.l.b16 %v745
  %v2689 = vunpack.c.h.b16 %v745
  %v2690 = vunpack.c.l.b16 %v746
  %v2691 = vunpack.c.h.b16 %v746
  %v2692 = vunpack.c.l.b16 %v747
  %v2693 = vunpack.c.h.b16 %v747
  %v2694 = vunpack.c.l.b16 %v748
  %v2695 = vunpack.c.h.b16 %v748
  %v2696 = vunpack.c.l.b16 %v749
  %v2697 = vunpack.c.h.b16 %v749
  %v2698 = vunpack.c.l.b16 %v750
  %v2699 = vunpack.c.h.b16 %v750
  %v2700 = vunpack.c.l.b16 %v751
  %v2701 = vunpack.c.h.b16 %v751
  %v2702 = vunpack.c.l.b16 %v752
  %v2703 = vunpack.c.h.b16 %v752
  %v2704 = vunpack.c.l.b16 %v753
  %v2705 = vunpack.c.h.b16 %v753
  %v2706 = vunpack.c.l.b16 %v754
  %v2707 = vunpack.c.h.b16 %v754
  %v2708 = vunpack.c.l.b16 %v755
  %v2709 = vunpack.c.h.b16 %v755
  %v2710 = vunpack.c.l.b16 %v756
  %v2711 = vunpack.c.h.b16 %v756
  %v2712 = vunpack.c.l.b16 %v757
  %v2713 = vunpack.c.h.b16 %v757
  %v2714 = vunpack.c.l.b16 %v758
  %v2715 = vunpack.c.h.b16 %v758
  %v2716 = vunpack.c.l.b16 %v759
  %v2717 = vunpack.c.h.b16 %v759
  %v2718 = vunpack.c.l.b16 %v760
  %v2719 = vunpack.c.h.b16 %v760
  %v2720 = vunpack.c.l.b16 %v761
  %v2721 = vunpack.c.h.b16 %v761
  %v2722 = vunpack.c.l.b16 %v762
  %v2723 = vunpack.c.h.b16 %v762
  %v2724 = vunpack.c.l.b16 %v763
  %v2725 = vunpack.c.h.b16 %v763
  %v2726 = vunpack.c.l.b16 %v764
  %v2727 = vunpack.c.h.b16 %v764
  %v2728 = vunpack.c.l.b16 %v765
  %v2729 = vunpack.c.h.b16 %v765
  %v2730 = vunpack.c.l.b16 %v766
  %v2731 = vunpack.c.h.b16 %v766
  %v2732 = vpack.c.b16 %v1508, %v1474
  %v2733 = vpack.c.b16 %v1509, %v1475
  %v2734 = vpack.c.b16 %v1510, %v1476
  %v2735 = vpack.c.b16 %v1511, %v1477
  %v2736 = vpack.c.b16 %v1512, %v1478
  %v2737 = vpack.c.b16 %v1513, %v1479
  %v2738 = vpack.c.b16 %v1514, %v1480
  %v2739 = vpack.c.b16 %v1515, %v1481
  %v2740 = vpack.c.b16 %v1516, %v1482
  %v2741 = vpack.c.b16 %v1517, %v1483
  %v2742 = vpack.c.b16 %v1518, %v1484
  %v2743 = vpack.c.b16 %v1519, %v1485
  %v2744 = vpack.c.b16 %v1520, %v1486
  %v2745 = vpack.c.b16 %v1521, %v1487
  %v2746 = vpack.c.b16 %v1522, %v1488
  %v2747 = vpack.c.b16 %v1523, %v1489
  %v2748 = vpack.c.b16 %v1524, %v1490
  %v2749 = vpack.c.b16 %v1525, %v1491
  %v2750 = vpack.c.b16 %v1526, %v1492
  %v2751 = vpack.c.b16 %v1527, %v1493
  %v2752 = vpack.c.b16 %v1528, %v1494
  %v2753 = vpack.c.b16 %v1529, %v1495
  %v2754 = vpack.c.b16 %v1530, %v1496
  %v2755 = vpack.c.b16 %v1531, %v1497
  %v2756 = vpack.c.b16 %v1532, %v1498
  %v2757 = vpack.c.b16 %v1533, %v1499
  %v2758 = vpack.c.b16 %v1534, %v1500
  %v2759 = vpack.c.b16 %v1535, %v1501
  %v2760 = vpack.c.b16 %v1536, %v1502
  %v2761 = vpack.c.b16 %v1537, %v1503
  %v2762 = vpack.c.b16 %v1538, %v1504
  %v2763 = vpack.c.b16 %v1539, %v1505
  %v2764 = vpack.c.b16 %v1540, %v1506
  %v2765 = vpack.c.b16 %v1541, %v1507
  %v2766 = vpack.c.b16 %v1576, %v1542
  %v2767 = vpack.c.b16 %v1577, %v1543
  %v2768 = vpack.c.b16 %v1578, %v1544
  %v2769 = vpack.c.b16 %v1579, %v1545
  %v2770 = vpack.c.b16 %v1580, %v1546
  %v2771 = vpack.c.b16 %v1581, %v1547
  %v2772 = vpack.c.b16 %v1582, %v1548
  %v2773 = vpack.c.b16 %v1583, %v1549
  %v2774 = vpack.c.b16 %v1584, %v1550
  %v2775 = vpack.c.b16 %v1585, %v1551
  %v2776 = vpack.c.b16 %v1586, %v1552
  %v2777 = vpack.c.b16 %v1587, %v1553
  %v2778 = vpack.c.b16 %v1588, %v1554
  %v2779 = vpack.c.b16 %v1589, %v1555
  %v2780 = vpack.c.b16 %v1590, %v1556
  %v2781 = vpack.c.b16 %v1591, %v1557
  %v2782 = vpack.c.b16 %v1592, %v1558
  %v2783 = vpack.c.b16 %v1593, %v1559
  %v2784 = vpack.c.b16 %v1594, %v1560
  %v2785 = vpack.c.b16 %v1595, %v1561
  %v2786 = vpack.c.b16 %v1596, %v1562
  %v2787 = vpack.c.b16 %v1597, %v1563
  %v2788 = vpack.c.b16 %v1598, %v1564
  %v2789 = vpack.c.b16 %v1599, %v1565
  %v2790 = vpack.c.b16 %v1600, %v1566
  %v2791 = vpack.c.b16 %v1601, %v1567
  %v2792 = vpack.c.b16 %v1602, %v1568
  %v2793 = vpack.c.b16 %v1603, %v1569
  %v2794 = vpack.c.b16 %v1604, %v1570
  %v2795 = vpack.c.b16 %v1605, %v1571
  %v2796 = vpack.c.b16 %v1606, %v1572
  %v2797 = vpack.c.b16 %v1607, %v1573
  %v2798 = vpack.c.b16 %v1608, %v1574
  %v2799 = vpack.c.b16 %v1609, %v1575
  %v2800 = vpack.c.b16 %v1644, %v1610
  %v2801 = vpack.c.b16 %v1645, %v1611
  %v2802 = vpack.c.b16 %v1646, %v1612
  %v2803 = vpack.c.b16 %v1647, %v1613
  %v2804 = vpack.c.b16 %v1648, %v1614
  %v2805 = vpack.c.b16 %v1649, %v1615
  %v2806 = vpack.c.b16 %v1650, %v1616
  %v2807 = vpack.c.b16 %v1651, %v1617
  %v2808 = vpack.c.b16 %v1652, %v1618
  %v2809 = vpack.c.b16 %v1653, %v1619
  %v2810 = vpack.c.b16 %v1654, %v1620
  %v2811 = vpack.c.b16 %v1655, %v1621
  %v2812 = vpack.c.b16 %v1656, %v1622
  %v2813 = vpack.c.b16 %v1657, %v1623
  %v2814 = vpack.c.b16 %v1658, %v1624
  %v2815 = vpack.c.b16 %v1659, %v1625
  %v2816 = vpack.c.b16 %v1660, %v1626
  %v2817 = vpack.c.b16 %v1661, %v1627
  %v2818 = vpack.c.b16 %v1662, %v1628
  %v2819 = vpack.c.b16 %v1663, %v1629
  %v2820 = vpack.c.b16 %v1664, %v1630
  %v2821 = vpack.c.b16 %v1665, %v1631
  %v2822 = vpack.c.b16 %v1666, %v1632
  %v2823 = vpack.c.b16 %v1667, %v1633
  %v2824 = vpack.c.b16 %v1668, %v1634
  %v2825 = vpack.c.b16 %v1669, %v1635
  %v2826 = vpack.c.b16 %v1670, %v1636
  %v2827 = vpack.c.b16 %v1671, %v1637
  %v2828 = vpack.c.b16 %v1672, %v1638
  %v2829 = vpack.c.b16 %v1673, %v1639
  %v2830 = vpack.c.b16 %v1674, %v1640
  %v2831 = vpack.c.b16 %v1675, %v1641
  %v2832 = vpack.c.b16 %v1676, %v1642
  %v2833 = vpack.c.b16 %v1677, %v1643
  %v2834 = vpack.c.b16 %v1712, %v1678
  %v2835 = vpack.c.b16 %v1713, %v1679
  %v2836 = vpack.c.b16 %v1714, %v1680
  %v2837 = vpack.c.b16 %v1715, %v1681
  %v2838 = vpack.c.b16 %v1716, %v1682
  %v2839 = vpack.c.b16 %v1717, %v1683
  %v2840 = vpack.c.b16 %v1718, %v1684
  %v2841 = vpack.c.b16 %v1719, %v1685
  %v2842 = vpack.c.b16 %v1720, %v1686
  %v2843 = vpack.c.b16 %v1721, %v1687
  %v2844 = vpack.c.b16 %v1722, %v1688
  %v2845 = vpack.c.b16 %v1723, %v1689
  %v2846 = vpack.c.b16 %v1724, %v1690
  %v2847 = vpack.c.b16 %v1725, %v1691
  %v2848 = vpack.c.b16 %v1726, %v1692
  %v2849 = vpack.c.b16 %v1727, %v1693
  %v2850 = vpack.c.b16 %v1728, %v1694
  %v2851 = vpack.c.b16 %v1729, %v1695
  %v2852 = vpack.c.b16 %v1730, %v1696
  %v2853 = vpack.c.b16 %v1731, %v1697
  %v2854 = vpack.c.b16 %v1732, %v1698
  %v2855 = vpack.c.b16 %v1733, %v1699
  %v2856 = vpack.c.b16 %v1734, %v1700
  %v2857 = vpack.c.b16 %v1735, %v1701
  %v2858 = vpack.c.b16 %v1736, %v1702
  %v2859 = vpack.c.b16 %v1737, %v1703
  %v2860 = vpack.c.b16 %v1738, %v1704
  %v2861 = vpack.c.b16 %v1739, %v1705
  %v2862 = vpack.c.b16 %v1740, %v1706
  %v2863 = vpack.c.b16 %v1741, %v1707
  %v2864 = vpack.c.b16 %v1742, %v1708
  %v2865 = vpack.c.b16 %v1743, %v1709
  %v2866 = vpack.c.b16 %v1744, %v1710
  %v2867 = vpack.c.b16 %v1745, %v1711
  %v2868 = vpack.c.b16 %v1780, %v1746
  %v2869 = vpack.c.b16 %v1781, %v1747
  %v2870 = vpack.c.b16 %v1782, %v1748
  %v2871 = vpack.c.b16 %v1783, %v1749
  %v2872 = vpack.c.b16 %v1784, %v1750
  %v2873 = vpack.c.b16 %v1785, %v1751
  %v2874 = vpack.c.b16 %v1786, %v1752
  %v2875 = vpack.c.b16 %v1787, %v1753
  %v2876 = vpack.c.b16 %v1788, %v1754
  %v2877 = vpack.c.b16 %v1789, %v1755
  %v2878 = vpack.c.b16 %v1790, %v1756
  %v2879 = vpack.c.b16 %v1791, %v1757
  %v2880 = vpack.c.b16 %v1792, %v1758
  %v2881 = vpack.c.b16 %v1793, %v1759
  %v2882 = vpack.c.b16 %v1794, %v1760
  %v2883 = vpack.c.b16 %v1795, %v1761
  %v2884 = vpack.c.b16 %v1796, %v1762
  %v2885 = vpack.c.b16 %v1797, %v1763
  %v2886 = vpack.c.b16 %v1798, %v1764
  %v2887 = vpack.c.b16 %v1799, %v1765
  %v2888 = vpack.c.b16 %v1800, %v1766
  %v2889 = vpack.c.b16 %v1801, %v1767
  %v2890 = vpack.c.b16 %v1802, %v1768
  %v2891 = vpack.c.b16 %v1803, %v1769
  %v2892 = vpack.c.b16 %v1804, %v1770
  %v2893 = vpack.c.b16 %v1805, %v1771
  %v2894 = vpack.c.b16 %v1806, %v1772
  %v2895 = vpack.c.b16 %v1807, %v1773
  %v2896 = vpack.c.b16 %v1808, %v1774
  %v2897 = vpack.c.b16 %v1809, %v1775
  %v2898 = vpack.c.b16 %v1810, %v1776
  %v2899 = vpack.c.b16 %v1811, %v1777
  %v2900 = vpack.c.b16 %v1812, %v1778
  %v2901 = vpack.c.b16 %v1813, %v1779
  %v2902 = vpack.c.b16 %v1848, %v1814
  %v2903 = vpack.c.b16 %v1849, %v1815
  %v2904 = vpack.c.b16 %v1850, %v1816
  %v2905 = vpack.c.b16 %v1851, %v1817
  %v2906 = vpack.c.b16 %v1852, %v1818
  %v2907 = vpack.c.b16 %v1853, %v1819
  %v2908 = vpack.c.b16 %v1854, %v1820
  %v2909 = vpack.c.b16 %v1855, %v1821
  %v2910 = vpack.c.b16 %v1856, %v1822
  %v2911 = vpack.c.b16 %v1857, %v1823
  %v2912 = vpack.c.b16 %v1858, %v1824
  %v2913 = vpack.c.b16 %v1859, %v1825
  %v2914 = vpack.c.b16 %v1860, %v1826
  %v2915 = vpack.c.b16 %v1861, %v1827
  %v2916 = vpack.c.b16 %v1862, %v1828
  %v2917 = vpack.c.b16 %v1863, %v1829
  %v2918 = vpack.c.b16 %v1864, %v1830
  %v2919 = vpack.c.b16 %v1865, %v1831
  %v2920 = vpack.c.b16 %v1866, %v1832
  %v2921 = vpack.c.b16 %v1867, %v1833
  %v2922 = vpack.c.b16 %v1868, %v1834
  %v2923 = vpack.c.b16 %v1869, %v1835
  %v2924 = vpack.c.b16 %v1870, %v1836
  %v2925 = vpack.c.b16 %v1871, %v1837
  %v2926 = vpack.c.b16 %v1872, %v1838
  %v2927 = vpack.c.b16 %v1873, %v1839
  %v2928 = vpack.c.b16 %v1874, %v1840
  %v2929 = vpack.c.b16 %v1875, %v1841
  %v2930 = vpack.c.b16 %v1876, %v1842
  %v2931 = vpack.c.b16 %v1877, %v1843
  %v2932 = vpack.c.b16 %v1878, %v1844
  %v2933 = vpack.c.b16 %v1879, %v1845
  %v2934 = vpack.c.b16 %v1880, %v1846
  %v2935 = vpack.c.b16 %v1881, %v1847
  %v2936 = vpack.c.b16 %v1916, %v1882
  %v2937 = vpack.c.b16 %v1917, %v1883
  %v2938 = vpack.c.b16 %v1918, %v1884
  %v2939 = vpack.c.b16 %v1919, %v1885
  %v2940 = vpack.c.b16 %v1920, %v1886
  %v2941 = vpack.c.b16 %v1921, %v1887
  %v2942 = vpack.c.b16 %v1922, %v1888
  %v2943 = vpack.c.b16 %v1923, %v1889
  %v2944 = vpack.c.b16 %v1924, %v1890
  %v2945 = vpack.c.b16 %v1925, %v1891
  %v2946 = vpack.c.b16 %v1926, %v1892
  %v2947 = vpack.c.b16 %v1927, %v1893
  %v2948 = vpack.c.b16 %v1928, %v1894
  %v2949 = vpack.c.b16 %v1929, %v1895
  %v2950 = vpack.c.b16 %v1930, %v1896
  %v2951 = vpack.c.b16 %v1931, %v1897
  %v2952 = vpack.c.b16 %v1932, %v1898
  %v2953 = vpack.c.b16 %v1933, %v1899
  %v2954 = vpack.c.b16 %v1934, %v1900
  %v2955 = vpack.c.b16 %v1935, %v1901
  %v2956 = vpack.c.b16 %v1936, %v1902
  %v2957 = vpack.c.b16 %v1937, %v1903
  %v2958 = vpack.c.b16 %v1938, %v1904
  %v2959 = vpack.c.b16 %v1939, %v1905
  %v2960 = vpack.c.b16 %v1940, %v1906
  %v2961 = vpack.c.b16 %v1941, %v1907
  %v2962 = vpack.c.b16 %v1942, %v1908
  %v2963 = vpack.c.b16 %v1943, %v1909
  %v2964 = vpack.c.b16 %v1944, %v1910
  %v2965 = vpack.c.b16 %v1945, %v1911
  %v2966 = vpack.c.b16 %v1946, %v1912
  %v2967 = vpack.c.b16 %v1947, %v1913
  %v2968 = vpack.c.b16 %v1948, %v1914
  %v2969 = vpack.c.b16 %v1949, %v1915
  %v2970 = vpack.c.b16 %v1984, %v1950
  %v2971 = vpack.c.b16 %v1985, %v1951
  %v2972 = vpack.c.b16 %v1986, %v1952
  %v2973 = vpack.c.b16 %v1987, %v1953
  %v2974 = vpack.c.b16 %v1988, %v1954
  %v2975 = vpack.c.b16 %v1989, %v1955
  %v2976 = vpack.c.b16 %v1990, %v1956
  %v2977 = vpack.c.b16 %v1991, %v1957
  %v2978 = vpack.c.b16 %v1992, %v1958
  %v2979 = vpack.c.b16 %v1993, %v1959
  %v2980 = vpack.c.b16 %v1994, %v1960
  %v2981 = vpack.c.b16 %v1995, %v1961
  %v2982 = vpack.c.b16 %v1996, %v1962
  %v2983 = vpack.c.b16 %v1997, %v1963
  %v2984 = vpack.c.b16 %v1998, %v1964
  %v2985 = vpack.c.b16 %v1999, %v1965
  %v2986 = vpack.c.b16 %v2000, %v1966
  %v2987 = vpack.c.b16 %v2001, %v1967
  %v2988 = vpack.c.b16 %v2002, %v1968
  %v2989 = vpack.c.b16 %v2003, %v1969
  %v2990 = vpack.c.b16 %v2004, %v1970
  %v2991 = vpack.c.b16 %v2005, %v1971
  %v2992 = vpack.c.b16 %v2006, %v1972
  %v2993 = vpack.c.b16 %v2007, %v1973
  %v2994 = vpack.c.b16 %v2008, %v1974
  %v2995 = vpack.c.b16 %v2009, %v1975
  %v2996 = vpack.c.b16 %v2010, %v1976
  %v2997 = vpack.c.b16 %v2011, %v1977
  %v2998 = vpack.c.b16 %v2012, %v1978
  %v2999 = vpack.c.b16 %v2013, %v1979
  %v3000 = vpack.c.b16 %v2014, %v1980
  %v3001 = vpack.c.b16 %v2015, %v1981
  %v3002 = vpack.c.b16 %v2016, %v1982
  %v3003 = vpack.c.b16 %v2017, %v1983
  %v3004 = vpack.c.b16 %v2052, %v2018
  %v3005 = vpack.c.b16 %v2053, %v2019
  %v3006 = vpack.c.b16 %v2054, %v2020
  %v3007 = vpack.c.b16 %v2055, %v2021
  %v3008 = vpack.c.b16 %v2056, %v2022
  %v3009 = vpack.c.b16 %v2057, %v2023
  %v3010 = vpack.c.b16 %v2058, %v2024
  %v3011 = vpack.c.b16 %v2059, %v2025
  %v3012 = vpack.c.b16 %v2060, %v2026
  %v3013 = vpack.c.b16 %v2061, %v2027
  %v3014 = vpack.c.b16 %v2062, %v2028
  %v3015 = vpack.c.b16 %v2063, %v2029
  %v3016 = vpack.c.b16 %v2064, %v2030
  %v3017 = vpack.c.b16 %v2065, %v2031
  %v3018 = vpack.c.b16 %v2066, %v2032
  %v3019 = vpack.c.b16 %v2067, %v2033
  %v3020 = vpack.c.b16 %v2068, %v2034
  %v3021 = vpack.c.b16 %v2069, %v2035
  %v3022 = vpack.c.b16 %v2070, %v2036
  %v3023 = vpack.c.b16 %v2071, %v2037
  %v3024 = vpack.c.b16 %v2072, %v2038
  %v3025 = vpack.c.b16 %v2073, %v2039
  %v3026 = vpack.c.b16 %v2074, %v2040
  %v3027 = vpack.c.b16 %v2075, %v2041
  %v3028 = vpack.c.b16 %v2076, %v2042
  %v3029 = vpack.c.b16 %v2077, %v2043
  %v3030 = vpack.c.b16 %v2078, %v2044
  %v3031 = vpack.c.b16 %v2079, %v2045
  %v3032 = vpack.c.b16 %v2080, %v2046
  %v3033 = vpack.c.b16 %v2081, %v2047
  %v3034 = vpack.c.b16 %v2082, %v2048
  %v3035 = vpack.c.b16 %v2083, %v2049
  %v3036 = vpack.c.b16 %v2084, %v2050
  %v3037 = vpack.c.b16 %v2085, %v2051
  %v3038 = vpack.c.b16 %v2120, %v2086
  %v3039 = vpack.c.b16 %v2121, %v2087
  %v3040 = vpack.c.b16 %v2122, %v2088
  %v3041 = vpack.c.b16 %v2123, %v2089
  %v3042 = vpack.c.b16 %v2124, %v2090
  %v3043 = vpack.c.b16 %v2125, %v2091
  %v3044 = vpack.c.b16 %v2126, %v2092
  %v3045 = vpack.c.b16 %v2127, %v2093
  %v3046 = vpack.c.b16 %v2128, %v2094
  %v3047 = vpack.c.b16 %v2129, %v2095
  %v3048 = vpack.c.b16 %v2130, %v2096
  %v3049 = vpack.c.b16 %v2131, %v2097
  %v3050 = vpack.c.b16 %v2132, %v2098
  %v3051 = vpack.c.b16 %v2133, %v2099
  %v3052 = vpack.c.b16 %v2134, %v2100
  %v3053 = vpack.c.b16 %v2135, %v2101
  %v3054 = vpack.c.b16 %v2136, %v2102
  %v3055 = vpack.c.b16 %v2137, %v2103
  %v3056 = vpack.c.b16 %v2138, %v2104
  %v3057 = vpack.c.b16 %v2139, %v2105
  %v3058 = vpack.c.b16 %v2140, %v2106
  %v3059 = vpack.c.b16 %v2141, %v2107
  %v3060 = vpack.c.b16 %v2142, %v2108
  %v3061 = vpack.c.b16 %v2143, %v2109
  %v3062 = vpack.c.b16 %v2144, %v2110
  %v3063 = vpack.c.b16 %v2145, %v2111
  %v3064 = vpack.c.b16 %v2146, %v2112
  %v3065 = vpack.c.b16 %v2147, %v2113
  %v3066 = vpack.c.b16 %v2148, %v2114
  %v3067 = vpack.c.b16 %v2149, %v2115
  %v3068 = vpack.c.b16 %v2150, %v2116
  %v3069 = vpack.c.b16 %v2151, %v2117
  %v3070 = vpack.c.b16 %v2152, %v2118
  %v3071 = vpack.c.b16 %v2153, %v2119
  %v3072 = vpack.c.b16 %v2188, %v2154
  %v3073 = vpack.c.b16 %v2189, %v2155
  %v3074 = vpack.c.b16 %v2190, %v2156
  %v3075 = vpack.c.b16 %v2191, %v2157
  %v3076 = vpack.c.b16 %v2192, %v2158
  %v3077 = vpack.c.b16 %v2193, %v2159
  %v3078 = vpack.c.b16 %v2194, %v2160
  %v3079 = vpack.c.b16 %v2195, %v2161
  %v3080 = vpack.c.b16 %v2196, %v2162
  %v3081 = vpack.c.b16 %v2197, %v2163
  %v3082 = vpack.c.b16 %v2198, %v2164
  %v3083 = vpack.c.b16 %v2199, %v2165
  %v3084 = vpack.c.b16 %v2200, %v2166
  %v3085 = vpack.c.b16 %v2201, %v2167
  %v3086 = vpack.c.b16 %v2202, %v2168
  %v3087 = vpack.c.b16 %v2203, %v2169
  %v3088 = vpack.c.b16 %v2204, %v2170
  %v3089 = vpack.c.b16 %v2205, %v2171
  %v3090 = vpack.c.b16 %v2206, %v2172
  %v3091 = vpack.c.b16 %v2207, %v2173
  %v3092 = vpack.c.b16 %v2208, %v2174
  %v3093 = vpack.c.b16 %v2209, %v2175
  %v3094 = vpack.c.b16 %v2210, %v2176
  %v3095 = vpack.c.b16 %v2211, %v2177
  %v3096 = vpack.c.b16 %v2212, %v2178
  %v3097 = vpack.c.b16 %v2213, %v2179
  %v3098 = vpack.c.b16 %v2214, %v2180
  %v3099 = vpack.c.b16 %v2215, %v2181
  %v3100 = vpack.c.b16 %v2216, %v2182
  %v3101 = vpack.c.b16 %v2217, %v2183
  %v3102 = vpack.c.b16 %v2218, %v2184
  %v3103 = vpack.c.b16 %v2219, %v2185
  %v3104 = vpack.c.b16 %v2220, %v2186
  %v3105 = vpack.c.b16 %v2221, %v2187
  %v3106 = vpack.c.b16 %v2256, %v2222
  %v3107 = vpack.c.b16 %v2257, %v2223
  %v3108 = vpack.c.b16 %v2258, %v2224
  %v3109 = vpack.c.b16 %v2259, %v2225
  %v3110 = vpack.c.b16 %v2260, %v2226
  %v3111 = vpack.c.b16 %v2261, %v2227
  %v3112 = vpack.c.b16 %v2262, %v2228
  %v3113 = vpack.c.b16 %v2263, %v2229
  %v3114 = vpack.c.b16 %v2264, %v2230
  %v3115 = vpack.c.b16 %v2265, %v2231
  %v3116 = vpack.c.b16 %v2266, %v2232
  %v3117 = vpack.c.b16 %v2267, %v2233
  %v3118 = vpack.c.b16 %v2268, %v2234
  %v3119 = vpack.c.b16 %v2269, %v2235
  %v3120 = vpack.c.b16 %v2270, %v2236
  %v3121 = vpack.c.b16 %v2271, %v2237
  %v3122 = vpack.c.b16 %v2272, %v2238
  %v3123 = vpack.c.b16 %v2273, %v2239
  %v3124 = vpack.c.b16 %v2274, %v2240
  %v3125 = vpack.c.b16 %v2275, %v2241
  %v3126 = vpack.c.b16 %v2276, %v2242
  %v3127 = vpack.c.b16 %v2277, %v2243
  %v3128 = vpack.c.b16 %v2278, %v2244
  %v3129 = vpack.c.b16 %v2279, %v2245
  %v3130 = vpack.c.b16 %v2280, %v2246
  %v3131 = vpack.c.b16 %v2281, %v2247
  %v3132 = vpack.c.b16 %v2282, %v2248
  %v3133 = vpack.c.b16 %v2283, %v2249
  %v3134 = vpack.c.b16 %v2284, %v2250
  %v3135 = vpack.c.b16 %v2285, %v2251
  %v3136 = vpack.c.b16 %v2286, %v2252
  %v3137 = vpack.c.b16 %v2287, %v2253
  %v3138 = vpack.c.b16 %v2288, %v2254
  %v3139 = vpack.c.b16 %v2289, %v2255
  %v3140 = vpack.c.b16 %v2324, %v2290
  %v3141 = vpack.c.b16 %v2325, %v2291
  %v3142 = vpack.c.b16 %v2326, %v2292
  %v3143 = vpack.c.b16 %v2327, %v2293
  %v3144 = vpack.c.b16 %v2328, %v2294
  %v3145 = vpack.c.b16 %v2329, %v2295
  %v3146 = vpack.c.b16 %v2330, %v2296
  %v3147 = vpack.c.b16 %v2331, %v2297
  %v3148 = vpack.c.b16 %v2332, %v2298
  %v3149 = vpack.c.b16 %v2333, %v2299
  %v3150 = vpack.c.b16 %v2334, %v2300
  %v3151 = vpack.c.b16 %v2335, %v2301
  %v3152 = vpack.c.b16 %v2336, %v2302
  %v3153 = vpack.c.b16 %v2337, %v2303
  %v3154 = vpack.c.b16 %v2338, %v2304
  %v3155 = vpack.c.b16 %v2339, %v2305
  %v3156 = vpack.c.b16 %v2340, %v2306
  %v3157 = vpack.c.b16 %v2341, %v2307
  %v3158 = vpack.c.b16 %v2342, %v2308
  %v3159 = vpack.c.b16 %v2343, %v2309
  %v3160 = vpack.c.b16 %v2344, %v2310
  %v3161 = vpack.c.b16 %v2345, %v2311
  %v3162 = vpack.c.b16 %v2346, %v2312
  %v3163 = vpack.c.b16 %v2347, %v2313
  %v3164 = vpack.c.b16 %v2348, %v2314
  %v3165 = vpack.c.b16 %v2349, %v2315
  %v3166 = vpack.c.b16 %v2350, %v2316
  %v3167 = vpack.c.b16 %v2351, %v2317
  %v3168 = vpack.c.b16 %v2352, %v2318
  %v3169 = vpack.c.b16 %v2353, %v2319
  %v3170 = vpack.c.b16 %v2354, %v2320
  %v3171 = vpack.c.b16 %v2355, %v2321
  %v3172 = vpack.c.b16 %v2356, %v2322
  %v3173 = vpack.c.b16 %v2357, %v2323
  %v3174 = vpack.c.b16 %v2392, %v2358
  %v3175 = vpack.c.b16 %v2393, %v2359
  %v3176 = vpack.c.b16 %v2394, %v2360
  %v3177 = vpack.c.b16 %v2395, %v2361
  %v3178 = vpack.c.b16 %v2396, %v2362
  %v3179 = vpack.c.b16 %v2397, %v2363
  %v3180 = vpack.c.b16 %v2398, %v2364
  %v3181 = vpack.c.b16 %v2399, %v2365
  %v3182 = vpack.c.b16 %v2400, %v2366
  %v3183 = vpack.c.b16 %v2401, %v2367
  %v3184 = vpack.c.b16 %v2402, %v2368
  %v3185 = vpack.c.b16 %v2403, %v2369
  %v3186 = vpack.c.b16 %v2404, %v2370
  %v3187 = vpack.c.b16 %v2405, %v2371
  %v3188 = vpack.c.b16 %v2406, %v2372
  %v3189 = vpack.c.b16 %v2407, %v2373
  %v3190 = vpack.c.b16 %v2408, %v2374
  %v3191 = vpack.c.b16 %v2409, %v2375
  %v3192 = vpack.c.b16 %v2410, %v2376
  %v3193 = vpack.c.b16 %v2411, %v2377
  %v3194 = vpack.c.b16 %v2412, %v2378
  %v3195 = vpack.c.b16 %v2413, %v2379
  %v3196 = vpack.c.b16 %v2414, %v2380
  %v3197 = vpack.c.b16 %v2415, %v2381
  %v3198 = vpack.c.b16 %v2416, %v2382
  %v3199 = vpack.c.b16 %v2417, %v2383
  %v3200 = vpack.c.b16 %v2418, %v2384
  %v3201 = vpack.c.b16 %v2419, %v2385
  %v3202 = vpack.c.b16 %v2420, %v2386
  %v3203 = vpack.c.b16 %v2421, %v2387
  %v3204 = vpack.c.b16 %v2422, %v2388
  %v3205 = vpack.c.b16 %v2423, %v2389
  %v3206 = vpack.c.b16 %v2424, %v2390
  %v3207 = vpack.c.b16 %v2425, %v2391
  %v3208 = vpack.c.b16 %v2460, %v2426
  %v3209 = vpack.c.b16 %v2461, %v2427
  %v3210 = vpack.c.b16 %v2462, %v2428
  %v3211 = vpack.c.b16 %v2463, %v2429
  %v3212 = vpack.c.b16 %v2464, %v2430
  %v3213 = vpack.c.b16 %v2465, %v2431
  %v3214 = vpack.c.b16 %v2466, %v2432
  %v3215 = vpack.c.b16 %v2467, %v2433
  %v3216 = vpack.c.b16 %v2468, %v2434
  %v3217 = vpack.c.b16 %v2469, %v2435
  %v3218 = vpack.c.b16 %v2470, %v2436
  %v3219 = vpack.c.b16 %v2471, %v2437
  %v3220 = vpack.c.b16 %v2472, %v2438
  %v3221 = vpack.c.b16 %v2473, %v2439
  %v3222 = vpack.c.b16 %v2474, %v2440
  %v3223 = vpack.c.b16 %v2475, %v2441
  %v3224 = vpack.c.b16 %v2476, %v2442
  %v3225 = vpack.c.b16 %v2477, %v2443
  %v3226 = vpack.c.b16 %v2478, %v2444
  %v3227 = vpack.c.b16 %v2479, %v2445
  %v3228 = vpack.c.b16 %v2480, %v2446
  %v3229 = vpack.c.b16 %v2481, %v2447
  %v3230 = vpack.c.b16 %v2482, %v2448
  %v3231 = vpack.c.b16 %v2483, %v2449
  %v3232 = vpack.c.b16 %v2484, %v2450
  %v3233 = vpack.c.b16 %v2485, %v2451
  %v3234 = vpack.c.b16 %v2486, %v2452
  %v3235 = vpack.c.b16 %v2487, %v2453
  %v3236 = vpack.c.b16 %v2488, %v2454
  %v3237 = vpack.c.b16 %v2489, %v2455
  %v3238 = vpack.c.b16 %v2490, %v2456
  %v3239 = vpack.c.b16 %v2491, %v2457
  %v3240 = vpack.c.b16 %v2492, %v2458
  %v3241 = vpack.c.b16 %v2493, %v2459
  %v3242 = vpack.c.b16 %v2528, %v2494
  %v3243 = vpack.c.b16 %v2529, %v2495
  %v3244 = vpack.c.b16 %v2530, %v2496
  %v3245 = vpack.c.b16 %v2531, %v2497
  %v3246 = vpack.c.b16 %v2532, %v2498
  %v3247 = vpack.c.b16 %v2533, %v2499
  %v3248 = vpack.c.b16 %v2534, %v2500
  %v3249 = vpack.c.b16 %v2535, %v2501
  %v3250 = vpack.c.b16 %v2536, %v2502
  %v3251 = vpack.c.b16 %v2537, %v2503
  %v3252 = vpack.c.b16 %v2538, %v2504
  %v3253 = vpack.c.b16 %v2539, %v2505
  %v3254 = vpack.c.b16 %v2540, %v2506
  %v3255 = vpack.c.b16 %v2541, %v2507
  %v3256 = vpack.c.b16 %v2542, %v2508
  %v3257 = vpack.c.b16 %v2543, %v2509
  %v3258 = vpack.c.b16 %v2544, %v2510
  %v3259 = vpack.c.b16 %v2545, %v2511
  %v3260 = vpack.c.b16 %v2546, %v2512
  %v3261 = vpack.c.b16 %v2547, %v2513
  %v3262 = vpack.c.b16 %v2548, %v2514
  %v3263 = vpack.c.b16 %v2549, %v2515
  %v3264 = vpack.c.b16 %v2550, %v2516
  %v3265 = vpack.c.b16 %v2551, %v2517
  %v3266 = vpack.c.b16 %v2552, %v2518
  %v3267 = vpack.c.b16 %v2553, %v2519
  %v3268 = vpack.c.b16 %v2554, %v2520
  %v3269 = vpack.c.b16 %v2555, %v2521
  %v3270 = vpack.c.b16 %v2556, %v2522
  %v3271 = vpack.c.b16 %v2557, %v2523
  %v3272 = vpack.c.b16 %v2558, %v2524
  %v3273 = vpack.c.b16 %v2559, %v2525
  %v3274 = vpack.c.b16 %v2560, %v2526
  %v3275 = vpack.c.b16 %v2561, %v2527
  %v3276 = vpack.c.b16 %v2596, %v2562
  %v3277 = vpack.c.b16 %v2597, %v2563
  %v3278 = vpack.c.b16 %v2598, %v2564
  %v3279 = vpack.c.b16 %v2599, %v2565
  %v3280 = vpack.c.b16 %v2600, %v2566
  %v3281 = vpack.c.b16 %v2601, %v2567
  %v3282 = vpack.c.b16 %v2602, %v2568
  %v3283 = vpack.c.b16 %v2603, %v2569
  %v3284 = vpack.c.b16 %v2604, %v2570
  %v3285 = vpack.c.b16 %v2605, %v2571
  %v3286 = vpack.c.b16 %v2606, %v2572
  %v3287 = vpack.c.b16 %v2607, %v2573
  %v3288 = vpack.c.b16 %v2608, %v2574
  %v3289 = vpack.c.b16 %v2609, %v2575
  %v3290 = vpack.c.b16 %v2610, %v2576
  %v3291 = vpack.c.b16 %v2611, %v2577
  %v3292 = vpack.c.b16 %v2612, %v2578
  %v3293 = vpack.c.b16 %v2613, %v2579
  %v3294 = vpack.c.b16 %v2614, %v2580
  %v3295 = vpack.c.b16 %v2615, %v2581
  %v3296 = vpack.c.b16 %v2616, %v2582
  %v3297 = vpack.c.b16 %v2617, %v2583
  %v3298 = vpack.c.b16 %v2618, %v2584
  %v3299 = vpack.c.b16 %v2619, %v2585
  %v3300 = vpack.c.b16 %v2620, %v2586
  %v3301 = vpack.c.b16 %v2621, %v2587
  %v3302 = vpack.c.b16 %v2622, %v2588
  %v3303 = vpack.c.b16 %v2623, %v2589
  %v3304 = vpack.c.b16 %v2624, %v2590
  %v3305 = vpack.c.b16 %v2625, %v2591
  %v3306 = vpack.c.b16 %v2626, %v2592
  %v3307 = vpack.c.b16 %v2627, %v2593
  %v3308 = vpack.c.b16 %v2628, %v2594
  %v3309 = vpack.c.b16 %v2629, %v2595
  %v3310 = vpack.c.b16 %v2664, %v2630
  %v3311 = vpack.c.b16 %v2665, %v2631
  %v3312 = vpack.c.b16 %v2666, %v2632
  %v3313 = vpack.c.b16 %v2667, %v2633
  %v3314 = vpack.c.b16 %v2668, %v2634
  %v3315 = vpack.c.b16 %v2669, %v2635
  %v3316 = vpack.c.b16 %v2670, %v2636
  %v3317 = vpack.c.b16 %v2671, %v2637
  %v3318 = vpack.c.b16 %v2672, %v2638
  %v3319 = vpack.c.b16 %v2673, %v2639
  %v3320 = vpack.c.b16 %v2674, %v2640
  %v3321 = vpack.c.b16 %v2675, %v2641
  %v3322 = vpack.c.b16 %v2676, %v2642
  %v3323 = vpack.c.b16 %v2677, %v2643
  %v3324 = vpack.c.b16 %v2678, %v2644
  %v3325 = vpack.c.b16 %v2679, %v2645
  %v3326 = vpack.c.b16 %v2680, %v2646
  %v3327 = vpack.c.b16 %v2681, %v2647
  %v3328 = vpack.c.b16 %v2682, %v2648
  %v3329 = vpack.c.b16 %v2683, %v2649
  %v3330 = vpack.c.b16 %v2684, %v2650
  %v3331 = vpack.c.b16 %v2685, %v2651
  %v3332 = vpack.c.b16 %v2686, %v2652
  %v3333 = vpack.c.b16 %v2687, %v2653
  %v3334 = vpack.c.b16 %v2688, %v2654
  %v3335 = vpack.c.b16 %v2689, %v2655
  %v3336 = vpack.c.b16 %v2690, %v2656
  %v3337 = vpack.c.b16 %v2691, %v2657
  %v3338 = vpack.c.b16 %v2692, %v2658
  %v3339 = vpack.c.b16 %v2693, %v2659
  %v3340 = vpack.c.b16 %v2694, %v2660
  %v3341 = vpack.c.b16 %v2695, %v2661
  %v3342 = vpack.c.b16 %v2696, %v2662
  %v3343 = vpack.c.b16 %v2697, %v2663
  %v3344 = vpack.c.b16 %v2698, %v2698
  %v3345 = vpack.c.b16 %v2699, %v2699
  %v3346 = vpack.c.b16 %v2700, %v2700
  %v3347 = vpack.c.b16 %v2701, %v2701
  %v3348 = vpack.c.b16 %v2702, %v2702
  %v3349 = vpack.c.b16 %v2703, %v2703
  %v3350 = vpack.c.b16 %v2704, %v2704
  %v3351 = vpack.c.b16 %v2705, %v2705
  %v3352 = vpack.c.b16 %v2706, %v2706
  %v3353 = vpack.c.b16 %v2707, %v2707
  %v3354 = vpack.c.b16 %v2708, %v2708
  %v3355 = vpack.c.b16 %v2709, %v2709
  %v3356 = vpack.c.b16 %v2710, %v2710
  %v3357 = vpack.c.b16 %v2711, %v2711
  %v3358 = vpack.c.b16 %v2712, %v2712
  %v3359 = vpack.c.b16 %v2713, %v2713
  %v3360 = vpack.c.b16 %v2714, %v2714
  %v3361 = vpack.c.b16 %v2715, %v2715
  %v3362 = vpack.c.b16 %v2716, %v2716
  %v3363 = vpack.c.b16 %v2717, %v2717
  %v3364 = vpack.c.b16 %v2718, %v2718
  %v3365 = vpack.c.b16 %v2719, %v2719
  %v3366 = vpack.c.b16 %v2720, %v2720
  %v3367 = vpack.c.b16 %v2721, %v2721
  %v3368 = vpack.c.b16 %v2722, %v2722
  %v3369 = vpack.c.b16 %v2723, %v2723
  %v3370 = vpack.c.b16 %v2724, %v2724
  %v3371 = vpack.c.b16 %v2725, %v2725
  %v3372 = vpack.c.b16 %v2726, %v2726
  %v3373 = vpack.c.b16 %v2727, %v2727
  %v3374 = vpack.c.b16 %v2728, %v2728
  %v3375 = vpack.c.b16 %v2729, %v2729
  %v3376 = vpack.c.b16 %v2730, %v2730
  %v3377 = vpack.c.b16 %v2731, %v2731
  %vm3990 = vcmask 269312
  %v3992 = vsel %vm3990, %v137, 0
  %vm3994 = vcmask 1040384
  %v3995 = vsel 0, 4294967295, 65535
  %v3996 = vsel %vm3994, %v3995, 0
  %v3998 = vand.u32 %v3344, %v3996
  %v4001 = vand.u32 %v3345, %v3996
  %v4004 = vand.u32 %v3346, %v3996
  %v4007 = vand.u32 %v3347, %v3996
  %v4010 = vand.u32 %v3348, %v3996
  %v4013 = vand.u32 %v3349, %v3996
  %v4016 = vand.u32 %v3350, %v3996
  %v4019 = vand.u32 %v3351, %v3996
  %v4022 = vand.u32 %v3352, %v3996
  %v4025 = vand.u32 %v3353, %v3996
  %v4028 = vand.u32 %v3354, %v3996
  %v4031 = vand.u32 %v3355, %v3996
  %v4034 = vand.u32 %v3356, %v3996
  %v4037 = vand.u32 %v3357, %v3996
  %v4040 = vand.u32 %v3358, %v3996
  %v4043 = vand.u32 %v3359, %v3996
  %v4046 = vand.u32 %v3360, %v3996
  %v4049 = vand.u32 %v3361, %v3996
  %v4052 = vand.u32 %v3362, %v3996
  %v4055 = vand.u32 %v3363, %v3996
  %v4058 = vand.u32 %v3364, %v3996
  %v4061 = vand.u32 %v3365, %v3996
  %v4064 = vand.u32 %v3366, %v3996
  %v4067 = vand.u32 %v3367, %v3996
  %v4070 = vand.u32 %v3368, %v3996
  %v4073 = vand.u32 %v3369, %v3996
  %v4076 = vand.u32 %v3370, %v3996
  %v4079 = vand.u32 %v3371, %v3996
  %v4082 = vand.u32 %v3372, %v3996
  %v4085 = vand.u32 %v3373, %v3996
  %v4088 = vand.u32 %v3374, %v3996
  %v4091 = vand.u32 %v3375, %v3996
  %v4094 = vand.u32 %v3376, %v3996
  %v4097 = vand.u32 %v3377, %v3996
  %4099 = vmatpush.bf16.msra.mxu0 %v2970
  %4100 = vmatpush.bf16.msra.mxu0 %v2936
  %4101 = vmatpush.bf16.msra.mxu0 %v2902
  %4102 = vmatpush.bf16.msra.mxu0 %v2868
  %4103 = vmatpush.bf16.msra.mxu0 %v2834
  %4104 = vmatpush.bf16.msra.mxu0 %v2800
  %4105 = vmatpush.bf16.msra.mxu0 %v2766
  %4106 = vmatpush.bf16.msra.mxu0 %v2732
  %4107 = vmatmul.bf16.gmra.mxu0 %v135
  %v4108 = vpop.f32.mrf.mxu0
  %v4109 = vadd.f32 %v777, %v4108
  %v4110 = vpop.f32.mrf.mxu0
  %4111 = vdwg.mxu0
  %4112 = vmatpush.bf16.msra.mxu0 %v3242
  %4113 = vmatpush.bf16.msra.mxu0 %v3208
  %4114 = vmatpush.bf16.msra.mxu0 %v3174
  %4115 = vmatpush.bf16.msra.mxu0 %v3140
  %4116 = vmatpush.bf16.msra.mxu0 %v3106
  %4117 = vmatpush.bf16.msra.mxu0 %v3072
  %4118 = vmatpush.bf16.msra.mxu0 %v3038
  %4119 = vmatpush.bf16.msra.mxu0 %v3004
  %4120 = vmatmul.bf16.gmra.mxu0 %v136
  %v4121 = vpop.f32.mrf.mxu0
  %v4122 = vadd.f32 %v4109, %v4121
  %v4123 = vpop.f32.mrf.mxu0
  %4124 = vdwg.mxu0
  %4125 = vmatpush.bf16.msra.mxu0 0
  %4126 = vmatpush.bf16.msra.mxu0 0
  %4127 = vmatpush.bf16.msra.mxu0 0
  %4128 = vmatpush.bf16.msra.mxu0 0
  %4129 = vmatpush.bf16.msra.mxu0 0
  %4130 = vmatpush.bf16.msra.mxu0 %v3998
  %4131 = vmatpush.bf16.msra.mxu0 %v3310
  %4132 = vmatpush.bf16.msra.mxu0 %v3276
  %4133 = vmatmul.bf16.gmra.mxu0 %v3992
  %v4134 = vpop.f32.mrf.mxu0
  %v4135 = vadd.f32 %v4122, %v4134
  %v4136 = vpop.f32.mrf.mxu0
  %4137 = vdwg.mxu0
  %4138 = vmatpush.bf16.msra.mxu0 %v2971
  %4139 = vmatpush.bf16.msra.mxu0 %v2937
  %4140 = vmatpush.bf16.msra.mxu0 %v2903
  %4141 = vmatpush.bf16.msra.mxu0 %v2869
  %4142 = vmatpush.bf16.msra.mxu0 %v2835
  %4143 = vmatpush.bf16.msra.mxu0 %v2801
  %4144 = vmatpush.bf16.msra.mxu0 %v2767
  %4145 = vmatpush.bf16.msra.mxu0 %v2733
  %4146 = vmatmul.bf16.gmra.mxu0 %v135
  %v4147 = vpop.f32.mrf.mxu0
  %v4148 = vadd.f32 %v778, %v4147
  %v4149 = vpop.f32.mrf.mxu0
  %4150 = vdwg.mxu0
  %4151 = vmatpush.bf16.msra.mxu0 %v3243
  %4152 = vmatpush.bf16.msra.mxu0 %v3209
  %4153 = vmatpush.bf16.msra.mxu0 %v3175
  %4154 = vmatpush.bf16.msra.mxu0 %v3141
  %4155 = vmatpush.bf16.msra.mxu0 %v3107
  %4156 = vmatpush.bf16.msra.mxu0 %v3073
  %4157 = vmatpush.bf16.msra.mxu0 %v3039
  %4158 = vmatpush.bf16.msra.mxu0 %v3005
  %4159 = vmatmul.bf16.gmra.mxu0 %v136
  %v4160 = vpop.f32.mrf.mxu0
  %v4161 = vadd.f32 %v4148, %v4160
  %v4162 = vpop.f32.mrf.mxu0
  %4163 = vdwg.mxu0
  %4164 = vmatpush.bf16.msra.mxu0 0
  %4165 = vmatpush.bf16.msra.mxu0 0
  %4166 = vmatpush.bf16.msra.mxu0 0
  %4167 = vmatpush.bf16.msra.mxu0 0
  %4168 = vmatpush.bf16.msra.mxu0 0
  %4169 = vmatpush.bf16.msra.mxu0 %v4001
  %4170 = vmatpush.bf16.msra.mxu0 %v3311
  %4171 = vmatpush.bf16.msra.mxu0 %v3277
  %4172 = vmatmul.bf16.gmra.mxu0 %v3992
  %v4173 = vpop.f32.mrf.mxu0
  %v4174 = vadd.f32 %v4161, %v4173
  %v4175 = vpop.f32.mrf.mxu0
  %4176 = vdwg.mxu0
  %4177 = vmatpush.bf16.msra.mxu0 %v2972
  %4178 = vmatpush.bf16.msra.mxu0 %v2938
  %4179 = vmatpush.bf16.msra.mxu0 %v2904
  %4180 = vmatpush.bf16.msra.mxu0 %v2870
  %4181 = vmatpush.bf16.msra.mxu0 %v2836
  %4182 = vmatpush.bf16.msra.mxu0 %v2802
  %4183 = vmatpush.bf16.msra.mxu0 %v2768
  %4184 = vmatpush.bf16.msra.mxu0 %v2734
  %4185 = vmatmul.bf16.gmra.mxu0 %v135
  %v4186 = vpop.f32.mrf.mxu0
  %v4187 = vadd.f32 %v779, %v4186
  %v4188 = vpop.f32.mrf.mxu0
  %4189 = vdwg.mxu0
  %4190 = vmatpush.bf16.msra.mxu0 %v3244
  %4191 = vmatpush.bf16.msra.mxu0 %v3210
  %4192 = vmatpush.bf16.msra.mxu0 %v3176
  %4193 = vmatpush.bf16.msra.mxu0 %v3142
  %4194 = vmatpush.bf16.msra.mxu0 %v3108
  %4195 = vmatpush.bf16.msra.mxu0 %v3074
  %4196 = vmatpush.bf16.msra.mxu0 %v3040
  %4197 = vmatpush.bf16.msra.mxu0 %v3006
  %4198 = vmatmul.bf16.gmra.mxu0 %v136
  %v4199 = vpop.f32.mrf.mxu0
  %v4200 = vadd.f32 %v4187, %v4199
  %v4201 = vpop.f32.mrf.mxu0
  %4202 = vdwg.mxu0
  %4203 = vmatpush.bf16.msra.mxu0 0
  %4204 = vmatpush.bf16.msra.mxu0 0
  %4205 = vmatpush.bf16.msra.mxu0 0
  %4206 = vmatpush.bf16.msra.mxu0 0
  %4207 = vmatpush.bf16.msra.mxu0 0
  %4208 = vmatpush.bf16.msra.mxu0 %v4004
  %4209 = vmatpush.bf16.msra.mxu0 %v3312
  %4210 = vmatpush.bf16.msra.mxu0 %v3278
  %4211 = vmatmul.bf16.gmra.mxu0 %v3992
  %v4212 = vpop.f32.mrf.mxu0
  %v4213 = vadd.f32 %v4200, %v4212
  %v4214 = vpop.f32.mrf.mxu0
  %4215 = vdwg.mxu0
  %4216 = vmatpush.bf16.msra.mxu0 %v2973
  %4217 = vmatpush.bf16.msra.mxu0 %v2939
  %4218 = vmatpush.bf16.msra.mxu0 %v2905
  %4219 = vmatpush.bf16.msra.mxu0 %v2871
  %4220 = vmatpush.bf16.msra.mxu0 %v2837
  %4221 = vmatpush.bf16.msra.mxu0 %v2803
  %4222 = vmatpush.bf16.msra.mxu0 %v2769
  %4223 = vmatpush.bf16.msra.mxu0 %v2735
  %4224 = vmatmul.bf16.gmra.mxu0 %v135
  %v4225 = vpop.f32.mrf.mxu0
  %v4226 = vadd.f32 %v780, %v4225
  %v4227 = vpop.f32.mrf.mxu0
  %4228 = vdwg.mxu0
  %4229 = vmatpush.bf16.msra.mxu0 %v3245
  %4230 = vmatpush.bf16.msra.mxu0 %v3211
  %4231 = vmatpush.bf16.msra.mxu0 %v3177
  %4232 = vmatpush.bf16.msra.mxu0 %v3143
  %4233 = vmatpush.bf16.msra.mxu0 %v3109
  %4234 = vmatpush.bf16.msra.mxu0 %v3075
  %4235 = vmatpush.bf16.msra.mxu0 %v3041
  %4236 = vmatpush.bf16.msra.mxu0 %v3007
  %4237 = vmatmul.bf16.gmra.mxu0 %v136
  %v4238 = vpop.f32.mrf.mxu0
  %v4239 = vadd.f32 %v4226, %v4238
  %v4240 = vpop.f32.mrf.mxu0
  %4241 = vdwg.mxu0
  %4242 = vmatpush.bf16.msra.mxu0 0
  %4243 = vmatpush.bf16.msra.mxu0 0
  %4244 = vmatpush.bf16.msra.mxu0 0
  %4245 = vmatpush.bf16.msra.mxu0 0
  %4246 = vmatpush.bf16.msra.mxu0 0
  %4247 = vmatpush.bf16.msra.mxu0 %v4007
  %4248 = vmatpush.bf16.msra.mxu0 %v3313
  %4249 = vmatpush.bf16.msra.mxu0 %v3279
  %4250 = vmatmul.bf16.gmra.mxu0 %v3992
  %v4251 = vpop.f32.mrf.mxu0
  %v4252 = vadd.f32 %v4239, %v4251
  %v4253 = vpop.f32.mrf.mxu0
  %4254 = vdwg.mxu0
  %4255 = vmatpush.bf16.msra.mxu0 %v2974
  %4256 = vmatpush.bf16.msra.mxu0 %v2940
  %4257 = vmatpush.bf16.msra.mxu0 %v2906
  %4258 = vmatpush.bf16.msra.mxu0 %v2872
  %4259 = vmatpush.bf16.msra.mxu0 %v2838
  %4260 = vmatpush.bf16.msra.mxu0 %v2804
  %4261 = vmatpush.bf16.msra.mxu0 %v2770
  %4262 = vmatpush.bf16.msra.mxu0 %v2736
  %4263 = vmatmul.bf16.gmra.mxu0 %v135
  %v4264 = vpop.f32.mrf.mxu0
  %v4265 = vadd.f32 %v781, %v4264
  %v4266 = vpop.f32.mrf.mxu0
  %4267 = vdwg.mxu0
  %4268 = vmatpush.bf16.msra.mxu0 %v3246
  %4269 = vmatpush.bf16.msra.mxu0 %v3212
  %4270 = vmatpush.bf16.msra.mxu0 %v3178
  %4271 = vmatpush.bf16.msra.mxu0 %v3144
  %4272 = vmatpush.bf16.msra.mxu0 %v3110
  %4273 = vmatpush.bf16.msra.mxu0 %v3076
  %4274 = vmatpush.bf16.msra.mxu0 %v3042
  %4275 = vmatpush.bf16.msra.mxu0 %v3008
  %4276 = vmatmul.bf16.gmra.mxu0 %v136
  %v4277 = vpop.f32.mrf.mxu0
  %v4278 = vadd.f32 %v4265, %v4277
  %v4279 = vpop.f32.mrf.mxu0
  %4280 = vdwg.mxu0
  %4281 = vmatpush.bf16.msra.mxu0 0
  %4282 = vmatpush.bf16.msra.mxu0 0
  %4283 = vmatpush.bf16.msra.mxu0 0
  %4284 = vmatpush.bf16.msra.mxu0 0
  %4285 = vmatpush.bf16.msra.mxu0 0
  %4286 = vmatpush.bf16.msra.mxu0 %v4010
  %4287 = vmatpush.bf16.msra.mxu0 %v3314
  %4288 = vmatpush.bf16.msra.mxu0 %v3280
  %4289 = vmatmul.bf16.gmra.mxu0 %v3992
  %v4290 = vpop.f32.mrf.mxu0
  %v4291 = vadd.f32 %v4278, %v4290
  %v4292 = vpop.f32.mrf.mxu0
  %4293 = vdwg.mxu0
  %4294 = vmatpush.bf16.msra.mxu0 %v2975
  %4295 = vmatpush.bf16.msra.mxu0 %v2941
  %4296 = vmatpush.bf16.msra.mxu0 %v2907
  %4297 = vmatpush.bf16.msra.mxu0 %v2873
  %4298 = vmatpush.bf16.msra.mxu0 %v2839
  %4299 = vmatpush.bf16.msra.mxu0 %v2805
  %4300 = vmatpush.bf16.msra.mxu0 %v2771
  %4301 = vmatpush.bf16.msra.mxu0 %v2737
  %4302 = vmatmul.bf16.gmra.mxu0 %v135
  %v4303 = vpop.f32.mrf.mxu0
  %v4304 = vadd.f32 %v782, %v4303
  %v4305 = vpop.f32.mrf.mxu0
  %4306 = vdwg.mxu0
  %4307 = vmatpush.bf16.msra.mxu0 %v3247
  %4308 = vmatpush.bf16.msra.mxu0 %v3213
  %4309 = vmatpush.bf16.msra.mxu0 %v3179
  %4310 = vmatpush.bf16.msra.mxu0 %v3145
  %4311 = vmatpush.bf16.msra.mxu0 %v3111
  %4312 = vmatpush.bf16.msra.mxu0 %v3077
  %4313 = vmatpush.bf16.msra.mxu0 %v3043
  %4314 = vmatpush.bf16.msra.mxu0 %v3009
  %4315 = vmatmul.bf16.gmra.mxu0 %v136
  %v4316 = vpop.f32.mrf.mxu0
  %v4317 = vadd.f32 %v4304, %v4316
  %v4318 = vpop.f32.mrf.mxu0
  %4319 = vdwg.mxu0
  %4320 = vmatpush.bf16.msra.mxu0 0
  %4321 = vmatpush.bf16.msra.mxu0 0
  %4322 = vmatpush.bf16.msra.mxu0 0
  %4323 = vmatpush.bf16.msra.mxu0 0
  %4324 = vmatpush.bf16.msra.mxu0 0
  %4325 = vmatpush.bf16.msra.mxu0 %v4013
  %4326 = vmatpush.bf16.msra.mxu0 %v3315
  %4327 = vmatpush.bf16.msra.mxu0 %v3281
  %4328 = vmatmul.bf16.gmra.mxu0 %v3992
  %v4329 = vpop.f32.mrf.mxu0
  %v4330 = vadd.f32 %v4317, %v4329
  %v4331 = vpop.f32.mrf.mxu0
  %4332 = vdwg.mxu0
  %4333 = vmatpush.bf16.msra.mxu0 %v2976
  %4334 = vmatpush.bf16.msra.mxu0 %v2942
  %4335 = vmatpush.bf16.msra.mxu0 %v2908
  %4336 = vmatpush.bf16.msra.mxu0 %v2874
  %4337 = vmatpush.bf16.msra.mxu0 %v2840
  %4338 = vmatpush.bf16.msra.mxu0 %v2806
  %4339 = vmatpush.bf16.msra.mxu0 %v2772
  %4340 = vmatpush.bf16.msra.mxu0 %v2738
  %4341 = vmatmul.bf16.gmra.mxu0 %v135
  %v4342 = vpop.f32.mrf.mxu0
  %v4343 = vadd.f32 %v783, %v4342
  %v4344 = vpop.f32.mrf.mxu0
  %4345 = vdwg.mxu0
  %4346 = vmatpush.bf16.msra.mxu0 %v3248
  %4347 = vmatpush.bf16.msra.mxu0 %v3214
  %4348 = vmatpush.bf16.msra.mxu0 %v3180
  %4349 = vmatpush.bf16.msra.mxu0 %v3146
  %4350 = vmatpush.bf16.msra.mxu0 %v3112
  %4351 = vmatpush.bf16.msra.mxu0 %v3078
  %4352 = vmatpush.bf16.msra.mxu0 %v3044
  %4353 = vmatpush.bf16.msra.mxu0 %v3010
  %4354 = vmatmul.bf16.gmra.mxu0 %v136
  %v4355 = vpop.f32.mrf.mxu0
  %v4356 = vadd.f32 %v4343, %v4355
  %v4357 = vpop.f32.mrf.mxu0
  %4358 = vdwg.mxu0
  %4359 = vmatpush.bf16.msra.mxu0 0
  %4360 = vmatpush.bf16.msra.mxu0 0
  %4361 = vmatpush.bf16.msra.mxu0 0
  %4362 = vmatpush.bf16.msra.mxu0 0
  %4363 = vmatpush.bf16.msra.mxu0 0
  %4364 = vmatpush.bf16.msra.mxu0 %v4016
  %4365 = vmatpush.bf16.msra.mxu0 %v3316
  %4366 = vmatpush.bf16.msra.mxu0 %v3282
  %4367 = vmatmul.bf16.gmra.mxu0 %v3992
  %v4368 = vpop.f32.mrf.mxu0
  %v4369 = vadd.f32 %v4356, %v4368
  %v4370 = vpop.f32.mrf.mxu0
  %4371 = vdwg.mxu0
  %4372 = vmatpush.bf16.msra.mxu0 %v2977
  %4373 = vmatpush.bf16.msra.mxu0 %v2943
  %4374 = vmatpush.bf16.msra.mxu0 %v2909
  %4375 = vmatpush.bf16.msra.mxu0 %v2875
  %4376 = vmatpush.bf16.msra.mxu0 %v2841
  %4377 = vmatpush.bf16.msra.mxu0 %v2807
  %4378 = vmatpush.bf16.msra.mxu0 %v2773
  %4379 = vmatpush.bf16.msra.mxu0 %v2739
  %4380 = vmatmul.bf16.gmra.mxu0 %v135
  %v4381 = vpop.f32.mrf.mxu0
  %v4382 = vadd.f32 %v784, %v4381
  %v4383 = vpop.f32.mrf.mxu0
  %4384 = vdwg.mxu0
  %4385 = vmatpush.bf16.msra.mxu0 %v3249
  %4386 = vmatpush.bf16.msra.mxu0 %v3215
  %4387 = vmatpush.bf16.msra.mxu0 %v3181
  %4388 = vmatpush.bf16.msra.mxu0 %v3147
  %4389 = vmatpush.bf16.msra.mxu0 %v3113
  %4390 = vmatpush.bf16.msra.mxu0 %v3079
  %4391 = vmatpush.bf16.msra.mxu0 %v3045
  %4392 = vmatpush.bf16.msra.mxu0 %v3011
  %4393 = vmatmul.bf16.gmra.mxu0 %v136
  %v4394 = vpop.f32.mrf.mxu0
  %v4395 = vadd.f32 %v4382, %v4394
  %v4396 = vpop.f32.mrf.mxu0
  %4397 = vdwg.mxu0
  %4398 = vmatpush.bf16.msra.mxu0 0
  %4399 = vmatpush.bf16.msra.mxu0 0
  %4400 = vmatpush.bf16.msra.mxu0 0
  %4401 = vmatpush.bf16.msra.mxu0 0
  %4402 = vmatpush.bf16.msra.mxu0 0
  %4403 = vmatpush.bf16.msra.mxu0 %v4019
  %4404 = vmatpush.bf16.msra.mxu0 %v3317
  %4405 = vmatpush.bf16.msra.mxu0 %v3283
  %4406 = vmatmul.bf16.gmra.mxu0 %v3992
  %v4407 = vpop.f32.mrf.mxu0
  %v4408 = vadd.f32 %v4395, %v4407
  %v4409 = vpop.f32.mrf.mxu0
  %4410 = vdwg.mxu0
  %4411 = vmatpush.bf16.msra.mxu0 %v2978
  %4412 = vmatpush.bf16.msra.mxu0 %v2944
  %4413 = vmatpush.bf16.msra.mxu0 %v2910
  %4414 = vmatpush.bf16.msra.mxu0 %v2876
  %4415 = vmatpush.bf16.msra.mxu0 %v2842
  %4416 = vmatpush.bf16.msra.mxu0 %v2808
  %4417 = vmatpush.bf16.msra.mxu0 %v2774
  %4418 = vmatpush.bf16.msra.mxu0 %v2740
  %4419 = vmatmul.bf16.gmra.mxu0 %v135
  %v4420 = vpop.f32.mrf.mxu0
  %v4421 = vadd.f32 %v785, %v4420
  %v4422 = vpop.f32.mrf.mxu0
  %4423 = vdwg.mxu0
  %4424 = vmatpush.bf16.msra.mxu0 %v3250
  %4425 = vmatpush.bf16.msra.mxu0 %v3216
  %4426 = vmatpush.bf16.msra.mxu0 %v3182
  %4427 = vmatpush.bf16.msra.mxu0 %v3148
  %4428 = vmatpush.bf16.msra.mxu0 %v3114
  %4429 = vmatpush.bf16.msra.mxu0 %v3080
  %4430 = vmatpush.bf16.msra.mxu0 %v3046
  %4431 = vmatpush.bf16.msra.mxu0 %v3012
  %4432 = vmatmul.bf16.gmra.mxu0 %v136
  %v4433 = vpop.f32.mrf.mxu0
  %v4434 = vadd.f32 %v4421, %v4433
  %v4435 = vpop.f32.mrf.mxu0
  %4436 = vdwg.mxu0
  %4437 = vmatpush.bf16.msra.mxu0 0
  %4438 = vmatpush.bf16.msra.mxu0 0
  %4439 = vmatpush.bf16.msra.mxu0 0
  %4440 = vmatpush.bf16.msra.mxu0 0
  %4441 = vmatpush.bf16.msra.mxu0 0
  %4442 = vmatpush.bf16.msra.mxu0 %v4022
  %4443 = vmatpush.bf16.msra.mxu0 %v3318
  %4444 = vmatpush.bf16.msra.mxu0 %v3284
  %4445 = vmatmul.bf16.gmra.mxu0 %v3992
  %v4446 = vpop.f32.mrf.mxu0
  %v4447 = vadd.f32 %v4434, %v4446
  %v4448 = vpop.f32.mrf.mxu0
  %4449 = vdwg.mxu0
  %4450 = vmatpush.bf16.msra.mxu0 %v2979
  %4451 = vmatpush.bf16.msra.mxu0 %v2945
  %4452 = vmatpush.bf16.msra.mxu0 %v2911
  %4453 = vmatpush.bf16.msra.mxu0 %v2877
  %4454 = vmatpush.bf16.msra.mxu0 %v2843
  %4455 = vmatpush.bf16.msra.mxu0 %v2809
  %4456 = vmatpush.bf16.msra.mxu0 %v2775
  %4457 = vmatpush.bf16.msra.mxu0 %v2741
  %4458 = vmatmul.bf16.gmra.mxu0 %v135
  %v4459 = vpop.f32.mrf.mxu0
  %v4460 = vadd.f32 %v786, %v4459
  %v4461 = vpop.f32.mrf.mxu0
  %4462 = vdwg.mxu0
  %4463 = vmatpush.bf16.msra.mxu0 %v3251
  %4464 = vmatpush.bf16.msra.mxu0 %v3217
  %4465 = vmatpush.bf16.msra.mxu0 %v3183
  %4466 = vmatpush.bf16.msra.mxu0 %v3149
  %4467 = vmatpush.bf16.msra.mxu0 %v3115
  %4468 = vmatpush.bf16.msra.mxu0 %v3081
  %4469 = vmatpush.bf16.msra.mxu0 %v3047
  %4470 = vmatpush.bf16.msra.mxu0 %v3013
  %4471 = vmatmul.bf16.gmra.mxu0 %v136
  %v4472 = vpop.f32.mrf.mxu0
  %v4473 = vadd.f32 %v4460, %v4472
  %v4474 = vpop.f32.mrf.mxu0
  %4475 = vdwg.mxu0
  %4476 = vmatpush.bf16.msra.mxu0 0
  %4477 = vmatpush.bf16.msra.mxu0 0
  %4478 = vmatpush.bf16.msra.mxu0 0
  %4479 = vmatpush.bf16.msra.mxu0 0
  %4480 = vmatpush.bf16.msra.mxu0 0
  %4481 = vmatpush.bf16.msra.mxu0 %v4025
  %4482 = vmatpush.bf16.msra.mxu0 %v3319
  %4483 = vmatpush.bf16.msra.mxu0 %v3285
  %4484 = vmatmul.bf16.gmra.mxu0 %v3992
  %v4485 = vpop.f32.mrf.mxu0
  %v4486 = vadd.f32 %v4473, %v4485
  %v4487 = vpop.f32.mrf.mxu0
  %4488 = vdwg.mxu0
  %4489 = vmatpush.bf16.msra.mxu0 %v2980
  %4490 = vmatpush.bf16.msra.mxu0 %v2946
  %4491 = vmatpush.bf16.msra.mxu0 %v2912
  %4492 = vmatpush.bf16.msra.mxu0 %v2878
  %4493 = vmatpush.bf16.msra.mxu0 %v2844
  %4494 = vmatpush.bf16.msra.mxu0 %v2810
  %4495 = vmatpush.bf16.msra.mxu0 %v2776
  %4496 = vmatpush.bf16.msra.mxu0 %v2742
  %4497 = vmatmul.bf16.gmra.mxu0 %v135
  %v4498 = vpop.f32.mrf.mxu0
  %v4499 = vadd.f32 %v787, %v4498
  %v4500 = vpop.f32.mrf.mxu0
  %4501 = vdwg.mxu0
  %4502 = vmatpush.bf16.msra.mxu0 %v3252
  %4503 = vmatpush.bf16.msra.mxu0 %v3218
  %4504 = vmatpush.bf16.msra.mxu0 %v3184
  %4505 = vmatpush.bf16.msra.mxu0 %v3150
  %4506 = vmatpush.bf16.msra.mxu0 %v3116
  %4507 = vmatpush.bf16.msra.mxu0 %v3082
  %4508 = vmatpush.bf16.msra.mxu0 %v3048
  %4509 = vmatpush.bf16.msra.mxu0 %v3014
  %4510 = vmatmul.bf16.gmra.mxu0 %v136
  %v4511 = vpop.f32.mrf.mxu0
  %v4512 = vadd.f32 %v4499, %v4511
  %v4513 = vpop.f32.mrf.mxu0
  %4514 = vdwg.mxu0
  %4515 = vmatpush.bf16.msra.mxu0 0
  %4516 = vmatpush.bf16.msra.mxu0 0
  %4517 = vmatpush.bf16.msra.mxu0 0
  %4518 = vmatpush.bf16.msra.mxu0 0
  %4519 = vmatpush.bf16.msra.mxu0 0
  %4520 = vmatpush.bf16.msra.mxu0 %v4028
  %4521 = vmatpush.bf16.msra.mxu0 %v3320
  %4522 = vmatpush.bf16.msra.mxu0 %v3286
  %4523 = vmatmul.bf16.gmra.mxu0 %v3992
  %v4524 = vpop.f32.mrf.mxu0
  %v4525 = vadd.f32 %v4512, %v4524
  %v4526 = vpop.f32.mrf.mxu0
  %4527 = vdwg.mxu0
  %4528 = vmatpush.bf16.msra.mxu0 %v2981
  %4529 = vmatpush.bf16.msra.mxu0 %v2947
  %4530 = vmatpush.bf16.msra.mxu0 %v2913
  %4531 = vmatpush.bf16.msra.mxu0 %v2879
  %4532 = vmatpush.bf16.msra.mxu0 %v2845
  %4533 = vmatpush.bf16.msra.mxu0 %v2811
  %4534 = vmatpush.bf16.msra.mxu0 %v2777
  %4535 = vmatpush.bf16.msra.mxu0 %v2743
  %4536 = vmatmul.bf16.gmra.mxu0 %v135
  %v4537 = vpop.f32.mrf.mxu0
  %v4538 = vadd.f32 %v788, %v4537
  %v4539 = vpop.f32.mrf.mxu0
  %4540 = vdwg.mxu0
  %4541 = vmatpush.bf16.msra.mxu0 %v3253
  %4542 = vmatpush.bf16.msra.mxu0 %v3219
  %4543 = vmatpush.bf16.msra.mxu0 %v3185
  %4544 = vmatpush.bf16.msra.mxu0 %v3151
  %4545 = vmatpush.bf16.msra.mxu0 %v3117
  %4546 = vmatpush.bf16.msra.mxu0 %v3083
  %4547 = vmatpush.bf16.msra.mxu0 %v3049
  %4548 = vmatpush.bf16.msra.mxu0 %v3015
  %4549 = vmatmul.bf16.gmra.mxu0 %v136
  %v4550 = vpop.f32.mrf.mxu0
  %v4551 = vadd.f32 %v4538, %v4550
  %v4552 = vpop.f32.mrf.mxu0
  %4553 = vdwg.mxu0
  %4554 = vmatpush.bf16.msra.mxu0 0
  %4555 = vmatpush.bf16.msra.mxu0 0
  %4556 = vmatpush.bf16.msra.mxu0 0
  %4557 = vmatpush.bf16.msra.mxu0 0
  %4558 = vmatpush.bf16.msra.mxu0 0
  %4559 = vmatpush.bf16.msra.mxu0 %v4031
  %4560 = vmatpush.bf16.msra.mxu0 %v3321
  %4561 = vmatpush.bf16.msra.mxu0 %v3287
  %4562 = vmatmul.bf16.gmra.mxu0 %v3992
  %v4563 = vpop.f32.mrf.mxu0
  %v4564 = vadd.f32 %v4551, %v4563
  %v4565 = vpop.f32.mrf.mxu0
  %4566 = vdwg.mxu0
  %4567 = vmatpush.bf16.msra.mxu0 %v2982
  %4568 = vmatpush.bf16.msra.mxu0 %v2948
  %4569 = vmatpush.bf16.msra.mxu0 %v2914
  %4570 = vmatpush.bf16.msra.mxu0 %v2880
  %4571 = vmatpush.bf16.msra.mxu0 %v2846
  %4572 = vmatpush.bf16.msra.mxu0 %v2812
  %4573 = vmatpush.bf16.msra.mxu0 %v2778
  %4574 = vmatpush.bf16.msra.mxu0 %v2744
  %4575 = vmatmul.bf16.gmra.mxu0 %v135
  %v4576 = vpop.f32.mrf.mxu0
  %v4577 = vadd.f32 %v789, %v4576
  %v4578 = vpop.f32.mrf.mxu0
  %4579 = vdwg.mxu0
  %4580 = vmatpush.bf16.msra.mxu0 %v3254
  %4581 = vmatpush.bf16.msra.mxu0 %v3220
  %4582 = vmatpush.bf16.msra.mxu0 %v3186
  %4583 = vmatpush.bf16.msra.mxu0 %v3152
  %4584 = vmatpush.bf16.msra.mxu0 %v3118
  %4585 = vmatpush.bf16.msra.mxu0 %v3084
  %4586 = vmatpush.bf16.msra.mxu0 %v3050
  %4587 = vmatpush.bf16.msra.mxu0 %v3016
  %4588 = vmatmul.bf16.gmra.mxu0 %v136
  %v4589 = vpop.f32.mrf.mxu0
  %v4590 = vadd.f32 %v4577, %v4589
  %v4591 = vpop.f32.mrf.mxu0
  %4592 = vdwg.mxu0
  %4593 = vmatpush.bf16.msra.mxu0 0
  %4594 = vmatpush.bf16.msra.mxu0 0
  %4595 = vmatpush.bf16.msra.mxu0 0
  %4596 = vmatpush.bf16.msra.mxu0 0
  %4597 = vmatpush.bf16.msra.mxu0 0
  %4598 = vmatpush.bf16.msra.mxu0 %v4034
  %4599 = vmatpush.bf16.msra.mxu0 %v3322
  %4600 = vmatpush.bf16.msra.mxu0 %v3288
  %4601 = vmatmul.bf16.gmra.mxu0 %v3992
  %v4602 = vpop.f32.mrf.mxu0
  %v4603 = vadd.f32 %v4590, %v4602
  %v4604 = vpop.f32.mrf.mxu0
  %4605 = vdwg.mxu0
  %4606 = vmatpush.bf16.msra.mxu0 %v2983
  %4607 = vmatpush.bf16.msra.mxu0 %v2949
  %4608 = vmatpush.bf16.msra.mxu0 %v2915
  %4609 = vmatpush.bf16.msra.mxu0 %v2881
  %4610 = vmatpush.bf16.msra.mxu0 %v2847
  %4611 = vmatpush.bf16.msra.mxu0 %v2813
  %4612 = vmatpush.bf16.msra.mxu0 %v2779
  %4613 = vmatpush.bf16.msra.mxu0 %v2745
  %4614 = vmatmul.bf16.gmra.mxu0 %v135
  %v4615 = vpop.f32.mrf.mxu0
  %v4616 = vadd.f32 %v790, %v4615
  %v4617 = vpop.f32.mrf.mxu0
  %4618 = vdwg.mxu0
  %4619 = vmatpush.bf16.msra.mxu0 %v3255
  %4620 = vmatpush.bf16.msra.mxu0 %v3221
  %4621 = vmatpush.bf16.msra.mxu0 %v3187
  %4622 = vmatpush.bf16.msra.mxu0 %v3153
  %4623 = vmatpush.bf16.msra.mxu0 %v3119
  %4624 = vmatpush.bf16.msra.mxu0 %v3085
  %4625 = vmatpush.bf16.msra.mxu0 %v3051
  %4626 = vmatpush.bf16.msra.mxu0 %v3017
  %4627 = vmatmul.bf16.gmra.mxu0 %v136
  %v4628 = vpop.f32.mrf.mxu0
  %v4629 = vadd.f32 %v4616, %v4628
  %v4630 = vpop.f32.mrf.mxu0
  %4631 = vdwg.mxu0
  %4632 = vmatpush.bf16.msra.mxu0 0
  %4633 = vmatpush.bf16.msra.mxu0 0
  %4634 = vmatpush.bf16.msra.mxu0 0
  %4635 = vmatpush.bf16.msra.mxu0 0
  %4636 = vmatpush.bf16.msra.mxu0 0
  %4637 = vmatpush.bf16.msra.mxu0 %v4037
  %4638 = vmatpush.bf16.msra.mxu0 %v3323
  %4639 = vmatpush.bf16.msra.mxu0 %v3289
  %4640 = vmatmul.bf16.gmra.mxu0 %v3992
  %v4641 = vpop.f32.mrf.mxu0
  %v4642 = vadd.f32 %v4629, %v4641
  %v4643 = vpop.f32.mrf.mxu0
  %4644 = vdwg.mxu0
  %4645 = vmatpush.bf16.msra.mxu0 %v2984
  %4646 = vmatpush.bf16.msra.mxu0 %v2950
  %4647 = vmatpush.bf16.msra.mxu0 %v2916
  %4648 = vmatpush.bf16.msra.mxu0 %v2882
  %4649 = vmatpush.bf16.msra.mxu0 %v2848
  %4650 = vmatpush.bf16.msra.mxu0 %v2814
  %4651 = vmatpush.bf16.msra.mxu0 %v2780
  %4652 = vmatpush.bf16.msra.mxu0 %v2746
  %4653 = vmatmul.bf16.gmra.mxu0 %v135
  %v4654 = vpop.f32.mrf.mxu0
  %v4655 = vadd.f32 %v791, %v4654
  %v4656 = vpop.f32.mrf.mxu0
  %4657 = vdwg.mxu0
  %4658 = vmatpush.bf16.msra.mxu0 %v3256
  %4659 = vmatpush.bf16.msra.mxu0 %v3222
  %4660 = vmatpush.bf16.msra.mxu0 %v3188
  %4661 = vmatpush.bf16.msra.mxu0 %v3154
  %4662 = vmatpush.bf16.msra.mxu0 %v3120
  %4663 = vmatpush.bf16.msra.mxu0 %v3086
  %4664 = vmatpush.bf16.msra.mxu0 %v3052
  %4665 = vmatpush.bf16.msra.mxu0 %v3018
  %4666 = vmatmul.bf16.gmra.mxu0 %v136
  %v4667 = vpop.f32.mrf.mxu0
  %v4668 = vadd.f32 %v4655, %v4667
  %v4669 = vpop.f32.mrf.mxu0
  %4670 = vdwg.mxu0
  %4671 = vmatpush.bf16.msra.mxu0 0
  %4672 = vmatpush.bf16.msra.mxu0 0
  %4673 = vmatpush.bf16.msra.mxu0 0
  %4674 = vmatpush.bf16.msra.mxu0 0
  %4675 = vmatpush.bf16.msra.mxu0 0
  %4676 = vmatpush.bf16.msra.mxu0 %v4040
  %4677 = vmatpush.bf16.msra.mxu0 %v3324
  %4678 = vmatpush.bf16.msra.mxu0 %v3290
  %4679 = vmatmul.bf16.gmra.mxu0 %v3992
  %v4680 = vpop.f32.mrf.mxu0
  %v4681 = vadd.f32 %v4668, %v4680
  %v4682 = vpop.f32.mrf.mxu0
  %4683 = vdwg.mxu0
  %4684 = vmatpush.bf16.msra.mxu0 %v2985
  %4685 = vmatpush.bf16.msra.mxu0 %v2951
  %4686 = vmatpush.bf16.msra.mxu0 %v2917
  %4687 = vmatpush.bf16.msra.mxu0 %v2883
  %4688 = vmatpush.bf16.msra.mxu0 %v2849
  %4689 = vmatpush.bf16.msra.mxu0 %v2815
  %4690 = vmatpush.bf16.msra.mxu0 %v2781
  %4691 = vmatpush.bf16.msra.mxu0 %v2747
  %4692 = vmatmul.bf16.gmra.mxu0 %v135
  %v4693 = vpop.f32.mrf.mxu0
  %v4694 = vadd.f32 %v792, %v4693
  %v4695 = vpop.f32.mrf.mxu0
  %4696 = vdwg.mxu0
  %4697 = vmatpush.bf16.msra.mxu0 %v3257
  %4698 = vmatpush.bf16.msra.mxu0 %v3223
  %4699 = vmatpush.bf16.msra.mxu0 %v3189
  %4700 = vmatpush.bf16.msra.mxu0 %v3155
  %4701 = vmatpush.bf16.msra.mxu0 %v3121
  %4702 = vmatpush.bf16.msra.mxu0 %v3087
  %4703 = vmatpush.bf16.msra.mxu0 %v3053
  %4704 = vmatpush.bf16.msra.mxu0 %v3019
  %4705 = vmatmul.bf16.gmra.mxu0 %v136
  %v4706 = vpop.f32.mrf.mxu0
  %v4707 = vadd.f32 %v4694, %v4706
  %v4708 = vpop.f32.mrf.mxu0
  %4709 = vdwg.mxu0
  %4710 = vmatpush.bf16.msra.mxu0 0
  %4711 = vmatpush.bf16.msra.mxu0 0
  %4712 = vmatpush.bf16.msra.mxu0 0
  %4713 = vmatpush.bf16.msra.mxu0 0
  %4714 = vmatpush.bf16.msra.mxu0 0
  %4715 = vmatpush.bf16.msra.mxu0 %v4043
  %4716 = vmatpush.bf16.msra.mxu0 %v3325
  %4717 = vmatpush.bf16.msra.mxu0 %v3291
  %4718 = vmatmul.bf16.gmra.mxu0 %v3992
  %v4719 = vpop.f32.mrf.mxu0
  %v4720 = vadd.f32 %v4707, %v4719
  %v4721 = vpop.f32.mrf.mxu0
  %4722 = vdwg.mxu0
  %4723 = vmatpush.bf16.msra.mxu0 %v2986
  %4724 = vmatpush.bf16.msra.mxu0 %v2952
  %4725 = vmatpush.bf16.msra.mxu0 %v2918
  %4726 = vmatpush.bf16.msra.mxu0 %v2884
  %4727 = vmatpush.bf16.msra.mxu0 %v2850
  %4728 = vmatpush.bf16.msra.mxu0 %v2816
  %4729 = vmatpush.bf16.msra.mxu0 %v2782
  %4730 = vmatpush.bf16.msra.mxu0 %v2748
  %4731 = vmatmul.bf16.gmra.mxu0 %v135
  %v4732 = vpop.f32.mrf.mxu0
  %v4733 = vadd.f32 %v793, %v4732
  %v4734 = vpop.f32.mrf.mxu0
  %4735 = vdwg.mxu0
  %4736 = vmatpush.bf16.msra.mxu0 %v3258
  %4737 = vmatpush.bf16.msra.mxu0 %v3224
  %4738 = vmatpush.bf16.msra.mxu0 %v3190
  %4739 = vmatpush.bf16.msra.mxu0 %v3156
  %4740 = vmatpush.bf16.msra.mxu0 %v3122
  %4741 = vmatpush.bf16.msra.mxu0 %v3088
  %4742 = vmatpush.bf16.msra.mxu0 %v3054
  %4743 = vmatpush.bf16.msra.mxu0 %v3020
  %4744 = vmatmul.bf16.gmra.mxu0 %v136
  %v4745 = vpop.f32.mrf.mxu0
  %v4746 = vadd.f32 %v4733, %v4745
  %v4747 = vpop.f32.mrf.mxu0
  %4748 = vdwg.mxu0
  %4749 = vmatpush.bf16.msra.mxu0 0
  %4750 = vmatpush.bf16.msra.mxu0 0
  %4751 = vmatpush.bf16.msra.mxu0 0
  %4752 = vmatpush.bf16.msra.mxu0 0
  %4753 = vmatpush.bf16.msra.mxu0 0
  %4754 = vmatpush.bf16.msra.mxu0 %v4046
  %4755 = vmatpush.bf16.msra.mxu0 %v3326
  %4756 = vmatpush.bf16.msra.mxu0 %v3292
  %4757 = vmatmul.bf16.gmra.mxu0 %v3992
  %v4758 = vpop.f32.mrf.mxu0
  %v4759 = vadd.f32 %v4746, %v4758
  %v4760 = vpop.f32.mrf.mxu0
  %4761 = vdwg.mxu0
  %4762 = vmatpush.bf16.msra.mxu0 %v2987
  %4763 = vmatpush.bf16.msra.mxu0 %v2953
  %4764 = vmatpush.bf16.msra.mxu0 %v2919
  %4765 = vmatpush.bf16.msra.mxu0 %v2885
  %4766 = vmatpush.bf16.msra.mxu0 %v2851
  %4767 = vmatpush.bf16.msra.mxu0 %v2817
  %4768 = vmatpush.bf16.msra.mxu0 %v2783
  %4769 = vmatpush.bf16.msra.mxu0 %v2749
  %4770 = vmatmul.bf16.gmra.mxu0 %v135
  %v4771 = vpop.f32.mrf.mxu0
  %v4772 = vadd.f32 %v794, %v4771
  %v4773 = vpop.f32.mrf.mxu0
  %4774 = vdwg.mxu0
  %4775 = vmatpush.bf16.msra.mxu0 %v3259
  %4776 = vmatpush.bf16.msra.mxu0 %v3225
  %4777 = vmatpush.bf16.msra.mxu0 %v3191
  %4778 = vmatpush.bf16.msra.mxu0 %v3157
  %4779 = vmatpush.bf16.msra.mxu0 %v3123
  %4780 = vmatpush.bf16.msra.mxu0 %v3089
  %4781 = vmatpush.bf16.msra.mxu0 %v3055
  %4782 = vmatpush.bf16.msra.mxu0 %v3021
  %4783 = vmatmul.bf16.gmra.mxu0 %v136
  %v4784 = vpop.f32.mrf.mxu0
  %v4785 = vadd.f32 %v4772, %v4784
  %v4786 = vpop.f32.mrf.mxu0
  %4787 = vdwg.mxu0
  %4788 = vmatpush.bf16.msra.mxu0 0
  %4789 = vmatpush.bf16.msra.mxu0 0
  %4790 = vmatpush.bf16.msra.mxu0 0
  %4791 = vmatpush.bf16.msra.mxu0 0
  %4792 = vmatpush.bf16.msra.mxu0 0
  %4793 = vmatpush.bf16.msra.mxu0 %v4049
  %4794 = vmatpush.bf16.msra.mxu0 %v3327
  %4795 = vmatpush.bf16.msra.mxu0 %v3293
  %4796 = vmatmul.bf16.gmra.mxu0 %v3992
  %v4797 = vpop.f32.mrf.mxu0
  %v4798 = vadd.f32 %v4785, %v4797
  %v4799 = vpop.f32.mrf.mxu0
  %4800 = vdwg.mxu0
  %4801 = vmatpush.bf16.msra.mxu0 %v2988
  %4802 = vmatpush.bf16.msra.mxu0 %v2954
  %4803 = vmatpush.bf16.msra.mxu0 %v2920
  %4804 = vmatpush.bf16.msra.mxu0 %v2886
  %4805 = vmatpush.bf16.msra.mxu0 %v2852
  %4806 = vmatpush.bf16.msra.mxu0 %v2818
  %4807 = vmatpush.bf16.msra.mxu0 %v2784
  %4808 = vmatpush.bf16.msra.mxu0 %v2750
  %4809 = vmatmul.bf16.gmra.mxu0 %v135
  %v4810 = vpop.f32.mrf.mxu0
  %v4811 = vadd.f32 %v795, %v4810
  %v4812 = vpop.f32.mrf.mxu0
  %4813 = vdwg.mxu0
  %4814 = vmatpush.bf16.msra.mxu0 %v3260
  %4815 = vmatpush.bf16.msra.mxu0 %v3226
  %4816 = vmatpush.bf16.msra.mxu0 %v3192
  %4817 = vmatpush.bf16.msra.mxu0 %v3158
  %4818 = vmatpush.bf16.msra.mxu0 %v3124
  %4819 = vmatpush.bf16.msra.mxu0 %v3090
  %4820 = vmatpush.bf16.msra.mxu0 %v3056
  %4821 = vmatpush.bf16.msra.mxu0 %v3022
  %4822 = vmatmul.bf16.gmra.mxu0 %v136
  %v4823 = vpop.f32.mrf.mxu0
  %v4824 = vadd.f32 %v4811, %v4823
  %v4825 = vpop.f32.mrf.mxu0
  %4826 = vdwg.mxu0
  %4827 = vmatpush.bf16.msra.mxu0 0
  %4828 = vmatpush.bf16.msra.mxu0 0
  %4829 = vmatpush.bf16.msra.mxu0 0
  %4830 = vmatpush.bf16.msra.mxu0 0
  %4831 = vmatpush.bf16.msra.mxu0 0
  %4832 = vmatpush.bf16.msra.mxu0 %v4052
  %4833 = vmatpush.bf16.msra.mxu0 %v3328
  %4834 = vmatpush.bf16.msra.mxu0 %v3294
  %4835 = vmatmul.bf16.gmra.mxu0 %v3992
  %v4836 = vpop.f32.mrf.mxu0
  %v4837 = vadd.f32 %v4824, %v4836
  %v4838 = vpop.f32.mrf.mxu0
  %4839 = vdwg.mxu0
  %4840 = vmatpush.bf16.msra.mxu0 %v2989
  %4841 = vmatpush.bf16.msra.mxu0 %v2955
  %4842 = vmatpush.bf16.msra.mxu0 %v2921
  %4843 = vmatpush.bf16.msra.mxu0 %v2887
  %4844 = vmatpush.bf16.msra.mxu0 %v2853
  %4845 = vmatpush.bf16.msra.mxu0 %v2819
  %4846 = vmatpush.bf16.msra.mxu0 %v2785
  %4847 = vmatpush.bf16.msra.mxu0 %v2751
  %4848 = vmatmul.bf16.gmra.mxu0 %v135
  %v4849 = vpop.f32.mrf.mxu0
  %v4850 = vadd.f32 %v796, %v4849
  %v4851 = vpop.f32.mrf.mxu0
  %4852 = vdwg.mxu0
  %4853 = vmatpush.bf16.msra.mxu0 %v3261
  %4854 = vmatpush.bf16.msra.mxu0 %v3227
  %4855 = vmatpush.bf16.msra.mxu0 %v3193
  %4856 = vmatpush.bf16.msra.mxu0 %v3159
  %4857 = vmatpush.bf16.msra.mxu0 %v3125
  %4858 = vmatpush.bf16.msra.mxu0 %v3091
  %4859 = vmatpush.bf16.msra.mxu0 %v3057
  %4860 = vmatpush.bf16.msra.mxu0 %v3023
  %4861 = vmatmul.bf16.gmra.mxu0 %v136
  %v4862 = vpop.f32.mrf.mxu0
  %v4863 = vadd.f32 %v4850, %v4862
  %v4864 = vpop.f32.mrf.mxu0
  %4865 = vdwg.mxu0
  %4866 = vmatpush.bf16.msra.mxu0 0
  %4867 = vmatpush.bf16.msra.mxu0 0
  %4868 = vmatpush.bf16.msra.mxu0 0
  %4869 = vmatpush.bf16.msra.mxu0 0
  %4870 = vmatpush.bf16.msra.mxu0 0
  %4871 = vmatpush.bf16.msra.mxu0 %v4055
  %4872 = vmatpush.bf16.msra.mxu0 %v3329
  %4873 = vmatpush.bf16.msra.mxu0 %v3295
  %4874 = vmatmul.bf16.gmra.mxu0 %v3992
  %v4875 = vpop.f32.mrf.mxu0
  %v4876 = vadd.f32 %v4863, %v4875
  %v4877 = vpop.f32.mrf.mxu0
  %4878 = vdwg.mxu0
  %4879 = vmatpush.bf16.msra.mxu0 %v2990
  %4880 = vmatpush.bf16.msra.mxu0 %v2956
  %4881 = vmatpush.bf16.msra.mxu0 %v2922
  %4882 = vmatpush.bf16.msra.mxu0 %v2888
  %4883 = vmatpush.bf16.msra.mxu0 %v2854
  %4884 = vmatpush.bf16.msra.mxu0 %v2820
  %4885 = vmatpush.bf16.msra.mxu0 %v2786
  %4886 = vmatpush.bf16.msra.mxu0 %v2752
  %4887 = vmatmul.bf16.gmra.mxu0 %v135
  %v4888 = vpop.f32.mrf.mxu0
  %v4889 = vadd.f32 %v797, %v4888
  %v4890 = vpop.f32.mrf.mxu0
  %4891 = vdwg.mxu0
  %4892 = vmatpush.bf16.msra.mxu0 %v3262
  %4893 = vmatpush.bf16.msra.mxu0 %v3228
  %4894 = vmatpush.bf16.msra.mxu0 %v3194
  %4895 = vmatpush.bf16.msra.mxu0 %v3160
  %4896 = vmatpush.bf16.msra.mxu0 %v3126
  %4897 = vmatpush.bf16.msra.mxu0 %v3092
  %4898 = vmatpush.bf16.msra.mxu0 %v3058
  %4899 = vmatpush.bf16.msra.mxu0 %v3024
  %4900 = vmatmul.bf16.gmra.mxu0 %v136
  %v4901 = vpop.f32.mrf.mxu0
  %v4902 = vadd.f32 %v4889, %v4901
  %v4903 = vpop.f32.mrf.mxu0
  %4904 = vdwg.mxu0
  %4905 = vmatpush.bf16.msra.mxu0 0
  %4906 = vmatpush.bf16.msra.mxu0 0
  %4907 = vmatpush.bf16.msra.mxu0 0
  %4908 = vmatpush.bf16.msra.mxu0 0
  %4909 = vmatpush.bf16.msra.mxu0 0
  %4910 = vmatpush.bf16.msra.mxu0 %v4058
  %4911 = vmatpush.bf16.msra.mxu0 %v3330
  %4912 = vmatpush.bf16.msra.mxu0 %v3296
  %4913 = vmatmul.bf16.gmra.mxu0 %v3992
  %v4914 = vpop.f32.mrf.mxu0
  %v4915 = vadd.f32 %v4902, %v4914
  %v4916 = vpop.f32.mrf.mxu0
  %4917 = vdwg.mxu0
  %4918 = vmatpush.bf16.msra.mxu0 %v2991
  %4919 = vmatpush.bf16.msra.mxu0 %v2957
  %4920 = vmatpush.bf16.msra.mxu0 %v2923
  %4921 = vmatpush.bf16.msra.mxu0 %v2889
  %4922 = vmatpush.bf16.msra.mxu0 %v2855
  %4923 = vmatpush.bf16.msra.mxu0 %v2821
  %4924 = vmatpush.bf16.msra.mxu0 %v2787
  %4925 = vmatpush.bf16.msra.mxu0 %v2753
  %4926 = vmatmul.bf16.gmra.mxu0 %v135
  %v4927 = vpop.f32.mrf.mxu0
  %v4928 = vadd.f32 %v798, %v4927
  %v4929 = vpop.f32.mrf.mxu0
  %4930 = vdwg.mxu0
  %4931 = vmatpush.bf16.msra.mxu0 %v3263
  %4932 = vmatpush.bf16.msra.mxu0 %v3229
  %4933 = vmatpush.bf16.msra.mxu0 %v3195
  %4934 = vmatpush.bf16.msra.mxu0 %v3161
  %4935 = vmatpush.bf16.msra.mxu0 %v3127
  %4936 = vmatpush.bf16.msra.mxu0 %v3093
  %4937 = vmatpush.bf16.msra.mxu0 %v3059
  %4938 = vmatpush.bf16.msra.mxu0 %v3025
  %4939 = vmatmul.bf16.gmra.mxu0 %v136
  %v4940 = vpop.f32.mrf.mxu0
  %v4941 = vadd.f32 %v4928, %v4940
  %v4942 = vpop.f32.mrf.mxu0
  %4943 = vdwg.mxu0
  %4944 = vmatpush.bf16.msra.mxu0 0
  %4945 = vmatpush.bf16.msra.mxu0 0
  %4946 = vmatpush.bf16.msra.mxu0 0
  %4947 = vmatpush.bf16.msra.mxu0 0
  %4948 = vmatpush.bf16.msra.mxu0 0
  %4949 = vmatpush.bf16.msra.mxu0 %v4061
  %4950 = vmatpush.bf16.msra.mxu0 %v3331
  %4951 = vmatpush.bf16.msra.mxu0 %v3297
  %4952 = vmatmul.bf16.gmra.mxu0 %v3992
  %v4953 = vpop.f32.mrf.mxu0
  %v4954 = vadd.f32 %v4941, %v4953
  %v4955 = vpop.f32.mrf.mxu0
  %4956 = vdwg.mxu0
  %4957 = vmatpush.bf16.msra.mxu0 %v2992
  %4958 = vmatpush.bf16.msra.mxu0 %v2958
  %4959 = vmatpush.bf16.msra.mxu0 %v2924
  %4960 = vmatpush.bf16.msra.mxu0 %v2890
  %4961 = vmatpush.bf16.msra.mxu0 %v2856
  %4962 = vmatpush.bf16.msra.mxu0 %v2822
  %4963 = vmatpush.bf16.msra.mxu0 %v2788
  %4964 = vmatpush.bf16.msra.mxu0 %v2754
  %4965 = vmatmul.bf16.gmra.mxu0 %v135
  %v4966 = vpop.f32.mrf.mxu0
  %v4967 = vadd.f32 %v799, %v4966
  %v4968 = vpop.f32.mrf.mxu0
  %4969 = vdwg.mxu0
  %4970 = vmatpush.bf16.msra.mxu0 %v3264
  %4971 = vmatpush.bf16.msra.mxu0 %v3230
  %4972 = vmatpush.bf16.msra.mxu0 %v3196
  %4973 = vmatpush.bf16.msra.mxu0 %v3162
  %4974 = vmatpush.bf16.msra.mxu0 %v3128
  %4975 = vmatpush.bf16.msra.mxu0 %v3094
  %4976 = vmatpush.bf16.msra.mxu0 %v3060
  %4977 = vmatpush.bf16.msra.mxu0 %v3026
  %4978 = vmatmul.bf16.gmra.mxu0 %v136
  %v4979 = vpop.f32.mrf.mxu0
  %v4980 = vadd.f32 %v4967, %v4979
  %v4981 = vpop.f32.mrf.mxu0
  %4982 = vdwg.mxu0
  %4983 = vmatpush.bf16.msra.mxu0 0
  %4984 = vmatpush.bf16.msra.mxu0 0
  %4985 = vmatpush.bf16.msra.mxu0 0
  %4986 = vmatpush.bf16.msra.mxu0 0
  %4987 = vmatpush.bf16.msra.mxu0 0
  %4988 = vmatpush.bf16.msra.mxu0 %v4064
  %4989 = vmatpush.bf16.msra.mxu0 %v3332
  %4990 = vmatpush.bf16.msra.mxu0 %v3298
  %4991 = vmatmul.bf16.gmra.mxu0 %v3992
  %v4992 = vpop.f32.mrf.mxu0
  %v4993 = vadd.f32 %v4980, %v4992
  %v4994 = vpop.f32.mrf.mxu0
  %4995 = vdwg.mxu0
  %4996 = vmatpush.bf16.msra.mxu0 %v2993
  %4997 = vmatpush.bf16.msra.mxu0 %v2959
  %4998 = vmatpush.bf16.msra.mxu0 %v2925
  %4999 = vmatpush.bf16.msra.mxu0 %v2891
  %5000 = vmatpush.bf16.msra.mxu0 %v2857
  %5001 = vmatpush.bf16.msra.mxu0 %v2823
  %5002 = vmatpush.bf16.msra.mxu0 %v2789
  %5003 = vmatpush.bf16.msra.mxu0 %v2755
  %5004 = vmatmul.bf16.gmra.mxu0 %v135
  %v5005 = vpop.f32.mrf.mxu0
  %v5006 = vadd.f32 %v800, %v5005
  %v5007 = vpop.f32.mrf.mxu0
  %5008 = vdwg.mxu0
  %5009 = vmatpush.bf16.msra.mxu0 %v3265
  %5010 = vmatpush.bf16.msra.mxu0 %v3231
  %5011 = vmatpush.bf16.msra.mxu0 %v3197
  %5012 = vmatpush.bf16.msra.mxu0 %v3163
  %5013 = vmatpush.bf16.msra.mxu0 %v3129
  %5014 = vmatpush.bf16.msra.mxu0 %v3095
  %5015 = vmatpush.bf16.msra.mxu0 %v3061
  %5016 = vmatpush.bf16.msra.mxu0 %v3027
  %5017 = vmatmul.bf16.gmra.mxu0 %v136
  %v5018 = vpop.f32.mrf.mxu0
  %v5019 = vadd.f32 %v5006, %v5018
  %v5020 = vpop.f32.mrf.mxu0
  %5021 = vdwg.mxu0
  %5022 = vmatpush.bf16.msra.mxu0 0
  %5023 = vmatpush.bf16.msra.mxu0 0
  %5024 = vmatpush.bf16.msra.mxu0 0
  %5025 = vmatpush.bf16.msra.mxu0 0
  %5026 = vmatpush.bf16.msra.mxu0 0
  %5027 = vmatpush.bf16.msra.mxu0 %v4067
  %5028 = vmatpush.bf16.msra.mxu0 %v3333
  %5029 = vmatpush.bf16.msra.mxu0 %v3299
  %5030 = vmatmul.bf16.gmra.mxu0 %v3992
  %v5031 = vpop.f32.mrf.mxu0
  %v5032 = vadd.f32 %v5019, %v5031
  %v5033 = vpop.f32.mrf.mxu0
  %5034 = vdwg.mxu0
  %5035 = vmatpush.bf16.msra.mxu0 %v2994
  %5036 = vmatpush.bf16.msra.mxu0 %v2960
  %5037 = vmatpush.bf16.msra.mxu0 %v2926
  %5038 = vmatpush.bf16.msra.mxu0 %v2892
  %5039 = vmatpush.bf16.msra.mxu0 %v2858
  %5040 = vmatpush.bf16.msra.mxu0 %v2824
  %5041 = vmatpush.bf16.msra.mxu0 %v2790
  %5042 = vmatpush.bf16.msra.mxu0 %v2756
  %5043 = vmatmul.bf16.gmra.mxu0 %v135
  %v5044 = vpop.f32.mrf.mxu0
  %v5045 = vadd.f32 %v801, %v5044
  %v5046 = vpop.f32.mrf.mxu0
  %5047 = vdwg.mxu0
  %5048 = vmatpush.bf16.msra.mxu0 %v3266
  %5049 = vmatpush.bf16.msra.mxu0 %v3232
  %5050 = vmatpush.bf16.msra.mxu0 %v3198
  %5051 = vmatpush.bf16.msra.mxu0 %v3164
  %5052 = vmatpush.bf16.msra.mxu0 %v3130
  %5053 = vmatpush.bf16.msra.mxu0 %v3096
  %5054 = vmatpush.bf16.msra.mxu0 %v3062
  %5055 = vmatpush.bf16.msra.mxu0 %v3028
  %5056 = vmatmul.bf16.gmra.mxu0 %v136
  %v5057 = vpop.f32.mrf.mxu0
  %v5058 = vadd.f32 %v5045, %v5057
  %v5059 = vpop.f32.mrf.mxu0
  %5060 = vdwg.mxu0
  %5061 = vmatpush.bf16.msra.mxu0 0
  %5062 = vmatpush.bf16.msra.mxu0 0
  %5063 = vmatpush.bf16.msra.mxu0 0
  %5064 = vmatpush.bf16.msra.mxu0 0
  %5065 = vmatpush.bf16.msra.mxu0 0
  %5066 = vmatpush.bf16.msra.mxu0 %v4070
  %5067 = vmatpush.bf16.msra.mxu0 %v3334
  %5068 = vmatpush.bf16.msra.mxu0 %v3300
  %5069 = vmatmul.bf16.gmra.mxu0 %v3992
  %v5070 = vpop.f32.mrf.mxu0
  %v5071 = vadd.f32 %v5058, %v5070
  %v5072 = vpop.f32.mrf.mxu0
  %5073 = vdwg.mxu0
  %5074 = vmatpush.bf16.msra.mxu0 %v2995
  %5075 = vmatpush.bf16.msra.mxu0 %v2961
  %5076 = vmatpush.bf16.msra.mxu0 %v2927
  %5077 = vmatpush.bf16.msra.mxu0 %v2893
  %5078 = vmatpush.bf16.msra.mxu0 %v2859
  %5079 = vmatpush.bf16.msra.mxu0 %v2825
  %5080 = vmatpush.bf16.msra.mxu0 %v2791
  %5081 = vmatpush.bf16.msra.mxu0 %v2757
  %5082 = vmatmul.bf16.gmra.mxu0 %v135
  %v5083 = vpop.f32.mrf.mxu0
  %v5084 = vadd.f32 %v802, %v5083
  %v5085 = vpop.f32.mrf.mxu0
  %5086 = vdwg.mxu0
  %5087 = vmatpush.bf16.msra.mxu0 %v3267
  %5088 = vmatpush.bf16.msra.mxu0 %v3233
  %5089 = vmatpush.bf16.msra.mxu0 %v3199
  %5090 = vmatpush.bf16.msra.mxu0 %v3165
  %5091 = vmatpush.bf16.msra.mxu0 %v3131
  %5092 = vmatpush.bf16.msra.mxu0 %v3097
  %5093 = vmatpush.bf16.msra.mxu0 %v3063
  %5094 = vmatpush.bf16.msra.mxu0 %v3029
  %5095 = vmatmul.bf16.gmra.mxu0 %v136
  %v5096 = vpop.f32.mrf.mxu0
  %v5097 = vadd.f32 %v5084, %v5096
  %v5098 = vpop.f32.mrf.mxu0
  %5099 = vdwg.mxu0
  %5100 = vmatpush.bf16.msra.mxu0 0
  %5101 = vmatpush.bf16.msra.mxu0 0
  %5102 = vmatpush.bf16.msra.mxu0 0
  %5103 = vmatpush.bf16.msra.mxu0 0
  %5104 = vmatpush.bf16.msra.mxu0 0
  %5105 = vmatpush.bf16.msra.mxu0 %v4073
  %5106 = vmatpush.bf16.msra.mxu0 %v3335
  %5107 = vmatpush.bf16.msra.mxu0 %v3301
  %5108 = vmatmul.bf16.gmra.mxu0 %v3992
  %v5109 = vpop.f32.mrf.mxu0
  %v5110 = vadd.f32 %v5097, %v5109
  %v5111 = vpop.f32.mrf.mxu0
  %5112 = vdwg.mxu0
  %5113 = vmatpush.bf16.msra.mxu0 %v2996
  %5114 = vmatpush.bf16.msra.mxu0 %v2962
  %5115 = vmatpush.bf16.msra.mxu0 %v2928
  %5116 = vmatpush.bf16.msra.mxu0 %v2894
  %5117 = vmatpush.bf16.msra.mxu0 %v2860
  %5118 = vmatpush.bf16.msra.mxu0 %v2826
  %5119 = vmatpush.bf16.msra.mxu0 %v2792
  %5120 = vmatpush.bf16.msra.mxu0 %v2758
  %5121 = vmatmul.bf16.gmra.mxu0 %v135
  %v5122 = vpop.f32.mrf.mxu0
  %v5123 = vadd.f32 %v803, %v5122
  %v5124 = vpop.f32.mrf.mxu0
  %5125 = vdwg.mxu0
  %5126 = vmatpush.bf16.msra.mxu0 %v3268
  %5127 = vmatpush.bf16.msra.mxu0 %v3234
  %5128 = vmatpush.bf16.msra.mxu0 %v3200
  %5129 = vmatpush.bf16.msra.mxu0 %v3166
  %5130 = vmatpush.bf16.msra.mxu0 %v3132
  %5131 = vmatpush.bf16.msra.mxu0 %v3098
  %5132 = vmatpush.bf16.msra.mxu0 %v3064
  %5133 = vmatpush.bf16.msra.mxu0 %v3030
  %5134 = vmatmul.bf16.gmra.mxu0 %v136
  %v5135 = vpop.f32.mrf.mxu0
  %v5136 = vadd.f32 %v5123, %v5135
  %v5137 = vpop.f32.mrf.mxu0
  %5138 = vdwg.mxu0
  %5139 = vmatpush.bf16.msra.mxu0 0
  %5140 = vmatpush.bf16.msra.mxu0 0
  %5141 = vmatpush.bf16.msra.mxu0 0
  %5142 = vmatpush.bf16.msra.mxu0 0
  %5143 = vmatpush.bf16.msra.mxu0 0
  %5144 = vmatpush.bf16.msra.mxu0 %v4076
  %5145 = vmatpush.bf16.msra.mxu0 %v3336
  %5146 = vmatpush.bf16.msra.mxu0 %v3302
  %5147 = vmatmul.bf16.gmra.mxu0 %v3992
  %v5148 = vpop.f32.mrf.mxu0
  %v5149 = vadd.f32 %v5136, %v5148
  %v5150 = vpop.f32.mrf.mxu0
  %5151 = vdwg.mxu0
  %5152 = vmatpush.bf16.msra.mxu0 %v2997
  %5153 = vmatpush.bf16.msra.mxu0 %v2963
  %5154 = vmatpush.bf16.msra.mxu0 %v2929
  %5155 = vmatpush.bf16.msra.mxu0 %v2895
  %5156 = vmatpush.bf16.msra.mxu0 %v2861
  %5157 = vmatpush.bf16.msra.mxu0 %v2827
  %5158 = vmatpush.bf16.msra.mxu0 %v2793
  %5159 = vmatpush.bf16.msra.mxu0 %v2759
  %5160 = vmatmul.bf16.gmra.mxu0 %v135
  %v5161 = vpop.f32.mrf.mxu0
  %v5162 = vadd.f32 %v804, %v5161
  %v5163 = vpop.f32.mrf.mxu0
  %5164 = vdwg.mxu0
  %5165 = vmatpush.bf16.msra.mxu0 %v3269
  %5166 = vmatpush.bf16.msra.mxu0 %v3235
  %5167 = vmatpush.bf16.msra.mxu0 %v3201
  %5168 = vmatpush.bf16.msra.mxu0 %v3167
  %5169 = vmatpush.bf16.msra.mxu0 %v3133
  %5170 = vmatpush.bf16.msra.mxu0 %v3099
  %5171 = vmatpush.bf16.msra.mxu0 %v3065
  %5172 = vmatpush.bf16.msra.mxu0 %v3031
  %5173 = vmatmul.bf16.gmra.mxu0 %v136
  %v5174 = vpop.f32.mrf.mxu0
  %v5175 = vadd.f32 %v5162, %v5174
  %v5176 = vpop.f32.mrf.mxu0
  %5177 = vdwg.mxu0
  %5178 = vmatpush.bf16.msra.mxu0 0
  %5179 = vmatpush.bf16.msra.mxu0 0
  %5180 = vmatpush.bf16.msra.mxu0 0
  %5181 = vmatpush.bf16.msra.mxu0 0
  %5182 = vmatpush.bf16.msra.mxu0 0
  %5183 = vmatpush.bf16.msra.mxu0 %v4079
  %5184 = vmatpush.bf16.msra.mxu0 %v3337
  %5185 = vmatpush.bf16.msra.mxu0 %v3303
  %5186 = vmatmul.bf16.gmra.mxu0 %v3992
  %v5187 = vpop.f32.mrf.mxu0
  %v5188 = vadd.f32 %v5175, %v5187
  %v5189 = vpop.f32.mrf.mxu0
  %5190 = vdwg.mxu0
  %5191 = vmatpush.bf16.msra.mxu0 %v2998
  %5192 = vmatpush.bf16.msra.mxu0 %v2964
  %5193 = vmatpush.bf16.msra.mxu0 %v2930
  %5194 = vmatpush.bf16.msra.mxu0 %v2896
  %5195 = vmatpush.bf16.msra.mxu0 %v2862
  %5196 = vmatpush.bf16.msra.mxu0 %v2828
  %5197 = vmatpush.bf16.msra.mxu0 %v2794
  %5198 = vmatpush.bf16.msra.mxu0 %v2760
  %5199 = vmatmul.bf16.gmra.mxu0 %v135
  %v5200 = vpop.f32.mrf.mxu0
  %v5201 = vadd.f32 %v805, %v5200
  %v5202 = vpop.f32.mrf.mxu0
  %5203 = vdwg.mxu0
  %5204 = vmatpush.bf16.msra.mxu0 %v3270
  %5205 = vmatpush.bf16.msra.mxu0 %v3236
  %5206 = vmatpush.bf16.msra.mxu0 %v3202
  %5207 = vmatpush.bf16.msra.mxu0 %v3168
  %5208 = vmatpush.bf16.msra.mxu0 %v3134
  %5209 = vmatpush.bf16.msra.mxu0 %v3100
  %5210 = vmatpush.bf16.msra.mxu0 %v3066
  %5211 = vmatpush.bf16.msra.mxu0 %v3032
  %5212 = vmatmul.bf16.gmra.mxu0 %v136
  %v5213 = vpop.f32.mrf.mxu0
  %v5214 = vadd.f32 %v5201, %v5213
  %v5215 = vpop.f32.mrf.mxu0
  %5216 = vdwg.mxu0
  %5217 = vmatpush.bf16.msra.mxu0 0
  %5218 = vmatpush.bf16.msra.mxu0 0
  %5219 = vmatpush.bf16.msra.mxu0 0
  %5220 = vmatpush.bf16.msra.mxu0 0
  %5221 = vmatpush.bf16.msra.mxu0 0
  %5222 = vmatpush.bf16.msra.mxu0 %v4082
  %5223 = vmatpush.bf16.msra.mxu0 %v3338
  %5224 = vmatpush.bf16.msra.mxu0 %v3304
  %5225 = vmatmul.bf16.gmra.mxu0 %v3992
  %v5226 = vpop.f32.mrf.mxu0
  %v5227 = vadd.f32 %v5214, %v5226
  %v5228 = vpop.f32.mrf.mxu0
  %5229 = vdwg.mxu0
  %5230 = vmatpush.bf16.msra.mxu0 %v2999
  %5231 = vmatpush.bf16.msra.mxu0 %v2965
  %5232 = vmatpush.bf16.msra.mxu0 %v2931
  %5233 = vmatpush.bf16.msra.mxu0 %v2897
  %5234 = vmatpush.bf16.msra.mxu0 %v2863
  %5235 = vmatpush.bf16.msra.mxu0 %v2829
  %5236 = vmatpush.bf16.msra.mxu0 %v2795
  %5237 = vmatpush.bf16.msra.mxu0 %v2761
  %5238 = vmatmul.bf16.gmra.mxu0 %v135
  %v5239 = vpop.f32.mrf.mxu0
  %v5240 = vadd.f32 %v806, %v5239
  %v5241 = vpop.f32.mrf.mxu0
  %5242 = vdwg.mxu0
  %5243 = vmatpush.bf16.msra.mxu0 %v3271
  %5244 = vmatpush.bf16.msra.mxu0 %v3237
  %5245 = vmatpush.bf16.msra.mxu0 %v3203
  %5246 = vmatpush.bf16.msra.mxu0 %v3169
  %5247 = vmatpush.bf16.msra.mxu0 %v3135
  %5248 = vmatpush.bf16.msra.mxu0 %v3101
  %5249 = vmatpush.bf16.msra.mxu0 %v3067
  %5250 = vmatpush.bf16.msra.mxu0 %v3033
  %5251 = vmatmul.bf16.gmra.mxu0 %v136
  %v5252 = vpop.f32.mrf.mxu0
  %v5253 = vadd.f32 %v5240, %v5252
  %v5254 = vpop.f32.mrf.mxu0
  %5255 = vdwg.mxu0
  %5256 = vmatpush.bf16.msra.mxu0 0
  %5257 = vmatpush.bf16.msra.mxu0 0
  %5258 = vmatpush.bf16.msra.mxu0 0
  %5259 = vmatpush.bf16.msra.mxu0 0
  %5260 = vmatpush.bf16.msra.mxu0 0
  %5261 = vmatpush.bf16.msra.mxu0 %v4085
  %5262 = vmatpush.bf16.msra.mxu0 %v3339
  %5263 = vmatpush.bf16.msra.mxu0 %v3305
  %5264 = vmatmul.bf16.gmra.mxu0 %v3992
  %v5265 = vpop.f32.mrf.mxu0
  %v5266 = vadd.f32 %v5253, %v5265
  %v5267 = vpop.f32.mrf.mxu0
  %5268 = vdwg.mxu0
  %5269 = vmatpush.bf16.msra.mxu0 %v3000
  %5270 = vmatpush.bf16.msra.mxu0 %v2966
  %5271 = vmatpush.bf16.msra.mxu0 %v2932
  %5272 = vmatpush.bf16.msra.mxu0 %v2898
  %5273 = vmatpush.bf16.msra.mxu0 %v2864
  %5274 = vmatpush.bf16.msra.mxu0 %v2830
  %5275 = vmatpush.bf16.msra.mxu0 %v2796
  %5276 = vmatpush.bf16.msra.mxu0 %v2762
  %5277 = vmatmul.bf16.gmra.mxu0 %v135
  %v5278 = vpop.f32.mrf.mxu0
  %v5279 = vadd.f32 %v807, %v5278
  %v5280 = vpop.f32.mrf.mxu0
  %5281 = vdwg.mxu0
  %5282 = vmatpush.bf16.msra.mxu0 %v3272
  %5283 = vmatpush.bf16.msra.mxu0 %v3238
  %5284 = vmatpush.bf16.msra.mxu0 %v3204
  %5285 = vmatpush.bf16.msra.mxu0 %v3170
  %5286 = vmatpush.bf16.msra.mxu0 %v3136
  %5287 = vmatpush.bf16.msra.mxu0 %v3102
  %5288 = vmatpush.bf16.msra.mxu0 %v3068
  %5289 = vmatpush.bf16.msra.mxu0 %v3034
  %5290 = vmatmul.bf16.gmra.mxu0 %v136
  %v5291 = vpop.f32.mrf.mxu0
  %v5292 = vadd.f32 %v5279, %v5291
  %v5293 = vpop.f32.mrf.mxu0
  %5294 = vdwg.mxu0
  %5295 = vmatpush.bf16.msra.mxu0 0
  %5296 = vmatpush.bf16.msra.mxu0 0
  %5297 = vmatpush.bf16.msra.mxu0 0
  %5298 = vmatpush.bf16.msra.mxu0 0
  %5299 = vmatpush.bf16.msra.mxu0 0
  %5300 = vmatpush.bf16.msra.mxu0 %v4088
  %5301 = vmatpush.bf16.msra.mxu0 %v3340
  %5302 = vmatpush.bf16.msra.mxu0 %v3306
  %5303 = vmatmul.bf16.gmra.mxu0 %v3992
  %v5304 = vpop.f32.mrf.mxu0
  %v5305 = vadd.f32 %v5292, %v5304
  %v5306 = vpop.f32.mrf.mxu0
  %5307 = vdwg.mxu0
  %5308 = vmatpush.bf16.msra.mxu0 %v3001
  %5309 = vmatpush.bf16.msra.mxu0 %v2967
  %5310 = vmatpush.bf16.msra.mxu0 %v2933
  %5311 = vmatpush.bf16.msra.mxu0 %v2899
  %5312 = vmatpush.bf16.msra.mxu0 %v2865
  %5313 = vmatpush.bf16.msra.mxu0 %v2831
  %5314 = vmatpush.bf16.msra.mxu0 %v2797
  %5315 = vmatpush.bf16.msra.mxu0 %v2763
  %5316 = vmatmul.bf16.gmra.mxu0 %v135
  %v5317 = vpop.f32.mrf.mxu0
  %v5318 = vadd.f32 %v808, %v5317
  %v5319 = vpop.f32.mrf.mxu0
  %5320 = vdwg.mxu0
  %5321 = vmatpush.bf16.msra.mxu0 %v3273
  %5322 = vmatpush.bf16.msra.mxu0 %v3239
  %5323 = vmatpush.bf16.msra.mxu0 %v3205
  %5324 = vmatpush.bf16.msra.mxu0 %v3171
  %5325 = vmatpush.bf16.msra.mxu0 %v3137
  %5326 = vmatpush.bf16.msra.mxu0 %v3103
  %5327 = vmatpush.bf16.msra.mxu0 %v3069
  %5328 = vmatpush.bf16.msra.mxu0 %v3035
  %5329 = vmatmul.bf16.gmra.mxu0 %v136
  %v5330 = vpop.f32.mrf.mxu0
  %v5331 = vadd.f32 %v5318, %v5330
  %v5332 = vpop.f32.mrf.mxu0
  %5333 = vdwg.mxu0
  %5334 = vmatpush.bf16.msra.mxu0 0
  %5335 = vmatpush.bf16.msra.mxu0 0
  %5336 = vmatpush.bf16.msra.mxu0 0
  %5337 = vmatpush.bf16.msra.mxu0 0
  %5338 = vmatpush.bf16.msra.mxu0 0
  %5339 = vmatpush.bf16.msra.mxu0 %v4091
  %5340 = vmatpush.bf16.msra.mxu0 %v3341
  %5341 = vmatpush.bf16.msra.mxu0 %v3307
  %5342 = vmatmul.bf16.gmra.mxu0 %v3992
  %v5343 = vpop.f32.mrf.mxu0
  %v5344 = vadd.f32 %v5331, %v5343
  %v5345 = vpop.f32.mrf.mxu0
  %5346 = vdwg.mxu0
  %5347 = vmatpush.bf16.msra.mxu0 %v3002
  %5348 = vmatpush.bf16.msra.mxu0 %v2968
  %5349 = vmatpush.bf16.msra.mxu0 %v2934
  %5350 = vmatpush.bf16.msra.mxu0 %v2900
  %5351 = vmatpush.bf16.msra.mxu0 %v2866
  %5352 = vmatpush.bf16.msra.mxu0 %v2832
  %5353 = vmatpush.bf16.msra.mxu0 %v2798
  %5354 = vmatpush.bf16.msra.mxu0 %v2764
  %5355 = vmatmul.bf16.gmra.mxu0 %v135
  %v5356 = vpop.f32.mrf.mxu0
  %v5357 = vadd.f32 %v809, %v5356
  %v5358 = vpop.f32.mrf.mxu0
  %5359 = vdwg.mxu0
  %5360 = vmatpush.bf16.msra.mxu0 %v3274
  %5361 = vmatpush.bf16.msra.mxu0 %v3240
  %5362 = vmatpush.bf16.msra.mxu0 %v3206
  %5363 = vmatpush.bf16.msra.mxu0 %v3172
  %5364 = vmatpush.bf16.msra.mxu0 %v3138
  %5365 = vmatpush.bf16.msra.mxu0 %v3104
  %5366 = vmatpush.bf16.msra.mxu0 %v3070
  %5367 = vmatpush.bf16.msra.mxu0 %v3036
  %5368 = vmatmul.bf16.gmra.mxu0 %v136
  %v5369 = vpop.f32.mrf.mxu0
  %v5370 = vadd.f32 %v5357, %v5369
  %v5371 = vpop.f32.mrf.mxu0
  %5372 = vdwg.mxu0
  %5373 = vmatpush.bf16.msra.mxu0 0
  %5374 = vmatpush.bf16.msra.mxu0 0
  %5375 = vmatpush.bf16.msra.mxu0 0
  %5376 = vmatpush.bf16.msra.mxu0 0
  %5377 = vmatpush.bf16.msra.mxu0 0
  %5378 = vmatpush.bf16.msra.mxu0 %v4094
  %5379 = vmatpush.bf16.msra.mxu0 %v3342
  %5380 = vmatpush.bf16.msra.mxu0 %v3308
  %5381 = vmatmul.bf16.gmra.mxu0 %v3992
  %v5382 = vpop.f32.mrf.mxu0
  %v5383 = vadd.f32 %v5370, %v5382
  %v5384 = vpop.f32.mrf.mxu0
  %5385 = vdwg.mxu0
  %5386 = vmatpush.bf16.msra.mxu0 %v3003
  %5387 = vmatpush.bf16.msra.mxu0 %v2969
  %5388 = vmatpush.bf16.msra.mxu0 %v2935
  %5389 = vmatpush.bf16.msra.mxu0 %v2901
  %5390 = vmatpush.bf16.msra.mxu0 %v2867
  %5391 = vmatpush.bf16.msra.mxu0 %v2833
  %5392 = vmatpush.bf16.msra.mxu0 %v2799
  %5393 = vmatpush.bf16.msra.mxu0 %v2765
  %5394 = vmatmul.bf16.gmra.mxu0 %v135
  %v5395 = vpop.f32.mrf.mxu0
  %v5396 = vadd.f32 %v810, %v5395
  %v5397 = vpop.f32.mrf.mxu0
  %5398 = vdwg.mxu0
  %5399 = vmatpush.bf16.msra.mxu0 %v3275
  %5400 = vmatpush.bf16.msra.mxu0 %v3241
  %5401 = vmatpush.bf16.msra.mxu0 %v3207
  %5402 = vmatpush.bf16.msra.mxu0 %v3173
  %5403 = vmatpush.bf16.msra.mxu0 %v3139
  %5404 = vmatpush.bf16.msra.mxu0 %v3105
  %5405 = vmatpush.bf16.msra.mxu0 %v3071
  %5406 = vmatpush.bf16.msra.mxu0 %v3037
  %5407 = vmatmul.bf16.gmra.mxu0 %v136
  %v5408 = vpop.f32.mrf.mxu0
  %v5409 = vadd.f32 %v5396, %v5408
  %v5410 = vpop.f32.mrf.mxu0
  %5411 = vdwg.mxu0
  %5412 = vmatpush.bf16.msra.mxu0 0
  %5413 = vmatpush.bf16.msra.mxu0 0
  %5414 = vmatpush.bf16.msra.mxu0 0
  %5415 = vmatpush.bf16.msra.mxu0 0
  %5416 = vmatpush.bf16.msra.mxu0 0
  %5417 = vmatpush.bf16.msra.mxu0 %v4097
  %5418 = vmatpush.bf16.msra.mxu0 %v3343
  %5419 = vmatpush.bf16.msra.mxu0 %v3309
  %5420 = vmatmul.bf16.gmra.mxu0 %v3992
  %v5421 = vpop.f32.mrf.mxu0
  %v5422 = vadd.f32 %v5409, %v5421
  %v5423 = vpop.f32.mrf.mxu0
  %5424 = vdwg.mxu0
  %v5425 = vmax.f32 %v4135, 0.0
  %v5426 = vmax.f32 %v4174, 0.0
  %v5427 = vmax.f32 %v4213, 0.0
  %v5428 = vmax.f32 %v4252, 0.0
  %v5429 = vmax.f32 %v4291, 0.0
  %v5430 = vmax.f32 %v4330, 0.0
  %v5431 = vmax.f32 %v4369, 0.0
  %v5432 = vmax.f32 %v4408, 0.0
  %v5433 = vmax.f32 %v4447, 0.0
  %v5434 = vmax.f32 %v4486, 0.0
  %v5435 = vmax.f32 %v4525, 0.0
  %v5436 = vmax.f32 %v4564, 0.0
  %v5437 = vmax.f32 %v4603, 0.0
  %v5438 = vmax.f32 %v4642, 0.0
  %v5439 = vmax.f32 %v4681, 0.0
  %v5440 = vmax.f32 %v4720, 0.0
  %v5441 = vmax.f32 %v4759, 0.0
  %v5442 = vmax.f32 %v4798, 0.0
  %v5443 = vmax.f32 %v4837, 0.0
  %v5444 = vmax.f32 %v4876, 0.0
  %v5445 = vmax.f32 %v4915, 0.0
  %v5446 = vmax.f32 %v4954, 0.0
  %v5447 = vmax.f32 %v4993, 0.0
  %v5448 = vmax.f32 %v5032, 0.0
  %v5449 = vmax.f32 %v5071, 0.0
  %v5450 = vmax.f32 %v5110, 0.0
  %v5451 = vmax.f32 %v5149, 0.0
  %v5452 = vmax.f32 %v5188, 0.0
  %v5453 = vmax.f32 %v5227, 0.0
  %v5454 = vmax.f32 %v5266, 0.0
  %v5455 = vmax.f32 %v5305, 0.0
  %v5456 = vmax.f32 %v5344, 0.0
  %v5457 = vmax.f32 %v5383, 0.0
  %v5458 = vmax.f32 %v5422, 0.0
  %v5459 = vpack.c.bf16 %v5425, %v5425
  %v5460 = vpack.c.bf16 %v5426, %v5426
  %v5461 = vpack.c.bf16 %v5427, %v5427
  %v5462 = vpack.c.bf16 %v5428, %v5428
  %v5463 = vpack.c.bf16 %v5429, %v5429
  %v5464 = vpack.c.bf16 %v5430, %v5430
  %v5465 = vpack.c.bf16 %v5431, %v5431
  %v5466 = vpack.c.bf16 %v5432, %v5432
  %v5467 = vpack.c.bf16 %v5433, %v5433
  %v5468 = vpack.c.bf16 %v5434, %v5434
  %v5469 = vpack.c.bf16 %v5435, %v5435
  %v5470 = vpack.c.bf16 %v5436, %v5436
  %v5471 = vpack.c.bf16 %v5437, %v5437
  %v5472 = vpack.c.bf16 %v5438, %v5438
  %v5473 = vpack.c.bf16 %v5439, %v5439
  %v5474 = vpack.c.bf16 %v5440, %v5440
  %v5475 = vpack.c.bf16 %v5441, %v5441
  %v5476 = vpack.c.bf16 %v5442, %v5442
  %v5477 = vpack.c.bf16 %v5443, %v5443
  %v5478 = vpack.c.bf16 %v5444, %v5444
  %v5479 = vpack.c.bf16 %v5445, %v5445
  %v5480 = vpack.c.bf16 %v5446, %v5446
  %v5481 = vpack.c.bf16 %v5447, %v5447
  %v5482 = vpack.c.bf16 %v5448, %v5448
  %v5483 = vpack.c.bf16 %v5449, %v5449
  %v5484 = vpack.c.bf16 %v5450, %v5450
  %v5485 = vpack.c.bf16 %v5451, %v5451
  %v5486 = vpack.c.bf16 %v5452, %v5452
  %v5487 = vpack.c.bf16 %v5453, %v5453
  %v5488 = vpack.c.bf16 %v5454, %v5454
  %v5489 = vpack.c.bf16 %v5455, %v5455
  %v5490 = vpack.c.bf16 %v5456, %v5456
  %v5491 = vpack.c.bf16 %v5457, %v5457
  %v5492 = vpack.c.bf16 %v5458, %v5458
  %v5493 = vld [vmem:[%s5] sm:$0xff]
  %v5494 = vld [vmem:[%s5 + $0x8] sm:$0xf]
  %v5495 = vld [vmem:[%s5 + $0xc] sm:$0xff]
  %v5496 = vld [vmem:[%s5 + $0x14] sm:$0xf]
  %v5497 = vld [vmem:[%s5 + $0x18] sm:$0xff]
  %v5498 = vld [vmem:[%s5 + $0x20] sm:$0xf]
  %v5499 = vld [vmem:[%s5 + $0x24] sm:$0xff]
  %v5500 = vld [vmem:[%s5 + $0x2c] sm:$0xf]
  %v5501 = vld [vmem:[%s5 + $0x30] sm:$0xff]
  %v5502 = vld [vmem:[%s5 + $0x38] sm:$0xf]
  %v5503 = vld [vmem:[%s5 + $0x3c] sm:$0xff]
  %v5504 = vld [vmem:[%s5 + $0x44] sm:$0xf]
  %v5505 = vld [vmem:[%s5 + $0x48] sm:$0xff]
  %v5506 = vld [vmem:[%s5 + $0x50] sm:$0xf]
  %v5507 = vld [vmem:[%s5 + $0x54] sm:$0xff]
  %v5508 = vld [vmem:[%s5 + $0x5c] sm:$0xf]
  %v5509 = vld [vmem:[%s5 + $0x60] sm:$0xff]
  %v5510 = vld [vmem:[%s5 + $0x68] sm:$0xf]
  %v5511 = vld [vmem:[%s5 + $0x6c] sm:$0xff]
  %v5512 = vld [vmem:[%s5 + $0x74] sm:$0xf]
  %v5513 = vld [vmem:[%s5 + $0x78] sm:$0xff]
  %v5514 = vld [vmem:[%s5 + $0x80] sm:$0xf]
  %v5515 = vld [vmem:[%s5 + $0x84] sm:$0xff]
  %v5516 = vld [vmem:[%s5 + $0x8c] sm:$0xf]
  %v5517 = vld [vmem:[%s5 + $0x90] sm:$0xff]
  %v5518 = vld [vmem:[%s5 + $0x98] sm:$0xf]
  %v5519 = vld [vmem:[%s5 + $0x9c] sm:$0xff]
  %v5520 = vld [vmem:[%s5 + $0xa4] sm:$0xf]
  %v5521 = vld [vmem:[%s5 + $0xa8] sm:$0xff]
  %v5522 = vld [vmem:[%s5 + $0xb0] sm:$0xf]
  %v5523 = vld [vmem:[%s5 + $0xb4] sm:$0xff]
  %v5524 = vld [vmem:[%s5 + $0xbc] sm:$0xf]
  %v5525 = vld [vmem:[%s5 + $0xc0] sm:$0xff]
  %v5526 = vld [vmem:[%s5 + $0xc8] sm:$0xf]
  %v5527 = vld [vmem:[%s5 + $0xcc] sm:$0xff]
  %v5528 = vld [vmem:[%s5 + $0xd4] sm:$0xf]
  %v5529 = vld [vmem:[%s5 + $0xd8] sm:$0xff]
  %v5530 = vld [vmem:[%s5 + $0xe0] sm:$0xf]
  %v5531 = vld [vmem:[%s5 + $0xe4] sm:$0xff]
  %v5532 = vld [vmem:[%s5 + $0xec] sm:$0xf]
  %v5533 = vld [vmem:[%s5 + $0xf0] sm:$0xff]
  %v5534 = vld [vmem:[%s5 + $0xf8] sm:$0xf]
  %v5535 = vld [vmem:[%s5 + $0xfc] sm:$0xff]
  %v5536 = vld [vmem:[%s5 + $0x104] sm:$0xf]
  %v5537 = vld [vmem:[%s5 + $0x108] sm:$0xff]
  %v5538 = vld [vmem:[%s5 + $0x110] sm:$0xf]
  %v5539 = vld [vmem:[%s5 + $0x114] sm:$0xff]
  %v5540 = vld [vmem:[%s5 + $0x11c] sm:$0xf]
  %v5541 = vld [vmem:[%s5 + $0x120] sm:$0xff]
  %v5542 = vld [vmem:[%s5 + $0x128] sm:$0xf]
  %v5543 = vld [vmem:[%s5 + $0x12c] sm:$0xff]
  %v5544 = vld [vmem:[%s5 + $0x134] sm:$0xf]
  %v5545 = vld [vmem:[%s5 + $0x138] sm:$0xff]
  %v5546 = vld [vmem:[%s5 + $0x140] sm:$0xf]
  %v5547 = vld [vmem:[%s5 + $0x144] sm:$0xff]
  %v5548 = vld [vmem:[%s5 + $0x14c] sm:$0xf]
  %v5549 = vld [vmem:[%s5 + $0x150] sm:$0xff]
  %v5550 = vld [vmem:[%s5 + $0x158] sm:$0xf]
  %v5551 = vld [vmem:[%s5 + $0x15c] sm:$0xff]
  %v5552 = vld [vmem:[%s5 + $0x164] sm:$0xf]
  %v5553 = vld [vmem:[%s5 + $0x168] sm:$0xff]
  %v5554 = vld [vmem:[%s5 + $0x170] sm:$0xf]
  %v5555 = vld [vmem:[%s5 + $0x174] sm:$0xff]
  %v5556 = vld [vmem:[%s5 + $0x17c] sm:$0xf]
  %v5557 = vld [vmem:[%s5 + $0x180] sm:$0xff]
  %v5558 = vld [vmem:[%s5 + $0x188] sm:$0xf]
  %v5559 = vld [vmem:[%s5 + $0x18c] sm:$0xff]
  %v5560 = vld [vmem:[%s5 + $0x194] sm:$0xf]
  %v5561 = vld [vmem:[%s5 + $0x198] sm:$0xff]
  %v5562 = vld [vmem:[%s5 + $0x1a0] sm:$0xf]
  %v5563 = vld [vmem:[%s5 + $0x1a4] sm:$0xff]
  %v5564 = vld [vmem:[%s5 + $0x1ac] sm:$0xf]
  %v5565 = vld [vmem:[%s5 + $0x1b0] sm:$0xff]
  %v5566 = vld [vmem:[%s5 + $0x1b8] sm:$0xf]
  %v5567 = vld [vmem:[%s5 + $0x1bc] sm:$0xff]
  %v5568 = vld [vmem:[%s5 + $0x1c4] sm:$0xf]
  %v5569 = vld [vmem:[%s5 + $0x1c8] sm:$0xff]
  %v5570 = vld [vmem:[%s5 + $0x1d0] sm:$0xf]
  %v5571 = vld [vmem:[%s5 + $0x1d4] sm:$0xff]
  %v5572 = vld [vmem:[%s5 + $0x1dc] sm:$0xf]
  %v5573 = vld [vmem:[%s5 + $0x1e0] sm:$0xff]
  %v5574 = vld [vmem:[%s5 + $0x1e8] sm:$0xf]
  %v5575 = vld [vmem:[%s5 + $0x1ec] sm:$0xff]
  %v5576 = vld [vmem:[%s5 + $0x1f4] sm:$0xf]
  %v5577 = vld [vmem:[%s5 + $0x1f8] sm:$0xff]
  %v5578 = vld [vmem:[%s5 + $0x200] sm:$0xf]
  %v5579 = vld [vmem:[%s5 + $0x204] sm:$0xff]
  %v5580 = vld [vmem:[%s5 + $0x20c] sm:$0xf]
  %v5581 = vld [vmem:[%s5 + $0x210] sm:$0xff]
  %v5582 = vld [vmem:[%s5 + $0x218] sm:$0xf]
  %v5583 = vld [vmem:[%s5 + $0x21c] sm:$0xff]
  %v5584 = vld [vmem:[%s5 + $0x224] sm:$0xf]
  %v5585 = vld [vmem:[%s5 + $0x228] sm:$0xff]
  %v5586 = vld [vmem:[%s5 + $0x230] sm:$0xf]
  %v5587 = vld [vmem:[%s5 + $0x234] sm:$0xff]
  %v5588 = vld [vmem:[%s5 + $0x23c] sm:$0xf]
  %v5589 = vld [vmem:[%s5 + $0x240] sm:$0xff]
  %v5590 = vld [vmem:[%s5 + $0x248] sm:$0xf]
  %v5591 = vld [vmem:[%s5 + $0x24c] sm:$0xff]
  %v5592 = vld [vmem:[%s5 + $0x254] sm:$0xf]
  %v5593 = vld [vmem:[%s5 + $0x258] sm:$0xff]
  %v5594 = vld [vmem:[%s5 + $0x260] sm:$0xf]
  %v5595 = vld [vmem:[%s5 + $0x264] sm:$0xff]
  %v5596 = vld [vmem:[%s5 + $0x26c] sm:$0xf]
  %v5597 = vld [vmem:[%s5 + $0x270] sm:$0xff]
  %v5598 = vld [vmem:[%s5 + $0x278] sm:$0xf]
  %v5599 = vld [vmem:[%s5 + $0x27c] sm:$0xff]
  %v5600 = vld [vmem:[%s5 + $0x284] sm:$0xf]
  %v5601 = vld [vmem:[%s5 + $0x288] sm:$0xff]
  %v5602 = vld [vmem:[%s5 + $0x290] sm:$0xf]
  %v5603 = vld [vmem:[%s5 + $0x294] sm:$0xff]
  %v5604 = vld [vmem:[%s5 + $0x29c] sm:$0xf]
  %v5605 = vld [vmem:[%s5 + $0x2a0] sm:$0xff]
  %v5606 = vld [vmem:[%s5 + $0x2a8] sm:$0xf]
  %v5607 = vld [vmem:[%s5 + $0x2ac] sm:$0xff]
  %v5608 = vld [vmem:[%s5 + $0x2b4] sm:$0xf]
  %v5609 = vld [vmem:[%s5 + $0x2b8] sm:$0xff]
  %v5610 = vld [vmem:[%s5 + $0x2c0] sm:$0xf]
  %v5611 = vld [vmem:[%s5 + $0x2c4] sm:$0xff]
  %v5612 = vld [vmem:[%s5 + $0x2cc] sm:$0xf]
  %v5613 = vld [vmem:[%s5 + $0x2d0] sm:$0xff]
  %v5614 = vld [vmem:[%s5 + $0x2d8] sm:$0xf]
  %v5615 = vld [vmem:[%s5 + $0x2dc] sm:$0xff]
  %v5616 = vld [vmem:[%s5 + $0x2e4] sm:$0xf]
  %v5617 = vld [vmem:[%s5 + $0x2e8] sm:$0xff]
  %v5618 = vld [vmem:[%s5 + $0x2f0] sm:$0xf]
  %v5619 = vld [vmem:[%s5 + $0x2f4] sm:$0xff]
  %v5620 = vld [vmem:[%s5 + $0x2fc] sm:$0xf]
  %v5621 = vld [vmem:[%s5 + $0x300] sm:$0xff]
  %v5622 = vld [vmem:[%s5 + $0x308] sm:$0xf]
  %v5623 = vld [vmem:[%s5 + $0x30c] sm:$0xff]
  %v5624 = vld [vmem:[%s5 + $0x314] sm:$0xf]
  %v5625 = vld [vmem:[%s5 + $0x318] sm:$0xff]
  %v5626 = vld [vmem:[%s5 + $0x320] sm:$0xf]
  %v5627 = vld [vmem:[%s5 + $0x324] sm:$0xff]
  %v5628 = vld [vmem:[%s5 + $0x32c] sm:$0xf]
  %v5629 = vld [vmem:[%s5 + $0x330] sm:$0xff]
  %v5630 = vld [vmem:[%s5 + $0x338] sm:$0xf]
  %v5631 = vld [vmem:[%s5 + $0x33c] sm:$0xff]
  %v5632 = vld [vmem:[%s5 + $0x344] sm:$0xf]
  %v5633 = vld [vmem:[%s5 + $0x348] sm:$0xff]
  %v5634 = vld [vmem:[%s5 + $0x350] sm:$0xf]
  %v5635 = vld [vmem:[%s5 + $0x354] sm:$0xff]
  %v5636 = vld [vmem:[%s5 + $0x35c] sm:$0xf]
  %v5637 = vld [vmem:[%s5 + $0x360] sm:$0xff]
  %v5638 = vld [vmem:[%s5 + $0x368] sm:$0xf]
  %v5639 = vld [vmem:[%s5 + $0x36c] sm:$0xff]
  %v5640 = vld [vmem:[%s5 + $0x374] sm:$0xf]
  %v5641 = vld [vmem:[%s5 + $0x378] sm:$0xff]
  %v5642 = vld [vmem:[%s5 + $0x380] sm:$0xf]
  %v5643 = vld [vmem:[%s5 + $0x384] sm:$0xff]
  %v5644 = vld [vmem:[%s5 + $0x38c] sm:$0xf]
  %v5645 = vld [vmem:[%s5 + $0x390] sm:$0xff]
  %v5646 = vld [vmem:[%s5 + $0x398] sm:$0xf]
  %v5647 = vld [vmem:[%s5 + $0x39c] sm:$0xff]
  %v5648 = vld [vmem:[%s5 + $0x3a4] sm:$0xf]
  %v5649 = vld [vmem:[%s5 + $0x3a8] sm:$0xff]
  %v5650 = vld [vmem:[%s5 + $0x3b0] sm:$0xf]
  %v5651 = vld [vmem:[%s5 + $0x3b4] sm:$0xff]
  %v5652 = vld [vmem:[%s5 + $0x3bc] sm:$0xf]
  %v5653 = vld [vmem:[%s5 + $0x3c0] sm:$0xff]
  %v5654 = vld [vmem:[%s5 + $0x3c8] sm:$0xf]
  %v5655 = vld [vmem:[%s5 + $0x3cc] sm:$0xff]
  %v5656 = vld [vmem:[%s5 + $0x3d4] sm:$0xf]
  %v5657 = vld [vmem:[%s5 + $0x3d8] sm:$0xff]
  %v5658 = vld [vmem:[%s5 + $0x3e0] sm:$0xf]
  %v5659 = vld [vmem:[%s5 + $0x3e4] sm:$0xff]
  %v5660 = vld [vmem:[%s5 + $0x3ec] sm:$0xf]
  %v5661 = vld [vmem:[%s5 + $0x3f0] sm:$0xff]
  %v5662 = vld [vmem:[%s5 + $0x3f8] sm:$0xf]
  %v5663 = vld [vmem:[%s5 + $0x3fc] sm:$0xff]
  %v5664 = vld [vmem:[%s5 + $0x404] sm:$0xf]
  %v5665 = vld [vmem:[%s5 + $0x408] sm:$0xff]
  %v5666 = vld [vmem:[%s5 + $0x410] sm:$0xf]
  %v5667 = vld [vmem:[%s5 + $0x414] sm:$0xff]
  %v5668 = vld [vmem:[%s5 + $0x41c] sm:$0xf]
  %v5669 = vld [vmem:[%s5 + $0x420] sm:$0xff]
  %v5670 = vld [vmem:[%s5 + $0x428] sm:$0xf]
  %v5671 = vld [vmem:[%s5 + $0x42c] sm:$0xff]
  %v5672 = vld [vmem:[%s5 + $0x434] sm:$0xf]
  %v5673 = vld [vmem:[%s5 + $0x438] sm:$0xff]
  %v5674 = vld [vmem:[%s5 + $0x440] sm:$0xf]
  %v5675 = vld [vmem:[%s5 + $0x444] sm:$0xff]
  %v5676 = vld [vmem:[%s5 + $0x44c] sm:$0xf]
  %v5677 = vld [vmem:[%s5 + $0x450] sm:$0xff]
  %v5678 = vld [vmem:[%s5 + $0x458] sm:$0xf]
  %v5679 = vld [vmem:[%s5 + $0x45c] sm:$0xff]
  %v5680 = vld [vmem:[%s5 + $0x464] sm:$0xf]
  %v5681 = vld [vmem:[%s5 + $0x468] sm:$0xff]
  %v5682 = vld [vmem:[%s5 + $0x470] sm:$0xf]
  %v5683 = vld [vmem:[%s5 + $0x474] sm:$0xff]
  %v5684 = vld [vmem:[%s5 + $0x47c] sm:$0xf]
  %v5685 = vld [vmem:[%s5 + $0x480] sm:$0xff]
  %v5686 = vld [vmem:[%s5 + $0x488] sm:$0xf]
  %v5687 = vld [vmem:[%s5 + $0x48c] sm:$0xff]
  %v5688 = vld [vmem:[%s5 + $0x494] sm:$0xf]
  %v5689 = vld [vmem:[%s5 + $0x498] sm:$0xff]
  %v5690 = vld [vmem:[%s5 + $0x4a0] sm:$0xf]
  %v5691 = vld [vmem:[%s5 + $0x4a4] sm:$0xff]
  %v5692 = vld [vmem:[%s5 + $0x4ac] sm:$0xf]
  %v5693 = vld [vmem:[%s5 + $0x4b0] sm:$0xff]
  %v5694 = vld [vmem:[%s5 + $0x4b8] sm:$0xf]
  %v5695 = vld [vmem:[%s5 + $0x4bc] sm:$0xff]
  %v5696 = vld [vmem:[%s5 + $0x4c4] sm:$0xf]
  %v5697 = vld [vmem:[%s5 + $0x4c8] sm:$0xff]
  %v5698 = vld [vmem:[%s5 + $0x4d0] sm:$0xf]
  %v5699 = vld [vmem:[%s5 + $0x4d4] sm:$0xff]
  %v5700 = vld [vmem:[%s5 + $0x4dc] sm:$0xf]
  %v5701 = vld [vmem:[%s5 + $0x4e0] sm:$0xff]
  %v5702 = vld [vmem:[%s5 + $0x4e8] sm:$0xf]
  %v5703 = vld [vmem:[%s5 + $0x4ec] sm:$0xff]
  %v5704 = vld [vmem:[%s5 + $0x4f4] sm:$0xf]
  %v5705 = vld [vmem:[%s5 + $0x4f8] sm:$0xff]
  %v5706 = vld [vmem:[%s5 + $0x500] sm:$0xf]
  %v5707 = vld [vmem:[%s5 + $0x504] sm:$0xff]
  %v5708 = vld [vmem:[%s5 + $0x50c] sm:$0xf]
  %v5709 = vld [vmem:[%s5 + $0x510] sm:$0xff]
  %v5710 = vld [vmem:[%s5 + $0x518] sm:$0xf]
  %v5711 = vld [vmem:[%s5 + $0x51c] sm:$0xff]
  %v5712 = vld [vmem:[%s5 + $0x524] sm:$0xf]
  %v5713 = vld [vmem:[%s5 + $0x528] sm:$0xff]
  %v5714 = vld [vmem:[%s5 + $0x530] sm:$0xf]
  %v5715 = vld [vmem:[%s5 + $0x534] sm:$0xff]
  %v5716 = vld [vmem:[%s5 + $0x53c] sm:$0xf]
  %v5717 = vld [vmem:[%s5 + $0x540] sm:$0xff]
  %v5718 = vld [vmem:[%s5 + $0x548] sm:$0xf]
  %v5719 = vld [vmem:[%s5 + $0x54c] sm:$0xff]
  %v5720 = vld [vmem:[%s5 + $0x554] sm:$0xf]
  %v5721 = vld [vmem:[%s5 + $0x558] sm:$0xff]
  %v5722 = vld [vmem:[%s5 + $0x560] sm:$0xf]
  %v5723 = vld [vmem:[%s5 + $0x564] sm:$0xff]
  %v5724 = vld [vmem:[%s5 + $0x56c] sm:$0xf]
  %v5725 = vld [vmem:[%s5 + $0x570] sm:$0xff]
  %v5726 = vld [vmem:[%s5 + $0x578] sm:$0xf]
  %v5727 = vld [vmem:[%s5 + $0x57c] sm:$0xff]
  %v5728 = vld [vmem:[%s5 + $0x584] sm:$0xf]
  %v5729 = vld [vmem:[%s5 + $0x588] sm:$0xff]
  %v5730 = vld [vmem:[%s5 + $0x590] sm:$0xf]
  %v5731 = vld [vmem:[%s5 + $0x594] sm:$0xff]
  %v5732 = vld [vmem:[%s5 + $0x59c] sm:$0xf]
  %v5733 = vld [vmem:[%s5 + $0x5a0] sm:$0xff]
  %v5734 = vld [vmem:[%s5 + $0x5a8] sm:$0xf]
  %v5735 = vld [vmem:[%s5 + $0x5ac] sm:$0xff]
  %v5736 = vld [vmem:[%s5 + $0x5b4] sm:$0xf]
  %v5737 = vld [vmem:[%s5 + $0x5b8] sm:$0xff]
  %v5738 = vld [vmem:[%s5 + $0x5c0] sm:$0xf]
  %v5739 = vld [vmem:[%s5 + $0x5c4] sm:$0xff]
  %v5740 = vld [vmem:[%s5 + $0x5cc] sm:$0xf]
  %v5741 = vld [vmem:[%s5 + $0x5d0] sm:$0xff]
  %v5742 = vld [vmem:[%s5 + $0x5d8] sm:$0xf]
  %v5743 = vld [vmem:[%s5 + $0x5dc] sm:$0xff]
  %v5744 = vld [vmem:[%s5 + $0x5e4] sm:$0xf]
  %v5745 = vld [vmem:[%s5 + $0x5e8] sm:$0xff]
  %v5746 = vld [vmem:[%s5 + $0x5f0] sm:$0xf]
  %v5747 = vld [vmem:[%s5 + $0x5f4] sm:$0xff]
  %v5748 = vld [vmem:[%s5 + $0x5fc] sm:$0xf]
  %v5749 = vld [vmem:[%s5 + $0x600] sm:$0xff]
  %v5750 = vld [vmem:[%s5 + $0x608] sm:$0xf]
  %v5751 = vld [vmem:[%s5 + $0x60c] sm:$0xff]
  %v5752 = vld [vmem:[%s5 + $0x614] sm:$0xf]
  %v5753 = vld [vmem:[%s5 + $0x618] sm:$0xff]
  %v5754 = vld [vmem:[%s5 + $0x620] sm:$0xf]
  %v5755 = vld [vmem:[%s5 + $0x624] sm:$0xff]
  %v5756 = vld [vmem:[%s5 + $0x62c] sm:$0xf]
  %v5757 = vld [vmem:[%s5 + $0x630] sm:$0xff]
  %v5758 = vld [vmem:[%s5 + $0x638] sm:$0xf]
  %v5759 = vld [vmem:[%s5 + $0x63c] sm:$0xff]
  %v5760 = vld [vmem:[%s5 + $0x644] sm:$0xf]
  %v5761 = vld [vmem:[%s5 + $0x648] sm:$0xff]
  %v5762 = vld [vmem:[%s5 + $0x650] sm:$0xf]
  %v5763 = vld [vmem:[%s5 + $0x654] sm:$0xff]
  %v5764 = vld [vmem:[%s5 + $0x65c] sm:$0xf]
  %v5765 = vld [vmem:[%s5 + $0x660] sm:$0xff]
  %v5766 = vld [vmem:[%s5 + $0x668] sm:$0xf]
  %v5767 = vld [vmem:[%s5 + $0x66c] sm:$0xff]
  %v5768 = vld [vmem:[%s5 + $0x674] sm:$0xf]
  %v5769 = vld [vmem:[%s5 + $0x678] sm:$0xff]
  %v5770 = vld [vmem:[%s5 + $0x680] sm:$0xf]
  %v5771 = vld [vmem:[%s5 + $0x684] sm:$0xff]
  %v5772 = vld [vmem:[%s5 + $0x68c] sm:$0xf]
  %v5773 = vld [vmem:[%s5 + $0x690] sm:$0xff]
  %v5774 = vld [vmem:[%s5 + $0x698] sm:$0xf]
  %v5775 = vld [vmem:[%s5 + $0x69c] sm:$0xff]
  %v5776 = vld [vmem:[%s5 + $0x6a4] sm:$0xf]
  %v5777 = vld [vmem:[%s5 + $0x6a8] sm:$0xff]
  %v5778 = vld [vmem:[%s5 + $0x6b0] sm:$0xf]
  %v5779 = vld [vmem:[%s5 + $0x6b4] sm:$0xff]
  %v5780 = vld [vmem:[%s5 + $0x6bc] sm:$0xf]
  %v5781 = vld [vmem:[%s5 + $0x6c0] sm:$0xff]
  %v5782 = vld [vmem:[%s5 + $0x6c8] sm:$0xf]
  %v5783 = vld [vmem:[%s5 + $0x6cc] sm:$0xff]
  %v5784 = vld [vmem:[%s5 + $0x6d4] sm:$0xf]
  %v5785 = vld [vmem:[%s5 + $0x6d8] sm:$0xff]
  %v5786 = vld [vmem:[%s5 + $0x6e0] sm:$0xf]
  %v5787 = vld [vmem:[%s5 + $0x6e4] sm:$0xff]
  %v5788 = vld [vmem:[%s5 + $0x6ec] sm:$0xf]
  %v5789 = vld [vmem:[%s5 + $0x6f0] sm:$0xff]
  %v5790 = vld [vmem:[%s5 + $0x6f8] sm:$0xf]
  %v5791 = vld [vmem:[%s5 + $0x6fc] sm:$0xff]
  %v5792 = vld [vmem:[%s5 + $0x704] sm:$0xf]
  %v5793 = vld [vmem:[%s5 + $0x708] sm:$0xff]
  %v5794 = vld [vmem:[%s5 + $0x710] sm:$0xf]
  %v5795 = vld [vmem:[%s5 + $0x714] sm:$0xff]
  %v5796 = vld [vmem:[%s5 + $0x71c] sm:$0xf]
  %v5797 = vld [vmem:[%s5 + $0x720] sm:$0xff]
  %v5798 = vld [vmem:[%s5 + $0x728] sm:$0xf]
  %v5799 = vld [vmem:[%s5 + $0x72c] sm:$0xff]
  %v5800 = vld [vmem:[%s5 + $0x734] sm:$0xf]
  %v5801 = vld [vmem:[%s5 + $0x738] sm:$0xff]
  %v5802 = vld [vmem:[%s5 + $0x740] sm:$0xf]
  %v5803 = vld [vmem:[%s5 + $0x744] sm:$0xff]
  %v5804 = vld [vmem:[%s5 + $0x74c] sm:$0xf]
  %v5805 = vld [vmem:[%s5 + $0x750] sm:$0xff]
  %v5806 = vld [vmem:[%s5 + $0x758] sm:$0xf]
  %v5807 = vld [vmem:[%s5 + $0x75c] sm:$0xff]
  %v5808 = vld [vmem:[%s5 + $0x764] sm:$0xf]
  %v5809 = vld [vmem:[%s5 + $0x768] sm:$0xff]
  %v5810 = vld [vmem:[%s5 + $0x770] sm:$0xf]
  %v5811 = vld [vmem:[%s5 + $0x774] sm:$0xff]
  %v5812 = vld [vmem:[%s5 + $0x77c] sm:$0xf]
  %v5813 = vld [vmem:[%s5 + $0x780] sm:$0xff]
  %v5814 = vld [vmem:[%s5 + $0x788] sm:$0xf]
  %v5815 = vld [vmem:[%s5 + $0x78c] sm:$0xff]
  %v5816 = vld [vmem:[%s5 + $0x794] sm:$0xf]
  %v5817 = vld [vmem:[%s5 + $0x798] sm:$0xff]
  %v5818 = vld [vmem:[%s5 + $0x7a0] sm:$0xf]
  %v5819 = vld [vmem:[%s5 + $0x7a4] sm:$0xff]
  %v5820 = vld [vmem:[%s5 + $0x7ac] sm:$0xf]
  %v5821 = vld [vmem:[%s5 + $0x7b0] sm:$0xff]
  %v5822 = vld [vmem:[%s5 + $0x7b8] sm:$0xf]
  %v5823 = vld [vmem:[%s5 + $0x7bc] sm:$0xff]
  %v5824 = vld [vmem:[%s5 + $0x7c4] sm:$0xf]
  %v5825 = vld [vmem:[%s5 + $0x7c8] sm:$0xff]
  %v5826 = vld [vmem:[%s5 + $0x7d0] sm:$0xf]
  %v5827 = vld [vmem:[%s5 + $0x7d4] sm:$0xff]
  %v5828 = vld [vmem:[%s5 + $0x7dc] sm:$0xf]
  %v5829 = vld [vmem:[%s5 + $0x7e0] sm:$0xff]
  %v5830 = vld [vmem:[%s5 + $0x7e8] sm:$0xf]
  %v5831 = vld [vmem:[%s5 + $0x7ec] sm:$0xff]
  %v5832 = vld [vmem:[%s5 + $0x7f4] sm:$0xf]
  %v5833 = vld [vmem:[%s5 + $0x7f8] sm:$0xff]
  %v5834 = vld [vmem:[%s5 + $0x800] sm:$0xf]
  %v5835 = vld [vmem:[%s5 + $0x804] sm:$0xff]
  %v5836 = vld [vmem:[%s5 + $0x80c] sm:$0xf]
  %v5837 = vld [vmem:[%s5 + $0x810] sm:$0xff]
  %v5838 = vld [vmem:[%s5 + $0x818] sm:$0xf]
  %v5839 = vld [vmem:[%s5 + $0x81c] sm:$0xff]
  %v5840 = vld [vmem:[%s5 + $0x824] sm:$0xf]
  %v5841 = vld [vmem:[%s5 + $0x828] sm:$0xff]
  %v5842 = vld [vmem:[%s5 + $0x830] sm:$0xf]
  %v5843 = vld [vmem:[%s5 + $0x834] sm:$0xff]
  %v5844 = vld [vmem:[%s5 + $0x83c] sm:$0xf]
  %v5845 = vld [vmem:[%s5 + $0x840] sm:$0xff]
  %v5846 = vld [vmem:[%s5 + $0x848] sm:$0xf]
  %v5847 = vld [vmem:[%s5 + $0x84c] sm:$0xff]
  %v5848 = vld [vmem:[%s5 + $0x854] sm:$0xf]
  %v5849 = vld [vmem:[%s5 + $0x858] sm:$0xff]
  %v5850 = vld [vmem:[%s5 + $0x860] sm:$0xf]
  %v5851 = vld [vmem:[%s5 + $0x864] sm:$0xff]
  %v5852 = vld [vmem:[%s5 + $0x86c] sm:$0xf]
  %v5853 = vld [vmem:[%s5 + $0x870] sm:$0xff]
  %v5854 = vld [vmem:[%s5 + $0x878] sm:$0xf]
  %v5855 = vld [vmem:[%s5 + $0x87c] sm:$0xff]
  %v5856 = vld [vmem:[%s5 + $0x884] sm:$0xf]
  %v5857 = vld [vmem:[%s5 + $0x888] sm:$0xff]
  %v5858 = vld [vmem:[%s5 + $0x890] sm:$0xf]
  %v5859 = vld [vmem:[%s5 + $0x894] sm:$0xff]
  %v5860 = vld [vmem:[%s5 + $0x89c] sm:$0xf]
  %v5861 = vld [vmem:[%s5 + $0x8a0] sm:$0xff]
  %v5862 = vld [vmem:[%s5 + $0x8a8] sm:$0xf]
  %v5863 = vld [vmem:[%s5 + $0x8ac] sm:$0xff]
  %v5864 = vld [vmem:[%s5 + $0x8b4] sm:$0xf]
  %v5865 = vld [vmem:[%s5 + $0x8b8] sm:$0xff]
  %v5866 = vld [vmem:[%s5 + $0x8c0] sm:$0xf]
  %v5867 = vld [vmem:[%s5 + $0x8c4] sm:$0xff]
  %v5868 = vld [vmem:[%s5 + $0x8cc] sm:$0xf]
  %v5869 = vld [vmem:[%s5 + $0x8d0] sm:$0xff]
  %v5870 = vld [vmem:[%s5 + $0x8d8] sm:$0xf]
  %v5871 = vld [vmem:[%s5 + $0x8dc] sm:$0xff]
  %v5872 = vld [vmem:[%s5 + $0x8e4] sm:$0xf]
  %v5873 = vld [vmem:[%s5 + $0x8e8] sm:$0xff]
  %v5874 = vld [vmem:[%s5 + $0x8f0] sm:$0xf]
  %v5875 = vld [vmem:[%s5 + $0x8f4] sm:$0xff]
  %v5876 = vld [vmem:[%s5 + $0x8fc] sm:$0xf]
  %v5877 = vld [vmem:[%s5 + $0x900] sm:$0xff]
  %v5878 = vld [vmem:[%s5 + $0x908] sm:$0xf]
  %v5879 = vld [vmem:[%s5 + $0x90c] sm:$0xff]
  %v5880 = vld [vmem:[%s5 + $0x914] sm:$0xf]
  %v5881 = vld [vmem:[%s5 + $0x918] sm:$0xff]
  %v5882 = vld [vmem:[%s5 + $0x920] sm:$0xf]
  %v5883 = vld [vmem:[%s5 + $0x924] sm:$0xff]
  %v5884 = vld [vmem:[%s5 + $0x92c] sm:$0xf]
  %v5885 = vld [vmem:[%s5 + $0x930] sm:$0xff]
  %v5886 = vld [vmem:[%s5 + $0x938] sm:$0xf]
  %v5887 = vld [vmem:[%s5 + $0x93c] sm:$0xff]
  %v5888 = vld [vmem:[%s5 + $0x944] sm:$0xf]
  %v5889 = vld [vmem:[%s5 + $0x948] sm:$0xff]
  %v5890 = vld [vmem:[%s5 + $0x950] sm:$0xf]
  %v5891 = vld [vmem:[%s5 + $0x954] sm:$0xff]
  %v5892 = vld [vmem:[%s5 + $0x95c] sm:$0xf]
  %v5893 = vld [vmem:[%s5 + $0x960] sm:$0xff]
  %v5894 = vld [vmem:[%s5 + $0x968] sm:$0xf]
  %v5895 = vld [vmem:[%s5 + $0x96c] sm:$0xff]
  %v5896 = vld [vmem:[%s5 + $0x974] sm:$0xf]
  %v5897 = vld [vmem:[%s5 + $0x978] sm:$0xff]
  %v5898 = vld [vmem:[%s5 + $0x980] sm:$0xf]
  %v5899 = vld [vmem:[%s5 + $0x984] sm:$0xff]
  %v5900 = vld [vmem:[%s5 + $0x98c] sm:$0xf]
  %v5901 = vld [vmem:[%s5 + $0x990] sm:$0xff]
  %v5902 = vld [vmem:[%s5 + $0x998] sm:$0xf]
  %v5903 = vld [vmem:[%s5 + $0x99c] sm:$0xff]
  %v5904 = vld [vmem:[%s5 + $0x9a4] sm:$0xf]
  %v5905 = vld [vmem:[%s5 + $0x9a8] sm:$0xff]
  %v5906 = vld [vmem:[%s5 + $0x9b0] sm:$0xf]
  %v5907 = vld [vmem:[%s5 + $0x9b4] sm:$0xff]
  %v5908 = vld [vmem:[%s5 + $0x9bc] sm:$0xf]
  %v5909 = vld [vmem:[%s5 + $0x9c0] sm:$0xff]
  %v5910 = vld [vmem:[%s5 + $0x9c8] sm:$0xf]
  %v5911 = vld [vmem:[%s5 + $0x9cc] sm:$0xff]
  %v5912 = vld [vmem:[%s5 + $0x9d4] sm:$0xf]
  %v5913 = vld [vmem:[%s5 + $0x9d8] sm:$0xff]
  %v5914 = vld [vmem:[%s5 + $0x9e0] sm:$0xf]
  %v5915 = vld [vmem:[%s5 + $0x9e4] sm:$0xff]
  %v5916 = vld [vmem:[%s5 + $0x9ec] sm:$0xf]
  %v5917 = vld [vmem:[%s5 + $0x9f0] sm:$0xff]
  %v5918 = vld [vmem:[%s5 + $0x9f8] sm:$0xf]
  %v5919 = vld [vmem:[%s5 + $0x9fc] sm:$0xff]
  %v5920 = vld [vmem:[%s5 + $0xa04] sm:$0xf]
  %v5921 = vld [vmem:[%s5 + $0xa08] sm:$0xff]
  %v5922 = vld [vmem:[%s5 + $0xa10] sm:$0xf]
  %v5923 = vld [vmem:[%s5 + $0xa14] sm:$0xff]
  %v5924 = vld [vmem:[%s5 + $0xa1c] sm:$0xf]
  %v5925 = vld [vmem:[%s5 + $0xa20] sm:$0xff]
  %v5926 = vld [vmem:[%s5 + $0xa28] sm:$0xf]
  %v5927 = vld [vmem:[%s5 + $0xa2c] sm:$0xff]
  %v5928 = vld [vmem:[%s5 + $0xa34] sm:$0xf]
  %v5929 = vld [vmem:[%s5 + $0xa38] sm:$0xff]
  %v5930 = vld [vmem:[%s5 + $0xa40] sm:$0xf]
  %v5931 = vld [vmem:[%s5 + $0xa44] sm:$0xff]
  %v5932 = vld [vmem:[%s5 + $0xa4c] sm:$0xf]
  %v5933 = vld [vmem:[%s5 + $0xa50] sm:$0xff]
  %v5934 = vld [vmem:[%s5 + $0xa58] sm:$0xf]
  %v5935 = vld [vmem:[%s5 + $0xa5c] sm:$0xff]
  %v5936 = vld [vmem:[%s5 + $0xa64] sm:$0xf]
  %v5937 = vld [vmem:[%s5 + $0xa68] sm:$0xff]
  %v5938 = vld [vmem:[%s5 + $0xa70] sm:$0xf]
  %v5939 = vld [vmem:[%s5 + $0xa74] sm:$0xff]
  %v5940 = vld [vmem:[%s5 + $0xa7c] sm:$0xf]
  %v5941 = vld [vmem:[%s5 + $0xa80] sm:$0xff]
  %v5942 = vld [vmem:[%s5 + $0xa88] sm:$0xf]
  %v5943 = vld [vmem:[%s5 + $0xa8c] sm:$0xff]
  %v5944 = vld [vmem:[%s5 + $0xa94] sm:$0xf]
  %v5945 = vld [vmem:[%s5 + $0xa98] sm:$0xff]
  %v5946 = vld [vmem:[%s5 + $0xaa0] sm:$0xf]
  %v5947 = vld [vmem:[%s5 + $0xaa4] sm:$0xff]
  %v5948 = vld [vmem:[%s5 + $0xaac] sm:$0xf]
  %v5949 = vld [vmem:[%s5 + $0xab0] sm:$0xff]
  %v5950 = vld [vmem:[%s5 + $0xab8] sm:$0xf]
  %v5951 = vld [vmem:[%s5 + $0xabc] sm:$0xff]
  %v5952 = vld [vmem:[%s5 + $0xac4] sm:$0xf]
  %v5953 = vld [vmem:[%s5 + $0xac8] sm:$0xff]
  %v5954 = vld [vmem:[%s5 + $0xad0] sm:$0xf]
  %v5955 = vld [vmem:[%s5 + $0xad4] sm:$0xff]
  %v5956 = vld [vmem:[%s5 + $0xadc] sm:$0xf]
  %v5957 = vld [vmem:[%s5 + $0xae0] sm:$0xff]
  %v5958 = vld [vmem:[%s5 + $0xae8] sm:$0xf]
  %v5959 = vld [vmem:[%s5 + $0xaec] sm:$0xff]
  %v5960 = vld [vmem:[%s5 + $0xaf4] sm:$0xf]
  %v5961 = vld [vmem:[%s5 + $0xaf8] sm:$0xff]
  %v5962 = vld [vmem:[%s5 + $0xb00] sm:$0xf]
  %v5963 = vld [vmem:[%s5 + $0xb04] sm:$0xff]
  %v5964 = vld [vmem:[%s5 + $0xb0c] sm:$0xf]
  %v5965 = vld [vmem:[%s5 + $0xb10] sm:$0xff]
  %v5966 = vld [vmem:[%s5 + $0xb18] sm:$0xf]
  %v5967 = vld [vmem:[%s5 + $0xb1c] sm:$0xff]
  %v5968 = vld [vmem:[%s5 + $0xb24] sm:$0xf]
  %v5969 = vld [vmem:[%s5 + $0xb28] sm:$0xff]
  %v5970 = vld [vmem:[%s5 + $0xb30] sm:$0xf]
  %v5971 = vld [vmem:[%s5 + $0xb34] sm:$0xff]
  %v5972 = vld [vmem:[%s5 + $0xb3c] sm:$0xf]
  %v5973 = vld [vmem:[%s5 + $0xb40] sm:$0xff]
  %v5974 = vld [vmem:[%s5 + $0xb48] sm:$0xf]
  %v5975 = vld [vmem:[%s5 + $0xb4c] sm:$0xff]
  %v5976 = vld [vmem:[%s5 + $0xb54] sm:$0xf]
  %v5977 = vld [vmem:[%s5 + $0xb58] sm:$0xff]
  %v5978 = vld [vmem:[%s5 + $0xb60] sm:$0xf]
  %v5979 = vld [vmem:[%s5 + $0xb64] sm:$0xff]
  %v5980 = vld [vmem:[%s5 + $0xb6c] sm:$0xf]
  %v5981 = vld [vmem:[%s5 + $0xb70] sm:$0xff]
  %v5982 = vld [vmem:[%s5 + $0xb78] sm:$0xf]
  %v5983 = vld [vmem:[%s5 + $0xb7c] sm:$0xff]
  %v5984 = vld [vmem:[%s5 + $0xb84] sm:$0xf]
  %v5985 = vld [vmem:[%s5 + $0xb88] sm:$0xff]
  %v5986 = vld [vmem:[%s5 + $0xb90] sm:$0xf]
  %v5987 = vld [vmem:[%s5 + $0xb94] sm:$0xff]
  %v5988 = vld [vmem:[%s5 + $0xb9c] sm:$0xf]
  %v5989 = vld [vmem:[%s5 + $0xba0] sm:$0xff]
  %v5990 = vld [vmem:[%s5 + $0xba8] sm:$0xf]
  %v5991 = vld [vmem:[%s5 + $0xbac] sm:$0xff]
  %v5992 = vld [vmem:[%s5 + $0xbb4] sm:$0xf]
  %v5993 = vld [vmem:[%s5 + $0xbb8] sm:$0xff]
  %v5994 = vld [vmem:[%s5 + $0xbc0] sm:$0xf]
  %v5995 = vld [vmem:[%s5 + $0xbc4] sm:$0xff]
  %v5996 = vld [vmem:[%s5 + $0xbcc] sm:$0xf]
  %v5997 = vld [vmem:[%s5 + $0xbd0] sm:$0xff]
  %v5998 = vld [vmem:[%s5 + $0xbd8] sm:$0xf]
  %v5999 = vld [vmem:[%s5 + $0xbdc] sm:$0xff]
  %v6000 = vld [vmem:[%s5 + $0xbe4] sm:$0xf]
  %v6001 = vld [vmem:[%s5 + $0xbe8] sm:$0xff]
  %v6002 = vld [vmem:[%s5 + $0xbf0] sm:$0xf]
  %v6003 = vld [vmem:[%s5 + $0xbf4] sm:$0xff]
  %v6004 = vld [vmem:[%s5 + $0xbfc] sm:$0xf]
  %v6005 = vld [vmem:[%s5 + $0xc00] sm:$0xff]
  %v6006 = vld [vmem:[%s5 + $0xc08] sm:$0xf]
  %v6007 = vld [vmem:[%s5 + $0xc0c] sm:$0xff]
  %v6008 = vld [vmem:[%s5 + $0xc14] sm:$0xf]
  %v6009 = vld [vmem:[%s5 + $0xc18] sm:$0xff]
  %v6010 = vld [vmem:[%s5 + $0xc20] sm:$0xf]
  %v6011 = vld [vmem:[%s5 + $0xc24] sm:$0xff]
  %v6012 = vld [vmem:[%s5 + $0xc2c] sm:$0xf]
  %v6013 = vld [vmem:[%s5 + $0xc30] sm:$0xff]
  %v6014 = vld [vmem:[%s5 + $0xc38] sm:$0xf]
  %v6015 = vld [vmem:[%s5 + $0xc3c] sm:$0xff]
  %v6016 = vld [vmem:[%s5 + $0xc44] sm:$0xf]
  %v6017 = vld [vmem:[%s5 + $0xc48] sm:$0xff]
  %v6018 = vld [vmem:[%s5 + $0xc50] sm:$0xf]
  %v6019 = vld [vmem:[%s5 + $0xc54] sm:$0xff]
  %v6020 = vld [vmem:[%s5 + $0xc5c] sm:$0xf]
  %v6021 = vld [vmem:[%s5 + $0xc60] sm:$0xff]
  %v6022 = vld [vmem:[%s5 + $0xc68] sm:$0xf]
  %v6023 = vld [vmem:[%s5 + $0xc6c] sm:$0xff]
  %v6024 = vld [vmem:[%s5 + $0xc74] sm:$0xf]
  %v6025 = vld [vmem:[%s5 + $0xc78] sm:$0xff]
  %v6026 = vld [vmem:[%s5 + $0xc80] sm:$0xf]
  %v6027 = vld [vmem:[%s5 + $0xc84] sm:$0xff]
  %v6028 = vld [vmem:[%s5 + $0xc8c] sm:$0xf]
  %v6029 = vld [vmem:[%s5 + $0xc90] sm:$0xff]
  %v6030 = vld [vmem:[%s5 + $0xc98] sm:$0xf]
  %v6031 = vld [vmem:[%s5 + $0xc9c] sm:$0xff]
  %v6032 = vld [vmem:[%s5 + $0xca4] sm:$0xf]
  %v6033 = vld [vmem:[%s5 + $0xca8] sm:$0xff]
  %v6034 = vld [vmem:[%s5 + $0xcb0] sm:$0xf]
  %v6035 = vld [vmem:[%s5 + $0xcb4] sm:$0xff]
  %v6036 = vld [vmem:[%s5 + $0xcbc] sm:$0xf]
  %v6037 = vld [vmem:[%s5 + $0xcc0] sm:$0xff]
  %v6038 = vld [vmem:[%s5 + $0xcc8] sm:$0xf]
  %v6039 = vld [vmem:[%s5 + $0xccc] sm:$0xff]
  %v6040 = vld [vmem:[%s5 + $0xcd4] sm:$0xf]
  %v6041 = vld [vmem:[%s5 + $0xcd8] sm:$0xff]
  %v6042 = vld [vmem:[%s5 + $0xce0] sm:$0xf]
  %v6043 = vld [vmem:[%s5 + $0xce4] sm:$0xff]
  %v6044 = vld [vmem:[%s5 + $0xcec] sm:$0xf]
  %v6045 = vld [vmem:[%s5 + $0xcf0] sm:$0xff]
  %v6046 = vld [vmem:[%s5 + $0xcf8] sm:$0xf]
  %v6047 = vld [vmem:[%s5 + $0xcfc] sm:$0xff]
  %v6048 = vld [vmem:[%s5 + $0xd04] sm:$0xf]
  %v6049 = vld [vmem:[%s5 + $0xd08] sm:$0xff]
  %v6050 = vld [vmem:[%s5 + $0xd10] sm:$0xf]
  %v6051 = vld [vmem:[%s5 + $0xd14] sm:$0xff]
  %v6052 = vld [vmem:[%s5 + $0xd1c] sm:$0xf]
  %v6053 = vld [vmem:[%s5 + $0xd20] sm:$0xff]
  %v6054 = vld [vmem:[%s5 + $0xd28] sm:$0xf]
  %v6055 = vld [vmem:[%s5 + $0xd2c] sm:$0xff]
  %v6056 = vld [vmem:[%s5 + $0xd34] sm:$0xf]
  %v6057 = vld [vmem:[%s5 + $0xd38] sm:$0xff]
  %v6058 = vld [vmem:[%s5 + $0xd40] sm:$0xf]
  %v6059 = vld [vmem:[%s5 + $0xd44] sm:$0xff]
  %v6060 = vld [vmem:[%s5 + $0xd4c] sm:$0xf]
  %v6061 = vld [vmem:[%s5 + $0xd50] sm:$0xff]
  %v6062 = vld [vmem:[%s5 + $0xd58] sm:$0xf]
  %v6063 = vld [vmem:[%s5 + $0xd5c] sm:$0xff]
  %v6064 = vld [vmem:[%s5 + $0xd64] sm:$0xf]
  %v6065 = vld [vmem:[%s5 + $0xd68] sm:$0xff]
  %v6066 = vld [vmem:[%s5 + $0xd70] sm:$0xf]
  %v6067 = vld [vmem:[%s5 + $0xd74] sm:$0xff]
  %v6068 = vld [vmem:[%s5 + $0xd7c] sm:$0xf]
  %v6069 = vld [vmem:[%s5 + $0xd80] sm:$0xff]
  %v6070 = vld [vmem:[%s5 + $0xd88] sm:$0xf]
  %v6071 = vld [vmem:[%s5 + $0xd8c] sm:$0xff]
  %v6072 = vld [vmem:[%s5 + $0xd94] sm:$0xf]
  %v6073 = vld [vmem:[%s5 + $0xd98] sm:$0xff]
  %v6074 = vld [vmem:[%s5 + $0xda0] sm:$0xf]
  %v6075 = vld [vmem:[%s5 + $0xda4] sm:$0xff]
  %v6076 = vld [vmem:[%s5 + $0xdac] sm:$0xf]
  %v6077 = vld [vmem:[%s5 + $0xdb0] sm:$0xff]
  %v6078 = vld [vmem:[%s5 + $0xdb8] sm:$0xf]
  %v6079 = vld [vmem:[%s5 + $0xdbc] sm:$0xff]
  %v6080 = vld [vmem:[%s5 + $0xdc4] sm:$0xf]
  %v6081 = vld [vmem:[%s5 + $0xdc8] sm:$0xff]
  %v6082 = vld [vmem:[%s5 + $0xdd0] sm:$0xf]
  %v6083 = vld [vmem:[%s5 + $0xdd4] sm:$0xff]
  %v6084 = vld [vmem:[%s5 + $0xddc] sm:$0xf]
  %v6085 = vld [vmem:[%s5 + $0xde0] sm:$0xff]
  %v6086 = vld [vmem:[%s5 + $0xde8] sm:$0xf]
  %v6087 = vld [vmem:[%s5 + $0xdec] sm:$0xff]
  %v6088 = vld [vmem:[%s5 + $0xdf4] sm:$0xf]
  %v6089 = vld [vmem:[%s5 + $0xdf8] sm:$0xff]
  %v6090 = vld [vmem:[%s5 + $0xe00] sm:$0xf]
  %v6091 = vld [vmem:[%s5 + $0xe04] sm:$0xff]
  %v6092 = vld [vmem:[%s5 + $0xe0c] sm:$0xf]
  %v6093 = vld [vmem:[%s5 + $0xe10] sm:$0xff]
  %v6094 = vld [vmem:[%s5 + $0xe18] sm:$0xf]
  %v6095 = vld [vmem:[%s5 + $0xe1c] sm:$0xff]
  %v6096 = vld [vmem:[%s5 + $0xe24] sm:$0xf]
  %v6097 = vld [vmem:[%s5 + $0xe28] sm:$0xff]
  %v6098 = vld [vmem:[%s5 + $0xe30] sm:$0xf]
  %v6099 = vld [vmem:[%s5 + $0xe34] sm:$0xff]
  %v6100 = vld [vmem:[%s5 + $0xe3c] sm:$0xf]
  %v6101 = vld [vmem:[%s5 + $0xe40] sm:$0xff]
  %v6102 = vld [vmem:[%s5 + $0xe48] sm:$0xf]
  %v6103 = vld [vmem:[%s5 + $0xe4c] sm:$0xff]
  %v6104 = vld [vmem:[%s5 + $0xe54] sm:$0xf]
  %v6105 = vld [vmem:[%s5 + $0xe58] sm:$0xff]
  %v6106 = vld [vmem:[%s5 + $0xe60] sm:$0xf]
  %v6107 = vld [vmem:[%s5 + $0xe64] sm:$0xff]
  %v6108 = vld [vmem:[%s5 + $0xe6c] sm:$0xf]
  %v6109 = vld [vmem:[%s5 + $0xe70] sm:$0xff]
  %v6110 = vld [vmem:[%s5 + $0xe78] sm:$0xf]
  %v6111 = vld [vmem:[%s5 + $0xe7c] sm:$0xff]
  %v6112 = vld [vmem:[%s5 + $0xe84] sm:$0xf]
  %v6113 = vld [vmem:[%s5 + $0xe88] sm:$0xff]
  %v6114 = vld [vmem:[%s5 + $0xe90] sm:$0xf]
  %v6115 = vld [vmem:[%s5 + $0xe94] sm:$0xff]
  %v6116 = vld [vmem:[%s5 + $0xe9c] sm:$0xf]
  %v6117 = vld [vmem:[%s5 + $0xea0] sm:$0xff]
  %v6118 = vld [vmem:[%s5 + $0xea8] sm:$0xf]
  %v6119 = vld [vmem:[%s5 + $0xeac] sm:$0xff]
  %v6120 = vld [vmem:[%s5 + $0xeb4] sm:$0xf]
  %v6121 = vld [vmem:[%s5 + $0xeb8] sm:$0xff]
  %v6122 = vld [vmem:[%s5 + $0xec0] sm:$0xf]
  %v6123 = vld [vmem:[%s5 + $0xec4] sm:$0xff]
  %v6124 = vld [vmem:[%s5 + $0xecc] sm:$0xf]
  %v6125 = vld [vmem:[%s5 + $0xed0] sm:$0xff]
  %v6126 = vld [vmem:[%s5 + $0xed8] sm:$0xf]
  %v6127 = vld [vmem:[%s5 + $0xedc] sm:$0xff]
  %v6128 = vld [vmem:[%s5 + $0xee4] sm:$0xf]
  %v6129 = vld [vmem:[%s5 + $0xee8] sm:$0xff]
  %v6130 = vld [vmem:[%s5 + $0xef0] sm:$0xf]
  %v6131 = vld [vmem:[%s5 + $0xef4] sm:$0xff]
  %v6132 = vld [vmem:[%s5 + $0xefc] sm:$0xf]
  %v6133 = vld [vmem:[%s5 + $0xf00] sm:$0xff]
  %v6134 = vld [vmem:[%s5 + $0xf08] sm:$0xf]
  %v6135 = vld [vmem:[%s5 + $0xf0c] sm:$0xff]
  %v6136 = vld [vmem:[%s5 + $0xf14] sm:$0xf]
  %v6137 = vld [vmem:[%s5 + $0xf18] sm:$0xff]
  %v6138 = vld [vmem:[%s5 + $0xf20] sm:$0xf]
  %v6139 = vld [vmem:[%s5 + $0xf24] sm:$0xff]
  %v6140 = vld [vmem:[%s5 + $0xf2c] sm:$0xf]
  %v6141 = vld [vmem:[%s5 + $0xf30] sm:$0xff]
  %v6142 = vld [vmem:[%s5 + $0xf38] sm:$0xf]
  %v6143 = vld [vmem:[%s5 + $0xf3c] sm:$0xff]
  %v6144 = vld [vmem:[%s5 + $0xf44] sm:$0xf]
  %v6145 = vld [vmem:[%s5 + $0xf48] sm:$0xff]
  %v6146 = vld [vmem:[%s5 + $0xf50] sm:$0xf]
  %v6147 = vld [vmem:[%s5 + $0xf54] sm:$0xff]
  %v6148 = vld [vmem:[%s5 + $0xf5c] sm:$0xf]
  %v6149 = vld [vmem:[%s5 + $0xf60] sm:$0xff]
  %v6150 = vld [vmem:[%s5 + $0xf68] sm:$0xf]
  %v6151 = vld [vmem:[%s5 + $0xf6c] sm:$0xff]
  %v6152 = vld [vmem:[%s5 + $0xf74] sm:$0xf]
  %v6153 = vld [vmem:[%s5 + $0xf78] sm:$0xff]
  %v6154 = vld [vmem:[%s5 + $0xf80] sm:$0xf]
  %v6155 = vld [vmem:[%s5 + $0xf84] sm:$0xff]
  %v6156 = vld [vmem:[%s5 + $0xf8c] sm:$0xf]
  %v6157 = vld [vmem:[%s5 + $0xf90] sm:$0xff]
  %v6158 = vld [vmem:[%s5 + $0xf98] sm:$0xf]
  %v6159 = vld [vmem:[%s5 + $0xf9c] sm:$0xff]
  %v6160 = vld [vmem:[%s5 + $0xfa4] sm:$0xf]
  %v6161 = vld [vmem:[%s5 + $0xfa8] sm:$0xff]
  %v6162 = vld [vmem:[%s5 + $0xfb0] sm:$0xf]
  %v6163 = vld [vmem:[%s5 + $0xfb4] sm:$0xff]
  %v6164 = vld [vmem:[%s5 + $0xfbc] sm:$0xf]
  %v6165 = vld [vmem:[%s5 + $0xfc0] sm:$0xff]
  %v6166 = vld [vmem:[%s5 + $0xfc8] sm:$0xf]
  %v6167 = vld [vmem:[%s5 + $0xfcc] sm:$0xff]
  %v6168 = vld [vmem:[%s5 + $0xfd4] sm:$0xf]
  %v6169 = vld [vmem:[%s5 + $0xfd8] sm:$0xff]
  %v6170 = vld [vmem:[%s5 + $0xfe0] sm:$0xf]
  %v6171 = vld [vmem:[%s5 + $0xfe4] sm:$0xff]
  %v6172 = vld [vmem:[%s5 + $0xfec] sm:$0xf]
  %v6173 = vld [vmem:[%s5 + $0xff0] sm:$0xff]
  %v6174 = vld [vmem:[%s5 + $0xff8] sm:$0xf]
  %v6175 = vld [vmem:[%s5 + $0xffc] sm:$0xff]
  %v6176 = vld [vmem:[%s5 + $0x1004] sm:$0xf]
  %v6177 = vld [vmem:[%s5 + $0x1008] sm:$0xff]
  %v6178 = vld [vmem:[%s5 + $0x1010] sm:$0xf]
  %v6179 = vld [vmem:[%s5 + $0x1014] sm:$0xff]
  %v6180 = vld [vmem:[%s5 + $0x101c] sm:$0xf]
  %v6181 = vld [vmem:[%s5 + $0x1020] sm:$0xff]
  %v6182 = vld [vmem:[%s5 + $0x1028] sm:$0xf]
  %v6183 = vld [vmem:[%s5 + $0x102c] sm:$0xff]
  %v6184 = vld [vmem:[%s5 + $0x1034] sm:$0xf]
  %v6185 = vld [vmem:[%s5 + $0x1038] sm:$0xff]
  %v6186 = vld [vmem:[%s5 + $0x1040] sm:$0xf]
  %v6187 = vld [vmem:[%s5 + $0x1044] sm:$0xff]
  %v6188 = vld [vmem:[%s5 + $0x104c] sm:$0xf]
  %v6189 = vld [vmem:[%s5 + $0x1050] sm:$0xff]
  %v6190 = vld [vmem:[%s5 + $0x1058] sm:$0xf]
  %v6191 = vld [vmem:[%s5 + $0x105c] sm:$0xff]
  %v6192 = vld [vmem:[%s5 + $0x1064] sm:$0xf]
  %v6193 = vld [vmem:[%s5 + $0x1068] sm:$0xff]
  %v6194 = vld [vmem:[%s5 + $0x1070] sm:$0xf]
  %v6195 = vld [vmem:[%s5 + $0x1074] sm:$0xff]
  %v6196 = vld [vmem:[%s5 + $0x107c] sm:$0xf]
  %v6197 = vld [vmem:[%s5 + $0x1080] sm:$0xff]
  %v6198 = vld [vmem:[%s5 + $0x1088] sm:$0xf]
  %v6199 = vld [vmem:[%s5 + $0x108c] sm:$0xff]
  %v6200 = vld [vmem:[%s5 + $0x1094] sm:$0xf]
  %v6201 = vld [vmem:[%s5 + $0x1098] sm:$0xff]
  %v6202 = vld [vmem:[%s5 + $0x10a0] sm:$0xf]
  %v6203 = vld [vmem:[%s5 + $0x10a4] sm:$0xff]
  %v6204 = vld [vmem:[%s5 + $0x10ac] sm:$0xf]
  %v6205 = vld [vmem:[%s5 + $0x10b0] sm:$0xff]
  %v6206 = vld [vmem:[%s5 + $0x10b8] sm:$0xf]
  %v6207 = vld [vmem:[%s5 + $0x10bc] sm:$0xff]
  %v6208 = vld [vmem:[%s5 + $0x10c4] sm:$0xf]
  %v6209 = vld [vmem:[%s5 + $0x10c8] sm:$0xff]
  %v6210 = vld [vmem:[%s5 + $0x10d0] sm:$0xf]
  %v6211 = vld [vmem:[%s5 + $0x10d4] sm:$0xff]
  %v6212 = vld [vmem:[%s5 + $0x10dc] sm:$0xf]
  %v6213 = vld [vmem:[%s5 + $0x10e0] sm:$0xff]
  %v6214 = vld [vmem:[%s5 + $0x10e8] sm:$0xf]
  %v6215 = vld [vmem:[%s5 + $0x10ec] sm:$0xff]
  %v6216 = vld [vmem:[%s5 + $0x10f4] sm:$0xf]
  %v6217 = vld [vmem:[%s5 + $0x10f8] sm:$0xff]
  %v6218 = vld [vmem:[%s5 + $0x1100] sm:$0xf]
  %v6219 = vld [vmem:[%s5 + $0x1104] sm:$0xff]
  %v6220 = vld [vmem:[%s5 + $0x110c] sm:$0xf]
  %v6221 = vld [vmem:[%s5 + $0x1110] sm:$0xff]
  %v6222 = vld [vmem:[%s5 + $0x1118] sm:$0xf]
  %v6223 = vld [vmem:[%s5 + $0x111c] sm:$0xff]
  %v6224 = vld [vmem:[%s5 + $0x1124] sm:$0xf]
  %v6225 = vld [vmem:[%s5 + $0x1128] sm:$0xff]
  %v6226 = vld [vmem:[%s5 + $0x1130] sm:$0xf]
  %v6227 = vld [vmem:[%s5 + $0x1134] sm:$0xff]
  %v6228 = vld [vmem:[%s5 + $0x113c] sm:$0xf]
  %v6229 = vld [vmem:[%s5 + $0x1140] sm:$0xff]
  %v6230 = vld [vmem:[%s5 + $0x1148] sm:$0xf]
  %v6231 = vld [vmem:[%s5 + $0x114c] sm:$0xff]
  %v6232 = vld [vmem:[%s5 + $0x1154] sm:$0xf]
  %v6233 = vld [vmem:[%s5 + $0x1158] sm:$0xff]
  %v6234 = vld [vmem:[%s5 + $0x1160] sm:$0xf]
  %v6235 = vld [vmem:[%s5 + $0x1164] sm:$0xff]
  %v6236 = vld [vmem:[%s5 + $0x116c] sm:$0xf]
  %v6237 = vld [vmem:[%s5 + $0x1170] sm:$0xff]
  %v6238 = vld [vmem:[%s5 + $0x1178] sm:$0xf]
  %v6239 = vld [vmem:[%s5 + $0x117c] sm:$0xff]
  %v6240 = vld [vmem:[%s5 + $0x1184] sm:$0xf]
  %v6241 = vld [vmem:[%s5 + $0x1188] sm:$0xff]
  %v6242 = vld [vmem:[%s5 + $0x1190] sm:$0xf]
  %v6243 = vld [vmem:[%s5 + $0x1194] sm:$0xff]
  %v6244 = vld [vmem:[%s5 + $0x119c] sm:$0xf]
  %v6245 = vld [vmem:[%s5 + $0x11a0] sm:$0xff]
  %v6246 = vld [vmem:[%s5 + $0x11a8] sm:$0xf]
  %v6247 = vld [vmem:[%s5 + $0x11ac] sm:$0xff]
  %v6248 = vld [vmem:[%s5 + $0x11b4] sm:$0xf]
  %v6249 = vld [vmem:[%s5 + $0x11b8] sm:$0xff]
  %v6250 = vld [vmem:[%s5 + $0x11c0] sm:$0xf]
  %v6251 = vld [vmem:[%s5 + $0x11c4] sm:$0xff]
  %v6252 = vld [vmem:[%s5 + $0x11cc] sm:$0xf]
  %v6253 = vld [vmem:[%s5 + $0x11d0] sm:$0xff]
  %v6254 = vld [vmem:[%s5 + $0x11d8] sm:$0xf]
  %v6255 = vld [vmem:[%s5 + $0x11dc] sm:$0xff]
  %v6256 = vld [vmem:[%s5 + $0x11e4] sm:$0xf]
  %v6257 = vld [vmem:[%s5 + $0x11e8] sm:$0xff]
  %v6258 = vld [vmem:[%s5 + $0x11f0] sm:$0xf]
  %v6259 = vld [vmem:[%s5 + $0x11f4] sm:$0xff]
  %v6260 = vld [vmem:[%s5 + $0x11fc] sm:$0xf]
  %v6261 = vld [vmem:[%s5 + $0x1200] sm:$0xff]
  %v6262 = vld [vmem:[%s5 + $0x1208] sm:$0xf]
  %v6263 = vld [vmem:[%s5 + $0x120c] sm:$0xff]
  %v6264 = vld [vmem:[%s5 + $0x1214] sm:$0xf]
  %v6265 = vld [vmem:[%s5 + $0x1218] sm:$0xff]
  %v6266 = vld [vmem:[%s5 + $0x1220] sm:$0xf]
  %v6267 = vld [vmem:[%s5 + $0x1224] sm:$0xff]
  %v6268 = vld [vmem:[%s5 + $0x122c] sm:$0xf]
  %v6269 = vld [vmem:[%s5 + $0x1230] sm:$0xff]
  %v6270 = vld [vmem:[%s5 + $0x1238] sm:$0xf]
  %v6271 = vld [vmem:[%s5 + $0x123c] sm:$0xff]
  %v6272 = vld [vmem:[%s5 + $0x1244] sm:$0xf]
  %v6273 = vld [vmem:[%s5 + $0x1248] sm:$0xff]
  %v6274 = vld [vmem:[%s5 + $0x1250] sm:$0xf]
  %v6275 = vld [vmem:[%s5 + $0x1254] sm:$0xff]
  %v6276 = vld [vmem:[%s5 + $0x125c] sm:$0xf]
  %v6277 = vld [vmem:[%s5 + $0x1260] sm:$0xff]
  %v6278 = vld [vmem:[%s5 + $0x1268] sm:$0xf]
  %v6279 = vld [vmem:[%s5 + $0x126c] sm:$0xff]
  %v6280 = vld [vmem:[%s5 + $0x1274] sm:$0xf]
  %v6281 = vld [vmem:[%s5 + $0x1278] sm:$0xff]
  %v6282 = vld [vmem:[%s5 + $0x1280] sm:$0xf]
  %v6283 = vld [vmem:[%s5 + $0x1284] sm:$0xff]
  %v6284 = vld [vmem:[%s5 + $0x128c] sm:$0xf]
  %v6285 = vld [vmem:[%s5 + $0x1290] sm:$0xff]
  %v6286 = vld [vmem:[%s5 + $0x1298] sm:$0xf]
  %v6287 = vld [vmem:[%s5 + $0x129c] sm:$0xff]
  %v6288 = vld [vmem:[%s5 + $0x12a4] sm:$0xf]
  %v6289 = vld [vmem:[%s5 + $0x12a8] sm:$0xff]
  %v6290 = vld [vmem:[%s5 + $0x12b0] sm:$0xf]
  %v6291 = vld [vmem:[%s5 + $0x12b4] sm:$0xff]
  %v6292 = vld [vmem:[%s5 + $0x12bc] sm:$0xf]
  %v6293 = vld [vmem:[%s5 + $0x12c0] sm:$0xff]
  %v6294 = vld [vmem:[%s5 + $0x12c8] sm:$0xf]
  %v6295 = vld [vmem:[%s5 + $0x12cc] sm:$0xff]
  %v6296 = vld [vmem:[%s5 + $0x12d4] sm:$0xf]
  %v6297 = vld [vmem:[%s5 + $0x12d8] sm:$0xff]
  %v6298 = vld [vmem:[%s5 + $0x12e0] sm:$0xf]
  %v6299 = vld [vmem:[%s5 + $0x12e4] sm:$0xff]
  %v6300 = vld [vmem:[%s5 + $0x12ec] sm:$0xf]
  %v6301 = vld [vmem:[%s5 + $0x12f0] sm:$0xff]
  %v6302 = vld [vmem:[%s5 + $0x12f8] sm:$0xf]
  %v6303 = vld [vmem:[%s5 + $0x12fc] sm:$0xff]
  %v6304 = vld [vmem:[%s5 + $0x1304] sm:$0xf]
  %v6305 = vld [vmem:[%s5 + $0x1308] sm:$0xff]
  %v6306 = vld [vmem:[%s5 + $0x1310] sm:$0xf]
  %v6307 = vld [vmem:[%s5 + $0x1314] sm:$0xff]
  %v6308 = vld [vmem:[%s5 + $0x131c] sm:$0xf]
  %v6309 = vld [vmem:[%s5 + $0x1320] sm:$0xff]
  %v6310 = vld [vmem:[%s5 + $0x1328] sm:$0xf]
  %v6311 = vld [vmem:[%s5 + $0x132c] sm:$0xff]
  %v6312 = vld [vmem:[%s5 + $0x1334] sm:$0xf]
  %v6313 = vld [vmem:[%s5 + $0x1338] sm:$0xff]
  %v6314 = vld [vmem:[%s5 + $0x1340] sm:$0xf]
  %v6315 = vld [vmem:[%s5 + $0x1344] sm:$0xff]
  %v6316 = vld [vmem:[%s5 + $0x134c] sm:$0xf]
  %v6317 = vld [vmem:[%s5 + $0x1350] sm:$0xff]
  %v6318 = vld [vmem:[%s5 + $0x1358] sm:$0xf]
  %v6319 = vld [vmem:[%s5 + $0x135c] sm:$0xff]
  %v6320 = vld [vmem:[%s5 + $0x1364] sm:$0xf]
  %v6321 = vld [vmem:[%s5 + $0x1368] sm:$0xff]
  %v6322 = vld [vmem:[%s5 + $0x1370] sm:$0xf]
  %v6323 = vld [vmem:[%s5 + $0x1374] sm:$0xff]
  %v6324 = vld [vmem:[%s5 + $0x137c] sm:$0xf]
  %v6325 = vld [vmem:[%s5 + $0x1380] sm:$0xff]
  %v6326 = vld [vmem:[%s5 + $0x1388] sm:$0xf]
  %v6327 = vld [vmem:[%s5 + $0x138c] sm:$0xff]
  %v6328 = vld [vmem:[%s5 + $0x1394] sm:$0xf]
  %v6329 = vld [vmem:[%s5 + $0x1398] sm:$0xff]
  %v6330 = vld [vmem:[%s5 + $0x13a0] sm:$0xf]
  %v6331 = vld [vmem:[%s5 + $0x13a4] sm:$0xff]
  %v6332 = vld [vmem:[%s5 + $0x13ac] sm:$0xf]
  %v6333 = vld [vmem:[%s5 + $0x13b0] sm:$0xff]
  %v6334 = vld [vmem:[%s5 + $0x13b8] sm:$0xf]
  %v6335 = vld [vmem:[%s5 + $0x13bc] sm:$0xff]
  %v6336 = vld [vmem:[%s5 + $0x13c4] sm:$0xf]
  %v6337 = vld [vmem:[%s5 + $0x13c8] sm:$0xff]
  %v6338 = vld [vmem:[%s5 + $0x13d0] sm:$0xf]
  %v6339 = vld [vmem:[%s5 + $0x13d4] sm:$0xff]
  %v6340 = vld [vmem:[%s5 + $0x13dc] sm:$0xf]
  %v6341 = vld [vmem:[%s5 + $0x13e0] sm:$0xff]
  %v6342 = vld [vmem:[%s5 + $0x13e8] sm:$0xf]
  %v6343 = vld [vmem:[%s5 + $0x13ec] sm:$0xff]
  %v6344 = vld [vmem:[%s5 + $0x13f4] sm:$0xf]
  %v6345 = vld [vmem:[%s5 + $0x13f8] sm:$0xff]
  %v6346 = vld [vmem:[%s5 + $0x1400] sm:$0xf]
  %v6347 = vld [vmem:[%s5 + $0x1404] sm:$0xff]
  %v6348 = vld [vmem:[%s5 + $0x140c] sm:$0xf]
  %v6349 = vld [vmem:[%s5 + $0x1410] sm:$0xff]
  %v6350 = vld [vmem:[%s5 + $0x1418] sm:$0xf]
  %v6351 = vld [vmem:[%s5 + $0x141c] sm:$0xff]
  %v6352 = vld [vmem:[%s5 + $0x1424] sm:$0xf]
  %v6353 = vld [vmem:[%s5 + $0x1428] sm:$0xff]
  %v6354 = vld [vmem:[%s5 + $0x1430] sm:$0xf]
  %v6355 = vld [vmem:[%s5 + $0x1434] sm:$0xff]
  %v6356 = vld [vmem:[%s5 + $0x143c] sm:$0xf]
  %v6357 = vld [vmem:[%s5 + $0x1440] sm:$0xff]
  %v6358 = vld [vmem:[%s5 + $0x1448] sm:$0xf]
  %v6359 = vld [vmem:[%s5 + $0x144c] sm:$0xff]
  %v6360 = vld [vmem:[%s5 + $0x1454] sm:$0xf]
  %v6361 = vld [vmem:[%s5 + $0x1458] sm:$0xff]
  %v6362 = vld [vmem:[%s5 + $0x1460] sm:$0xf]
  %v6363 = vld [vmem:[%s5 + $0x1464] sm:$0xff]
  %v6364 = vld [vmem:[%s5 + $0x146c] sm:$0xf]
  %v6365 = vld [vmem:[%s5 + $0x1470] sm:$0xff]
  %v6366 = vld [vmem:[%s5 + $0x1478] sm:$0xf]
  %v6367 = vld [vmem:[%s5 + $0x147c] sm:$0xff]
  %v6368 = vld [vmem:[%s5 + $0x1484] sm:$0xf]
  %v6369 = vld [vmem:[%s5 + $0x1488] sm:$0xff]
  %v6370 = vld [vmem:[%s5 + $0x1490] sm:$0xf]
  %v6371 = vld [vmem:[%s5 + $0x1494] sm:$0xff]
  %v6372 = vld [vmem:[%s5 + $0x149c] sm:$0xf]
  %v6373 = vld [vmem:[%s5 + $0x14a0] sm:$0xff]
  %v6374 = vld [vmem:[%s5 + $0x14a8] sm:$0xf]
  %v6375 = vld [vmem:[%s5 + $0x14ac] sm:$0xff]
  %v6376 = vld [vmem:[%s5 + $0x14b4] sm:$0xf]
  %v6377 = vld [vmem:[%s5 + $0x14b8] sm:$0xff]
  %v6378 = vld [vmem:[%s5 + $0x14c0] sm:$0xf]
  %v6379 = vld [vmem:[%s5 + $0x14c4] sm:$0xff]
  %v6380 = vld [vmem:[%s5 + $0x14cc] sm:$0xf]
  %v6381 = vld [vmem:[%s5 + $0x14d0] sm:$0xff]
  %v6382 = vld [vmem:[%s5 + $0x14d8] sm:$0xf]
  %v6383 = vld [vmem:[%s5 + $0x14dc] sm:$0xff]
  %v6384 = vld [vmem:[%s5 + $0x14e4] sm:$0xf]
  %v6385 = vld [vmem:[%s5 + $0x14e8] sm:$0xff]
  %v6386 = vld [vmem:[%s5 + $0x14f0] sm:$0xf]
  %v6387 = vld [vmem:[%s5 + $0x14f4] sm:$0xff]
  %v6388 = vld [vmem:[%s5 + $0x14fc] sm:$0xf]
  %v6389 = vld [vmem:[%s5 + $0x1500] sm:$0xff]
  %v6390 = vld [vmem:[%s5 + $0x1508] sm:$0xf]
  %v6391 = vld [vmem:[%s5 + $0x150c] sm:$0xff]
  %v6392 = vld [vmem:[%s5 + $0x1514] sm:$0xf]
  %v6393 = vld [vmem:[%s5 + $0x1518] sm:$0xff]
  %v6394 = vld [vmem:[%s5 + $0x1520] sm:$0xf]
  %v6395 = vld [vmem:[%s5 + $0x1524] sm:$0xff]
  %v6396 = vld [vmem:[%s5 + $0x152c] sm:$0xf]
  %v6397 = vld [vmem:[%s5 + $0x1530] sm:$0xff]
  %v6398 = vld [vmem:[%s5 + $0x1538] sm:$0xf]
  %v6399 = vld [vmem:[%s5 + $0x153c] sm:$0xff]
  %v6400 = vld [vmem:[%s5 + $0x1544] sm:$0xf]
  %v6401 = vld [vmem:[%s5 + $0x1548] sm:$0xff]
  %v6402 = vld [vmem:[%s5 + $0x1550] sm:$0xf]
  %v6403 = vld [vmem:[%s5 + $0x1554] sm:$0xff]
  %v6404 = vld [vmem:[%s5 + $0x155c] sm:$0xf]
  %v6405 = vld [vmem:[%s5 + $0x1560] sm:$0xff]
  %v6406 = vld [vmem:[%s5 + $0x1568] sm:$0xf]
  %v6407 = vld [vmem:[%s5 + $0x156c] sm:$0xff]
  %v6408 = vld [vmem:[%s5 + $0x1574] sm:$0xf]
  %v6409 = vld [vmem:[%s5 + $0x1578] sm:$0xff]
  %v6410 = vld [vmem:[%s5 + $0x1580] sm:$0xf]
  %v6411 = vld [vmem:[%s5 + $0x1584] sm:$0xff]
  %v6412 = vld [vmem:[%s5 + $0x158c] sm:$0xf]
  %v6413 = vld [vmem:[%s5 + $0x1590] sm:$0xff]
  %v6414 = vld [vmem:[%s5 + $0x1598] sm:$0xf]
  %v6415 = vld [vmem:[%s5 + $0x159c] sm:$0xff]
  %v6416 = vld [vmem:[%s5 + $0x15a4] sm:$0xf]
  %v6417 = vld [vmem:[%s5 + $0x15a8] sm:$0xff]
  %v6418 = vld [vmem:[%s5 + $0x15b0] sm:$0xf]
  %v6419 = vld [vmem:[%s5 + $0x15b4] sm:$0xff]
  %v6420 = vld [vmem:[%s5 + $0x15bc] sm:$0xf]
  %v6421 = vld [vmem:[%s5 + $0x15c0] sm:$0xff]
  %v6422 = vld [vmem:[%s5 + $0x15c8] sm:$0xf]
  %v6423 = vld [vmem:[%s5 + $0x15cc] sm:$0xff]
  %v6424 = vld [vmem:[%s5 + $0x15d4] sm:$0xf]
  %v6425 = vld [vmem:[%s5 + $0x15d8] sm:$0xff]
  %v6426 = vld [vmem:[%s5 + $0x15e0] sm:$0xf]
  %v6427 = vld [vmem:[%s5 + $0x15e4] sm:$0xff]
  %v6428 = vld [vmem:[%s5 + $0x15ec] sm:$0xf]
  %v6429 = vld [vmem:[%s5 + $0x15f0] sm:$0xff]
  %v6430 = vld [vmem:[%s5 + $0x15f8] sm:$0xf]
  %v6431 = vld [vmem:[%s5 + $0x15fc] sm:$0xff]
  %v6432 = vld [vmem:[%s5 + $0x1604] sm:$0xf]
  %v6433 = vld [vmem:[%s5 + $0x1608] sm:$0xff]
  %v6434 = vld [vmem:[%s5 + $0x1610] sm:$0xf]
  %v6435 = vld [vmem:[%s5 + $0x1614] sm:$0xff]
  %v6436 = vld [vmem:[%s5 + $0x161c] sm:$0xf]
  %v6437 = vld [vmem:[%s5 + $0x1620] sm:$0xff]
  %v6438 = vld [vmem:[%s5 + $0x1628] sm:$0xf]
  %v6439 = vld [vmem:[%s5 + $0x162c] sm:$0xff]
  %v6440 = vld [vmem:[%s5 + $0x1634] sm:$0xf]
  %v6441 = vld [vmem:[%s5 + $0x1638] sm:$0xff]
  %v6442 = vld [vmem:[%s5 + $0x1640] sm:$0xf]
  %v6443 = vld [vmem:[%s5 + $0x1644] sm:$0xff]
  %v6444 = vld [vmem:[%s5 + $0x164c] sm:$0xf]
  %v6445 = vld [vmem:[%s5 + $0x1650] sm:$0xff]
  %v6446 = vld [vmem:[%s5 + $0x1658] sm:$0xf]
  %v6447 = vld [vmem:[%s5 + $0x165c] sm:$0xff]
  %v6448 = vld [vmem:[%s5 + $0x1664] sm:$0xf]
  %v6449 = vld [vmem:[%s5 + $0x1668] sm:$0xff]
  %v6450 = vld [vmem:[%s5 + $0x1670] sm:$0xf]
  %v6451 = vld [vmem:[%s5 + $0x1674] sm:$0xff]
  %v6452 = vld [vmem:[%s5 + $0x167c] sm:$0xf]
  %v6453 = vld [vmem:[%s5 + $0x1680] sm:$0xff]
  %v6454 = vld [vmem:[%s5 + $0x1688] sm:$0xf]
  %v6455 = vld [vmem:[%s5 + $0x168c] sm:$0xff]
  %v6456 = vld [vmem:[%s5 + $0x1694] sm:$0xf]
  %v6457 = vld [vmem:[%s5 + $0x1698] sm:$0xff]
  %v6458 = vld [vmem:[%s5 + $0x16a0] sm:$0xf]
  %v6459 = vld [vmem:[%s5 + $0x16a4] sm:$0xff]
  %v6460 = vld [vmem:[%s5 + $0x16ac] sm:$0xf]
  %v6461 = vld [vmem:[%s5 + $0x16b0] sm:$0xff]
  %v6462 = vld [vmem:[%s5 + $0x16b8] sm:$0xf]
  %v6463 = vld [vmem:[%s5 + $0x16bc] sm:$0xff]
  %v6464 = vld [vmem:[%s5 + $0x16c4] sm:$0xf]
  %v6465 = vld [vmem:[%s5 + $0x16c8] sm:$0xff]
  %v6466 = vld [vmem:[%s5 + $0x16d0] sm:$0xf]
  %v6467 = vld [vmem:[%s5 + $0x16d4] sm:$0xff]
  %v6468 = vld [vmem:[%s5 + $0x16dc] sm:$0xf]
  %v6469 = vld [vmem:[%s5 + $0x16e0] sm:$0xff]
  %v6470 = vld [vmem:[%s5 + $0x16e8] sm:$0xf]
  %v6471 = vld [vmem:[%s5 + $0x16ec] sm:$0xff]
  %v6472 = vld [vmem:[%s5 + $0x16f4] sm:$0xf]
  %v6473 = vld [vmem:[%s5 + $0x16f8] sm:$0xff]
  %v6474 = vld [vmem:[%s5 + $0x1700] sm:$0xf]
  %v6475 = vld [vmem:[%s5 + $0x1704] sm:$0xff]
  %v6476 = vld [vmem:[%s5 + $0x170c] sm:$0xf]
  %v6477 = vld [vmem:[%s5 + $0x1710] sm:$0xff]
  %v6478 = vld [vmem:[%s5 + $0x1718] sm:$0xf]
  %v6479 = vld [vmem:[%s5 + $0x171c] sm:$0xff]
  %v6480 = vld [vmem:[%s5 + $0x1724] sm:$0xf]
  %v6481 = vld [vmem:[%s5 + $0x1728] sm:$0xff]
  %v6482 = vld [vmem:[%s5 + $0x1730] sm:$0xf]
  %v6483 = vld [vmem:[%s5 + $0x1734] sm:$0xff]
  %v6484 = vld [vmem:[%s5 + $0x173c] sm:$0xf]
  %v6485 = vld [vmem:[%s5 + $0x1740] sm:$0xff]
  %v6486 = vld [vmem:[%s5 + $0x1748] sm:$0xf]
  %v6487 = vld [vmem:[%s5 + $0x174c] sm:$0xff]
  %v6488 = vld [vmem:[%s5 + $0x1754] sm:$0xf]
  %v6489 = vld [vmem:[%s5 + $0x1758] sm:$0xff]
  %v6490 = vld [vmem:[%s5 + $0x1760] sm:$0xf]
  %v6491 = vld [vmem:[%s5 + $0x1764] sm:$0xff]
  %v6492 = vld [vmem:[%s5 + $0x176c] sm:$0xf]
  %v6493 = vld [vmem:[%s5 + $0x1770] sm:$0xff]
  %v6494 = vld [vmem:[%s5 + $0x1778] sm:$0xf]
  %v6495 = vld [vmem:[%s5 + $0x177c] sm:$0xff]
  %v6496 = vld [vmem:[%s5 + $0x1784] sm:$0xf]
  %v6497 = vld [vmem:[%s5 + $0x1788] sm:$0xff]
  %v6498 = vld [vmem:[%s5 + $0x1790] sm:$0xf]
  %v6499 = vld [vmem:[%s5 + $0x1794] sm:$0xff]
  %v6500 = vld [vmem:[%s5 + $0x179c] sm:$0xf]
  %v6501 = vld [vmem:[%s5 + $0x17a0] sm:$0xff]
  %v6502 = vld [vmem:[%s5 + $0x17a8] sm:$0xf]
  %v6503 = vld [vmem:[%s5 + $0x17ac] sm:$0xff]
  %v6504 = vld [vmem:[%s5 + $0x17b4] sm:$0xf]
  %v6505 = vld [vmem:[%s5 + $0x17b8] sm:$0xff]
  %v6506 = vld [vmem:[%s5 + $0x17c0] sm:$0xf]
  %v6507 = vld [vmem:[%s5 + $0x17c4] sm:$0xff]
  %v6508 = vld [vmem:[%s5 + $0x17cc] sm:$0xf]
  %v6509 = vld [vmem:[%s5 + $0x17d0] sm:$0xff]
  %v6510 = vld [vmem:[%s5 + $0x17d8] sm:$0xf]
  %v6511 = vld [vmem:[%s5 + $0x17dc] sm:$0xff]
  %v6512 = vld [vmem:[%s5 + $0x17e4] sm:$0xf]
  %v6513 = vld [vmem:[%s5 + $0x17e8] sm:$0xff]
  %v6514 = vld [vmem:[%s5 + $0x17f0] sm:$0xf]
  %v6515 = vld [vmem:[%s5 + $0x17f4] sm:$0xff]
  %v6516 = vld [vmem:[%s5 + $0x17fc] sm:$0xf]
  %v6517 = vld [vmem:[%s5 + $0x1800] sm:$0xff]
  %v6518 = vld [vmem:[%s5 + $0x1808] sm:$0xf]
  %v6519 = vld [vmem:[%s5 + $0x180c] sm:$0xff]
  %v6520 = vld [vmem:[%s5 + $0x1814] sm:$0xf]
  %v6521 = vld [vmem:[%s5 + $0x1818] sm:$0xff]
  %v6522 = vld [vmem:[%s5 + $0x1820] sm:$0xf]
  %v6523 = vld [vmem:[%s5 + $0x1824] sm:$0xff]
  %v6524 = vld [vmem:[%s5 + $0x182c] sm:$0xf]
  %v6525 = vld [vmem:[%s5 + $0x1830] sm:$0xff]
  %v6526 = vld [vmem:[%s5 + $0x1838] sm:$0xf]
  %v6527 = vld [vmem:[%s5 + $0x183c] sm:$0xff]
  %v6528 = vld [vmem:[%s5 + $0x1844] sm:$0xf]
  %v6529 = vld [vmem:[%s5 + $0x1848] sm:$0xff]
  %v6530 = vld [vmem:[%s5 + $0x1850] sm:$0xf]
  %v6531 = vld [vmem:[%s5 + $0x1854] sm:$0xff]
  %v6532 = vld [vmem:[%s5 + $0x185c] sm:$0xf]
  %v6533 = vld [vmem:[%s5 + $0x1860] sm:$0xff]
  %v6534 = vld [vmem:[%s5 + $0x1868] sm:$0xf]
  %v6535 = vld [vmem:[%s5 + $0x186c] sm:$0xff]
  %v6536 = vld [vmem:[%s5 + $0x1874] sm:$0xf]
  %v6537 = vld [vmem:[%s5 + $0x1878] sm:$0xff]
  %v6538 = vld [vmem:[%s5 + $0x1880] sm:$0xf]
  %v6539 = vld [vmem:[%s5 + $0x1884] sm:$0xff]
  %v6540 = vld [vmem:[%s5 + $0x188c] sm:$0xf]
  %v6541 = vld [vmem:[%s5 + $0x1890] sm:$0xff]
  %v6542 = vld [vmem:[%s5 + $0x1898] sm:$0xf]
  %v6543 = vld [vmem:[%s5 + $0x189c] sm:$0xff]
  %v6544 = vld [vmem:[%s5 + $0x18a4] sm:$0xf]
  %v6545 = vld [vmem:[%s5 + $0x18a8] sm:$0xff]
  %v6546 = vld [vmem:[%s5 + $0x18b0] sm:$0xf]
  %v6547 = vld [vmem:[%s5 + $0x18b4] sm:$0xff]
  %v6548 = vld [vmem:[%s5 + $0x18bc] sm:$0xf]
  %v6549 = vld [vmem:[%s5 + $0x18c0] sm:$0xff]
  %v6550 = vld [vmem:[%s5 + $0x18c8] sm:$0xf]
  %v6551 = vld [vmem:[%s5 + $0x18cc] sm:$0xff]
  %v6552 = vld [vmem:[%s5 + $0x18d4] sm:$0xf]
  %v6553 = vld [vmem:[%s5 + $0x18d8] sm:$0xff]
  %v6554 = vld [vmem:[%s5 + $0x18e0] sm:$0xf]
  %v6555 = vld [vmem:[%s5 + $0x18e4] sm:$0xff]
  %v6556 = vld [vmem:[%s5 + $0x18ec] sm:$0xf]
  %v6557 = vld [vmem:[%s5 + $0x18f0] sm:$0xff]
  %v6558 = vld [vmem:[%s5 + $0x18f8] sm:$0xf]
  %v6559 = vld [vmem:[%s5 + $0x18fc] sm:$0xff]
  %v6560 = vld [vmem:[%s5 + $0x1904] sm:$0xf]
  %v6561 = vld [vmem:[%s5 + $0x1908] sm:$0x33]
  %v6562 = vld [vmem:[%s5 + $0x1910] sm:$0x3]
  %v6563 = vld [vmem:[%s6] sm:$0x7]
  %v6565 = vperm.slane %v6563, 0
  %v6566 = vperm.slane %v6563, 1
  %v6567 = vperm.slane %v6563, 2
  %v7641 = vunpack.c.l.b16 %v5493
  %v7642 = vunpack.c.h.b16 %v5493
  %v7643 = vunpack.c.l.b16 %v5494
  %v7644 = vunpack.c.l.b16 %v5495
  %v7645 = vunpack.c.h.b16 %v5495
  %v7646 = vunpack.c.l.b16 %v5496
  %v7647 = vunpack.c.l.b16 %v5497
  %v7648 = vunpack.c.h.b16 %v5497
  %v7649 = vunpack.c.l.b16 %v5498
  %v7650 = vunpack.c.l.b16 %v5499
  %v7651 = vunpack.c.h.b16 %v5499
  %v7652 = vunpack.c.l.b16 %v5500
  %v7653 = vunpack.c.l.b16 %v5501
  %v7654 = vunpack.c.h.b16 %v5501
  %v7655 = vunpack.c.l.b16 %v5502
  %v7656 = vunpack.c.l.b16 %v5503
  %v7657 = vunpack.c.h.b16 %v5503
  %v7658 = vunpack.c.l.b16 %v5504
  %v7659 = vunpack.c.l.b16 %v5505
  %v7660 = vunpack.c.h.b16 %v5505
  %v7661 = vunpack.c.l.b16 %v5506
  %v7662 = vunpack.c.l.b16 %v5507
  %v7663 = vunpack.c.h.b16 %v5507
  %v7664 = vunpack.c.l.b16 %v5508
  %v7665 = vunpack.c.l.b16 %v5509
  %v7666 = vunpack.c.h.b16 %v5509
  %v7667 = vunpack.c.l.b16 %v5510
  %v7668 = vunpack.c.l.b16 %v5511
  %v7669 = vunpack.c.h.b16 %v5511
  %v7670 = vunpack.c.l.b16 %v5512
  %v7671 = vunpack.c.l.b16 %v5513
  %v7672 = vunpack.c.h.b16 %v5513
  %v7673 = vunpack.c.l.b16 %v5514
  %v7674 = vunpack.c.l.b16 %v5515
  %v7675 = vunpack.c.h.b16 %v5515
  %v7676 = vunpack.c.l.b16 %v5516
  %v7677 = vunpack.c.l.b16 %v5517
  %v7678 = vunpack.c.h.b16 %v5517
  %v7679 = vunpack.c.l.b16 %v5518
  %v7680 = vunpack.c.l.b16 %v5519
  %v7681 = vunpack.c.h.b16 %v5519
  %v7682 = vunpack.c.l.b16 %v5520
  %v7683 = vunpack.c.l.b16 %v5521
  %v7684 = vunpack.c.h.b16 %v5521
  %v7685 = vunpack.c.l.b16 %v5522
  %v7686 = vunpack.c.l.b16 %v5523
  %v7687 = vunpack.c.h.b16 %v5523
  %v7688 = vunpack.c.l.b16 %v5524
  %v7689 = vunpack.c.l.b16 %v5525
  %v7690 = vunpack.c.h.b16 %v5525
  %v7691 = vunpack.c.l.b16 %v5526
  %v7692 = vunpack.c.l.b16 %v5527
  %v7693 = vunpack.c.h.b16 %v5527
  %v7694 = vunpack.c.l.b16 %v5528
  %v7695 = vunpack.c.l.b16 %v5529
  %v7696 = vunpack.c.h.b16 %v5529
  %v7697 = vunpack.c.l.b16 %v5530
  %v7698 = vunpack.c.l.b16 %v5531
  %v7699 = vunpack.c.h.b16 %v5531
  %v7700 = vunpack.c.l.b16 %v5532
  %v7701 = vunpack.c.l.b16 %v5533
  %v7702 = vunpack.c.h.b16 %v5533
  %v7703 = vunpack.c.l.b16 %v5534
  %v7704 = vunpack.c.l.b16 %v5535
  %v7705 = vunpack.c.h.b16 %v5535
  %v7706 = vunpack.c.l.b16 %v5536
  %v7707 = vunpack.c.l.b16 %v5537
  %v7708 = vunpack.c.h.b16 %v5537
  %v7709 = vunpack.c.l.b16 %v5538
  %v7710 = vunpack.c.l.b16 %v5539
  %v7711 = vunpack.c.h.b16 %v5539
  %v7712 = vunpack.c.l.b16 %v5540
  %v7713 = vunpack.c.l.b16 %v5541
  %v7714 = vunpack.c.h.b16 %v5541
  %v7715 = vunpack.c.l.b16 %v5542
  %v7716 = vunpack.c.l.b16 %v5543
  %v7717 = vunpack.c.h.b16 %v5543
  %v7718 = vunpack.c.l.b16 %v5544
  %v7719 = vunpack.c.l.b16 %v5545
  %v7720 = vunpack.c.h.b16 %v5545
  %v7721 = vunpack.c.l.b16 %v5546
  %v7722 = vunpack.c.l.b16 %v5547
  %v7723 = vunpack.c.h.b16 %v5547
  %v7724 = vunpack.c.l.b16 %v5548
  %v7725 = vunpack.c.l.b16 %v5549
  %v7726 = vunpack.c.h.b16 %v5549
  %v7727 = vunpack.c.l.b16 %v5550
  %v7728 = vunpack.c.l.b16 %v5551
  %v7729 = vunpack.c.h.b16 %v5551
  %v7730 = vunpack.c.l.b16 %v5552
  %v7731 = vunpack.c.l.b16 %v5553
  %v7732 = vunpack.c.h.b16 %v5553
  %v7733 = vunpack.c.l.b16 %v5554
  %v7734 = vunpack.c.l.b16 %v5555
  %v7735 = vunpack.c.h.b16 %v5555
  %v7736 = vunpack.c.l.b16 %v5556
  %v7737 = vunpack.c.l.b16 %v5557
  %v7738 = vunpack.c.h.b16 %v5557
  %v7739 = vunpack.c.l.b16 %v5558
  %v7740 = vunpack.c.l.b16 %v5559
  %v7741 = vunpack.c.h.b16 %v5559
  %v7742 = vunpack.c.l.b16 %v5560
  %v7743 = vunpack.c.l.b16 %v5561
  %v7744 = vunpack.c.h.b16 %v5561
  %v7745 = vunpack.c.l.b16 %v5562
  %v7746 = vunpack.c.l.b16 %v5563
  %v7747 = vunpack.c.h.b16 %v5563
  %v7748 = vunpack.c.l.b16 %v5564
  %v7749 = vunpack.c.l.b16 %v5565
  %v7750 = vunpack.c.h.b16 %v5565
  %v7751 = vunpack.c.l.b16 %v5566
  %v7752 = vunpack.c.l.b16 %v5567
  %v7753 = vunpack.c.h.b16 %v5567
  %v7754 = vunpack.c.l.b16 %v5568
  %v7755 = vunpack.c.l.b16 %v5569
  %v7756 = vunpack.c.h.b16 %v5569
  %v7757 = vunpack.c.l.b16 %v5570
  %v7758 = vunpack.c.l.b16 %v5571
  %v7759 = vunpack.c.h.b16 %v5571
  %v7760 = vunpack.c.l.b16 %v5572
  %v7761 = vunpack.c.l.b16 %v5573
  %v7762 = vunpack.c.h.b16 %v5573
  %v7763 = vunpack.c.l.b16 %v5574
  %v7764 = vunpack.c.l.b16 %v5575
  %v7765 = vunpack.c.h.b16 %v5575
  %v7766 = vunpack.c.l.b16 %v5576
  %v7767 = vunpack.c.l.b16 %v5577
  %v7768 = vunpack.c.h.b16 %v5577
  %v7769 = vunpack.c.l.b16 %v5578
  %v7770 = vunpack.c.l.b16 %v5579
  %v7771 = vunpack.c.h.b16 %v5579
  %v7772 = vunpack.c.l.b16 %v5580
  %v7773 = vunpack.c.l.b16 %v5581
  %v7774 = vunpack.c.h.b16 %v5581
  %v7775 = vunpack.c.l.b16 %v5582
  %v7776 = vunpack.c.l.b16 %v5583
  %v7777 = vunpack.c.h.b16 %v5583
  %v7778 = vunpack.c.l.b16 %v5584
  %v7779 = vunpack.c.l.b16 %v5585
  %v7780 = vunpack.c.h.b16 %v5585
  %v7781 = vunpack.c.l.b16 %v5586
  %v7782 = vunpack.c.l.b16 %v5587
  %v7783 = vunpack.c.h.b16 %v5587
  %v7784 = vunpack.c.l.b16 %v5588
  %v7785 = vunpack.c.l.b16 %v5589
  %v7786 = vunpack.c.h.b16 %v5589
  %v7787 = vunpack.c.l.b16 %v5590
  %v7788 = vunpack.c.l.b16 %v5591
  %v7789 = vunpack.c.h.b16 %v5591
  %v7790 = vunpack.c.l.b16 %v5592
  %v7791 = vunpack.c.l.b16 %v5593
  %v7792 = vunpack.c.h.b16 %v5593
  %v7793 = vunpack.c.l.b16 %v5594
  %v7794 = vunpack.c.l.b16 %v5595
  %v7795 = vunpack.c.h.b16 %v5595
  %v7796 = vunpack.c.l.b16 %v5596
  %v7797 = vunpack.c.l.b16 %v5597
  %v7798 = vunpack.c.h.b16 %v5597
  %v7799 = vunpack.c.l.b16 %v5598
  %v7800 = vunpack.c.l.b16 %v5599
  %v7801 = vunpack.c.h.b16 %v5599
  %v7802 = vunpack.c.l.b16 %v5600
  %v7803 = vunpack.c.l.b16 %v5601
  %v7804 = vunpack.c.h.b16 %v5601
  %v7805 = vunpack.c.l.b16 %v5602
  %v7806 = vunpack.c.l.b16 %v5603
  %v7807 = vunpack.c.h.b16 %v5603
  %v7808 = vunpack.c.l.b16 %v5604
  %v7809 = vunpack.c.l.b16 %v5605
  %v7810 = vunpack.c.h.b16 %v5605
  %v7811 = vunpack.c.l.b16 %v5606
  %v7812 = vunpack.c.l.b16 %v5607
  %v7813 = vunpack.c.h.b16 %v5607
  %v7814 = vunpack.c.l.b16 %v5608
  %v7815 = vunpack.c.l.b16 %v5609
  %v7816 = vunpack.c.h.b16 %v5609
  %v7817 = vunpack.c.l.b16 %v5610
  %v7818 = vunpack.c.l.b16 %v5611
  %v7819 = vunpack.c.h.b16 %v5611
  %v7820 = vunpack.c.l.b16 %v5612
  %v7821 = vunpack.c.l.b16 %v5613
  %v7822 = vunpack.c.h.b16 %v5613
  %v7823 = vunpack.c.l.b16 %v5614
  %v7824 = vunpack.c.l.b16 %v5615
  %v7825 = vunpack.c.h.b16 %v5615
  %v7826 = vunpack.c.l.b16 %v5616
  %v7827 = vunpack.c.l.b16 %v5617
  %v7828 = vunpack.c.h.b16 %v5617
  %v7829 = vunpack.c.l.b16 %v5618
  %v7830 = vunpack.c.l.b16 %v5619
  %v7831 = vunpack.c.h.b16 %v5619
  %v7832 = vunpack.c.l.b16 %v5620
  %v7833 = vunpack.c.l.b16 %v5621
  %v7834 = vunpack.c.h.b16 %v5621
  %v7835 = vunpack.c.l.b16 %v5622
  %v7836 = vunpack.c.l.b16 %v5623
  %v7837 = vunpack.c.h.b16 %v5623
  %v7838 = vunpack.c.l.b16 %v5624
  %v7839 = vunpack.c.l.b16 %v5625
  %v7840 = vunpack.c.h.b16 %v5625
  %v7841 = vunpack.c.l.b16 %v5626
  %v7842 = vunpack.c.l.b16 %v5627
  %v7843 = vunpack.c.h.b16 %v5627
  %v7844 = vunpack.c.l.b16 %v5628
  %v7845 = vunpack.c.l.b16 %v5629
  %v7846 = vunpack.c.h.b16 %v5629
  %v7847 = vunpack.c.l.b16 %v5630
  %v7848 = vunpack.c.l.b16 %v5631
  %v7849 = vunpack.c.h.b16 %v5631
  %v7850 = vunpack.c.l.b16 %v5632
  %v7851 = vunpack.c.l.b16 %v5633
  %v7852 = vunpack.c.h.b16 %v5633
  %v7853 = vunpack.c.l.b16 %v5634
  %v7854 = vunpack.c.l.b16 %v5635
  %v7855 = vunpack.c.h.b16 %v5635
  %v7856 = vunpack.c.l.b16 %v5636
  %v7857 = vunpack.c.l.b16 %v5637
  %v7858 = vunpack.c.h.b16 %v5637
  %v7859 = vunpack.c.l.b16 %v5638
  %v7860 = vunpack.c.l.b16 %v5639
  %v7861 = vunpack.c.h.b16 %v5639
  %v7862 = vunpack.c.l.b16 %v5640
  %v7863 = vunpack.c.l.b16 %v5641
  %v7864 = vunpack.c.h.b16 %v5641
  %v7865 = vunpack.c.l.b16 %v5642
  %v7866 = vunpack.c.l.b16 %v5643
  %v7867 = vunpack.c.h.b16 %v5643
  %v7868 = vunpack.c.l.b16 %v5644
  %v7869 = vunpack.c.l.b16 %v5645
  %v7870 = vunpack.c.h.b16 %v5645
  %v7871 = vunpack.c.l.b16 %v5646
  %v7872 = vunpack.c.l.b16 %v5647
  %v7873 = vunpack.c.h.b16 %v5647
  %v7874 = vunpack.c.l.b16 %v5648
  %v7875 = vunpack.c.l.b16 %v5649
  %v7876 = vunpack.c.h.b16 %v5649
  %v7877 = vunpack.c.l.b16 %v5650
  %v7878 = vunpack.c.l.b16 %v5651
  %v7879 = vunpack.c.h.b16 %v5651
  %v7880 = vunpack.c.l.b16 %v5652
  %v7881 = vunpack.c.l.b16 %v5653
  %v7882 = vunpack.c.h.b16 %v5653
  %v7883 = vunpack.c.l.b16 %v5654
  %v7884 = vunpack.c.l.b16 %v5655
  %v7885 = vunpack.c.h.b16 %v5655
  %v7886 = vunpack.c.l.b16 %v5656
  %v7887 = vunpack.c.l.b16 %v5657
  %v7888 = vunpack.c.h.b16 %v5657
  %v7889 = vunpack.c.l.b16 %v5658
  %v7890 = vunpack.c.l.b16 %v5659
  %v7891 = vunpack.c.h.b16 %v5659
  %v7892 = vunpack.c.l.b16 %v5660
  %v7893 = vunpack.c.l.b16 %v5661
  %v7894 = vunpack.c.h.b16 %v5661
  %v7895 = vunpack.c.l.b16 %v5662
  %v7896 = vunpack.c.l.b16 %v5663
  %v7897 = vunpack.c.h.b16 %v5663
  %v7898 = vunpack.c.l.b16 %v5664
  %v7899 = vunpack.c.l.b16 %v5665
  %v7900 = vunpack.c.h.b16 %v5665
  %v7901 = vunpack.c.l.b16 %v5666
  %v7902 = vunpack.c.l.b16 %v5667
  %v7903 = vunpack.c.h.b16 %v5667
  %v7904 = vunpack.c.l.b16 %v5668
  %v7905 = vunpack.c.l.b16 %v5669
  %v7906 = vunpack.c.h.b16 %v5669
  %v7907 = vunpack.c.l.b16 %v5670
  %v7908 = vunpack.c.l.b16 %v5671
  %v7909 = vunpack.c.h.b16 %v5671
  %v7910 = vunpack.c.l.b16 %v5672
  %v7911 = vunpack.c.l.b16 %v5673
  %v7912 = vunpack.c.h.b16 %v5673
  %v7913 = vunpack.c.l.b16 %v5674
  %v7914 = vunpack.c.l.b16 %v5675
  %v7915 = vunpack.c.h.b16 %v5675
  %v7916 = vunpack.c.l.b16 %v5676
  %v7917 = vunpack.c.l.b16 %v5677
  %v7918 = vunpack.c.h.b16 %v5677
  %v7919 = vunpack.c.l.b16 %v5678
  %v7920 = vunpack.c.l.b16 %v5679
  %v7921 = vunpack.c.h.b16 %v5679
  %v7922 = vunpack.c.l.b16 %v5680
  %v7923 = vunpack.c.l.b16 %v5681
  %v7924 = vunpack.c.h.b16 %v5681
  %v7925 = vunpack.c.l.b16 %v5682
  %v7926 = vunpack.c.l.b16 %v5683
  %v7927 = vunpack.c.h.b16 %v5683
  %v7928 = vunpack.c.l.b16 %v5684
  %v7929 = vunpack.c.l.b16 %v5685
  %v7930 = vunpack.c.h.b16 %v5685
  %v7931 = vunpack.c.l.b16 %v5686
  %v7932 = vunpack.c.l.b16 %v5687
  %v7933 = vunpack.c.h.b16 %v5687
  %v7934 = vunpack.c.l.b16 %v5688
  %v7935 = vunpack.c.l.b16 %v5689
  %v7936 = vunpack.c.h.b16 %v5689
  %v7937 = vunpack.c.l.b16 %v5690
  %v7938 = vunpack.c.l.b16 %v5691
  %v7939 = vunpack.c.h.b16 %v5691
  %v7940 = vunpack.c.l.b16 %v5692
  %v7941 = vunpack.c.l.b16 %v5693
  %v7942 = vunpack.c.h.b16 %v5693
  %v7943 = vunpack.c.l.b16 %v5694
  %v7944 = vunpack.c.l.b16 %v5695
  %v7945 = vunpack.c.h.b16 %v5695
  %v7946 = vunpack.c.l.b16 %v5696
  %v7947 = vunpack.c.l.b16 %v5697
  %v7948 = vunpack.c.h.b16 %v5697
  %v7949 = vunpack.c.l.b16 %v5698
  %v7950 = vunpack.c.l.b16 %v5699
  %v7951 = vunpack.c.h.b16 %v5699
  %v7952 = vunpack.c.l.b16 %v5700
  %v7953 = vunpack.c.l.b16 %v5701
  %v7954 = vunpack.c.h.b16 %v5701
  %v7955 = vunpack.c.l.b16 %v5702
  %v7956 = vunpack.c.l.b16 %v5703
  %v7957 = vunpack.c.h.b16 %v5703
  %v7958 = vunpack.c.l.b16 %v5704
  %v7959 = vunpack.c.l.b16 %v5705
  %v7960 = vunpack.c.h.b16 %v5705
  %v7961 = vunpack.c.l.b16 %v5706
  %v7962 = vunpack.c.l.b16 %v5707
  %v7963 = vunpack.c.h.b16 %v5707
  %v7964 = vunpack.c.l.b16 %v5708
  %v7965 = vunpack.c.l.b16 %v5709
  %v7966 = vunpack.c.h.b16 %v5709
  %v7967 = vunpack.c.l.b16 %v5710
  %v7968 = vunpack.c.l.b16 %v5711
  %v7969 = vunpack.c.h.b16 %v5711
  %v7970 = vunpack.c.l.b16 %v5712
  %v7971 = vunpack.c.l.b16 %v5713
  %v7972 = vunpack.c.h.b16 %v5713
  %v7973 = vunpack.c.l.b16 %v5714
  %v7974 = vunpack.c.l.b16 %v5715
  %v7975 = vunpack.c.h.b16 %v5715
  %v7976 = vunpack.c.l.b16 %v5716
  %v7977 = vunpack.c.l.b16 %v5717
  %v7978 = vunpack.c.h.b16 %v5717
  %v7979 = vunpack.c.l.b16 %v5718
  %v7980 = vunpack.c.l.b16 %v5719
  %v7981 = vunpack.c.h.b16 %v5719
  %v7982 = vunpack.c.l.b16 %v5720
  %v7983 = vunpack.c.l.b16 %v5721
  %v7984 = vunpack.c.h.b16 %v5721
  %v7985 = vunpack.c.l.b16 %v5722
  %v7986 = vunpack.c.l.b16 %v5723
  %v7987 = vunpack.c.h.b16 %v5723
  %v7988 = vunpack.c.l.b16 %v5724
  %v7989 = vunpack.c.l.b16 %v5725
  %v7990 = vunpack.c.h.b16 %v5725
  %v7991 = vunpack.c.l.b16 %v5726
  %v7992 = vunpack.c.l.b16 %v5727
  %v7993 = vunpack.c.h.b16 %v5727
  %v7994 = vunpack.c.l.b16 %v5728
  %v7995 = vunpack.c.l.b16 %v5729
  %v7996 = vunpack.c.h.b16 %v5729
  %v7997 = vunpack.c.l.b16 %v5730
  %v7998 = vunpack.c.l.b16 %v5731
  %v7999 = vunpack.c.h.b16 %v5731
  %v8000 = vunpack.c.l.b16 %v5732
  %v8001 = vunpack.c.l.b16 %v5733
  %v8002 = vunpack.c.h.b16 %v5733
  %v8003 = vunpack.c.l.b16 %v5734
  %v8004 = vunpack.c.l.b16 %v5735
  %v8005 = vunpack.c.h.b16 %v5735
  %v8006 = vunpack.c.l.b16 %v5736
  %v8007 = vunpack.c.l.b16 %v5737
  %v8008 = vunpack.c.h.b16 %v5737
  %v8009 = vunpack.c.l.b16 %v5738
  %v8010 = vunpack.c.l.b16 %v5739
  %v8011 = vunpack.c.h.b16 %v5739
  %v8012 = vunpack.c.l.b16 %v5740
  %v8013 = vunpack.c.l.b16 %v5741
  %v8014 = vunpack.c.h.b16 %v5741
  %v8015 = vunpack.c.l.b16 %v5742
  %v8016 = vunpack.c.l.b16 %v5743
  %v8017 = vunpack.c.h.b16 %v5743
  %v8018 = vunpack.c.l.b16 %v5744
  %v8019 = vunpack.c.l.b16 %v5745
  %v8020 = vunpack.c.h.b16 %v5745
  %v8021 = vunpack.c.l.b16 %v5746
  %v8022 = vunpack.c.l.b16 %v5747
  %v8023 = vunpack.c.h.b16 %v5747
  %v8024 = vunpack.c.l.b16 %v5748
  %v8025 = vunpack.c.l.b16 %v5749
  %v8026 = vunpack.c.h.b16 %v5749
  %v8027 = vunpack.c.l.b16 %v5750
  %v8028 = vunpack.c.l.b16 %v5751
  %v8029 = vunpack.c.h.b16 %v5751
  %v8030 = vunpack.c.l.b16 %v5752
  %v8031 = vunpack.c.l.b16 %v5753
  %v8032 = vunpack.c.h.b16 %v5753
  %v8033 = vunpack.c.l.b16 %v5754
  %v8034 = vunpack.c.l.b16 %v5755
  %v8035 = vunpack.c.h.b16 %v5755
  %v8036 = vunpack.c.l.b16 %v5756
  %v8037 = vunpack.c.l.b16 %v5757
  %v8038 = vunpack.c.h.b16 %v5757
  %v8039 = vunpack.c.l.b16 %v5758
  %v8040 = vunpack.c.l.b16 %v5759
  %v8041 = vunpack.c.h.b16 %v5759
  %v8042 = vunpack.c.l.b16 %v5760
  %v8043 = vunpack.c.l.b16 %v5761
  %v8044 = vunpack.c.h.b16 %v5761
  %v8045 = vunpack.c.l.b16 %v5762
  %v8046 = vunpack.c.l.b16 %v5763
  %v8047 = vunpack.c.h.b16 %v5763
  %v8048 = vunpack.c.l.b16 %v5764
  %v8049 = vunpack.c.l.b16 %v5765
  %v8050 = vunpack.c.h.b16 %v5765
  %v8051 = vunpack.c.l.b16 %v5766
  %v8052 = vunpack.c.l.b16 %v5767
  %v8053 = vunpack.c.h.b16 %v5767
  %v8054 = vunpack.c.l.b16 %v5768
  %v8055 = vunpack.c.l.b16 %v5769
  %v8056 = vunpack.c.h.b16 %v5769
  %v8057 = vunpack.c.l.b16 %v5770
  %v8058 = vunpack.c.l.b16 %v5771
  %v8059 = vunpack.c.h.b16 %v5771
  %v8060 = vunpack.c.l.b16 %v5772
  %v8061 = vunpack.c.l.b16 %v5773
  %v8062 = vunpack.c.h.b16 %v5773
  %v8063 = vunpack.c.l.b16 %v5774
  %v8064 = vunpack.c.l.b16 %v5775
  %v8065 = vunpack.c.h.b16 %v5775
  %v8066 = vunpack.c.l.b16 %v5776
  %v8067 = vunpack.c.l.b16 %v5777
  %v8068 = vunpack.c.h.b16 %v5777
  %v8069 = vunpack.c.l.b16 %v5778
  %v8070 = vunpack.c.l.b16 %v5779
  %v8071 = vunpack.c.h.b16 %v5779
  %v8072 = vunpack.c.l.b16 %v5780
  %v8073 = vunpack.c.l.b16 %v5781
  %v8074 = vunpack.c.h.b16 %v5781
  %v8075 = vunpack.c.l.b16 %v5782
  %v8076 = vunpack.c.l.b16 %v5783
  %v8077 = vunpack.c.h.b16 %v5783
  %v8078 = vunpack.c.l.b16 %v5784
  %v8079 = vunpack.c.l.b16 %v5785
  %v8080 = vunpack.c.h.b16 %v5785
  %v8081 = vunpack.c.l.b16 %v5786
  %v8082 = vunpack.c.l.b16 %v5787
  %v8083 = vunpack.c.h.b16 %v5787
  %v8084 = vunpack.c.l.b16 %v5788
  %v8085 = vunpack.c.l.b16 %v5789
  %v8086 = vunpack.c.h.b16 %v5789
  %v8087 = vunpack.c.l.b16 %v5790
  %v8088 = vunpack.c.l.b16 %v5791
  %v8089 = vunpack.c.h.b16 %v5791
  %v8090 = vunpack.c.l.b16 %v5792
  %v8091 = vunpack.c.l.b16 %v5793
  %v8092 = vunpack.c.h.b16 %v5793
  %v8093 = vunpack.c.l.b16 %v5794
  %v8094 = vunpack.c.l.b16 %v5795
  %v8095 = vunpack.c.h.b16 %v5795
  %v8096 = vunpack.c.l.b16 %v5796
  %v8097 = vunpack.c.l.b16 %v5797
  %v8098 = vunpack.c.h.b16 %v5797
  %v8099 = vunpack.c.l.b16 %v5798
  %v8100 = vunpack.c.l.b16 %v5799
  %v8101 = vunpack.c.h.b16 %v5799
  %v8102 = vunpack.c.l.b16 %v5800
  %v8103 = vunpack.c.l.b16 %v5801
  %v8104 = vunpack.c.h.b16 %v5801
  %v8105 = vunpack.c.l.b16 %v5802
  %v8106 = vunpack.c.l.b16 %v5803
  %v8107 = vunpack.c.h.b16 %v5803
  %v8108 = vunpack.c.l.b16 %v5804
  %v8109 = vunpack.c.l.b16 %v5805
  %v8110 = vunpack.c.h.b16 %v5805
  %v8111 = vunpack.c.l.b16 %v5806
  %v8112 = vunpack.c.l.b16 %v5807
  %v8113 = vunpack.c.h.b16 %v5807
  %v8114 = vunpack.c.l.b16 %v5808
  %v8115 = vunpack.c.l.b16 %v5809
  %v8116 = vunpack.c.h.b16 %v5809
  %v8117 = vunpack.c.l.b16 %v5810
  %v8118 = vunpack.c.l.b16 %v5811
  %v8119 = vunpack.c.h.b16 %v5811
  %v8120 = vunpack.c.l.b16 %v5812
  %v8121 = vunpack.c.l.b16 %v5813
  %v8122 = vunpack.c.h.b16 %v5813
  %v8123 = vunpack.c.l.b16 %v5814
  %v8124 = vunpack.c.l.b16 %v5815
  %v8125 = vunpack.c.h.b16 %v5815
  %v8126 = vunpack.c.l.b16 %v5816
  %v8127 = vunpack.c.l.b16 %v5817
  %v8128 = vunpack.c.h.b16 %v5817
  %v8129 = vunpack.c.l.b16 %v5818
  %v8130 = vunpack.c.l.b16 %v5819
  %v8131 = vunpack.c.h.b16 %v5819
  %v8132 = vunpack.c.l.b16 %v5820
  %v8133 = vunpack.c.l.b16 %v5821
  %v8134 = vunpack.c.h.b16 %v5821
  %v8135 = vunpack.c.l.b16 %v5822
  %v8136 = vunpack.c.l.b16 %v5823
  %v8137 = vunpack.c.h.b16 %v5823
  %v8138 = vunpack.c.l.b16 %v5824
  %v8139 = vunpack.c.l.b16 %v5825
  %v8140 = vunpack.c.h.b16 %v5825
  %v8141 = vunpack.c.l.b16 %v5826
  %v8142 = vunpack.c.l.b16 %v5827
  %v8143 = vunpack.c.h.b16 %v5827
  %v8144 = vunpack.c.l.b16 %v5828
  %v8145 = vunpack.c.l.b16 %v5829
  %v8146 = vunpack.c.h.b16 %v5829
  %v8147 = vunpack.c.l.b16 %v5830
  %v8148 = vunpack.c.l.b16 %v5831
  %v8149 = vunpack.c.h.b16 %v5831
  %v8150 = vunpack.c.l.b16 %v5832
  %v8151 = vunpack.c.l.b16 %v5833
  %v8152 = vunpack.c.h.b16 %v5833
  %v8153 = vunpack.c.l.b16 %v5834
  %v8154 = vunpack.c.l.b16 %v5835
  %v8155 = vunpack.c.h.b16 %v5835
  %v8156 = vunpack.c.l.b16 %v5836
  %v8157 = vunpack.c.l.b16 %v5837
  %v8158 = vunpack.c.h.b16 %v5837
  %v8159 = vunpack.c.l.b16 %v5838
  %v8160 = vunpack.c.l.b16 %v5839
  %v8161 = vunpack.c.h.b16 %v5839
  %v8162 = vunpack.c.l.b16 %v5840
  %v8163 = vunpack.c.l.b16 %v5841
  %v8164 = vunpack.c.h.b16 %v5841
  %v8165 = vunpack.c.l.b16 %v5842
  %v8166 = vunpack.c.l.b16 %v5843
  %v8167 = vunpack.c.h.b16 %v5843
  %v8168 = vunpack.c.l.b16 %v5844
  %v8169 = vunpack.c.l.b16 %v5845
  %v8170 = vunpack.c.h.b16 %v5845
  %v8171 = vunpack.c.l.b16 %v5846
  %v8172 = vunpack.c.l.b16 %v5847
  %v8173 = vunpack.c.h.b16 %v5847
  %v8174 = vunpack.c.l.b16 %v5848
  %v8175 = vunpack.c.l.b16 %v5849
  %v8176 = vunpack.c.h.b16 %v5849
  %v8177 = vunpack.c.l.b16 %v5850
  %v8178 = vunpack.c.l.b16 %v5851
  %v8179 = vunpack.c.h.b16 %v5851
  %v8180 = vunpack.c.l.b16 %v5852
  %v8181 = vunpack.c.l.b16 %v5853
  %v8182 = vunpack.c.h.b16 %v5853
  %v8183 = vunpack.c.l.b16 %v5854
  %v8184 = vunpack.c.l.b16 %v5855
  %v8185 = vunpack.c.h.b16 %v5855
  %v8186 = vunpack.c.l.b16 %v5856
  %v8187 = vunpack.c.l.b16 %v5857
  %v8188 = vunpack.c.h.b16 %v5857
  %v8189 = vunpack.c.l.b16 %v5858
  %v8190 = vunpack.c.l.b16 %v5859
  %v8191 = vunpack.c.h.b16 %v5859
  %v8192 = vunpack.c.l.b16 %v5860
  %v8193 = vunpack.c.l.b16 %v5861
  %v8194 = vunpack.c.h.b16 %v5861
  %v8195 = vunpack.c.l.b16 %v5862
  %v8196 = vunpack.c.l.b16 %v5863
  %v8197 = vunpack.c.h.b16 %v5863
  %v8198 = vunpack.c.l.b16 %v5864
  %v8199 = vunpack.c.l.b16 %v5865
  %v8200 = vunpack.c.h.b16 %v5865
  %v8201 = vunpack.c.l.b16 %v5866
  %v8202 = vunpack.c.l.b16 %v5867
  %v8203 = vunpack.c.h.b16 %v5867
  %v8204 = vunpack.c.l.b16 %v5868
  %v8205 = vunpack.c.l.b16 %v5869
  %v8206 = vunpack.c.h.b16 %v5869
  %v8207 = vunpack.c.l.b16 %v5870
  %v8208 = vunpack.c.l.b16 %v5871
  %v8209 = vunpack.c.h.b16 %v5871
  %v8210 = vunpack.c.l.b16 %v5872
  %v8211 = vunpack.c.l.b16 %v5873
  %v8212 = vunpack.c.h.b16 %v5873
  %v8213 = vunpack.c.l.b16 %v5874
  %v8214 = vunpack.c.l.b16 %v5875
  %v8215 = vunpack.c.h.b16 %v5875
  %v8216 = vunpack.c.l.b16 %v5876
  %v8217 = vunpack.c.l.b16 %v5877
  %v8218 = vunpack.c.h.b16 %v5877
  %v8219 = vunpack.c.l.b16 %v5878
  %v8220 = vunpack.c.l.b16 %v5879
  %v8221 = vunpack.c.h.b16 %v5879
  %v8222 = vunpack.c.l.b16 %v5880
  %v8223 = vunpack.c.l.b16 %v5881
  %v8224 = vunpack.c.h.b16 %v5881
  %v8225 = vunpack.c.l.b16 %v5882
  %v8226 = vunpack.c.l.b16 %v5883
  %v8227 = vunpack.c.h.b16 %v5883
  %v8228 = vunpack.c.l.b16 %v5884
  %v8229 = vunpack.c.l.b16 %v5885
  %v8230 = vunpack.c.h.b16 %v5885
  %v8231 = vunpack.c.l.b16 %v5886
  %v8232 = vunpack.c.l.b16 %v5887
  %v8233 = vunpack.c.h.b16 %v5887
  %v8234 = vunpack.c.l.b16 %v5888
  %v8235 = vunpack.c.l.b16 %v5889
  %v8236 = vunpack.c.h.b16 %v5889
  %v8237 = vunpack.c.l.b16 %v5890
  %v8238 = vunpack.c.l.b16 %v5891
  %v8239 = vunpack.c.h.b16 %v5891
  %v8240 = vunpack.c.l.b16 %v5892
  %v8241 = vunpack.c.l.b16 %v5893
  %v8242 = vunpack.c.h.b16 %v5893
  %v8243 = vunpack.c.l.b16 %v5894
  %v8244 = vunpack.c.l.b16 %v5895
  %v8245 = vunpack.c.h.b16 %v5895
  %v8246 = vunpack.c.l.b16 %v5896
  %v8247 = vunpack.c.l.b16 %v5897
  %v8248 = vunpack.c.h.b16 %v5897
  %v8249 = vunpack.c.l.b16 %v5898
  %v8250 = vunpack.c.l.b16 %v5899
  %v8251 = vunpack.c.h.b16 %v5899
  %v8252 = vunpack.c.l.b16 %v5900
  %v8253 = vunpack.c.l.b16 %v5901
  %v8254 = vunpack.c.h.b16 %v5901
  %v8255 = vunpack.c.l.b16 %v5902
  %v8256 = vunpack.c.l.b16 %v5903
  %v8257 = vunpack.c.h.b16 %v5903
  %v8258 = vunpack.c.l.b16 %v5904
  %v8259 = vunpack.c.l.b16 %v5905
  %v8260 = vunpack.c.h.b16 %v5905
  %v8261 = vunpack.c.l.b16 %v5906
  %v8262 = vunpack.c.l.b16 %v5907
  %v8263 = vunpack.c.h.b16 %v5907
  %v8264 = vunpack.c.l.b16 %v5908
  %v8265 = vunpack.c.l.b16 %v5909
  %v8266 = vunpack.c.h.b16 %v5909
  %v8267 = vunpack.c.l.b16 %v5910
  %v8268 = vunpack.c.l.b16 %v5911
  %v8269 = vunpack.c.h.b16 %v5911
  %v8270 = vunpack.c.l.b16 %v5912
  %v8271 = vunpack.c.l.b16 %v5913
  %v8272 = vunpack.c.h.b16 %v5913
  %v8273 = vunpack.c.l.b16 %v5914
  %v8274 = vunpack.c.l.b16 %v5915
  %v8275 = vunpack.c.h.b16 %v5915
  %v8276 = vunpack.c.l.b16 %v5916
  %v8277 = vunpack.c.l.b16 %v5917
  %v8278 = vunpack.c.h.b16 %v5917
  %v8279 = vunpack.c.l.b16 %v5918
  %v8280 = vunpack.c.l.b16 %v5919
  %v8281 = vunpack.c.h.b16 %v5919
  %v8282 = vunpack.c.l.b16 %v5920
  %v8283 = vunpack.c.l.b16 %v5921
  %v8284 = vunpack.c.h.b16 %v5921
  %v8285 = vunpack.c.l.b16 %v5922
  %v8286 = vunpack.c.l.b16 %v5923
  %v8287 = vunpack.c.h.b16 %v5923
  %v8288 = vunpack.c.l.b16 %v5924
  %v8289 = vunpack.c.l.b16 %v5925
  %v8290 = vunpack.c.h.b16 %v5925
  %v8291 = vunpack.c.l.b16 %v5926
  %v8292 = vunpack.c.l.b16 %v5927
  %v8293 = vunpack.c.h.b16 %v5927
  %v8294 = vunpack.c.l.b16 %v5928
  %v8295 = vunpack.c.l.b16 %v5929
  %v8296 = vunpack.c.h.b16 %v5929
  %v8297 = vunpack.c.l.b16 %v5930
  %v8298 = vunpack.c.l.b16 %v5931
  %v8299 = vunpack.c.h.b16 %v5931
  %v8300 = vunpack.c.l.b16 %v5932
  %v8301 = vunpack.c.l.b16 %v5933
  %v8302 = vunpack.c.h.b16 %v5933
  %v8303 = vunpack.c.l.b16 %v5934
  %v8304 = vunpack.c.l.b16 %v5935
  %v8305 = vunpack.c.h.b16 %v5935
  %v8306 = vunpack.c.l.b16 %v5936
  %v8307 = vunpack.c.l.b16 %v5937
  %v8308 = vunpack.c.h.b16 %v5937
  %v8309 = vunpack.c.l.b16 %v5938
  %v8310 = vunpack.c.l.b16 %v5939
  %v8311 = vunpack.c.h.b16 %v5939
  %v8312 = vunpack.c.l.b16 %v5940
  %v8313 = vunpack.c.l.b16 %v5941
  %v8314 = vunpack.c.h.b16 %v5941
  %v8315 = vunpack.c.l.b16 %v5942
  %v8316 = vunpack.c.l.b16 %v5943
  %v8317 = vunpack.c.h.b16 %v5943
  %v8318 = vunpack.c.l.b16 %v5944
  %v8319 = vunpack.c.l.b16 %v5945
  %v8320 = vunpack.c.h.b16 %v5945
  %v8321 = vunpack.c.l.b16 %v5946
  %v8322 = vunpack.c.l.b16 %v5947
  %v8323 = vunpack.c.h.b16 %v5947
  %v8324 = vunpack.c.l.b16 %v5948
  %v8325 = vunpack.c.l.b16 %v5949
  %v8326 = vunpack.c.h.b16 %v5949
  %v8327 = vunpack.c.l.b16 %v5950
  %v8328 = vunpack.c.l.b16 %v5951
  %v8329 = vunpack.c.h.b16 %v5951
  %v8330 = vunpack.c.l.b16 %v5952
  %v8331 = vunpack.c.l.b16 %v5953
  %v8332 = vunpack.c.h.b16 %v5953
  %v8333 = vunpack.c.l.b16 %v5954
  %v8334 = vunpack.c.l.b16 %v5955
  %v8335 = vunpack.c.h.b16 %v5955
  %v8336 = vunpack.c.l.b16 %v5956
  %v8337 = vunpack.c.l.b16 %v5957
  %v8338 = vunpack.c.h.b16 %v5957
  %v8339 = vunpack.c.l.b16 %v5958
  %v8340 = vunpack.c.l.b16 %v5959
  %v8341 = vunpack.c.h.b16 %v5959
  %v8342 = vunpack.c.l.b16 %v5960
  %v8343 = vunpack.c.l.b16 %v5961
  %v8344 = vunpack.c.h.b16 %v5961
  %v8345 = vunpack.c.l.b16 %v5962
  %v8346 = vunpack.c.l.b16 %v5963
  %v8347 = vunpack.c.h.b16 %v5963
  %v8348 = vunpack.c.l.b16 %v5964
  %v8349 = vunpack.c.l.b16 %v5965
  %v8350 = vunpack.c.h.b16 %v5965
  %v8351 = vunpack.c.l.b16 %v5966
  %v8352 = vunpack.c.l.b16 %v5967
  %v8353 = vunpack.c.h.b16 %v5967
  %v8354 = vunpack.c.l.b16 %v5968
  %v8355 = vunpack.c.l.b16 %v5969
  %v8356 = vunpack.c.h.b16 %v5969
  %v8357 = vunpack.c.l.b16 %v5970
  %v8358 = vunpack.c.l.b16 %v5971
  %v8359 = vunpack.c.h.b16 %v5971
  %v8360 = vunpack.c.l.b16 %v5972
  %v8361 = vunpack.c.l.b16 %v5973
  %v8362 = vunpack.c.h.b16 %v5973
  %v8363 = vunpack.c.l.b16 %v5974
  %v8364 = vunpack.c.l.b16 %v5975
  %v8365 = vunpack.c.h.b16 %v5975
  %v8366 = vunpack.c.l.b16 %v5976
  %v8367 = vunpack.c.l.b16 %v5977
  %v8368 = vunpack.c.h.b16 %v5977
  %v8369 = vunpack.c.l.b16 %v5978
  %v8370 = vunpack.c.l.b16 %v5979
  %v8371 = vunpack.c.h.b16 %v5979
  %v8372 = vunpack.c.l.b16 %v5980
  %v8373 = vunpack.c.l.b16 %v5981
  %v8374 = vunpack.c.h.b16 %v5981
  %v8375 = vunpack.c.l.b16 %v5982
  %v8376 = vunpack.c.l.b16 %v5983
  %v8377 = vunpack.c.h.b16 %v5983
  %v8378 = vunpack.c.l.b16 %v5984
  %v8379 = vunpack.c.l.b16 %v5985
  %v8380 = vunpack.c.h.b16 %v5985
  %v8381 = vunpack.c.l.b16 %v5986
  %v8382 = vunpack.c.l.b16 %v5987
  %v8383 = vunpack.c.h.b16 %v5987
  %v8384 = vunpack.c.l.b16 %v5988
  %v8385 = vunpack.c.l.b16 %v5989
  %v8386 = vunpack.c.h.b16 %v5989
  %v8387 = vunpack.c.l.b16 %v5990
  %v8388 = vunpack.c.l.b16 %v5991
  %v8389 = vunpack.c.h.b16 %v5991
  %v8390 = vunpack.c.l.b16 %v5992
  %v8391 = vunpack.c.l.b16 %v5993
  %v8392 = vunpack.c.h.b16 %v5993
  %v8393 = vunpack.c.l.b16 %v5994
  %v8394 = vunpack.c.l.b16 %v5995
  %v8395 = vunpack.c.h.b16 %v5995
  %v8396 = vunpack.c.l.b16 %v5996
  %v8397 = vunpack.c.l.b16 %v5997
  %v8398 = vunpack.c.h.b16 %v5997
  %v8399 = vunpack.c.l.b16 %v5998
  %v8400 = vunpack.c.l.b16 %v5999
  %v8401 = vunpack.c.h.b16 %v5999
  %v8402 = vunpack.c.l.b16 %v6000
  %v8403 = vunpack.c.l.b16 %v6001
  %v8404 = vunpack.c.h.b16 %v6001
  %v8405 = vunpack.c.l.b16 %v6002
  %v8406 = vunpack.c.l.b16 %v6003
  %v8407 = vunpack.c.h.b16 %v6003
  %v8408 = vunpack.c.l.b16 %v6004
  %v8409 = vunpack.c.l.b16 %v6005
  %v8410 = vunpack.c.h.b16 %v6005
  %v8411 = vunpack.c.l.b16 %v6006
  %v8412 = vunpack.c.l.b16 %v6007
  %v8413 = vunpack.c.h.b16 %v6007
  %v8414 = vunpack.c.l.b16 %v6008
  %v8415 = vunpack.c.l.b16 %v6009
  %v8416 = vunpack.c.h.b16 %v6009
  %v8417 = vunpack.c.l.b16 %v6010
  %v8418 = vunpack.c.l.b16 %v6011
  %v8419 = vunpack.c.h.b16 %v6011
  %v8420 = vunpack.c.l.b16 %v6012
  %v8421 = vunpack.c.l.b16 %v6013
  %v8422 = vunpack.c.h.b16 %v6013
  %v8423 = vunpack.c.l.b16 %v6014
  %v8424 = vunpack.c.l.b16 %v6015
  %v8425 = vunpack.c.h.b16 %v6015
  %v8426 = vunpack.c.l.b16 %v6016
  %v8427 = vunpack.c.l.b16 %v6017
  %v8428 = vunpack.c.h.b16 %v6017
  %v8429 = vunpack.c.l.b16 %v6018
  %v8430 = vunpack.c.l.b16 %v6019
  %v8431 = vunpack.c.h.b16 %v6019
  %v8432 = vunpack.c.l.b16 %v6020
  %v8433 = vunpack.c.l.b16 %v6021
  %v8434 = vunpack.c.h.b16 %v6021
  %v8435 = vunpack.c.l.b16 %v6022
  %v8436 = vunpack.c.l.b16 %v6023
  %v8437 = vunpack.c.h.b16 %v6023
  %v8438 = vunpack.c.l.b16 %v6024
  %v8439 = vunpack.c.l.b16 %v6025
  %v8440 = vunpack.c.h.b16 %v6025
  %v8441 = vunpack.c.l.b16 %v6026
  %v8442 = vunpack.c.l.b16 %v6027
  %v8443 = vunpack.c.h.b16 %v6027
  %v8444 = vunpack.c.l.b16 %v6028
  %v8445 = vunpack.c.l.b16 %v6029
  %v8446 = vunpack.c.h.b16 %v6029
  %v8447 = vunpack.c.l.b16 %v6030
  %v8448 = vunpack.c.l.b16 %v6031
  %v8449 = vunpack.c.h.b16 %v6031
  %v8450 = vunpack.c.l.b16 %v6032
  %v8451 = vunpack.c.l.b16 %v6033
  %v8452 = vunpack.c.h.b16 %v6033
  %v8453 = vunpack.c.l.b16 %v6034
  %v8454 = vunpack.c.l.b16 %v6035
  %v8455 = vunpack.c.h.b16 %v6035
  %v8456 = vunpack.c.l.b16 %v6036
  %v8457 = vunpack.c.l.b16 %v6037
  %v8458 = vunpack.c.h.b16 %v6037
  %v8459 = vunpack.c.l.b16 %v6038
  %v8460 = vunpack.c.l.b16 %v6039
  %v8461 = vunpack.c.h.b16 %v6039
  %v8462 = vunpack.c.l.b16 %v6040
  %v8463 = vunpack.c.l.b16 %v6041
  %v8464 = vunpack.c.h.b16 %v6041
  %v8465 = vunpack.c.l.b16 %v6042
  %v8466 = vunpack.c.l.b16 %v6043
  %v8467 = vunpack.c.h.b16 %v6043
  %v8468 = vunpack.c.l.b16 %v6044
  %v8469 = vunpack.c.l.b16 %v6045
  %v8470 = vunpack.c.h.b16 %v6045
  %v8471 = vunpack.c.l.b16 %v6046
  %v8472 = vunpack.c.l.b16 %v6047
  %v8473 = vunpack.c.h.b16 %v6047
  %v8474 = vunpack.c.l.b16 %v6048
  %v8475 = vunpack.c.l.b16 %v6049
  %v8476 = vunpack.c.h.b16 %v6049
  %v8477 = vunpack.c.l.b16 %v6050
  %v8478 = vunpack.c.l.b16 %v6051
  %v8479 = vunpack.c.h.b16 %v6051
  %v8480 = vunpack.c.l.b16 %v6052
  %v8481 = vunpack.c.l.b16 %v6053
  %v8482 = vunpack.c.h.b16 %v6053
  %v8483 = vunpack.c.l.b16 %v6054
  %v8484 = vunpack.c.l.b16 %v6055
  %v8485 = vunpack.c.h.b16 %v6055
  %v8486 = vunpack.c.l.b16 %v6056
  %v8487 = vunpack.c.l.b16 %v6057
  %v8488 = vunpack.c.h.b16 %v6057
  %v8489 = vunpack.c.l.b16 %v6058
  %v8490 = vunpack.c.l.b16 %v6059
  %v8491 = vunpack.c.h.b16 %v6059
  %v8492 = vunpack.c.l.b16 %v6060
  %v8493 = vunpack.c.l.b16 %v6061
  %v8494 = vunpack.c.h.b16 %v6061
  %v8495 = vunpack.c.l.b16 %v6062
  %v8496 = vunpack.c.l.b16 %v6063
  %v8497 = vunpack.c.h.b16 %v6063
  %v8498 = vunpack.c.l.b16 %v6064
  %v8499 = vunpack.c.l.b16 %v6065
  %v8500 = vunpack.c.h.b16 %v6065
  %v8501 = vunpack.c.l.b16 %v6066
  %v8502 = vunpack.c.l.b16 %v6067
  %v8503 = vunpack.c.h.b16 %v6067
  %v8504 = vunpack.c.l.b16 %v6068
  %v8505 = vunpack.c.l.b16 %v6069
  %v8506 = vunpack.c.h.b16 %v6069
  %v8507 = vunpack.c.l.b16 %v6070
  %v8508 = vunpack.c.l.b16 %v6071
  %v8509 = vunpack.c.h.b16 %v6071
  %v8510 = vunpack.c.l.b16 %v6072
  %v8511 = vunpack.c.l.b16 %v6073
  %v8512 = vunpack.c.h.b16 %v6073
  %v8513 = vunpack.c.l.b16 %v6074
  %v8514 = vunpack.c.l.b16 %v6075
  %v8515 = vunpack.c.h.b16 %v6075
  %v8516 = vunpack.c.l.b16 %v6076
  %v8517 = vunpack.c.l.b16 %v6077
  %v8518 = vunpack.c.h.b16 %v6077
  %v8519 = vunpack.c.l.b16 %v6078
  %v8520 = vunpack.c.l.b16 %v6079
  %v8521 = vunpack.c.h.b16 %v6079
  %v8522 = vunpack.c.l.b16 %v6080
  %v8523 = vunpack.c.l.b16 %v6081
  %v8524 = vunpack.c.h.b16 %v6081
  %v8525 = vunpack.c.l.b16 %v6082
  %v8526 = vunpack.c.l.b16 %v6083
  %v8527 = vunpack.c.h.b16 %v6083
  %v8528 = vunpack.c.l.b16 %v6084
  %v8529 = vunpack.c.l.b16 %v6085
  %v8530 = vunpack.c.h.b16 %v6085
  %v8531 = vunpack.c.l.b16 %v6086
  %v8532 = vunpack.c.l.b16 %v6087
  %v8533 = vunpack.c.h.b16 %v6087
  %v8534 = vunpack.c.l.b16 %v6088
  %v8535 = vunpack.c.l.b16 %v6089
  %v8536 = vunpack.c.h.b16 %v6089
  %v8537 = vunpack.c.l.b16 %v6090
  %v8538 = vunpack.c.l.b16 %v6091
  %v8539 = vunpack.c.h.b16 %v6091
  %v8540 = vunpack.c.l.b16 %v6092
  %v8541 = vunpack.c.l.b16 %v6093
  %v8542 = vunpack.c.h.b16 %v6093
  %v8543 = vunpack.c.l.b16 %v6094
  %v8544 = vunpack.c.l.b16 %v6095
  %v8545 = vunpack.c.h.b16 %v6095
  %v8546 = vunpack.c.l.b16 %v6096
  %v8547 = vunpack.c.l.b16 %v6097
  %v8548 = vunpack.c.h.b16 %v6097
  %v8549 = vunpack.c.l.b16 %v6098
  %v8550 = vunpack.c.l.b16 %v6099
  %v8551 = vunpack.c.h.b16 %v6099
  %v8552 = vunpack.c.l.b16 %v6100
  %v8553 = vunpack.c.l.b16 %v6101
  %v8554 = vunpack.c.h.b16 %v6101
  %v8555 = vunpack.c.l.b16 %v6102
  %v8556 = vunpack.c.l.b16 %v6103
  %v8557 = vunpack.c.h.b16 %v6103
  %v8558 = vunpack.c.l.b16 %v6104
  %v8559 = vunpack.c.l.b16 %v6105
  %v8560 = vunpack.c.h.b16 %v6105
  %v8561 = vunpack.c.l.b16 %v6106
  %v8562 = vunpack.c.l.b16 %v6107
  %v8563 = vunpack.c.h.b16 %v6107
  %v8564 = vunpack.c.l.b16 %v6108
  %v8565 = vunpack.c.l.b16 %v6109
  %v8566 = vunpack.c.h.b16 %v6109
  %v8567 = vunpack.c.l.b16 %v6110
  %v8568 = vunpack.c.l.b16 %v6111
  %v8569 = vunpack.c.h.b16 %v6111
  %v8570 = vunpack.c.l.b16 %v6112
  %v8571 = vunpack.c.l.b16 %v6113
  %v8572 = vunpack.c.h.b16 %v6113
  %v8573 = vunpack.c.l.b16 %v6114
  %v8574 = vunpack.c.l.b16 %v6115
  %v8575 = vunpack.c.h.b16 %v6115
  %v8576 = vunpack.c.l.b16 %v6116
  %v8577 = vunpack.c.l.b16 %v6117
  %v8578 = vunpack.c.h.b16 %v6117
  %v8579 = vunpack.c.l.b16 %v6118
  %v8580 = vunpack.c.l.b16 %v6119
  %v8581 = vunpack.c.h.b16 %v6119
  %v8582 = vunpack.c.l.b16 %v6120
  %v8583 = vunpack.c.l.b16 %v6121
  %v8584 = vunpack.c.h.b16 %v6121
  %v8585 = vunpack.c.l.b16 %v6122
  %v8586 = vunpack.c.l.b16 %v6123
  %v8587 = vunpack.c.h.b16 %v6123
  %v8588 = vunpack.c.l.b16 %v6124
  %v8589 = vunpack.c.l.b16 %v6125
  %v8590 = vunpack.c.h.b16 %v6125
  %v8591 = vunpack.c.l.b16 %v6126
  %v8592 = vunpack.c.l.b16 %v6127
  %v8593 = vunpack.c.h.b16 %v6127
  %v8594 = vunpack.c.l.b16 %v6128
  %v8595 = vunpack.c.l.b16 %v6129
  %v8596 = vunpack.c.h.b16 %v6129
  %v8597 = vunpack.c.l.b16 %v6130
  %v8598 = vunpack.c.l.b16 %v6131
  %v8599 = vunpack.c.h.b16 %v6131
  %v8600 = vunpack.c.l.b16 %v6132
  %v8601 = vunpack.c.l.b16 %v6133
  %v8602 = vunpack.c.h.b16 %v6133
  %v8603 = vunpack.c.l.b16 %v6134
  %v8604 = vunpack.c.l.b16 %v6135
  %v8605 = vunpack.c.h.b16 %v6135
  %v8606 = vunpack.c.l.b16 %v6136
  %v8607 = vunpack.c.l.b16 %v6137
  %v8608 = vunpack.c.h.b16 %v6137
  %v8609 = vunpack.c.l.b16 %v6138
  %v8610 = vunpack.c.l.b16 %v6139
  %v8611 = vunpack.c.h.b16 %v6139
  %v8612 = vunpack.c.l.b16 %v6140
  %v8613 = vunpack.c.l.b16 %v6141
  %v8614 = vunpack.c.h.b16 %v6141
  %v8615 = vunpack.c.l.b16 %v6142
  %v8616 = vunpack.c.l.b16 %v6143
  %v8617 = vunpack.c.h.b16 %v6143
  %v8618 = vunpack.c.l.b16 %v6144
  %v8619 = vunpack.c.l.b16 %v6145
  %v8620 = vunpack.c.h.b16 %v6145
  %v8621 = vunpack.c.l.b16 %v6146
  %v8622 = vunpack.c.l.b16 %v6147
  %v8623 = vunpack.c.h.b16 %v6147
  %v8624 = vunpack.c.l.b16 %v6148
  %v8625 = vunpack.c.l.b16 %v6149
  %v8626 = vunpack.c.h.b16 %v6149
  %v8627 = vunpack.c.l.b16 %v6150
  %v8628 = vunpack.c.l.b16 %v6151
  %v8629 = vunpack.c.h.b16 %v6151
  %v8630 = vunpack.c.l.b16 %v6152
  %v8631 = vunpack.c.l.b16 %v6153
  %v8632 = vunpack.c.h.b16 %v6153
  %v8633 = vunpack.c.l.b16 %v6154
  %v8634 = vunpack.c.l.b16 %v6155
  %v8635 = vunpack.c.h.b16 %v6155
  %v8636 = vunpack.c.l.b16 %v6156
  %v8637 = vunpack.c.l.b16 %v6157
  %v8638 = vunpack.c.h.b16 %v6157
  %v8639 = vunpack.c.l.b16 %v6158
  %v8640 = vunpack.c.l.b16 %v6159
  %v8641 = vunpack.c.h.b16 %v6159
  %v8642 = vunpack.c.l.b16 %v6160
  %v8643 = vunpack.c.l.b16 %v6161
  %v8644 = vunpack.c.h.b16 %v6161
  %v8645 = vunpack.c.l.b16 %v6162
  %v8646 = vunpack.c.l.b16 %v6163
  %v8647 = vunpack.c.h.b16 %v6163
  %v8648 = vunpack.c.l.b16 %v6164
  %v8649 = vunpack.c.l.b16 %v6165
  %v8650 = vunpack.c.h.b16 %v6165
  %v8651 = vunpack.c.l.b16 %v6166
  %v8652 = vunpack.c.l.b16 %v6167
  %v8653 = vunpack.c.h.b16 %v6167
  %v8654 = vunpack.c.l.b16 %v6168
  %v8655 = vunpack.c.l.b16 %v6169
  %v8656 = vunpack.c.h.b16 %v6169
  %v8657 = vunpack.c.l.b16 %v6170
  %v8658 = vunpack.c.l.b16 %v6171
  %v8659 = vunpack.c.h.b16 %v6171
  %v8660 = vunpack.c.l.b16 %v6172
  %v8661 = vunpack.c.l.b16 %v6173
  %v8662 = vunpack.c.h.b16 %v6173
  %v8663 = vunpack.c.l.b16 %v6174
  %v8664 = vunpack.c.l.b16 %v6175
  %v8665 = vunpack.c.h.b16 %v6175
  %v8666 = vunpack.c.l.b16 %v6176
  %v8667 = vunpack.c.l.b16 %v6177
  %v8668 = vunpack.c.h.b16 %v6177
  %v8669 = vunpack.c.l.b16 %v6178
  %v8670 = vunpack.c.l.b16 %v6179
  %v8671 = vunpack.c.h.b16 %v6179
  %v8672 = vunpack.c.l.b16 %v6180
  %v8673 = vunpack.c.l.b16 %v6181
  %v8674 = vunpack.c.h.b16 %v6181
  %v8675 = vunpack.c.l.b16 %v6182
  %v8676 = vunpack.c.l.b16 %v6183
  %v8677 = vunpack.c.h.b16 %v6183
  %v8678 = vunpack.c.l.b16 %v6184
  %v8679 = vunpack.c.l.b16 %v6185
  %v8680 = vunpack.c.h.b16 %v6185
  %v8681 = vunpack.c.l.b16 %v6186
  %v8682 = vunpack.c.l.b16 %v6187
  %v8683 = vunpack.c.h.b16 %v6187
  %v8684 = vunpack.c.l.b16 %v6188
  %v8685 = vunpack.c.l.b16 %v6189
  %v8686 = vunpack.c.h.b16 %v6189
  %v8687 = vunpack.c.l.b16 %v6190
  %v8688 = vunpack.c.l.b16 %v6191
  %v8689 = vunpack.c.h.b16 %v6191
  %v8690 = vunpack.c.l.b16 %v6192
  %v8691 = vunpack.c.l.b16 %v6193
  %v8692 = vunpack.c.h.b16 %v6193
  %v8693 = vunpack.c.l.b16 %v6194
  %v8694 = vunpack.c.l.b16 %v6195
  %v8695 = vunpack.c.h.b16 %v6195
  %v8696 = vunpack.c.l.b16 %v6196
  %v8697 = vunpack.c.l.b16 %v6197
  %v8698 = vunpack.c.h.b16 %v6197
  %v8699 = vunpack.c.l.b16 %v6198
  %v8700 = vunpack.c.l.b16 %v6199
  %v8701 = vunpack.c.h.b16 %v6199
  %v8702 = vunpack.c.l.b16 %v6200
  %v8703 = vunpack.c.l.b16 %v6201
  %v8704 = vunpack.c.h.b16 %v6201
  %v8705 = vunpack.c.l.b16 %v6202
  %v8706 = vunpack.c.l.b16 %v6203
  %v8707 = vunpack.c.h.b16 %v6203
  %v8708 = vunpack.c.l.b16 %v6204
  %v8709 = vunpack.c.l.b16 %v6205
  %v8710 = vunpack.c.h.b16 %v6205
  %v8711 = vunpack.c.l.b16 %v6206
  %v8712 = vunpack.c.l.b16 %v6207
  %v8713 = vunpack.c.h.b16 %v6207
  %v8714 = vunpack.c.l.b16 %v6208
  %v8715 = vunpack.c.l.b16 %v6209
  %v8716 = vunpack.c.h.b16 %v6209
  %v8717 = vunpack.c.l.b16 %v6210
  %v8718 = vunpack.c.l.b16 %v6211
  %v8719 = vunpack.c.h.b16 %v6211
  %v8720 = vunpack.c.l.b16 %v6212
  %v8721 = vunpack.c.l.b16 %v6213
  %v8722 = vunpack.c.h.b16 %v6213
  %v8723 = vunpack.c.l.b16 %v6214
  %v8724 = vunpack.c.l.b16 %v6215
  %v8725 = vunpack.c.h.b16 %v6215
  %v8726 = vunpack.c.l.b16 %v6216
  %v8727 = vunpack.c.l.b16 %v6217
  %v8728 = vunpack.c.h.b16 %v6217
  %v8729 = vunpack.c.l.b16 %v6218
  %v8730 = vunpack.c.l.b16 %v6219
  %v8731 = vunpack.c.h.b16 %v6219
  %v8732 = vunpack.c.l.b16 %v6220
  %v8733 = vunpack.c.l.b16 %v6221
  %v8734 = vunpack.c.h.b16 %v6221
  %v8735 = vunpack.c.l.b16 %v6222
  %v8736 = vunpack.c.l.b16 %v6223
  %v8737 = vunpack.c.h.b16 %v6223
  %v8738 = vunpack.c.l.b16 %v6224
  %v8739 = vunpack.c.l.b16 %v6225
  %v8740 = vunpack.c.h.b16 %v6225
  %v8741 = vunpack.c.l.b16 %v6226
  %v8742 = vunpack.c.l.b16 %v6227
  %v8743 = vunpack.c.h.b16 %v6227
  %v8744 = vunpack.c.l.b16 %v6228
  %v8745 = vunpack.c.l.b16 %v6229
  %v8746 = vunpack.c.h.b16 %v6229
  %v8747 = vunpack.c.l.b16 %v6230
  %v8748 = vunpack.c.l.b16 %v6231
  %v8749 = vunpack.c.h.b16 %v6231
  %v8750 = vunpack.c.l.b16 %v6232
  %v8751 = vunpack.c.l.b16 %v6233
  %v8752 = vunpack.c.h.b16 %v6233
  %v8753 = vunpack.c.l.b16 %v6234
  %v8754 = vunpack.c.l.b16 %v6235
  %v8755 = vunpack.c.h.b16 %v6235
  %v8756 = vunpack.c.l.b16 %v6236
  %v8757 = vunpack.c.l.b16 %v6237
  %v8758 = vunpack.c.h.b16 %v6237
  %v8759 = vunpack.c.l.b16 %v6238
  %v8760 = vunpack.c.l.b16 %v6239
  %v8761 = vunpack.c.h.b16 %v6239
  %v8762 = vunpack.c.l.b16 %v6240
  %v8763 = vunpack.c.l.b16 %v6241
  %v8764 = vunpack.c.h.b16 %v6241
  %v8765 = vunpack.c.l.b16 %v6242
  %v8766 = vunpack.c.l.b16 %v6243
  %v8767 = vunpack.c.h.b16 %v6243
  %v8768 = vunpack.c.l.b16 %v6244
  %v8769 = vunpack.c.l.b16 %v6245
  %v8770 = vunpack.c.h.b16 %v6245
  %v8771 = vunpack.c.l.b16 %v6246
  %v8772 = vunpack.c.l.b16 %v6247
  %v8773 = vunpack.c.h.b16 %v6247
  %v8774 = vunpack.c.l.b16 %v6248
  %v8775 = vunpack.c.l.b16 %v6249
  %v8776 = vunpack.c.h.b16 %v6249
  %v8777 = vunpack.c.l.b16 %v6250
  %v8778 = vunpack.c.l.b16 %v6251
  %v8779 = vunpack.c.h.b16 %v6251
  %v8780 = vunpack.c.l.b16 %v6252
  %v8781 = vunpack.c.l.b16 %v6253
  %v8782 = vunpack.c.h.b16 %v6253
  %v8783 = vunpack.c.l.b16 %v6254
  %v8784 = vunpack.c.l.b16 %v6255
  %v8785 = vunpack.c.h.b16 %v6255
  %v8786 = vunpack.c.l.b16 %v6256
  %v8787 = vunpack.c.l.b16 %v6257
  %v8788 = vunpack.c.h.b16 %v6257
  %v8789 = vunpack.c.l.b16 %v6258
  %v8790 = vunpack.c.l.b16 %v6259
  %v8791 = vunpack.c.h.b16 %v6259
  %v8792 = vunpack.c.l.b16 %v6260
  %v8793 = vunpack.c.l.b16 %v6261
  %v8794 = vunpack.c.h.b16 %v6261
  %v8795 = vunpack.c.l.b16 %v6262
  %v8796 = vunpack.c.l.b16 %v6263
  %v8797 = vunpack.c.h.b16 %v6263
  %v8798 = vunpack.c.l.b16 %v6264
  %v8799 = vunpack.c.l.b16 %v6265
  %v8800 = vunpack.c.h.b16 %v6265
  %v8801 = vunpack.c.l.b16 %v6266
  %v8802 = vunpack.c.l.b16 %v6267
  %v8803 = vunpack.c.h.b16 %v6267
  %v8804 = vunpack.c.l.b16 %v6268
  %v8805 = vunpack.c.l.b16 %v6269
  %v8806 = vunpack.c.h.b16 %v6269
  %v8807 = vunpack.c.l.b16 %v6270
  %v8808 = vunpack.c.l.b16 %v6271
  %v8809 = vunpack.c.h.b16 %v6271
  %v8810 = vunpack.c.l.b16 %v6272
  %v8811 = vunpack.c.l.b16 %v6273
  %v8812 = vunpack.c.h.b16 %v6273
  %v8813 = vunpack.c.l.b16 %v6274
  %v8814 = vunpack.c.l.b16 %v6275
  %v8815 = vunpack.c.h.b16 %v6275
  %v8816 = vunpack.c.l.b16 %v6276
  %v8817 = vunpack.c.l.b16 %v6277
  %v8818 = vunpack.c.h.b16 %v6277
  %v8819 = vunpack.c.l.b16 %v6278
  %v8820 = vunpack.c.l.b16 %v6279
  %v8821 = vunpack.c.h.b16 %v6279
  %v8822 = vunpack.c.l.b16 %v6280
  %v8823 = vunpack.c.l.b16 %v6281
  %v8824 = vunpack.c.h.b16 %v6281
  %v8825 = vunpack.c.l.b16 %v6282
  %v8826 = vunpack.c.l.b16 %v6283
  %v8827 = vunpack.c.h.b16 %v6283
  %v8828 = vunpack.c.l.b16 %v6284
  %v8829 = vunpack.c.l.b16 %v6285
  %v8830 = vunpack.c.h.b16 %v6285
  %v8831 = vunpack.c.l.b16 %v6286
  %v8832 = vunpack.c.l.b16 %v6287
  %v8833 = vunpack.c.h.b16 %v6287
  %v8834 = vunpack.c.l.b16 %v6288
  %v8835 = vunpack.c.l.b16 %v6289
  %v8836 = vunpack.c.h.b16 %v6289
  %v8837 = vunpack.c.l.b16 %v6290
  %v8838 = vunpack.c.l.b16 %v6291
  %v8839 = vunpack.c.h.b16 %v6291
  %v8840 = vunpack.c.l.b16 %v6292
  %v8841 = vunpack.c.l.b16 %v6293
  %v8842 = vunpack.c.h.b16 %v6293
  %v8843 = vunpack.c.l.b16 %v6294
  %v8844 = vunpack.c.l.b16 %v6295
  %v8845 = vunpack.c.h.b16 %v6295
  %v8846 = vunpack.c.l.b16 %v6296
  %v8847 = vunpack.c.l.b16 %v6297
  %v8848 = vunpack.c.h.b16 %v6297
  %v8849 = vunpack.c.l.b16 %v6298
  %v8850 = vunpack.c.l.b16 %v6299
  %v8851 = vunpack.c.h.b16 %v6299
  %v8852 = vunpack.c.l.b16 %v6300
  %v8853 = vunpack.c.l.b16 %v6301
  %v8854 = vunpack.c.h.b16 %v6301
  %v8855 = vunpack.c.l.b16 %v6302
  %v8856 = vunpack.c.l.b16 %v6303
  %v8857 = vunpack.c.h.b16 %v6303
  %v8858 = vunpack.c.l.b16 %v6304
  %v8859 = vunpack.c.l.b16 %v6305
  %v8860 = vunpack.c.h.b16 %v6305
  %v8861 = vunpack.c.l.b16 %v6306
  %v8862 = vunpack.c.l.b16 %v6307
  %v8863 = vunpack.c.h.b16 %v6307
  %v8864 = vunpack.c.l.b16 %v6308
  %v8865 = vunpack.c.l.b16 %v6309
  %v8866 = vunpack.c.h.b16 %v6309
  %v8867 = vunpack.c.l.b16 %v6310
  %v8868 = vunpack.c.l.b16 %v6311
  %v8869 = vunpack.c.h.b16 %v6311
  %v8870 = vunpack.c.l.b16 %v6312
  %v8871 = vunpack.c.l.b16 %v6313
  %v8872 = vunpack.c.h.b16 %v6313
  %v8873 = vunpack.c.l.b16 %v6314
  %v8874 = vunpack.c.l.b16 %v6315
  %v8875 = vunpack.c.h.b16 %v6315
  %v8876 = vunpack.c.l.b16 %v6316
  %v8877 = vunpack.c.l.b16 %v6317
  %v8878 = vunpack.c.h.b16 %v6317
  %v8879 = vunpack.c.l.b16 %v6318
  %v8880 = vunpack.c.l.b16 %v6319
  %v8881 = vunpack.c.h.b16 %v6319
  %v8882 = vunpack.c.l.b16 %v6320
  %v8883 = vunpack.c.l.b16 %v6321
  %v8884 = vunpack.c.h.b16 %v6321
  %v8885 = vunpack.c.l.b16 %v6322
  %v8886 = vunpack.c.l.b16 %v6323
  %v8887 = vunpack.c.h.b16 %v6323
  %v8888 = vunpack.c.l.b16 %v6324
  %v8889 = vunpack.c.l.b16 %v6325
  %v8890 = vunpack.c.h.b16 %v6325
  %v8891 = vunpack.c.l.b16 %v6326
  %v8892 = vunpack.c.l.b16 %v6327
  %v8893 = vunpack.c.h.b16 %v6327
  %v8894 = vunpack.c.l.b16 %v6328
  %v8895 = vunpack.c.l.b16 %v6329
  %v8896 = vunpack.c.h.b16 %v6329
  %v8897 = vunpack.c.l.b16 %v6330
  %v8898 = vunpack.c.l.b16 %v6331
  %v8899 = vunpack.c.h.b16 %v6331
  %v8900 = vunpack.c.l.b16 %v6332
  %v8901 = vunpack.c.l.b16 %v6333
  %v8902 = vunpack.c.h.b16 %v6333
  %v8903 = vunpack.c.l.b16 %v6334
  %v8904 = vunpack.c.l.b16 %v6335
  %v8905 = vunpack.c.h.b16 %v6335
  %v8906 = vunpack.c.l.b16 %v6336
  %v8907 = vunpack.c.l.b16 %v6337
  %v8908 = vunpack.c.h.b16 %v6337
  %v8909 = vunpack.c.l.b16 %v6338
  %v8910 = vunpack.c.l.b16 %v6339
  %v8911 = vunpack.c.h.b16 %v6339
  %v8912 = vunpack.c.l.b16 %v6340
  %v8913 = vunpack.c.l.b16 %v6341
  %v8914 = vunpack.c.h.b16 %v6341
  %v8915 = vunpack.c.l.b16 %v6342
  %v8916 = vunpack.c.l.b16 %v6343
  %v8917 = vunpack.c.h.b16 %v6343
  %v8918 = vunpack.c.l.b16 %v6344
  %v8919 = vunpack.c.l.b16 %v6345
  %v8920 = vunpack.c.h.b16 %v6345
  %v8921 = vunpack.c.l.b16 %v6346
  %v8922 = vunpack.c.l.b16 %v6347
  %v8923 = vunpack.c.h.b16 %v6347
  %v8924 = vunpack.c.l.b16 %v6348
  %v8925 = vunpack.c.l.b16 %v6349
  %v8926 = vunpack.c.h.b16 %v6349
  %v8927 = vunpack.c.l.b16 %v6350
  %v8928 = vunpack.c.l.b16 %v6351
  %v8929 = vunpack.c.h.b16 %v6351
  %v8930 = vunpack.c.l.b16 %v6352
  %v8931 = vunpack.c.l.b16 %v6353
  %v8932 = vunpack.c.h.b16 %v6353
  %v8933 = vunpack.c.l.b16 %v6354
  %v8934 = vunpack.c.l.b16 %v6355
  %v8935 = vunpack.c.h.b16 %v6355
  %v8936 = vunpack.c.l.b16 %v6356
  %v8937 = vunpack.c.l.b16 %v6357
  %v8938 = vunpack.c.h.b16 %v6357
  %v8939 = vunpack.c.l.b16 %v6358
  %v8940 = vunpack.c.l.b16 %v6359
  %v8941 = vunpack.c.h.b16 %v6359
  %v8942 = vunpack.c.l.b16 %v6360
  %v8943 = vunpack.c.l.b16 %v6361
  %v8944 = vunpack.c.h.b16 %v6361
  %v8945 = vunpack.c.l.b16 %v6362
  %v8946 = vunpack.c.l.b16 %v6363
  %v8947 = vunpack.c.h.b16 %v6363
  %v8948 = vunpack.c.l.b16 %v6364
  %v8949 = vunpack.c.l.b16 %v6365
  %v8950 = vunpack.c.h.b16 %v6365
  %v8951 = vunpack.c.l.b16 %v6366
  %v8952 = vunpack.c.l.b16 %v6367
  %v8953 = vunpack.c.h.b16 %v6367
  %v8954 = vunpack.c.l.b16 %v6368
  %v8955 = vunpack.c.l.b16 %v6369
  %v8956 = vunpack.c.h.b16 %v6369
  %v8957 = vunpack.c.l.b16 %v6370
  %v8958 = vunpack.c.l.b16 %v6371
  %v8959 = vunpack.c.h.b16 %v6371
  %v8960 = vunpack.c.l.b16 %v6372
  %v8961 = vunpack.c.l.b16 %v6373
  %v8962 = vunpack.c.h.b16 %v6373
  %v8963 = vunpack.c.l.b16 %v6374
  %v8964 = vunpack.c.l.b16 %v6375
  %v8965 = vunpack.c.h.b16 %v6375
  %v8966 = vunpack.c.l.b16 %v6376
  %v8967 = vunpack.c.l.b16 %v6377
  %v8968 = vunpack.c.h.b16 %v6377
  %v8969 = vunpack.c.l.b16 %v6378
  %v8970 = vunpack.c.l.b16 %v6379
  %v8971 = vunpack.c.h.b16 %v6379
  %v8972 = vunpack.c.l.b16 %v6380
  %v8973 = vunpack.c.l.b16 %v6381
  %v8974 = vunpack.c.h.b16 %v6381
  %v8975 = vunpack.c.l.b16 %v6382
  %v8976 = vunpack.c.l.b16 %v6383
  %v8977 = vunpack.c.h.b16 %v6383
  %v8978 = vunpack.c.l.b16 %v6384
  %v8979 = vunpack.c.l.b16 %v6385
  %v8980 = vunpack.c.h.b16 %v6385
  %v8981 = vunpack.c.l.b16 %v6386
  %v8982 = vunpack.c.l.b16 %v6387
  %v8983 = vunpack.c.h.b16 %v6387
  %v8984 = vunpack.c.l.b16 %v6388
  %v8985 = vunpack.c.l.b16 %v6389
  %v8986 = vunpack.c.h.b16 %v6389
  %v8987 = vunpack.c.l.b16 %v6390
  %v8988 = vunpack.c.l.b16 %v6391
  %v8989 = vunpack.c.h.b16 %v6391
  %v8990 = vunpack.c.l.b16 %v6392
  %v8991 = vunpack.c.l.b16 %v6393
  %v8992 = vunpack.c.h.b16 %v6393
  %v8993 = vunpack.c.l.b16 %v6394
  %v8994 = vunpack.c.l.b16 %v6395
  %v8995 = vunpack.c.h.b16 %v6395
  %v8996 = vunpack.c.l.b16 %v6396
  %v8997 = vunpack.c.l.b16 %v6397
  %v8998 = vunpack.c.h.b16 %v6397
  %v8999 = vunpack.c.l.b16 %v6398
  %v9000 = vunpack.c.l.b16 %v6399
  %v9001 = vunpack.c.h.b16 %v6399
  %v9002 = vunpack.c.l.b16 %v6400
  %v9003 = vunpack.c.l.b16 %v6401
  %v9004 = vunpack.c.h.b16 %v6401
  %v9005 = vunpack.c.l.b16 %v6402
  %v9006 = vunpack.c.l.b16 %v6403
  %v9007 = vunpack.c.h.b16 %v6403
  %v9008 = vunpack.c.l.b16 %v6404
  %v9009 = vunpack.c.l.b16 %v6405
  %v9010 = vunpack.c.h.b16 %v6405
  %v9011 = vunpack.c.l.b16 %v6406
  %v9012 = vunpack.c.l.b16 %v6407
  %v9013 = vunpack.c.h.b16 %v6407
  %v9014 = vunpack.c.l.b16 %v6408
  %v9015 = vunpack.c.l.b16 %v6409
  %v9016 = vunpack.c.h.b16 %v6409
  %v9017 = vunpack.c.l.b16 %v6410
  %v9018 = vunpack.c.l.b16 %v6411
  %v9019 = vunpack.c.h.b16 %v6411
  %v9020 = vunpack.c.l.b16 %v6412
  %v9021 = vunpack.c.l.b16 %v6413
  %v9022 = vunpack.c.h.b16 %v6413
  %v9023 = vunpack.c.l.b16 %v6414
  %v9024 = vunpack.c.l.b16 %v6415
  %v9025 = vunpack.c.h.b16 %v6415
  %v9026 = vunpack.c.l.b16 %v6416
  %v9027 = vunpack.c.l.b16 %v6417
  %v9028 = vunpack.c.h.b16 %v6417
  %v9029 = vunpack.c.l.b16 %v6418
  %v9030 = vunpack.c.l.b16 %v6419
  %v9031 = vunpack.c.h.b16 %v6419
  %v9032 = vunpack.c.l.b16 %v6420
  %v9033 = vunpack.c.l.b16 %v6421
  %v9034 = vunpack.c.h.b16 %v6421
  %v9035 = vunpack.c.l.b16 %v6422
  %v9036 = vunpack.c.l.b16 %v6423
  %v9037 = vunpack.c.h.b16 %v6423
  %v9038 = vunpack.c.l.b16 %v6424
  %v9039 = vunpack.c.l.b16 %v6425
  %v9040 = vunpack.c.h.b16 %v6425
  %v9041 = vunpack.c.l.b16 %v6426
  %v9042 = vunpack.c.l.b16 %v6427
  %v9043 = vunpack.c.h.b16 %v6427
  %v9044 = vunpack.c.l.b16 %v6428
  %v9045 = vunpack.c.l.b16 %v6429
  %v9046 = vunpack.c.h.b16 %v6429
  %v9047 = vunpack.c.l.b16 %v6430
  %v9048 = vunpack.c.l.b16 %v6431
  %v9049 = vunpack.c.h.b16 %v6431
  %v9050 = vunpack.c.l.b16 %v6432
  %v9051 = vunpack.c.l.b16 %v6433
  %v9052 = vunpack.c.h.b16 %v6433
  %v9053 = vunpack.c.l.b16 %v6434
  %v9054 = vunpack.c.l.b16 %v6435
  %v9055 = vunpack.c.h.b16 %v6435
  %v9056 = vunpack.c.l.b16 %v6436
  %v9057 = vunpack.c.l.b16 %v6437
  %v9058 = vunpack.c.h.b16 %v6437
  %v9059 = vunpack.c.l.b16 %v6438
  %v9060 = vunpack.c.l.b16 %v6439
  %v9061 = vunpack.c.h.b16 %v6439
  %v9062 = vunpack.c.l.b16 %v6440
  %v9063 = vunpack.c.l.b16 %v6441
  %v9064 = vunpack.c.h.b16 %v6441
  %v9065 = vunpack.c.l.b16 %v6442
  %v9066 = vunpack.c.l.b16 %v6443
  %v9067 = vunpack.c.h.b16 %v6443
  %v9068 = vunpack.c.l.b16 %v6444
  %v9069 = vunpack.c.l.b16 %v6445
  %v9070 = vunpack.c.h.b16 %v6445
  %v9071 = vunpack.c.l.b16 %v6446
  %v9072 = vunpack.c.l.b16 %v6447
  %v9073 = vunpack.c.h.b16 %v6447
  %v9074 = vunpack.c.l.b16 %v6448
  %v9075 = vunpack.c.l.b16 %v6449
  %v9076 = vunpack.c.h.b16 %v6449
  %v9077 = vunpack.c.l.b16 %v6450
  %v9078 = vunpack.c.l.b16 %v6451
  %v9079 = vunpack.c.h.b16 %v6451
  %v9080 = vunpack.c.l.b16 %v6452
  %v9081 = vunpack.c.l.b16 %v6453
  %v9082 = vunpack.c.h.b16 %v6453
  %v9083 = vunpack.c.l.b16 %v6454
  %v9084 = vunpack.c.l.b16 %v6455
  %v9085 = vunpack.c.h.b16 %v6455
  %v9086 = vunpack.c.l.b16 %v6456
  %v9087 = vunpack.c.l.b16 %v6457
  %v9088 = vunpack.c.h.b16 %v6457
  %v9089 = vunpack.c.l.b16 %v6458
  %v9090 = vunpack.c.l.b16 %v6459
  %v9091 = vunpack.c.h.b16 %v6459
  %v9092 = vunpack.c.l.b16 %v6460
  %v9093 = vunpack.c.l.b16 %v6461
  %v9094 = vunpack.c.h.b16 %v6461
  %v9095 = vunpack.c.l.b16 %v6462
  %v9096 = vunpack.c.l.b16 %v6463
  %v9097 = vunpack.c.h.b16 %v6463
  %v9098 = vunpack.c.l.b16 %v6464
  %v9099 = vunpack.c.l.b16 %v6465
  %v9100 = vunpack.c.h.b16 %v6465
  %v9101 = vunpack.c.l.b16 %v6466
  %v9102 = vunpack.c.l.b16 %v6467
  %v9103 = vunpack.c.h.b16 %v6467
  %v9104 = vunpack.c.l.b16 %v6468
  %v9105 = vunpack.c.l.b16 %v6469
  %v9106 = vunpack.c.h.b16 %v6469
  %v9107 = vunpack.c.l.b16 %v6470
  %v9108 = vunpack.c.l.b16 %v6471
  %v9109 = vunpack.c.h.b16 %v6471
  %v9110 = vunpack.c.l.b16 %v6472
  %v9111 = vunpack.c.l.b16 %v6473
  %v9112 = vunpack.c.h.b16 %v6473
  %v9113 = vunpack.c.l.b16 %v6474
  %v9114 = vunpack.c.l.b16 %v6475
  %v9115 = vunpack.c.h.b16 %v6475
  %v9116 = vunpack.c.l.b16 %v6476
  %v9117 = vunpack.c.l.b16 %v6477
  %v9118 = vunpack.c.h.b16 %v6477
  %v9119 = vunpack.c.l.b16 %v6478
  %v9120 = vunpack.c.l.b16 %v6479
  %v9121 = vunpack.c.h.b16 %v6479
  %v9122 = vunpack.c.l.b16 %v6480
  %v9123 = vunpack.c.l.b16 %v6481
  %v9124 = vunpack.c.h.b16 %v6481
  %v9125 = vunpack.c.l.b16 %v6482
  %v9126 = vunpack.c.l.b16 %v6483
  %v9127 = vunpack.c.h.b16 %v6483
  %v9128 = vunpack.c.l.b16 %v6484
  %v9129 = vunpack.c.l.b16 %v6485
  %v9130 = vunpack.c.h.b16 %v6485
  %v9131 = vunpack.c.l.b16 %v6486
  %v9132 = vunpack.c.l.b16 %v6487
  %v9133 = vunpack.c.h.b16 %v6487
  %v9134 = vunpack.c.l.b16 %v6488
  %v9135 = vunpack.c.l.b16 %v6489
  %v9136 = vunpack.c.h.b16 %v6489
  %v9137 = vunpack.c.l.b16 %v6490
  %v9138 = vunpack.c.l.b16 %v6491
  %v9139 = vunpack.c.h.b16 %v6491
  %v9140 = vunpack.c.l.b16 %v6492
  %v9141 = vunpack.c.l.b16 %v6493
  %v9142 = vunpack.c.h.b16 %v6493
  %v9143 = vunpack.c.l.b16 %v6494
  %v9144 = vunpack.c.l.b16 %v6495
  %v9145 = vunpack.c.h.b16 %v6495
  %v9146 = vunpack.c.l.b16 %v6496
  %v9147 = vunpack.c.l.b16 %v6497
  %v9148 = vunpack.c.h.b16 %v6497
  %v9149 = vunpack.c.l.b16 %v6498
  %v9150 = vunpack.c.l.b16 %v6499
  %v9151 = vunpack.c.h.b16 %v6499
  %v9152 = vunpack.c.l.b16 %v6500
  %v9153 = vunpack.c.l.b16 %v6501
  %v9154 = vunpack.c.h.b16 %v6501
  %v9155 = vunpack.c.l.b16 %v6502
  %v9156 = vunpack.c.l.b16 %v6503
  %v9157 = vunpack.c.h.b16 %v6503
  %v9158 = vunpack.c.l.b16 %v6504
  %v9159 = vunpack.c.l.b16 %v6505
  %v9160 = vunpack.c.h.b16 %v6505
  %v9161 = vunpack.c.l.b16 %v6506
  %v9162 = vunpack.c.l.b16 %v6507
  %v9163 = vunpack.c.h.b16 %v6507
  %v9164 = vunpack.c.l.b16 %v6508
  %v9165 = vunpack.c.l.b16 %v6509
  %v9166 = vunpack.c.h.b16 %v6509
  %v9167 = vunpack.c.l.b16 %v6510
  %v9168 = vunpack.c.l.b16 %v6511
  %v9169 = vunpack.c.h.b16 %v6511
  %v9170 = vunpack.c.l.b16 %v6512
  %v9171 = vunpack.c.l.b16 %v6513
  %v9172 = vunpack.c.h.b16 %v6513
  %v9173 = vunpack.c.l.b16 %v6514
  %v9174 = vunpack.c.l.b16 %v6515
  %v9175 = vunpack.c.h.b16 %v6515
  %v9176 = vunpack.c.l.b16 %v6516
  %v9177 = vunpack.c.l.b16 %v6517
  %v9178 = vunpack.c.h.b16 %v6517
  %v9179 = vunpack.c.l.b16 %v6518
  %v9180 = vunpack.c.l.b16 %v6519
  %v9181 = vunpack.c.h.b16 %v6519
  %v9182 = vunpack.c.l.b16 %v6520
  %v9183 = vunpack.c.l.b16 %v6521
  %v9184 = vunpack.c.h.b16 %v6521
  %v9185 = vunpack.c.l.b16 %v6522
  %v9186 = vunpack.c.l.b16 %v6523
  %v9187 = vunpack.c.h.b16 %v6523
  %v9188 = vunpack.c.l.b16 %v6524
  %v9189 = vunpack.c.l.b16 %v6525
  %v9190 = vunpack.c.h.b16 %v6525
  %v9191 = vunpack.c.l.b16 %v6526
  %v9192 = vunpack.c.l.b16 %v6527
  %v9193 = vunpack.c.h.b16 %v6527
  %v9194 = vunpack.c.l.b16 %v6528
  %v9195 = vunpack.c.l.b16 %v6529
  %v9196 = vunpack.c.h.b16 %v6529
  %v9197 = vunpack.c.l.b16 %v6530
  %v9198 = vunpack.c.l.b16 %v6531
  %v9199 = vunpack.c.h.b16 %v6531
  %v9200 = vunpack.c.l.b16 %v6532
  %v9201 = vunpack.c.l.b16 %v6533
  %v9202 = vunpack.c.h.b16 %v6533
  %v9203 = vunpack.c.l.b16 %v6534
  %v9204 = vunpack.c.l.b16 %v6535
  %v9205 = vunpack.c.h.b16 %v6535
  %v9206 = vunpack.c.l.b16 %v6536
  %v9207 = vunpack.c.l.b16 %v6537
  %v9208 = vunpack.c.h.b16 %v6537
  %v9209 = vunpack.c.l.b16 %v6538
  %v9210 = vunpack.c.l.b16 %v6539
  %v9211 = vunpack.c.h.b16 %v6539
  %v9212 = vunpack.c.l.b16 %v6540
  %v9213 = vunpack.c.l.b16 %v6541
  %v9214 = vunpack.c.h.b16 %v6541
  %v9215 = vunpack.c.l.b16 %v6542
  %v9216 = vunpack.c.l.b16 %v6543
  %v9217 = vunpack.c.h.b16 %v6543
  %v9218 = vunpack.c.l.b16 %v6544
  %v9219 = vunpack.c.l.b16 %v6545
  %v9220 = vunpack.c.h.b16 %v6545
  %v9221 = vunpack.c.l.b16 %v6546
  %v9222 = vunpack.c.l.b16 %v6547
  %v9223 = vunpack.c.h.b16 %v6547
  %v9224 = vunpack.c.l.b16 %v6548
  %v9225 = vunpack.c.l.b16 %v6549
  %v9226 = vunpack.c.h.b16 %v6549
  %v9227 = vunpack.c.l.b16 %v6550
  %v9228 = vunpack.c.l.b16 %v6551
  %v9229 = vunpack.c.h.b16 %v6551
  %v9230 = vunpack.c.l.b16 %v6552
  %v9231 = vunpack.c.l.b16 %v6553
  %v9232 = vunpack.c.h.b16 %v6553
  %v9233 = vunpack.c.l.b16 %v6554
  %v9234 = vunpack.c.l.b16 %v6555
  %v9235 = vunpack.c.h.b16 %v6555
  %v9236 = vunpack.c.l.b16 %v6556
  %v9237 = vunpack.c.l.b16 %v6557
  %v9238 = vunpack.c.h.b16 %v6557
  %v9239 = vunpack.c.l.b16 %v6558
  %v9240 = vunpack.c.l.b16 %v6559
  %v9241 = vunpack.c.h.b16 %v6559
  %v9242 = vunpack.c.l.b16 %v6560
  %v9243 = vunpack.c.l.b16 %v6561
  %v9244 = vunpack.c.h.b16 %v6561
  %v9245 = vunpack.c.l.b16 %v6562
  %v9246 = vpack.c.b16 %v7644, %v7641
  %v9247 = vpack.c.b16 %v7645, %v7642
  %v9248 = vpack.c.b16 %v7646, %v7643
  %v9249 = vpack.c.b16 %v7650, %v7647
  %v9250 = vpack.c.b16 %v7651, %v7648
  %v9251 = vpack.c.b16 %v7652, %v7649
  %v9252 = vpack.c.b16 %v7656, %v7653
  %v9253 = vpack.c.b16 %v7657, %v7654
  %v9254 = vpack.c.b16 %v7658, %v7655
  %v9255 = vpack.c.b16 %v7662, %v7659
  %v9256 = vpack.c.b16 %v7663, %v7660
  %v9257 = vpack.c.b16 %v7664, %v7661
  %v9258 = vpack.c.b16 %v7668, %v7665
  %v9259 = vpack.c.b16 %v7669, %v7666
  %v9260 = vpack.c.b16 %v7670, %v7667
  %v9261 = vpack.c.b16 %v7674, %v7671
  %v9262 = vpack.c.b16 %v7675, %v7672
  %v9263 = vpack.c.b16 %v7676, %v7673
  %v9264 = vpack.c.b16 %v7680, %v7677
  %v9265 = vpack.c.b16 %v7681, %v7678
  %v9266 = vpack.c.b16 %v7682, %v7679
  %v9267 = vpack.c.b16 %v7686, %v7683
  %v9268 = vpack.c.b16 %v7687, %v7684
  %v9269 = vpack.c.b16 %v7688, %v7685
  %v9270 = vpack.c.b16 %v7692, %v7689
  %v9271 = vpack.c.b16 %v7693, %v7690
  %v9272 = vpack.c.b16 %v7694, %v7691
  %v9273 = vpack.c.b16 %v7698, %v7695
  %v9274 = vpack.c.b16 %v7699, %v7696
  %v9275 = vpack.c.b16 %v7700, %v7697
  %v9276 = vpack.c.b16 %v7704, %v7701
  %v9277 = vpack.c.b16 %v7705, %v7702
  %v9278 = vpack.c.b16 %v7706, %v7703
  %v9279 = vpack.c.b16 %v7710, %v7707
  %v9280 = vpack.c.b16 %v7711, %v7708
  %v9281 = vpack.c.b16 %v7712, %v7709
  %v9282 = vpack.c.b16 %v7716, %v7713
  %v9283 = vpack.c.b16 %v7717, %v7714
  %v9284 = vpack.c.b16 %v7718, %v7715
  %v9285 = vpack.c.b16 %v7722, %v7719
  %v9286 = vpack.c.b16 %v7723, %v7720
  %v9287 = vpack.c.b16 %v7724, %v7721
  %v9288 = vpack.c.b16 %v7728, %v7725
  %v9289 = vpack.c.b16 %v7729, %v7726
  %v9290 = vpack.c.b16 %v7730, %v7727
  %v9291 = vpack.c.b16 %v7734, %v7731
  %v9292 = vpack.c.b16 %v7735, %v7732
  %v9293 = vpack.c.b16 %v7736, %v7733
  %v9294 = vpack.c.b16 %v7740, %v7737
  %v9295 = vpack.c.b16 %v7741, %v7738
  %v9296 = vpack.c.b16 %v7742, %v7739
  %v9297 = vpack.c.b16 %v7746, %v7743
  %v9298 = vpack.c.b16 %v7747, %v7744
  %v9299 = vpack.c.b16 %v7748, %v7745
  %v9300 = vpack.c.b16 %v7752, %v7749
  %v9301 = vpack.c.b16 %v7753, %v7750
  %v9302 = vpack.c.b16 %v7754, %v7751
  %v9303 = vpack.c.b16 %v7758, %v7755
  %v9304 = vpack.c.b16 %v7759, %v7756
  %v9305 = vpack.c.b16 %v7760, %v7757
  %v9306 = vpack.c.b16 %v7764, %v7761
  %v9307 = vpack.c.b16 %v7765, %v7762
  %v9308 = vpack.c.b16 %v7766, %v7763
  %v9309 = vpack.c.b16 %v7770, %v7767
  %v9310 = vpack.c.b16 %v7771, %v7768
  %v9311 = vpack.c.b16 %v7772, %v7769
  %v9312 = vpack.c.b16 %v7776, %v7773
  %v9313 = vpack.c.b16 %v7777, %v7774
  %v9314 = vpack.c.b16 %v7778, %v7775
  %v9315 = vpack.c.b16 %v7782, %v7779
  %v9316 = vpack.c.b16 %v7783, %v7780
  %v9317 = vpack.c.b16 %v7784, %v7781
  %v9318 = vpack.c.b16 %v7788, %v7785
  %v9319 = vpack.c.b16 %v7789, %v7786
  %v9320 = vpack.c.b16 %v7790, %v7787
  %v9321 = vpack.c.b16 %v7794, %v7791
  %v9322 = vpack.c.b16 %v7795, %v7792
  %v9323 = vpack.c.b16 %v7796, %v7793
  %v9324 = vpack.c.b16 %v7800, %v7797
  %v9325 = vpack.c.b16 %v7801, %v7798
  %v9326 = vpack.c.b16 %v7802, %v7799
  %v9327 = vpack.c.b16 %v7806, %v7803
  %v9328 = vpack.c.b16 %v7807, %v7804
  %v9329 = vpack.c.b16 %v7808, %v7805
  %v9330 = vpack.c.b16 %v7812, %v7809
  %v9331 = vpack.c.b16 %v7813, %v7810
  %v9332 = vpack.c.b16 %v7814, %v7811
  %v9333 = vpack.c.b16 %v7818, %v7815
  %v9334 = vpack.c.b16 %v7819, %v7816
  %v9335 = vpack.c.b16 %v7820, %v7817
  %v9336 = vpack.c.b16 %v7824, %v7821
  %v9337 = vpack.c.b16 %v7825, %v7822
  %v9338 = vpack.c.b16 %v7826, %v7823
  %v9339 = vpack.c.b16 %v7830, %v7827
  %v9340 = vpack.c.b16 %v7831, %v7828
  %v9341 = vpack.c.b16 %v7832, %v7829
  %v9342 = vpack.c.b16 %v7836, %v7833
  %v9343 = vpack.c.b16 %v7837, %v7834
  %v9344 = vpack.c.b16 %v7838, %v7835
  %v9345 = vpack.c.b16 %v7842, %v7839
  %v9346 = vpack.c.b16 %v7843, %v7840
  %v9347 = vpack.c.b16 %v7844, %v7841
  %v9348 = vpack.c.b16 %v7848, %v7845
  %v9349 = vpack.c.b16 %v7849, %v7846
  %v9350 = vpack.c.b16 %v7850, %v7847
  %v9351 = vpack.c.b16 %v7854, %v7851
  %v9352 = vpack.c.b16 %v7855, %v7852
  %v9353 = vpack.c.b16 %v7856, %v7853
  %v9354 = vpack.c.b16 %v7860, %v7857
  %v9355 = vpack.c.b16 %v7861, %v7858
  %v9356 = vpack.c.b16 %v7862, %v7859
  %v9357 = vpack.c.b16 %v7866, %v7863
  %v9358 = vpack.c.b16 %v7867, %v7864
  %v9359 = vpack.c.b16 %v7868, %v7865
  %v9360 = vpack.c.b16 %v7872, %v7869
  %v9361 = vpack.c.b16 %v7873, %v7870
  %v9362 = vpack.c.b16 %v7874, %v7871
  %v9363 = vpack.c.b16 %v7878, %v7875
  %v9364 = vpack.c.b16 %v7879, %v7876
  %v9365 = vpack.c.b16 %v7880, %v7877
  %v9366 = vpack.c.b16 %v7884, %v7881
  %v9367 = vpack.c.b16 %v7885, %v7882
  %v9368 = vpack.c.b16 %v7886, %v7883
  %v9369 = vpack.c.b16 %v7890, %v7887
  %v9370 = vpack.c.b16 %v7891, %v7888
  %v9371 = vpack.c.b16 %v7892, %v7889
  %v9372 = vpack.c.b16 %v7896, %v7893
  %v9373 = vpack.c.b16 %v7897, %v7894
  %v9374 = vpack.c.b16 %v7898, %v7895
  %v9375 = vpack.c.b16 %v7902, %v7899
  %v9376 = vpack.c.b16 %v7903, %v7900
  %v9377 = vpack.c.b16 %v7904, %v7901
  %v9378 = vpack.c.b16 %v7908, %v7905
  %v9379 = vpack.c.b16 %v7909, %v7906
  %v9380 = vpack.c.b16 %v7910, %v7907
  %v9381 = vpack.c.b16 %v7914, %v7911
  %v9382 = vpack.c.b16 %v7915, %v7912
  %v9383 = vpack.c.b16 %v7916, %v7913
  %v9384 = vpack.c.b16 %v7920, %v7917
  %v9385 = vpack.c.b16 %v7921, %v7918
  %v9386 = vpack.c.b16 %v7922, %v7919
  %v9387 = vpack.c.b16 %v7926, %v7923
  %v9388 = vpack.c.b16 %v7927, %v7924
  %v9389 = vpack.c.b16 %v7928, %v7925
  %v9390 = vpack.c.b16 %v7932, %v7929
  %v9391 = vpack.c.b16 %v7933, %v7930
  %v9392 = vpack.c.b16 %v7934, %v7931
  %v9393 = vpack.c.b16 %v7938, %v7935
  %v9394 = vpack.c.b16 %v7939, %v7936
  %v9395 = vpack.c.b16 %v7940, %v7937
  %v9396 = vpack.c.b16 %v7944, %v7941
  %v9397 = vpack.c.b16 %v7945, %v7942
  %v9398 = vpack.c.b16 %v7946, %v7943
  %v9399 = vpack.c.b16 %v7950, %v7947
  %v9400 = vpack.c.b16 %v7951, %v7948
  %v9401 = vpack.c.b16 %v7952, %v7949
  %v9402 = vpack.c.b16 %v7956, %v7953
  %v9403 = vpack.c.b16 %v7957, %v7954
  %v9404 = vpack.c.b16 %v7958, %v7955
  %v9405 = vpack.c.b16 %v7962, %v7959
  %v9406 = vpack.c.b16 %v7963, %v7960
  %v9407 = vpack.c.b16 %v7964, %v7961
  %v9408 = vpack.c.b16 %v7968, %v7965
  %v9409 = vpack.c.b16 %v7969, %v7966
  %v9410 = vpack.c.b16 %v7970, %v7967
  %v9411 = vpack.c.b16 %v7974, %v7971
  %v9412 = vpack.c.b16 %v7975, %v7972
  %v9413 = vpack.c.b16 %v7976, %v7973
  %v9414 = vpack.c.b16 %v7980, %v7977
  %v9415 = vpack.c.b16 %v7981, %v7978
  %v9416 = vpack.c.b16 %v7982, %v7979
  %v9417 = vpack.c.b16 %v7986, %v7983
  %v9418 = vpack.c.b16 %v7987, %v7984
  %v9419 = vpack.c.b16 %v7988, %v7985
  %v9420 = vpack.c.b16 %v7992, %v7989
  %v9421 = vpack.c.b16 %v7993, %v7990
  %v9422 = vpack.c.b16 %v7994, %v7991
  %v9423 = vpack.c.b16 %v7998, %v7995
  %v9424 = vpack.c.b16 %v7999, %v7996
  %v9425 = vpack.c.b16 %v8000, %v7997
  %v9426 = vpack.c.b16 %v8004, %v8001
  %v9427 = vpack.c.b16 %v8005, %v8002
  %v9428 = vpack.c.b16 %v8006, %v8003
  %v9429 = vpack.c.b16 %v8010, %v8007
  %v9430 = vpack.c.b16 %v8011, %v8008
  %v9431 = vpack.c.b16 %v8012, %v8009
  %v9432 = vpack.c.b16 %v8016, %v8013
  %v9433 = vpack.c.b16 %v8017, %v8014
  %v9434 = vpack.c.b16 %v8018, %v8015
  %v9435 = vpack.c.b16 %v8022, %v8019
  %v9436 = vpack.c.b16 %v8023, %v8020
  %v9437 = vpack.c.b16 %v8024, %v8021
  %v9438 = vpack.c.b16 %v8028, %v8025
  %v9439 = vpack.c.b16 %v8029, %v8026
  %v9440 = vpack.c.b16 %v8030, %v8027
  %v9441 = vpack.c.b16 %v8034, %v8031
  %v9442 = vpack.c.b16 %v8035, %v8032
  %v9443 = vpack.c.b16 %v8036, %v8033
  %v9444 = vpack.c.b16 %v8040, %v8037
  %v9445 = vpack.c.b16 %v8041, %v8038
  %v9446 = vpack.c.b16 %v8042, %v8039
  %v9447 = vpack.c.b16 %v8046, %v8043
  %v9448 = vpack.c.b16 %v8047, %v8044
  %v9449 = vpack.c.b16 %v8048, %v8045
  %v9450 = vpack.c.b16 %v8052, %v8049
  %v9451 = vpack.c.b16 %v8053, %v8050
  %v9452 = vpack.c.b16 %v8054, %v8051
  %v9453 = vpack.c.b16 %v8058, %v8055
  %v9454 = vpack.c.b16 %v8059, %v8056
  %v9455 = vpack.c.b16 %v8060, %v8057
  %v9456 = vpack.c.b16 %v8064, %v8061
  %v9457 = vpack.c.b16 %v8065, %v8062
  %v9458 = vpack.c.b16 %v8066, %v8063
  %v9459 = vpack.c.b16 %v8070, %v8067
  %v9460 = vpack.c.b16 %v8071, %v8068
  %v9461 = vpack.c.b16 %v8072, %v8069
  %v9462 = vpack.c.b16 %v8076, %v8073
  %v9463 = vpack.c.b16 %v8077, %v8074
  %v9464 = vpack.c.b16 %v8078, %v8075
  %v9465 = vpack.c.b16 %v8082, %v8079
  %v9466 = vpack.c.b16 %v8083, %v8080
  %v9467 = vpack.c.b16 %v8084, %v8081
  %v9468 = vpack.c.b16 %v8088, %v8085
  %v9469 = vpack.c.b16 %v8089, %v8086
  %v9470 = vpack.c.b16 %v8090, %v8087
  %v9471 = vpack.c.b16 %v8094, %v8091
  %v9472 = vpack.c.b16 %v8095, %v8092
  %v9473 = vpack.c.b16 %v8096, %v8093
  %v9474 = vpack.c.b16 %v8100, %v8097
  %v9475 = vpack.c.b16 %v8101, %v8098
  %v9476 = vpack.c.b16 %v8102, %v8099
  %v9477 = vpack.c.b16 %v8106, %v8103
  %v9478 = vpack.c.b16 %v8107, %v8104
  %v9479 = vpack.c.b16 %v8108, %v8105
  %v9480 = vpack.c.b16 %v8112, %v8109
  %v9481 = vpack.c.b16 %v8113, %v8110
  %v9482 = vpack.c.b16 %v8114, %v8111
  %v9483 = vpack.c.b16 %v8118, %v8115
  %v9484 = vpack.c.b16 %v8119, %v8116
  %v9485 = vpack.c.b16 %v8120, %v8117
  %v9486 = vpack.c.b16 %v8124, %v8121
  %v9487 = vpack.c.b16 %v8125, %v8122
  %v9488 = vpack.c.b16 %v8126, %v8123
  %v9489 = vpack.c.b16 %v8130, %v8127
  %v9490 = vpack.c.b16 %v8131, %v8128
  %v9491 = vpack.c.b16 %v8132, %v8129
  %v9492 = vpack.c.b16 %v8136, %v8133
  %v9493 = vpack.c.b16 %v8137, %v8134
  %v9494 = vpack.c.b16 %v8138, %v8135
  %v9495 = vpack.c.b16 %v8142, %v8139
  %v9496 = vpack.c.b16 %v8143, %v8140
  %v9497 = vpack.c.b16 %v8144, %v8141
  %v9498 = vpack.c.b16 %v8148, %v8145
  %v9499 = vpack.c.b16 %v8149, %v8146
  %v9500 = vpack.c.b16 %v8150, %v8147
  %v9501 = vpack.c.b16 %v8154, %v8151
  %v9502 = vpack.c.b16 %v8155, %v8152
  %v9503 = vpack.c.b16 %v8156, %v8153
  %v9504 = vpack.c.b16 %v8160, %v8157
  %v9505 = vpack.c.b16 %v8161, %v8158
  %v9506 = vpack.c.b16 %v8162, %v8159
  %v9507 = vpack.c.b16 %v8166, %v8163
  %v9508 = vpack.c.b16 %v8167, %v8164
  %v9509 = vpack.c.b16 %v8168, %v8165
  %v9510 = vpack.c.b16 %v8172, %v8169
  %v9511 = vpack.c.b16 %v8173, %v8170
  %v9512 = vpack.c.b16 %v8174, %v8171
  %v9513 = vpack.c.b16 %v8178, %v8175
  %v9514 = vpack.c.b16 %v8179, %v8176
  %v9515 = vpack.c.b16 %v8180, %v8177
  %v9516 = vpack.c.b16 %v8184, %v8181
  %v9517 = vpack.c.b16 %v8185, %v8182
  %v9518 = vpack.c.b16 %v8186, %v8183
  %v9519 = vpack.c.b16 %v8190, %v8187
  %v9520 = vpack.c.b16 %v8191, %v8188
  %v9521 = vpack.c.b16 %v8192, %v8189
  %v9522 = vpack.c.b16 %v8196, %v8193
  %v9523 = vpack.c.b16 %v8197, %v8194
  %v9524 = vpack.c.b16 %v8198, %v8195
  %v9525 = vpack.c.b16 %v8202, %v8199
  %v9526 = vpack.c.b16 %v8203, %v8200
  %v9527 = vpack.c.b16 %v8204, %v8201
  %v9528 = vpack.c.b16 %v8208, %v8205
  %v9529 = vpack.c.b16 %v8209, %v8206
  %v9530 = vpack.c.b16 %v8210, %v8207
  %v9531 = vpack.c.b16 %v8214, %v8211
  %v9532 = vpack.c.b16 %v8215, %v8212
  %v9533 = vpack.c.b16 %v8216, %v8213
  %v9534 = vpack.c.b16 %v8220, %v8217
  %v9535 = vpack.c.b16 %v8221, %v8218
  %v9536 = vpack.c.b16 %v8222, %v8219
  %v9537 = vpack.c.b16 %v8226, %v8223
  %v9538 = vpack.c.b16 %v8227, %v8224
  %v9539 = vpack.c.b16 %v8228, %v8225
  %v9540 = vpack.c.b16 %v8232, %v8229
  %v9541 = vpack.c.b16 %v8233, %v8230
  %v9542 = vpack.c.b16 %v8234, %v8231
  %v9543 = vpack.c.b16 %v8238, %v8235
  %v9544 = vpack.c.b16 %v8239, %v8236
  %v9545 = vpack.c.b16 %v8240, %v8237
  %v9546 = vpack.c.b16 %v8244, %v8241
  %v9547 = vpack.c.b16 %v8245, %v8242
  %v9548 = vpack.c.b16 %v8246, %v8243
  %v9549 = vpack.c.b16 %v8250, %v8247
  %v9550 = vpack.c.b16 %v8251, %v8248
  %v9551 = vpack.c.b16 %v8252, %v8249
  %v9552 = vpack.c.b16 %v8256, %v8253
  %v9553 = vpack.c.b16 %v8257, %v8254
  %v9554 = vpack.c.b16 %v8258, %v8255
  %v9555 = vpack.c.b16 %v8262, %v8259
  %v9556 = vpack.c.b16 %v8263, %v8260
  %v9557 = vpack.c.b16 %v8264, %v8261
  %v9558 = vpack.c.b16 %v8268, %v8265
  %v9559 = vpack.c.b16 %v8269, %v8266
  %v9560 = vpack.c.b16 %v8270, %v8267
  %v9561 = vpack.c.b16 %v8274, %v8271
  %v9562 = vpack.c.b16 %v8275, %v8272
  %v9563 = vpack.c.b16 %v8276, %v8273
  %v9564 = vpack.c.b16 %v8280, %v8277
  %v9565 = vpack.c.b16 %v8281, %v8278
  %v9566 = vpack.c.b16 %v8282, %v8279
  %v9567 = vpack.c.b16 %v8286, %v8283
  %v9568 = vpack.c.b16 %v8287, %v8284
  %v9569 = vpack.c.b16 %v8288, %v8285
  %v9570 = vpack.c.b16 %v8292, %v8289
  %v9571 = vpack.c.b16 %v8293, %v8290
  %v9572 = vpack.c.b16 %v8294, %v8291
  %v9573 = vpack.c.b16 %v8298, %v8295
  %v9574 = vpack.c.b16 %v8299, %v8296
  %v9575 = vpack.c.b16 %v8300, %v8297
  %v9576 = vpack.c.b16 %v8304, %v8301
  %v9577 = vpack.c.b16 %v8305, %v8302
  %v9578 = vpack.c.b16 %v8306, %v8303
  %v9579 = vpack.c.b16 %v8310, %v8307
  %v9580 = vpack.c.b16 %v8311, %v8308
  %v9581 = vpack.c.b16 %v8312, %v8309
  %v9582 = vpack.c.b16 %v8316, %v8313
  %v9583 = vpack.c.b16 %v8317, %v8314
  %v9584 = vpack.c.b16 %v8318, %v8315
  %v9585 = vpack.c.b16 %v8322, %v8319
  %v9586 = vpack.c.b16 %v8323, %v8320
  %v9587 = vpack.c.b16 %v8324, %v8321
  %v9588 = vpack.c.b16 %v8328, %v8325
  %v9589 = vpack.c.b16 %v8329, %v8326
  %v9590 = vpack.c.b16 %v8330, %v8327
  %v9591 = vpack.c.b16 %v8334, %v8331
  %v9592 = vpack.c.b16 %v8335, %v8332
  %v9593 = vpack.c.b16 %v8336, %v8333
  %v9594 = vpack.c.b16 %v8340, %v8337
  %v9595 = vpack.c.b16 %v8341, %v8338
  %v9596 = vpack.c.b16 %v8342, %v8339
  %v9597 = vpack.c.b16 %v8346, %v8343
  %v9598 = vpack.c.b16 %v8347, %v8344
  %v9599 = vpack.c.b16 %v8348, %v8345
  %v9600 = vpack.c.b16 %v8352, %v8349
  %v9601 = vpack.c.b16 %v8353, %v8350
  %v9602 = vpack.c.b16 %v8354, %v8351
  %v9603 = vpack.c.b16 %v8358, %v8355
  %v9604 = vpack.c.b16 %v8359, %v8356
  %v9605 = vpack.c.b16 %v8360, %v8357
  %v9606 = vpack.c.b16 %v8364, %v8361
  %v9607 = vpack.c.b16 %v8365, %v8362
  %v9608 = vpack.c.b16 %v8366, %v8363
  %v9609 = vpack.c.b16 %v8370, %v8367
  %v9610 = vpack.c.b16 %v8371, %v8368
  %v9611 = vpack.c.b16 %v8372, %v8369
  %v9612 = vpack.c.b16 %v8376, %v8373
  %v9613 = vpack.c.b16 %v8377, %v8374
  %v9614 = vpack.c.b16 %v8378, %v8375
  %v9615 = vpack.c.b16 %v8382, %v8379
  %v9616 = vpack.c.b16 %v8383, %v8380
  %v9617 = vpack.c.b16 %v8384, %v8381
  %v9618 = vpack.c.b16 %v8388, %v8385
  %v9619 = vpack.c.b16 %v8389, %v8386
  %v9620 = vpack.c.b16 %v8390, %v8387
  %v9621 = vpack.c.b16 %v8394, %v8391
  %v9622 = vpack.c.b16 %v8395, %v8392
  %v9623 = vpack.c.b16 %v8396, %v8393
  %v9624 = vpack.c.b16 %v8400, %v8397
  %v9625 = vpack.c.b16 %v8401, %v8398
  %v9626 = vpack.c.b16 %v8402, %v8399
  %v9627 = vpack.c.b16 %v8406, %v8403
  %v9628 = vpack.c.b16 %v8407, %v8404
  %v9629 = vpack.c.b16 %v8408, %v8405
  %v9630 = vpack.c.b16 %v8412, %v8409
  %v9631 = vpack.c.b16 %v8413, %v8410
  %v9632 = vpack.c.b16 %v8414, %v8411
  %v9633 = vpack.c.b16 %v8418, %v8415
  %v9634 = vpack.c.b16 %v8419, %v8416
  %v9635 = vpack.c.b16 %v8420, %v8417
  %v9636 = vpack.c.b16 %v8424, %v8421
  %v9637 = vpack.c.b16 %v8425, %v8422
  %v9638 = vpack.c.b16 %v8426, %v8423
  %v9639 = vpack.c.b16 %v8430, %v8427
  %v9640 = vpack.c.b16 %v8431, %v8428
  %v9641 = vpack.c.b16 %v8432, %v8429
  %v9642 = vpack.c.b16 %v8436, %v8433
  %v9643 = vpack.c.b16 %v8437, %v8434
  %v9644 = vpack.c.b16 %v8438, %v8435
  %v9645 = vpack.c.b16 %v8442, %v8439
  %v9646 = vpack.c.b16 %v8443, %v8440
  %v9647 = vpack.c.b16 %v8444, %v8441
  %v9648 = vpack.c.b16 %v8448, %v8445
  %v9649 = vpack.c.b16 %v8449, %v8446
  %v9650 = vpack.c.b16 %v8450, %v8447
  %v9651 = vpack.c.b16 %v8454, %v8451
  %v9652 = vpack.c.b16 %v8455, %v8452
  %v9653 = vpack.c.b16 %v8456, %v8453
  %v9654 = vpack.c.b16 %v8460, %v8457
  %v9655 = vpack.c.b16 %v8461, %v8458
  %v9656 = vpack.c.b16 %v8462, %v8459
  %v9657 = vpack.c.b16 %v8466, %v8463
  %v9658 = vpack.c.b16 %v8467, %v8464
  %v9659 = vpack.c.b16 %v8468, %v8465
  %v9660 = vpack.c.b16 %v8472, %v8469
  %v9661 = vpack.c.b16 %v8473, %v8470
  %v9662 = vpack.c.b16 %v8474, %v8471
  %v9663 = vpack.c.b16 %v8478, %v8475
  %v9664 = vpack.c.b16 %v8479, %v8476
  %v9665 = vpack.c.b16 %v8480, %v8477
  %v9666 = vpack.c.b16 %v8484, %v8481
  %v9667 = vpack.c.b16 %v8485, %v8482
  %v9668 = vpack.c.b16 %v8486, %v8483
  %v9669 = vpack.c.b16 %v8490, %v8487
  %v9670 = vpack.c.b16 %v8491, %v8488
  %v9671 = vpack.c.b16 %v8492, %v8489
  %v9672 = vpack.c.b16 %v8496, %v8493
  %v9673 = vpack.c.b16 %v8497, %v8494
  %v9674 = vpack.c.b16 %v8498, %v8495
  %v9675 = vpack.c.b16 %v8502, %v8499
  %v9676 = vpack.c.b16 %v8503, %v8500
  %v9677 = vpack.c.b16 %v8504, %v8501
  %v9678 = vpack.c.b16 %v8508, %v8505
  %v9679 = vpack.c.b16 %v8509, %v8506
  %v9680 = vpack.c.b16 %v8510, %v8507
  %v9681 = vpack.c.b16 %v8514, %v8511
  %v9682 = vpack.c.b16 %v8515, %v8512
  %v9683 = vpack.c.b16 %v8516, %v8513
  %v9684 = vpack.c.b16 %v8520, %v8517
  %v9685 = vpack.c.b16 %v8521, %v8518
  %v9686 = vpack.c.b16 %v8522, %v8519
  %v9687 = vpack.c.b16 %v8526, %v8523
  %v9688 = vpack.c.b16 %v8527, %v8524
  %v9689 = vpack.c.b16 %v8528, %v8525
  %v9690 = vpack.c.b16 %v8532, %v8529
  %v9691 = vpack.c.b16 %v8533, %v8530
  %v9692 = vpack.c.b16 %v8534, %v8531
  %v9693 = vpack.c.b16 %v8538, %v8535
  %v9694 = vpack.c.b16 %v8539, %v8536
  %v9695 = vpack.c.b16 %v8540, %v8537
  %v9696 = vpack.c.b16 %v8544, %v8541
  %v9697 = vpack.c.b16 %v8545, %v8542
  %v9698 = vpack.c.b16 %v8546, %v8543
  %v9699 = vpack.c.b16 %v8550, %v8547
  %v9700 = vpack.c.b16 %v8551, %v8548
  %v9701 = vpack.c.b16 %v8552, %v8549
  %v9702 = vpack.c.b16 %v8556, %v8553
  %v9703 = vpack.c.b16 %v8557, %v8554
  %v9704 = vpack.c.b16 %v8558, %v8555
  %v9705 = vpack.c.b16 %v8562, %v8559
  %v9706 = vpack.c.b16 %v8563, %v8560
  %v9707 = vpack.c.b16 %v8564, %v8561
  %v9708 = vpack.c.b16 %v8568, %v8565
  %v9709 = vpack.c.b16 %v8569, %v8566
  %v9710 = vpack.c.b16 %v8570, %v8567
  %v9711 = vpack.c.b16 %v8574, %v8571
  %v9712 = vpack.c.b16 %v8575, %v8572
  %v9713 = vpack.c.b16 %v8576, %v8573
  %v9714 = vpack.c.b16 %v8580, %v8577
  %v9715 = vpack.c.b16 %v8581, %v8578
  %v9716 = vpack.c.b16 %v8582, %v8579
  %v9717 = vpack.c.b16 %v8586, %v8583
  %v9718 = vpack.c.b16 %v8587, %v8584
  %v9719 = vpack.c.b16 %v8588, %v8585
  %v9720 = vpack.c.b16 %v8592, %v8589
  %v9721 = vpack.c.b16 %v8593, %v8590
  %v9722 = vpack.c.b16 %v8594, %v8591
  %v9723 = vpack.c.b16 %v8598, %v8595
  %v9724 = vpack.c.b16 %v8599, %v8596
  %v9725 = vpack.c.b16 %v8600, %v8597
  %v9726 = vpack.c.b16 %v8604, %v8601
  %v9727 = vpack.c.b16 %v8605, %v8602
  %v9728 = vpack.c.b16 %v8606, %v8603
  %v9729 = vpack.c.b16 %v8610, %v8607
  %v9730 = vpack.c.b16 %v8611, %v8608
  %v9731 = vpack.c.b16 %v8612, %v8609
  %v9732 = vpack.c.b16 %v8616, %v8613
  %v9733 = vpack.c.b16 %v8617, %v8614
  %v9734 = vpack.c.b16 %v8618, %v8615
  %v9735 = vpack.c.b16 %v8622, %v8619
  %v9736 = vpack.c.b16 %v8623, %v8620
  %v9737 = vpack.c.b16 %v8624, %v8621
  %v9738 = vpack.c.b16 %v8628, %v8625
  %v9739 = vpack.c.b16 %v8629, %v8626
  %v9740 = vpack.c.b16 %v8630, %v8627
  %v9741 = vpack.c.b16 %v8634, %v8631
  %v9742 = vpack.c.b16 %v8635, %v8632
  %v9743 = vpack.c.b16 %v8636, %v8633
  %v9744 = vpack.c.b16 %v8640, %v8637
  %v9745 = vpack.c.b16 %v8641, %v8638
  %v9746 = vpack.c.b16 %v8642, %v8639
  %v9747 = vpack.c.b16 %v8646, %v8643
  %v9748 = vpack.c.b16 %v8647, %v8644
  %v9749 = vpack.c.b16 %v8648, %v8645
  %v9750 = vpack.c.b16 %v8652, %v8649
  %v9751 = vpack.c.b16 %v8653, %v8650
  %v9752 = vpack.c.b16 %v8654, %v8651
  %v9753 = vpack.c.b16 %v8658, %v8655
  %v9754 = vpack.c.b16 %v8659, %v8656
  %v9755 = vpack.c.b16 %v8660, %v8657
  %v9756 = vpack.c.b16 %v8664, %v8661
  %v9757 = vpack.c.b16 %v8665, %v8662
  %v9758 = vpack.c.b16 %v8666, %v8663
  %v9759 = vpack.c.b16 %v8670, %v8667
  %v9760 = vpack.c.b16 %v8671, %v8668
  %v9761 = vpack.c.b16 %v8672, %v8669
  %v9762 = vpack.c.b16 %v8676, %v8673
  %v9763 = vpack.c.b16 %v8677, %v8674
  %v9764 = vpack.c.b16 %v8678, %v8675
  %v9765 = vpack.c.b16 %v8682, %v8679
  %v9766 = vpack.c.b16 %v8683, %v8680
  %v9767 = vpack.c.b16 %v8684, %v8681
  %v9768 = vpack.c.b16 %v8688, %v8685
  %v9769 = vpack.c.b16 %v8689, %v8686
  %v9770 = vpack.c.b16 %v8690, %v8687
  %v9771 = vpack.c.b16 %v8694, %v8691
  %v9772 = vpack.c.b16 %v8695, %v8692
  %v9773 = vpack.c.b16 %v8696, %v8693
  %v9774 = vpack.c.b16 %v8700, %v8697
  %v9775 = vpack.c.b16 %v8701, %v8698
  %v9776 = vpack.c.b16 %v8702, %v8699
  %v9777 = vpack.c.b16 %v8706, %v8703
  %v9778 = vpack.c.b16 %v8707, %v8704
  %v9779 = vpack.c.b16 %v8708, %v8705
  %v9780 = vpack.c.b16 %v8712, %v8709
  %v9781 = vpack.c.b16 %v8713, %v8710
  %v9782 = vpack.c.b16 %v8714, %v8711
  %v9783 = vpack.c.b16 %v8718, %v8715
  %v9784 = vpack.c.b16 %v8719, %v8716
  %v9785 = vpack.c.b16 %v8720, %v8717
  %v9786 = vpack.c.b16 %v8724, %v8721
  %v9787 = vpack.c.b16 %v8725, %v8722
  %v9788 = vpack.c.b16 %v8726, %v8723
  %v9789 = vpack.c.b16 %v8730, %v8727
  %v9790 = vpack.c.b16 %v8731, %v8728
  %v9791 = vpack.c.b16 %v8732, %v8729
  %v9792 = vpack.c.b16 %v8736, %v8733
  %v9793 = vpack.c.b16 %v8737, %v8734
  %v9794 = vpack.c.b16 %v8738, %v8735
  %v9795 = vpack.c.b16 %v8742, %v8739
  %v9796 = vpack.c.b16 %v8743, %v8740
  %v9797 = vpack.c.b16 %v8744, %v8741
  %v9798 = vpack.c.b16 %v8748, %v8745
  %v9799 = vpack.c.b16 %v8749, %v8746
  %v9800 = vpack.c.b16 %v8750, %v8747
  %v9801 = vpack.c.b16 %v8754, %v8751
  %v9802 = vpack.c.b16 %v8755, %v8752
  %v9803 = vpack.c.b16 %v8756, %v8753
  %v9804 = vpack.c.b16 %v8760, %v8757
  %v9805 = vpack.c.b16 %v8761, %v8758
  %v9806 = vpack.c.b16 %v8762, %v8759
  %v9807 = vpack.c.b16 %v8766, %v8763
  %v9808 = vpack.c.b16 %v8767, %v8764
  %v9809 = vpack.c.b16 %v8768, %v8765
  %v9810 = vpack.c.b16 %v8772, %v8769
  %v9811 = vpack.c.b16 %v8773, %v8770
  %v9812 = vpack.c.b16 %v8774, %v8771
  %v9813 = vpack.c.b16 %v8778, %v8775
  %v9814 = vpack.c.b16 %v8779, %v8776
  %v9815 = vpack.c.b16 %v8780, %v8777
  %v9816 = vpack.c.b16 %v8784, %v8781
  %v9817 = vpack.c.b16 %v8785, %v8782
  %v9818 = vpack.c.b16 %v8786, %v8783
  %v9819 = vpack.c.b16 %v8790, %v8787
  %v9820 = vpack.c.b16 %v8791, %v8788
  %v9821 = vpack.c.b16 %v8792, %v8789
  %v9822 = vpack.c.b16 %v8796, %v8793
  %v9823 = vpack.c.b16 %v8797, %v8794
  %v9824 = vpack.c.b16 %v8798, %v8795
  %v9825 = vpack.c.b16 %v8802, %v8799
  %v9826 = vpack.c.b16 %v8803, %v8800
  %v9827 = vpack.c.b16 %v8804, %v8801
  %v9828 = vpack.c.b16 %v8808, %v8805
  %v9829 = vpack.c.b16 %v8809, %v8806
  %v9830 = vpack.c.b16 %v8810, %v8807
  %v9831 = vpack.c.b16 %v8814, %v8811
  %v9832 = vpack.c.b16 %v8815, %v8812
  %v9833 = vpack.c.b16 %v8816, %v8813
  %v9834 = vpack.c.b16 %v8820, %v8817
  %v9835 = vpack.c.b16 %v8821, %v8818
  %v9836 = vpack.c.b16 %v8822, %v8819
  %v9837 = vpack.c.b16 %v8826, %v8823
  %v9838 = vpack.c.b16 %v8827, %v8824
  %v9839 = vpack.c.b16 %v8828, %v8825
  %v9840 = vpack.c.b16 %v8832, %v8829
  %v9841 = vpack.c.b16 %v8833, %v8830
  %v9842 = vpack.c.b16 %v8834, %v8831
  %v9843 = vpack.c.b16 %v8838, %v8835
  %v9844 = vpack.c.b16 %v8839, %v8836
  %v9845 = vpack.c.b16 %v8840, %v8837
  %v9846 = vpack.c.b16 %v8844, %v8841
  %v9847 = vpack.c.b16 %v8845, %v8842
  %v9848 = vpack.c.b16 %v8846, %v8843
  %v9849 = vpack.c.b16 %v8850, %v8847
  %v9850 = vpack.c.b16 %v8851, %v8848
  %v9851 = vpack.c.b16 %v8852, %v8849
  %v9852 = vpack.c.b16 %v8856, %v8853
  %v9853 = vpack.c.b16 %v8857, %v8854
  %v9854 = vpack.c.b16 %v8858, %v8855
  %v9855 = vpack.c.b16 %v8862, %v8859
  %v9856 = vpack.c.b16 %v8863, %v8860
  %v9857 = vpack.c.b16 %v8864, %v8861
  %v9858 = vpack.c.b16 %v8868, %v8865
  %v9859 = vpack.c.b16 %v8869, %v8866
  %v9860 = vpack.c.b16 %v8870, %v8867
  %v9861 = vpack.c.b16 %v8874, %v8871
  %v9862 = vpack.c.b16 %v8875, %v8872
  %v9863 = vpack.c.b16 %v8876, %v8873
  %v9864 = vpack.c.b16 %v8880, %v8877
  %v9865 = vpack.c.b16 %v8881, %v8878
  %v9866 = vpack.c.b16 %v8882, %v8879
  %v9867 = vpack.c.b16 %v8886, %v8883
  %v9868 = vpack.c.b16 %v8887, %v8884
  %v9869 = vpack.c.b16 %v8888, %v8885
  %v9870 = vpack.c.b16 %v8892, %v8889
  %v9871 = vpack.c.b16 %v8893, %v8890
  %v9872 = vpack.c.b16 %v8894, %v8891
  %v9873 = vpack.c.b16 %v8898, %v8895
  %v9874 = vpack.c.b16 %v8899, %v8896
  %v9875 = vpack.c.b16 %v8900, %v8897
  %v9876 = vpack.c.b16 %v8904, %v8901
  %v9877 = vpack.c.b16 %v8905, %v8902
  %v9878 = vpack.c.b16 %v8906, %v8903
  %v9879 = vpack.c.b16 %v8910, %v8907
  %v9880 = vpack.c.b16 %v8911, %v8908
  %v9881 = vpack.c.b16 %v8912, %v8909
  %v9882 = vpack.c.b16 %v8916, %v8913
  %v9883 = vpack.c.b16 %v8917, %v8914
  %v9884 = vpack.c.b16 %v8918, %v8915
  %v9885 = vpack.c.b16 %v8922, %v8919
  %v9886 = vpack.c.b16 %v8923, %v8920
  %v9887 = vpack.c.b16 %v8924, %v8921
  %v9888 = vpack.c.b16 %v8928, %v8925
  %v9889 = vpack.c.b16 %v8929, %v8926
  %v9890 = vpack.c.b16 %v8930, %v8927
  %v9891 = vpack.c.b16 %v8934, %v8931
  %v9892 = vpack.c.b16 %v8935, %v8932
  %v9893 = vpack.c.b16 %v8936, %v8933
  %v9894 = vpack.c.b16 %v8940, %v8937
  %v9895 = vpack.c.b16 %v8941, %v8938
  %v9896 = vpack.c.b16 %v8942, %v8939
  %v9897 = vpack.c.b16 %v8946, %v8943
  %v9898 = vpack.c.b16 %v8947, %v8944
  %v9899 = vpack.c.b16 %v8948, %v8945
  %v9900 = vpack.c.b16 %v8952, %v8949
  %v9901 = vpack.c.b16 %v8953, %v8950
  %v9902 = vpack.c.b16 %v8954, %v8951
  %v9903 = vpack.c.b16 %v8958, %v8955
  %v9904 = vpack.c.b16 %v8959, %v8956
  %v9905 = vpack.c.b16 %v8960, %v8957
  %v9906 = vpack.c.b16 %v8964, %v8961
  %v9907 = vpack.c.b16 %v8965, %v8962
  %v9908 = vpack.c.b16 %v8966, %v8963
  %v9909 = vpack.c.b16 %v8970, %v8967
  %v9910 = vpack.c.b16 %v8971, %v8968
  %v9911 = vpack.c.b16 %v8972, %v8969
  %v9912 = vpack.c.b16 %v8976, %v8973
  %v9913 = vpack.c.b16 %v8977, %v8974
  %v9914 = vpack.c.b16 %v8978, %v8975
  %v9915 = vpack.c.b16 %v8982, %v8979
  %v9916 = vpack.c.b16 %v8983, %v8980
  %v9917 = vpack.c.b16 %v8984, %v8981
  %v9918 = vpack.c.b16 %v8988, %v8985
  %v9919 = vpack.c.b16 %v8989, %v8986
  %v9920 = vpack.c.b16 %v8990, %v8987
  %v9921 = vpack.c.b16 %v8994, %v8991
  %v9922 = vpack.c.b16 %v8995, %v8992
  %v9923 = vpack.c.b16 %v8996, %v8993
  %v9924 = vpack.c.b16 %v9000, %v8997
  %v9925 = vpack.c.b16 %v9001, %v8998
  %v9926 = vpack.c.b16 %v9002, %v8999
  %v9927 = vpack.c.b16 %v9006, %v9003
  %v9928 = vpack.c.b16 %v9007, %v9004
  %v9929 = vpack.c.b16 %v9008, %v9005
  %v9930 = vpack.c.b16 %v9012, %v9009
  %v9931 = vpack.c.b16 %v9013, %v9010
  %v9932 = vpack.c.b16 %v9014, %v9011
  %v9933 = vpack.c.b16 %v9018, %v9015
  %v9934 = vpack.c.b16 %v9019, %v9016
  %v9935 = vpack.c.b16 %v9020, %v9017
  %v9936 = vpack.c.b16 %v9024, %v9021
  %v9937 = vpack.c.b16 %v9025, %v9022
  %v9938 = vpack.c.b16 %v9026, %v9023
  %v9939 = vpack.c.b16 %v9030, %v9027
  %v9940 = vpack.c.b16 %v9031, %v9028
  %v9941 = vpack.c.b16 %v9032, %v9029
  %v9942 = vpack.c.b16 %v9036, %v9033
  %v9943 = vpack.c.b16 %v9037, %v9034
  %v9944 = vpack.c.b16 %v9038, %v9035
  %v9945 = vpack.c.b16 %v9042, %v9039
  %v9946 = vpack.c.b16 %v9043, %v9040
  %v9947 = vpack.c.b16 %v9044, %v9041
  %v9948 = vpack.c.b16 %v9048, %v9045
  %v9949 = vpack.c.b16 %v9049, %v9046
  %v9950 = vpack.c.b16 %v9050, %v9047
  %v9951 = vpack.c.b16 %v9054, %v9051
  %v9952 = vpack.c.b16 %v9055, %v9052
  %v9953 = vpack.c.b16 %v9056, %v9053
  %v9954 = vpack.c.b16 %v9060, %v9057
  %v9955 = vpack.c.b16 %v9061, %v9058
  %v9956 = vpack.c.b16 %v9062, %v9059
  %v9957 = vpack.c.b16 %v9066, %v9063
  %v9958 = vpack.c.b16 %v9067, %v9064
  %v9959 = vpack.c.b16 %v9068, %v9065
  %v9960 = vpack.c.b16 %v9072, %v9069
  %v9961 = vpack.c.b16 %v9073, %v9070
  %v9962 = vpack.c.b16 %v9074, %v9071
  %v9963 = vpack.c.b16 %v9078, %v9075
  %v9964 = vpack.c.b16 %v9079, %v9076
  %v9965 = vpack.c.b16 %v9080, %v9077
  %v9966 = vpack.c.b16 %v9084, %v9081
  %v9967 = vpack.c.b16 %v9085, %v9082
  %v9968 = vpack.c.b16 %v9086, %v9083
  %v9969 = vpack.c.b16 %v9090, %v9087
  %v9970 = vpack.c.b16 %v9091, %v9088
  %v9971 = vpack.c.b16 %v9092, %v9089
  %v9972 = vpack.c.b16 %v9096, %v9093
  %v9973 = vpack.c.b16 %v9097, %v9094
  %v9974 = vpack.c.b16 %v9098, %v9095
  %v9975 = vpack.c.b16 %v9102, %v9099
  %v9976 = vpack.c.b16 %v9103, %v9100
  %v9977 = vpack.c.b16 %v9104, %v9101
  %v9978 = vpack.c.b16 %v9108, %v9105
  %v9979 = vpack.c.b16 %v9109, %v9106
  %v9980 = vpack.c.b16 %v9110, %v9107
  %v9981 = vpack.c.b16 %v9114, %v9111
  %v9982 = vpack.c.b16 %v9115, %v9112
  %v9983 = vpack.c.b16 %v9116, %v9113
  %v9984 = vpack.c.b16 %v9120, %v9117
  %v9985 = vpack.c.b16 %v9121, %v9118
  %v9986 = vpack.c.b16 %v9122, %v9119
  %v9987 = vpack.c.b16 %v9126, %v9123
  %v9988 = vpack.c.b16 %v9127, %v9124
  %v9989 = vpack.c.b16 %v9128, %v9125
  %v9990 = vpack.c.b16 %v9132, %v9129
  %v9991 = vpack.c.b16 %v9133, %v9130
  %v9992 = vpack.c.b16 %v9134, %v9131
  %v9993 = vpack.c.b16 %v9138, %v9135
  %v9994 = vpack.c.b16 %v9139, %v9136
  %v9995 = vpack.c.b16 %v9140, %v9137
  %v9996 = vpack.c.b16 %v9144, %v9141
  %v9997 = vpack.c.b16 %v9145, %v9142
  %v9998 = vpack.c.b16 %v9146, %v9143
  %v9999 = vpack.c.b16 %v9150, %v9147
  %v10000 = vpack.c.b16 %v9151, %v9148
  %v10001 = vpack.c.b16 %v9152, %v9149
  %v10002 = vpack.c.b16 %v9156, %v9153
  %v10003 = vpack.c.b16 %v9157, %v9154
  %v10004 = vpack.c.b16 %v9158, %v9155
  %v10005 = vpack.c.b16 %v9162, %v9159
  %v10006 = vpack.c.b16 %v9163, %v9160
  %v10007 = vpack.c.b16 %v9164, %v9161
  %v10008 = vpack.c.b16 %v9168, %v9165
  %v10009 = vpack.c.b16 %v9169, %v9166
  %v10010 = vpack.c.b16 %v9170, %v9167
  %v10011 = vpack.c.b16 %v9174, %v9171
  %v10012 = vpack.c.b16 %v9175, %v9172
  %v10013 = vpack.c.b16 %v9176, %v9173
  %v10014 = vpack.c.b16 %v9180, %v9177
  %v10015 = vpack.c.b16 %v9181, %v9178
  %v10016 = vpack.c.b16 %v9182, %v9179
  %v10017 = vpack.c.b16 %v9186, %v9183
  %v10018 = vpack.c.b16 %v9187, %v9184
  %v10019 = vpack.c.b16 %v9188, %v9185
  %v10020 = vpack.c.b16 %v9192, %v9189
  %v10021 = vpack.c.b16 %v9193, %v9190
  %v10022 = vpack.c.b16 %v9194, %v9191
  %v10023 = vpack.c.b16 %v9198, %v9195
  %v10024 = vpack.c.b16 %v9199, %v9196
  %v10025 = vpack.c.b16 %v9200, %v9197
  %v10026 = vpack.c.b16 %v9204, %v9201
  %v10027 = vpack.c.b16 %v9205, %v9202
  %v10028 = vpack.c.b16 %v9206, %v9203
  %v10029 = vpack.c.b16 %v9210, %v9207
  %v10030 = vpack.c.b16 %v9211, %v9208
  %v10031 = vpack.c.b16 %v9212, %v9209
  %v10032 = vpack.c.b16 %v9216, %v9213
  %v10033 = vpack.c.b16 %v9217, %v9214
  %v10034 = vpack.c.b16 %v9218, %v9215
  %v10035 = vpack.c.b16 %v9222, %v9219
  %v10036 = vpack.c.b16 %v9223, %v9220
  %v10037 = vpack.c.b16 %v9224, %v9221
  %v10038 = vpack.c.b16 %v9228, %v9225
  %v10039 = vpack.c.b16 %v9229, %v9226
  %v10040 = vpack.c.b16 %v9230, %v9227
  %v10041 = vpack.c.b16 %v9234, %v9231
  %v10042 = vpack.c.b16 %v9235, %v9232
  %v10043 = vpack.c.b16 %v9236, %v9233
  %v10044 = vpack.c.b16 %v9240, %v9237
  %v10045 = vpack.c.b16 %v9241, %v9238
  %v10046 = vpack.c.b16 %v9242, %v9239
  %v10047 = vpack.c.b16 %v9243, %v9243
  %v10048 = vpack.c.b16 %v9244, %v9244
  %v10049 = vpack.c.b16 %v9245, %v9245
  %vm10851 = vcmask 416768
  %v10853 = vsel %vm10851, %v5492, 0
  %vm10855 = vcmask 1041408
  %v10856 = vsel %vm3994, 4294967295, 65535
  %v10857 = vsel %vm10855, %v10856, 0
  %v10859 = vand.u32 %v10047, %v10857
  %v10862 = vand.u32 %v10048, %v10857
  %v10865 = vand.u32 %v10049, %v10857
  %10867 = vmatpush.bf16.msra.mxu0 %v9267
  %10868 = vmatpush.bf16.msra.mxu0 %v9264
  %10869 = vmatpush.bf16.msra.mxu0 %v9261
  %10870 = vmatpush.bf16.msra.mxu0 %v9258
  %10871 = vmatpush.bf16.msra.mxu0 %v9255
  %10872 = vmatpush.bf16.msra.mxu0 %v9252
  %10873 = vmatpush.bf16.msra.mxu0 %v9249
  %10874 = vmatpush.bf16.msra.mxu0 %v9246
  %10875 = vmatmul.bf16.gmra.mxu0 %v5459
  %v10876 = vpop.f32.mrf.mxu0
  %v10877 = vadd.f32 %v6565, %v10876
  %v10878 = vpop.f32.mrf.mxu0
  %10879 = vdwg.mxu0
  %10880 = vmatpush.bf16.msra.mxu0 %v9291
  %10881 = vmatpush.bf16.msra.mxu0 %v9288
  %10882 = vmatpush.bf16.msra.mxu0 %v9285
  %10883 = vmatpush.bf16.msra.mxu0 %v9282
  %10884 = vmatpush.bf16.msra.mxu0 %v9279
  %10885 = vmatpush.bf16.msra.mxu0 %v9276
  %10886 = vmatpush.bf16.msra.mxu0 %v9273
  %10887 = vmatpush.bf16.msra.mxu0 %v9270
  %10888 = vmatmul.bf16.gmra.mxu0 %v5460
  %v10889 = vpop.f32.mrf.mxu0
  %v10890 = vadd.f32 %v10877, %v10889
  %v10891 = vpop.f32.mrf.mxu0
  %10892 = vdwg.mxu0
  %10893 = vmatpush.bf16.msra.mxu0 %v9315
  %10894 = vmatpush.bf16.msra.mxu0 %v9312
  %10895 = vmatpush.bf16.msra.mxu0 %v9309
  %10896 = vmatpush.bf16.msra.mxu0 %v9306
  %10897 = vmatpush.bf16.msra.mxu0 %v9303
  %10898 = vmatpush.bf16.msra.mxu0 %v9300
  %10899 = vmatpush.bf16.msra.mxu0 %v9297
  %10900 = vmatpush.bf16.msra.mxu0 %v9294
  %10901 = vmatmul.bf16.gmra.mxu0 %v5461
  %v10902 = vpop.f32.mrf.mxu0
  %v10903 = vadd.f32 %v10890, %v10902
  %v10904 = vpop.f32.mrf.mxu0
  %10905 = vdwg.mxu0
  %10906 = vmatpush.bf16.msra.mxu0 %v9339
  %10907 = vmatpush.bf16.msra.mxu0 %v9336
  %10908 = vmatpush.bf16.msra.mxu0 %v9333
  %10909 = vmatpush.bf16.msra.mxu0 %v9330
  %10910 = vmatpush.bf16.msra.mxu0 %v9327
  %10911 = vmatpush.bf16.msra.mxu0 %v9324
  %10912 = vmatpush.bf16.msra.mxu0 %v9321
  %10913 = vmatpush.bf16.msra.mxu0 %v9318
  %10914 = vmatmul.bf16.gmra.mxu0 %v5462
  %v10915 = vpop.f32.mrf.mxu0
  %v10916 = vadd.f32 %v10903, %v10915
  %v10917 = vpop.f32.mrf.mxu0
  %10918 = vdwg.mxu0
  %10919 = vmatpush.bf16.msra.mxu0 %v9363
  %10920 = vmatpush.bf16.msra.mxu0 %v9360
  %10921 = vmatpush.bf16.msra.mxu0 %v9357
  %10922 = vmatpush.bf16.msra.mxu0 %v9354
  %10923 = vmatpush.bf16.msra.mxu0 %v9351
  %10924 = vmatpush.bf16.msra.mxu0 %v9348
  %10925 = vmatpush.bf16.msra.mxu0 %v9345
  %10926 = vmatpush.bf16.msra.mxu0 %v9342
  %10927 = vmatmul.bf16.gmra.mxu0 %v5463
  %v10928 = vpop.f32.mrf.mxu0
  %v10929 = vadd.f32 %v10916, %v10928
  %v10930 = vpop.f32.mrf.mxu0
  %10931 = vdwg.mxu0
  %10932 = vmatpush.bf16.msra.mxu0 %v9387
  %10933 = vmatpush.bf16.msra.mxu0 %v9384
  %10934 = vmatpush.bf16.msra.mxu0 %v9381
  %10935 = vmatpush.bf16.msra.mxu0 %v9378
  %10936 = vmatpush.bf16.msra.mxu0 %v9375
  %10937 = vmatpush.bf16.msra.mxu0 %v9372
  %10938 = vmatpush.bf16.msra.mxu0 %v9369
  %10939 = vmatpush.bf16.msra.mxu0 %v9366
  %10940 = vmatmul.bf16.gmra.mxu0 %v5464
  %v10941 = vpop.f32.mrf.mxu0
  %v10942 = vadd.f32 %v10929, %v10941
  %v10943 = vpop.f32.mrf.mxu0
  %10944 = vdwg.mxu0
  %10945 = vmatpush.bf16.msra.mxu0 %v9411
  %10946 = vmatpush.bf16.msra.mxu0 %v9408
  %10947 = vmatpush.bf16.msra.mxu0 %v9405
  %10948 = vmatpush.bf16.msra.mxu0 %v9402
  %10949 = vmatpush.bf16.msra.mxu0 %v9399
  %10950 = vmatpush.bf16.msra.mxu0 %v9396
  %10951 = vmatpush.bf16.msra.mxu0 %v9393
  %10952 = vmatpush.bf16.msra.mxu0 %v9390
  %10953 = vmatmul.bf16.gmra.mxu0 %v5465
  %v10954 = vpop.f32.mrf.mxu0
  %v10955 = vadd.f32 %v10942, %v10954
  %v10956 = vpop.f32.mrf.mxu0
  %10957 = vdwg.mxu0
  %10958 = vmatpush.bf16.msra.mxu0 %v9435
  %10959 = vmatpush.bf16.msra.mxu0 %v9432
  %10960 = vmatpush.bf16.msra.mxu0 %v9429
  %10961 = vmatpush.bf16.msra.mxu0 %v9426
  %10962 = vmatpush.bf16.msra.mxu0 %v9423
  %10963 = vmatpush.bf16.msra.mxu0 %v9420
  %10964 = vmatpush.bf16.msra.mxu0 %v9417
  %10965 = vmatpush.bf16.msra.mxu0 %v9414
  %10966 = vmatmul.bf16.gmra.mxu0 %v5466
  %v10967 = vpop.f32.mrf.mxu0
  %v10968 = vadd.f32 %v10955, %v10967
  %v10969 = vpop.f32.mrf.mxu0
  %10970 = vdwg.mxu0
  %10971 = vmatpush.bf16.msra.mxu0 %v9459
  %10972 = vmatpush.bf16.msra.mxu0 %v9456
  %10973 = vmatpush.bf16.msra.mxu0 %v9453
  %10974 = vmatpush.bf16.msra.mxu0 %v9450
  %10975 = vmatpush.bf16.msra.mxu0 %v9447
  %10976 = vmatpush.bf16.msra.mxu0 %v9444
  %10977 = vmatpush.bf16.msra.mxu0 %v9441
  %10978 = vmatpush.bf16.msra.mxu0 %v9438
  %10979 = vmatmul.bf16.gmra.mxu0 %v5467
  %v10980 = vpop.f32.mrf.mxu0
  %v10981 = vadd.f32 %v10968, %v10980
  %v10982 = vpop.f32.mrf.mxu0
  %10983 = vdwg.mxu0
  %10984 = vmatpush.bf16.msra.mxu0 %v9483
  %10985 = vmatpush.bf16.msra.mxu0 %v9480
  %10986 = vmatpush.bf16.msra.mxu0 %v9477
  %10987 = vmatpush.bf16.msra.mxu0 %v9474
  %10988 = vmatpush.bf16.msra.mxu0 %v9471
  %10989 = vmatpush.bf16.msra.mxu0 %v9468
  %10990 = vmatpush.bf16.msra.mxu0 %v9465
  %10991 = vmatpush.bf16.msra.mxu0 %v9462
  %10992 = vmatmul.bf16.gmra.mxu0 %v5468
  %v10993 = vpop.f32.mrf.mxu0
  %v10994 = vadd.f32 %v10981, %v10993
  %v10995 = vpop.f32.mrf.mxu0
  %10996 = vdwg.mxu0
  %10997 = vmatpush.bf16.msra.mxu0 %v9507
  %10998 = vmatpush.bf16.msra.mxu0 %v9504
  %10999 = vmatpush.bf16.msra.mxu0 %v9501
  %11000 = vmatpush.bf16.msra.mxu0 %v9498
  %11001 = vmatpush.bf16.msra.mxu0 %v9495
  %11002 = vmatpush.bf16.msra.mxu0 %v9492
  %11003 = vmatpush.bf16.msra.mxu0 %v9489
  %11004 = vmatpush.bf16.msra.mxu0 %v9486
  %11005 = vmatmul.bf16.gmra.mxu0 %v5469
  %v11006 = vpop.f32.mrf.mxu0
  %v11007 = vadd.f32 %v10994, %v11006
  %v11008 = vpop.f32.mrf.mxu0
  %11009 = vdwg.mxu0
  %11010 = vmatpush.bf16.msra.mxu0 %v9531
  %11011 = vmatpush.bf16.msra.mxu0 %v9528
  %11012 = vmatpush.bf16.msra.mxu0 %v9525
  %11013 = vmatpush.bf16.msra.mxu0 %v9522
  %11014 = vmatpush.bf16.msra.mxu0 %v9519
  %11015 = vmatpush.bf16.msra.mxu0 %v9516
  %11016 = vmatpush.bf16.msra.mxu0 %v9513
  %11017 = vmatpush.bf16.msra.mxu0 %v9510
  %11018 = vmatmul.bf16.gmra.mxu0 %v5470
  %v11019 = vpop.f32.mrf.mxu0
  %v11020 = vadd.f32 %v11007, %v11019
  %v11021 = vpop.f32.mrf.mxu0
  %11022 = vdwg.mxu0
  %11023 = vmatpush.bf16.msra.mxu0 %v9555
  %11024 = vmatpush.bf16.msra.mxu0 %v9552
  %11025 = vmatpush.bf16.msra.mxu0 %v9549
  %11026 = vmatpush.bf16.msra.mxu0 %v9546
  %11027 = vmatpush.bf16.msra.mxu0 %v9543
  %11028 = vmatpush.bf16.msra.mxu0 %v9540
  %11029 = vmatpush.bf16.msra.mxu0 %v9537
  %11030 = vmatpush.bf16.msra.mxu0 %v9534
  %11031 = vmatmul.bf16.gmra.mxu0 %v5471
  %v11032 = vpop.f32.mrf.mxu0
  %v11033 = vadd.f32 %v11020, %v11032
  %v11034 = vpop.f32.mrf.mxu0
  %11035 = vdwg.mxu0
  %11036 = vmatpush.bf16.msra.mxu0 %v9579
  %11037 = vmatpush.bf16.msra.mxu0 %v9576
  %11038 = vmatpush.bf16.msra.mxu0 %v9573
  %11039 = vmatpush.bf16.msra.mxu0 %v9570
  %11040 = vmatpush.bf16.msra.mxu0 %v9567
  %11041 = vmatpush.bf16.msra.mxu0 %v9564
  %11042 = vmatpush.bf16.msra.mxu0 %v9561
  %11043 = vmatpush.bf16.msra.mxu0 %v9558
  %11044 = vmatmul.bf16.gmra.mxu0 %v5472
  %v11045 = vpop.f32.mrf.mxu0
  %v11046 = vadd.f32 %v11033, %v11045
  %v11047 = vpop.f32.mrf.mxu0
  %11048 = vdwg.mxu0
  %11049 = vmatpush.bf16.msra.mxu0 %v9603
  %11050 = vmatpush.bf16.msra.mxu0 %v9600
  %11051 = vmatpush.bf16.msra.mxu0 %v9597
  %11052 = vmatpush.bf16.msra.mxu0 %v9594
  %11053 = vmatpush.bf16.msra.mxu0 %v9591
  %11054 = vmatpush.bf16.msra.mxu0 %v9588
  %11055 = vmatpush.bf16.msra.mxu0 %v9585
  %11056 = vmatpush.bf16.msra.mxu0 %v9582
  %11057 = vmatmul.bf16.gmra.mxu0 %v5473
  %v11058 = vpop.f32.mrf.mxu0
  %v11059 = vadd.f32 %v11046, %v11058
  %v11060 = vpop.f32.mrf.mxu0
  %11061 = vdwg.mxu0
  %11062 = vmatpush.bf16.msra.mxu0 %v9627
  %11063 = vmatpush.bf16.msra.mxu0 %v9624
  %11064 = vmatpush.bf16.msra.mxu0 %v9621
  %11065 = vmatpush.bf16.msra.mxu0 %v9618
  %11066 = vmatpush.bf16.msra.mxu0 %v9615
  %11067 = vmatpush.bf16.msra.mxu0 %v9612
  %11068 = vmatpush.bf16.msra.mxu0 %v9609
  %11069 = vmatpush.bf16.msra.mxu0 %v9606
  %11070 = vmatmul.bf16.gmra.mxu0 %v5474
  %v11071 = vpop.f32.mrf.mxu0
  %v11072 = vadd.f32 %v11059, %v11071
  %v11073 = vpop.f32.mrf.mxu0
  %11074 = vdwg.mxu0
  %11075 = vmatpush.bf16.msra.mxu0 %v9651
  %11076 = vmatpush.bf16.msra.mxu0 %v9648
  %11077 = vmatpush.bf16.msra.mxu0 %v9645
  %11078 = vmatpush.bf16.msra.mxu0 %v9642
  %11079 = vmatpush.bf16.msra.mxu0 %v9639
  %11080 = vmatpush.bf16.msra.mxu0 %v9636
  %11081 = vmatpush.bf16.msra.mxu0 %v9633
  %11082 = vmatpush.bf16.msra.mxu0 %v9630
  %11083 = vmatmul.bf16.gmra.mxu0 %v5475
  %v11084 = vpop.f32.mrf.mxu0
  %v11085 = vadd.f32 %v11072, %v11084
  %v11086 = vpop.f32.mrf.mxu0
  %11087 = vdwg.mxu0
  %11088 = vmatpush.bf16.msra.mxu0 %v9675
  %11089 = vmatpush.bf16.msra.mxu0 %v9672
  %11090 = vmatpush.bf16.msra.mxu0 %v9669
  %11091 = vmatpush.bf16.msra.mxu0 %v9666
  %11092 = vmatpush.bf16.msra.mxu0 %v9663
  %11093 = vmatpush.bf16.msra.mxu0 %v9660
  %11094 = vmatpush.bf16.msra.mxu0 %v9657
  %11095 = vmatpush.bf16.msra.mxu0 %v9654
  %11096 = vmatmul.bf16.gmra.mxu0 %v5476
  %v11097 = vpop.f32.mrf.mxu0
  %v11098 = vadd.f32 %v11085, %v11097
  %v11099 = vpop.f32.mrf.mxu0
  %11100 = vdwg.mxu0
  %11101 = vmatpush.bf16.msra.mxu0 %v9699
  %11102 = vmatpush.bf16.msra.mxu0 %v9696
  %11103 = vmatpush.bf16.msra.mxu0 %v9693
  %11104 = vmatpush.bf16.msra.mxu0 %v9690
  %11105 = vmatpush.bf16.msra.mxu0 %v9687
  %11106 = vmatpush.bf16.msra.mxu0 %v9684
  %11107 = vmatpush.bf16.msra.mxu0 %v9681
  %11108 = vmatpush.bf16.msra.mxu0 %v9678
  %11109 = vmatmul.bf16.gmra.mxu0 %v5477
  %v11110 = vpop.f32.mrf.mxu0
  %v11111 = vadd.f32 %v11098, %v11110
  %v11112 = vpop.f32.mrf.mxu0
  %11113 = vdwg.mxu0
  %11114 = vmatpush.bf16.msra.mxu0 %v9723
  %11115 = vmatpush.bf16.msra.mxu0 %v9720
  %11116 = vmatpush.bf16.msra.mxu0 %v9717
  %11117 = vmatpush.bf16.msra.mxu0 %v9714
  %11118 = vmatpush.bf16.msra.mxu0 %v9711
  %11119 = vmatpush.bf16.msra.mxu0 %v9708
  %11120 = vmatpush.bf16.msra.mxu0 %v9705
  %11121 = vmatpush.bf16.msra.mxu0 %v9702
  %11122 = vmatmul.bf16.gmra.mxu0 %v5478
  %v11123 = vpop.f32.mrf.mxu0
  %v11124 = vadd.f32 %v11111, %v11123
  %v11125 = vpop.f32.mrf.mxu0
  %11126 = vdwg.mxu0
  %11127 = vmatpush.bf16.msra.mxu0 %v9747
  %11128 = vmatpush.bf16.msra.mxu0 %v9744
  %11129 = vmatpush.bf16.msra.mxu0 %v9741
  %11130 = vmatpush.bf16.msra.mxu0 %v9738
  %11131 = vmatpush.bf16.msra.mxu0 %v9735
  %11132 = vmatpush.bf16.msra.mxu0 %v9732
  %11133 = vmatpush.bf16.msra.mxu0 %v9729
  %11134 = vmatpush.bf16.msra.mxu0 %v9726
  %11135 = vmatmul.bf16.gmra.mxu0 %v5479
  %v11136 = vpop.f32.mrf.mxu0
  %v11137 = vadd.f32 %v11124, %v11136
  %v11138 = vpop.f32.mrf.mxu0
  %11139 = vdwg.mxu0
  %11140 = vmatpush.bf16.msra.mxu0 %v9771
  %11141 = vmatpush.bf16.msra.mxu0 %v9768
  %11142 = vmatpush.bf16.msra.mxu0 %v9765
  %11143 = vmatpush.bf16.msra.mxu0 %v9762
  %11144 = vmatpush.bf16.msra.mxu0 %v9759
  %11145 = vmatpush.bf16.msra.mxu0 %v9756
  %11146 = vmatpush.bf16.msra.mxu0 %v9753
  %11147 = vmatpush.bf16.msra.mxu0 %v9750
  %11148 = vmatmul.bf16.gmra.mxu0 %v5480
  %v11149 = vpop.f32.mrf.mxu0
  %v11150 = vadd.f32 %v11137, %v11149
  %v11151 = vpop.f32.mrf.mxu0
  %11152 = vdwg.mxu0
  %11153 = vmatpush.bf16.msra.mxu0 %v9795
  %11154 = vmatpush.bf16.msra.mxu0 %v9792
  %11155 = vmatpush.bf16.msra.mxu0 %v9789
  %11156 = vmatpush.bf16.msra.mxu0 %v9786
  %11157 = vmatpush.bf16.msra.mxu0 %v9783
  %11158 = vmatpush.bf16.msra.mxu0 %v9780
  %11159 = vmatpush.bf16.msra.mxu0 %v9777
  %11160 = vmatpush.bf16.msra.mxu0 %v9774
  %11161 = vmatmul.bf16.gmra.mxu0 %v5481
  %v11162 = vpop.f32.mrf.mxu0
  %v11163 = vadd.f32 %v11150, %v11162
  %v11164 = vpop.f32.mrf.mxu0
  %11165 = vdwg.mxu0
  %11166 = vmatpush.bf16.msra.mxu0 %v9819
  %11167 = vmatpush.bf16.msra.mxu0 %v9816
  %11168 = vmatpush.bf16.msra.mxu0 %v9813
  %11169 = vmatpush.bf16.msra.mxu0 %v9810
  %11170 = vmatpush.bf16.msra.mxu0 %v9807
  %11171 = vmatpush.bf16.msra.mxu0 %v9804
  %11172 = vmatpush.bf16.msra.mxu0 %v9801
  %11173 = vmatpush.bf16.msra.mxu0 %v9798
  %11174 = vmatmul.bf16.gmra.mxu0 %v5482
  %v11175 = vpop.f32.mrf.mxu0
  %v11176 = vadd.f32 %v11163, %v11175
  %v11177 = vpop.f32.mrf.mxu0
  %11178 = vdwg.mxu0
  %11179 = vmatpush.bf16.msra.mxu0 %v9843
  %11180 = vmatpush.bf16.msra.mxu0 %v9840
  %11181 = vmatpush.bf16.msra.mxu0 %v9837
  %11182 = vmatpush.bf16.msra.mxu0 %v9834
  %11183 = vmatpush.bf16.msra.mxu0 %v9831
  %11184 = vmatpush.bf16.msra.mxu0 %v9828
  %11185 = vmatpush.bf16.msra.mxu0 %v9825
  %11186 = vmatpush.bf16.msra.mxu0 %v9822
  %11187 = vmatmul.bf16.gmra.mxu0 %v5483
  %v11188 = vpop.f32.mrf.mxu0
  %v11189 = vadd.f32 %v11176, %v11188
  %v11190 = vpop.f32.mrf.mxu0
  %11191 = vdwg.mxu0
  %11192 = vmatpush.bf16.msra.mxu0 %v9867
  %11193 = vmatpush.bf16.msra.mxu0 %v9864
  %11194 = vmatpush.bf16.msra.mxu0 %v9861
  %11195 = vmatpush.bf16.msra.mxu0 %v9858
  %11196 = vmatpush.bf16.msra.mxu0 %v9855
  %11197 = vmatpush.bf16.msra.mxu0 %v9852
  %11198 = vmatpush.bf16.msra.mxu0 %v9849
  %11199 = vmatpush.bf16.msra.mxu0 %v9846
  %11200 = vmatmul.bf16.gmra.mxu0 %v5484
  %v11201 = vpop.f32.mrf.mxu0
  %v11202 = vadd.f32 %v11189, %v11201
  %v11203 = vpop.f32.mrf.mxu0
  %11204 = vdwg.mxu0
  %11205 = vmatpush.bf16.msra.mxu0 %v9891
  %11206 = vmatpush.bf16.msra.mxu0 %v9888
  %11207 = vmatpush.bf16.msra.mxu0 %v9885
  %11208 = vmatpush.bf16.msra.mxu0 %v9882
  %11209 = vmatpush.bf16.msra.mxu0 %v9879
  %11210 = vmatpush.bf16.msra.mxu0 %v9876
  %11211 = vmatpush.bf16.msra.mxu0 %v9873
  %11212 = vmatpush.bf16.msra.mxu0 %v9870
  %11213 = vmatmul.bf16.gmra.mxu0 %v5485
  %v11214 = vpop.f32.mrf.mxu0
  %v11215 = vadd.f32 %v11202, %v11214
  %v11216 = vpop.f32.mrf.mxu0
  %11217 = vdwg.mxu0
  %11218 = vmatpush.bf16.msra.mxu0 %v9915
  %11219 = vmatpush.bf16.msra.mxu0 %v9912
  %11220 = vmatpush.bf16.msra.mxu0 %v9909
  %11221 = vmatpush.bf16.msra.mxu0 %v9906
  %11222 = vmatpush.bf16.msra.mxu0 %v9903
  %11223 = vmatpush.bf16.msra.mxu0 %v9900
  %11224 = vmatpush.bf16.msra.mxu0 %v9897
  %11225 = vmatpush.bf16.msra.mxu0 %v9894
  %11226 = vmatmul.bf16.gmra.mxu0 %v5486
  %v11227 = vpop.f32.mrf.mxu0
  %v11228 = vadd.f32 %v11215, %v11227
  %v11229 = vpop.f32.mrf.mxu0
  %11230 = vdwg.mxu0
  %11231 = vmatpush.bf16.msra.mxu0 %v9939
  %11232 = vmatpush.bf16.msra.mxu0 %v9936
  %11233 = vmatpush.bf16.msra.mxu0 %v9933
  %11234 = vmatpush.bf16.msra.mxu0 %v9930
  %11235 = vmatpush.bf16.msra.mxu0 %v9927
  %11236 = vmatpush.bf16.msra.mxu0 %v9924
  %11237 = vmatpush.bf16.msra.mxu0 %v9921
  %11238 = vmatpush.bf16.msra.mxu0 %v9918
  %11239 = vmatmul.bf16.gmra.mxu0 %v5487
  %v11240 = vpop.f32.mrf.mxu0
  %v11241 = vadd.f32 %v11228, %v11240
  %v11242 = vpop.f32.mrf.mxu0
  %11243 = vdwg.mxu0
  %11244 = vmatpush.bf16.msra.mxu0 %v9963
  %11245 = vmatpush.bf16.msra.mxu0 %v9960
  %11246 = vmatpush.bf16.msra.mxu0 %v9957
  %11247 = vmatpush.bf16.msra.mxu0 %v9954
  %11248 = vmatpush.bf16.msra.mxu0 %v9951
  %11249 = vmatpush.bf16.msra.mxu0 %v9948
  %11250 = vmatpush.bf16.msra.mxu0 %v9945
  %11251 = vmatpush.bf16.msra.mxu0 %v9942
  %11252 = vmatmul.bf16.gmra.mxu0 %v5488
  %v11253 = vpop.f32.mrf.mxu0
  %v11254 = vadd.f32 %v11241, %v11253
  %v11255 = vpop.f32.mrf.mxu0
  %11256 = vdwg.mxu0
  %11257 = vmatpush.bf16.msra.mxu0 %v9987
  %11258 = vmatpush.bf16.msra.mxu0 %v9984
  %11259 = vmatpush.bf16.msra.mxu0 %v9981
  %11260 = vmatpush.bf16.msra.mxu0 %v9978
  %11261 = vmatpush.bf16.msra.mxu0 %v9975
  %11262 = vmatpush.bf16.msra.mxu0 %v9972
  %11263 = vmatpush.bf16.msra.mxu0 %v9969
  %11264 = vmatpush.bf16.msra.mxu0 %v9966
  %11265 = vmatmul.bf16.gmra.mxu0 %v5489
  %v11266 = vpop.f32.mrf.mxu0
  %v11267 = vadd.f32 %v11254, %v11266
  %v11268 = vpop.f32.mrf.mxu0
  %11269 = vdwg.mxu0
  %11270 = vmatpush.bf16.msra.mxu0 %v10011
  %11271 = vmatpush.bf16.msra.mxu0 %v10008
  %11272 = vmatpush.bf16.msra.mxu0 %v10005
  %11273 = vmatpush.bf16.msra.mxu0 %v10002
  %11274 = vmatpush.bf16.msra.mxu0 %v9999
  %11275 = vmatpush.bf16.msra.mxu0 %v9996
  %11276 = vmatpush.bf16.msra.mxu0 %v9993
  %11277 = vmatpush.bf16.msra.mxu0 %v9990
  %11278 = vmatmul.bf16.gmra.mxu0 %v5490
  %v11279 = vpop.f32.mrf.mxu0
  %v11280 = vadd.f32 %v11267, %v11279
  %v11281 = vpop.f32.mrf.mxu0
  %11282 = vdwg.mxu0
  %11283 = vmatpush.bf16.msra.mxu0 %v10035
  %11284 = vmatpush.bf16.msra.mxu0 %v10032
  %11285 = vmatpush.bf16.msra.mxu0 %v10029
  %11286 = vmatpush.bf16.msra.mxu0 %v10026
  %11287 = vmatpush.bf16.msra.mxu0 %v10023
  %11288 = vmatpush.bf16.msra.mxu0 %v10020
  %11289 = vmatpush.bf16.msra.mxu0 %v10017
  %11290 = vmatpush.bf16.msra.mxu0 %v10014
  %11291 = vmatmul.bf16.gmra.mxu0 %v5491
  %v11292 = vpop.f32.mrf.mxu0
  %v11293 = vadd.f32 %v11280, %v11292
  %v11294 = vpop.f32.mrf.mxu0
  %11295 = vdwg.mxu0
  %11296 = vmatpush.bf16.msra.mxu0 0
  %11297 = vmatpush.bf16.msra.mxu0 0
  %11298 = vmatpush.bf16.msra.mxu0 0
  %11299 = vmatpush.bf16.msra.mxu0 0
  %11300 = vmatpush.bf16.msra.mxu0 %v10859
  %11301 = vmatpush.bf16.msra.mxu0 %v10044
  %11302 = vmatpush.bf16.msra.mxu0 %v10041
  %11303 = vmatpush.bf16.msra.mxu0 %v10038
  %11304 = vmatmul.bf16.gmra.mxu0 %v10853
  %v11305 = vpop.f32.mrf.mxu0
  %v11306 = vadd.f32 %v11293, %v11305
  %v11307 = vpop.f32.mrf.mxu0
  %11308 = vdwg.mxu0
  %11309 = vmatpush.bf16.msra.mxu0 %v9268
  %11310 = vmatpush.bf16.msra.mxu0 %v9265
  %11311 = vmatpush.bf16.msra.mxu0 %v9262
  %11312 = vmatpush.bf16.msra.mxu0 %v9259
  %11313 = vmatpush.bf16.msra.mxu0 %v9256
  %11314 = vmatpush.bf16.msra.mxu0 %v9253
  %11315 = vmatpush.bf16.msra.mxu0 %v9250
  %11316 = vmatpush.bf16.msra.mxu0 %v9247
  %11317 = vmatmul.bf16.gmra.mxu0 %v5459
  %v11318 = vpop.f32.mrf.mxu0
  %v11319 = vadd.f32 %v6566, %v11318
  %v11320 = vpop.f32.mrf.mxu0
  %11321 = vdwg.mxu0
  %11322 = vmatpush.bf16.msra.mxu0 %v9292
  %11323 = vmatpush.bf16.msra.mxu0 %v9289
  %11324 = vmatpush.bf16.msra.mxu0 %v9286
  %11325 = vmatpush.bf16.msra.mxu0 %v9283
  %11326 = vmatpush.bf16.msra.mxu0 %v9280
  %11327 = vmatpush.bf16.msra.mxu0 %v9277
  %11328 = vmatpush.bf16.msra.mxu0 %v9274
  %11329 = vmatpush.bf16.msra.mxu0 %v9271
  %11330 = vmatmul.bf16.gmra.mxu0 %v5460
  %v11331 = vpop.f32.mrf.mxu0
  %v11332 = vadd.f32 %v11319, %v11331
  %v11333 = vpop.f32.mrf.mxu0
  %11334 = vdwg.mxu0
  %11335 = vmatpush.bf16.msra.mxu0 %v9316
  %11336 = vmatpush.bf16.msra.mxu0 %v9313
  %11337 = vmatpush.bf16.msra.mxu0 %v9310
  %11338 = vmatpush.bf16.msra.mxu0 %v9307
  %11339 = vmatpush.bf16.msra.mxu0 %v9304
  %11340 = vmatpush.bf16.msra.mxu0 %v9301
  %11341 = vmatpush.bf16.msra.mxu0 %v9298
  %11342 = vmatpush.bf16.msra.mxu0 %v9295
  %11343 = vmatmul.bf16.gmra.mxu0 %v5461
  %v11344 = vpop.f32.mrf.mxu0
  %v11345 = vadd.f32 %v11332, %v11344
  %v11346 = vpop.f32.mrf.mxu0
  %11347 = vdwg.mxu0
  %11348 = vmatpush.bf16.msra.mxu0 %v9340
  %11349 = vmatpush.bf16.msra.mxu0 %v9337
  %11350 = vmatpush.bf16.msra.mxu0 %v9334
  %11351 = vmatpush.bf16.msra.mxu0 %v9331
  %11352 = vmatpush.bf16.msra.mxu0 %v9328
  %11353 = vmatpush.bf16.msra.mxu0 %v9325
  %11354 = vmatpush.bf16.msra.mxu0 %v9322
  %11355 = vmatpush.bf16.msra.mxu0 %v9319
  %11356 = vmatmul.bf16.gmra.mxu0 %v5462
  %v11357 = vpop.f32.mrf.mxu0
  %v11358 = vadd.f32 %v11345, %v11357
  %v11359 = vpop.f32.mrf.mxu0
  %11360 = vdwg.mxu0
  %11361 = vmatpush.bf16.msra.mxu0 %v9364
  %11362 = vmatpush.bf16.msra.mxu0 %v9361
  %11363 = vmatpush.bf16.msra.mxu0 %v9358
  %11364 = vmatpush.bf16.msra.mxu0 %v9355
  %11365 = vmatpush.bf16.msra.mxu0 %v9352
  %11366 = vmatpush.bf16.msra.mxu0 %v9349
  %11367 = vmatpush.bf16.msra.mxu0 %v9346
  %11368 = vmatpush.bf16.msra.mxu0 %v9343
  %11369 = vmatmul.bf16.gmra.mxu0 %v5463
  %v11370 = vpop.f32.mrf.mxu0
  %v11371 = vadd.f32 %v11358, %v11370
  %v11372 = vpop.f32.mrf.mxu0
  %11373 = vdwg.mxu0
  %11374 = vmatpush.bf16.msra.mxu0 %v9388
  %11375 = vmatpush.bf16.msra.mxu0 %v9385
  %11376 = vmatpush.bf16.msra.mxu0 %v9382
  %11377 = vmatpush.bf16.msra.mxu0 %v9379
  %11378 = vmatpush.bf16.msra.mxu0 %v9376
  %11379 = vmatpush.bf16.msra.mxu0 %v9373
  %11380 = vmatpush.bf16.msra.mxu0 %v9370
  %11381 = vmatpush.bf16.msra.mxu0 %v9367
  %11382 = vmatmul.bf16.gmra.mxu0 %v5464
  %v11383 = vpop.f32.mrf.mxu0
  %v11384 = vadd.f32 %v11371, %v11383
  %v11385 = vpop.f32.mrf.mxu0
  %11386 = vdwg.mxu0
  %11387 = vmatpush.bf16.msra.mxu0 %v9412
  %11388 = vmatpush.bf16.msra.mxu0 %v9409
  %11389 = vmatpush.bf16.msra.mxu0 %v9406
  %11390 = vmatpush.bf16.msra.mxu0 %v9403
  %11391 = vmatpush.bf16.msra.mxu0 %v9400
  %11392 = vmatpush.bf16.msra.mxu0 %v9397
  %11393 = vmatpush.bf16.msra.mxu0 %v9394
  %11394 = vmatpush.bf16.msra.mxu0 %v9391
  %11395 = vmatmul.bf16.gmra.mxu0 %v5465
  %v11396 = vpop.f32.mrf.mxu0
  %v11397 = vadd.f32 %v11384, %v11396
  %v11398 = vpop.f32.mrf.mxu0
  %11399 = vdwg.mxu0
  %11400 = vmatpush.bf16.msra.mxu0 %v9436
  %11401 = vmatpush.bf16.msra.mxu0 %v9433
  %11402 = vmatpush.bf16.msra.mxu0 %v9430
  %11403 = vmatpush.bf16.msra.mxu0 %v9427
  %11404 = vmatpush.bf16.msra.mxu0 %v9424
  %11405 = vmatpush.bf16.msra.mxu0 %v9421
  %11406 = vmatpush.bf16.msra.mxu0 %v9418
  %11407 = vmatpush.bf16.msra.mxu0 %v9415
  %11408 = vmatmul.bf16.gmra.mxu0 %v5466
  %v11409 = vpop.f32.mrf.mxu0
  %v11410 = vadd.f32 %v11397, %v11409
  %v11411 = vpop.f32.mrf.mxu0
  %11412 = vdwg.mxu0
  %11413 = vmatpush.bf16.msra.mxu0 %v9460
  %11414 = vmatpush.bf16.msra.mxu0 %v9457
  %11415 = vmatpush.bf16.msra.mxu0 %v9454
  %11416 = vmatpush.bf16.msra.mxu0 %v9451
  %11417 = vmatpush.bf16.msra.mxu0 %v9448
  %11418 = vmatpush.bf16.msra.mxu0 %v9445
  %11419 = vmatpush.bf16.msra.mxu0 %v9442
  %11420 = vmatpush.bf16.msra.mxu0 %v9439
  %11421 = vmatmul.bf16.gmra.mxu0 %v5467
  %v11422 = vpop.f32.mrf.mxu0
  %v11423 = vadd.f32 %v11410, %v11422
  %v11424 = vpop.f32.mrf.mxu0
  %11425 = vdwg.mxu0
  %11426 = vmatpush.bf16.msra.mxu0 %v9484
  %11427 = vmatpush.bf16.msra.mxu0 %v9481
  %11428 = vmatpush.bf16.msra.mxu0 %v9478
  %11429 = vmatpush.bf16.msra.mxu0 %v9475
  %11430 = vmatpush.bf16.msra.mxu0 %v9472
  %11431 = vmatpush.bf16.msra.mxu0 %v9469
  %11432 = vmatpush.bf16.msra.mxu0 %v9466
  %11433 = vmatpush.bf16.msra.mxu0 %v9463
  %11434 = vmatmul.bf16.gmra.mxu0 %v5468
  %v11435 = vpop.f32.mrf.mxu0
  %v11436 = vadd.f32 %v11423, %v11435
  %v11437 = vpop.f32.mrf.mxu0
  %11438 = vdwg.mxu0
  %11439 = vmatpush.bf16.msra.mxu0 %v9508
  %11440 = vmatpush.bf16.msra.mxu0 %v9505
  %11441 = vmatpush.bf16.msra.mxu0 %v9502
  %11442 = vmatpush.bf16.msra.mxu0 %v9499
  %11443 = vmatpush.bf16.msra.mxu0 %v9496
  %11444 = vmatpush.bf16.msra.mxu0 %v9493
  %11445 = vmatpush.bf16.msra.mxu0 %v9490
  %11446 = vmatpush.bf16.msra.mxu0 %v9487
  %11447 = vmatmul.bf16.gmra.mxu0 %v5469
  %v11448 = vpop.f32.mrf.mxu0
  %v11449 = vadd.f32 %v11436, %v11448
  %v11450 = vpop.f32.mrf.mxu0
  %11451 = vdwg.mxu0
  %11452 = vmatpush.bf16.msra.mxu0 %v9532
  %11453 = vmatpush.bf16.msra.mxu0 %v9529
  %11454 = vmatpush.bf16.msra.mxu0 %v9526
  %11455 = vmatpush.bf16.msra.mxu0 %v9523
  %11456 = vmatpush.bf16.msra.mxu0 %v9520
  %11457 = vmatpush.bf16.msra.mxu0 %v9517
  %11458 = vmatpush.bf16.msra.mxu0 %v9514
  %11459 = vmatpush.bf16.msra.mxu0 %v9511
  %11460 = vmatmul.bf16.gmra.mxu0 %v5470
  %v11461 = vpop.f32.mrf.mxu0
  %v11462 = vadd.f32 %v11449, %v11461
  %v11463 = vpop.f32.mrf.mxu0
  %11464 = vdwg.mxu0
  %11465 = vmatpush.bf16.msra.mxu0 %v9556
  %11466 = vmatpush.bf16.msra.mxu0 %v9553
  %11467 = vmatpush.bf16.msra.mxu0 %v9550
  %11468 = vmatpush.bf16.msra.mxu0 %v9547
  %11469 = vmatpush.bf16.msra.mxu0 %v9544
  %11470 = vmatpush.bf16.msra.mxu0 %v9541
  %11471 = vmatpush.bf16.msra.mxu0 %v9538
  %11472 = vmatpush.bf16.msra.mxu0 %v9535
  %11473 = vmatmul.bf16.gmra.mxu0 %v5471
  %v11474 = vpop.f32.mrf.mxu0
  %v11475 = vadd.f32 %v11462, %v11474
  %v11476 = vpop.f32.mrf.mxu0
  %11477 = vdwg.mxu0
  %11478 = vmatpush.bf16.msra.mxu0 %v9580
  %11479 = vmatpush.bf16.msra.mxu0 %v9577
  %11480 = vmatpush.bf16.msra.mxu0 %v9574
  %11481 = vmatpush.bf16.msra.mxu0 %v9571
  %11482 = vmatpush.bf16.msra.mxu0 %v9568
  %11483 = vmatpush.bf16.msra.mxu0 %v9565
  %11484 = vmatpush.bf16.msra.mxu0 %v9562
  %11485 = vmatpush.bf16.msra.mxu0 %v9559
  %11486 = vmatmul.bf16.gmra.mxu0 %v5472
  %v11487 = vpop.f32.mrf.mxu0
  %v11488 = vadd.f32 %v11475, %v11487
  %v11489 = vpop.f32.mrf.mxu0
  %11490 = vdwg.mxu0
  %11491 = vmatpush.bf16.msra.mxu0 %v9604
  %11492 = vmatpush.bf16.msra.mxu0 %v9601
  %11493 = vmatpush.bf16.msra.mxu0 %v9598
  %11494 = vmatpush.bf16.msra.mxu0 %v9595
  %11495 = vmatpush.bf16.msra.mxu0 %v9592
  %11496 = vmatpush.bf16.msra.mxu0 %v9589
  %11497 = vmatpush.bf16.msra.mxu0 %v9586
  %11498 = vmatpush.bf16.msra.mxu0 %v9583
  %11499 = vmatmul.bf16.gmra.mxu0 %v5473
  %v11500 = vpop.f32.mrf.mxu0
  %v11501 = vadd.f32 %v11488, %v11500
  %v11502 = vpop.f32.mrf.mxu0
  %11503 = vdwg.mxu0
  %11504 = vmatpush.bf16.msra.mxu0 %v9628
  %11505 = vmatpush.bf16.msra.mxu0 %v9625
  %11506 = vmatpush.bf16.msra.mxu0 %v9622
  %11507 = vmatpush.bf16.msra.mxu0 %v9619
  %11508 = vmatpush.bf16.msra.mxu0 %v9616
  %11509 = vmatpush.bf16.msra.mxu0 %v9613
  %11510 = vmatpush.bf16.msra.mxu0 %v9610
  %11511 = vmatpush.bf16.msra.mxu0 %v9607
  %11512 = vmatmul.bf16.gmra.mxu0 %v5474
  %v11513 = vpop.f32.mrf.mxu0
  %v11514 = vadd.f32 %v11501, %v11513
  %v11515 = vpop.f32.mrf.mxu0
  %11516 = vdwg.mxu0
  %11517 = vmatpush.bf16.msra.mxu0 %v9652
  %11518 = vmatpush.bf16.msra.mxu0 %v9649
  %11519 = vmatpush.bf16.msra.mxu0 %v9646
  %11520 = vmatpush.bf16.msra.mxu0 %v9643
  %11521 = vmatpush.bf16.msra.mxu0 %v9640
  %11522 = vmatpush.bf16.msra.mxu0 %v9637
  %11523 = vmatpush.bf16.msra.mxu0 %v9634
  %11524 = vmatpush.bf16.msra.mxu0 %v9631
  %11525 = vmatmul.bf16.gmra.mxu0 %v5475
  %v11526 = vpop.f32.mrf.mxu0
  %v11527 = vadd.f32 %v11514, %v11526
  %v11528 = vpop.f32.mrf.mxu0
  %11529 = vdwg.mxu0
  %11530 = vmatpush.bf16.msra.mxu0 %v9676
  %11531 = vmatpush.bf16.msra.mxu0 %v9673
  %11532 = vmatpush.bf16.msra.mxu0 %v9670
  %11533 = vmatpush.bf16.msra.mxu0 %v9667
  %11534 = vmatpush.bf16.msra.mxu0 %v9664
  %11535 = vmatpush.bf16.msra.mxu0 %v9661
  %11536 = vmatpush.bf16.msra.mxu0 %v9658
  %11537 = vmatpush.bf16.msra.mxu0 %v9655
  %11538 = vmatmul.bf16.gmra.mxu0 %v5476
  %v11539 = vpop.f32.mrf.mxu0
  %v11540 = vadd.f32 %v11527, %v11539
  %v11541 = vpop.f32.mrf.mxu0
  %11542 = vdwg.mxu0
  %11543 = vmatpush.bf16.msra.mxu0 %v9700
  %11544 = vmatpush.bf16.msra.mxu0 %v9697
  %11545 = vmatpush.bf16.msra.mxu0 %v9694
  %11546 = vmatpush.bf16.msra.mxu0 %v9691
  %11547 = vmatpush.bf16.msra.mxu0 %v9688
  %11548 = vmatpush.bf16.msra.mxu0 %v9685
  %11549 = vmatpush.bf16.msra.mxu0 %v9682
  %11550 = vmatpush.bf16.msra.mxu0 %v9679
  %11551 = vmatmul.bf16.gmra.mxu0 %v5477
  %v11552 = vpop.f32.mrf.mxu0
  %v11553 = vadd.f32 %v11540, %v11552
  %v11554 = vpop.f32.mrf.mxu0
  %11555 = vdwg.mxu0
  %11556 = vmatpush.bf16.msra.mxu0 %v9724
  %11557 = vmatpush.bf16.msra.mxu0 %v9721
  %11558 = vmatpush.bf16.msra.mxu0 %v9718
  %11559 = vmatpush.bf16.msra.mxu0 %v9715
  %11560 = vmatpush.bf16.msra.mxu0 %v9712
  %11561 = vmatpush.bf16.msra.mxu0 %v9709
  %11562 = vmatpush.bf16.msra.mxu0 %v9706
  %11563 = vmatpush.bf16.msra.mxu0 %v9703
  %11564 = vmatmul.bf16.gmra.mxu0 %v5478
  %v11565 = vpop.f32.mrf.mxu0
  %v11566 = vadd.f32 %v11553, %v11565
  %v11567 = vpop.f32.mrf.mxu0
  %11568 = vdwg.mxu0
  %11569 = vmatpush.bf16.msra.mxu0 %v9748
  %11570 = vmatpush.bf16.msra.mxu0 %v9745
  %11571 = vmatpush.bf16.msra.mxu0 %v9742
  %11572 = vmatpush.bf16.msra.mxu0 %v9739
  %11573 = vmatpush.bf16.msra.mxu0 %v9736
  %11574 = vmatpush.bf16.msra.mxu0 %v9733
  %11575 = vmatpush.bf16.msra.mxu0 %v9730
  %11576 = vmatpush.bf16.msra.mxu0 %v9727
  %11577 = vmatmul.bf16.gmra.mxu0 %v5479
  %v11578 = vpop.f32.mrf.mxu0
  %v11579 = vadd.f32 %v11566, %v11578
  %v11580 = vpop.f32.mrf.mxu0
  %11581 = vdwg.mxu0
  %11582 = vmatpush.bf16.msra.mxu0 %v9772
  %11583 = vmatpush.bf16.msra.mxu0 %v9769
  %11584 = vmatpush.bf16.msra.mxu0 %v9766
  %11585 = vmatpush.bf16.msra.mxu0 %v9763
  %11586 = vmatpush.bf16.msra.mxu0 %v9760
  %11587 = vmatpush.bf16.msra.mxu0 %v9757
  %11588 = vmatpush.bf16.msra.mxu0 %v9754
  %11589 = vmatpush.bf16.msra.mxu0 %v9751
  %11590 = vmatmul.bf16.gmra.mxu0 %v5480
  %v11591 = vpop.f32.mrf.mxu0
  %v11592 = vadd.f32 %v11579, %v11591
  %v11593 = vpop.f32.mrf.mxu0
  %11594 = vdwg.mxu0
  %11595 = vmatpush.bf16.msra.mxu0 %v9796
  %11596 = vmatpush.bf16.msra.mxu0 %v9793
  %11597 = vmatpush.bf16.msra.mxu0 %v9790
  %11598 = vmatpush.bf16.msra.mxu0 %v9787
  %11599 = vmatpush.bf16.msra.mxu0 %v9784
  %11600 = vmatpush.bf16.msra.mxu0 %v9781
  %11601 = vmatpush.bf16.msra.mxu0 %v9778
  %11602 = vmatpush.bf16.msra.mxu0 %v9775
  %11603 = vmatmul.bf16.gmra.mxu0 %v5481
  %v11604 = vpop.f32.mrf.mxu0
  %v11605 = vadd.f32 %v11592, %v11604
  %v11606 = vpop.f32.mrf.mxu0
  %11607 = vdwg.mxu0
  %11608 = vmatpush.bf16.msra.mxu0 %v9820
  %11609 = vmatpush.bf16.msra.mxu0 %v9817
  %11610 = vmatpush.bf16.msra.mxu0 %v9814
  %11611 = vmatpush.bf16.msra.mxu0 %v9811
  %11612 = vmatpush.bf16.msra.mxu0 %v9808
  %11613 = vmatpush.bf16.msra.mxu0 %v9805
  %11614 = vmatpush.bf16.msra.mxu0 %v9802
  %11615 = vmatpush.bf16.msra.mxu0 %v9799
  %11616 = vmatmul.bf16.gmra.mxu0 %v5482
  %v11617 = vpop.f32.mrf.mxu0
  %v11618 = vadd.f32 %v11605, %v11617
  %v11619 = vpop.f32.mrf.mxu0
  %11620 = vdwg.mxu0
  %11621 = vmatpush.bf16.msra.mxu0 %v9844
  %11622 = vmatpush.bf16.msra.mxu0 %v9841
  %11623 = vmatpush.bf16.msra.mxu0 %v9838
  %11624 = vmatpush.bf16.msra.mxu0 %v9835
  %11625 = vmatpush.bf16.msra.mxu0 %v9832
  %11626 = vmatpush.bf16.msra.mxu0 %v9829
  %11627 = vmatpush.bf16.msra.mxu0 %v9826
  %11628 = vmatpush.bf16.msra.mxu0 %v9823
  %11629 = vmatmul.bf16.gmra.mxu0 %v5483
  %v11630 = vpop.f32.mrf.mxu0
  %v11631 = vadd.f32 %v11618, %v11630
  %v11632 = vpop.f32.mrf.mxu0
  %11633 = vdwg.mxu0
  %11634 = vmatpush.bf16.msra.mxu0 %v9868
  %11635 = vmatpush.bf16.msra.mxu0 %v9865
  %11636 = vmatpush.bf16.msra.mxu0 %v9862
  %11637 = vmatpush.bf16.msra.mxu0 %v9859
  %11638 = vmatpush.bf16.msra.mxu0 %v9856
  %11639 = vmatpush.bf16.msra.mxu0 %v9853
  %11640 = vmatpush.bf16.msra.mxu0 %v9850
  %11641 = vmatpush.bf16.msra.mxu0 %v9847
  %11642 = vmatmul.bf16.gmra.mxu0 %v5484
  %v11643 = vpop.f32.mrf.mxu0
  %v11644 = vadd.f32 %v11631, %v11643
  %v11645 = vpop.f32.mrf.mxu0
  %11646 = vdwg.mxu0
  %11647 = vmatpush.bf16.msra.mxu0 %v9892
  %11648 = vmatpush.bf16.msra.mxu0 %v9889
  %11649 = vmatpush.bf16.msra.mxu0 %v9886
  %11650 = vmatpush.bf16.msra.mxu0 %v9883
  %11651 = vmatpush.bf16.msra.mxu0 %v9880
  %11652 = vmatpush.bf16.msra.mxu0 %v9877
  %11653 = vmatpush.bf16.msra.mxu0 %v9874
  %11654 = vmatpush.bf16.msra.mxu0 %v9871
  %11655 = vmatmul.bf16.gmra.mxu0 %v5485
  %v11656 = vpop.f32.mrf.mxu0
  %v11657 = vadd.f32 %v11644, %v11656
  %v11658 = vpop.f32.mrf.mxu0
  %11659 = vdwg.mxu0
  %11660 = vmatpush.bf16.msra.mxu0 %v9916
  %11661 = vmatpush.bf16.msra.mxu0 %v9913
  %11662 = vmatpush.bf16.msra.mxu0 %v9910
  %11663 = vmatpush.bf16.msra.mxu0 %v9907
  %11664 = vmatpush.bf16.msra.mxu0 %v9904
  %11665 = vmatpush.bf16.msra.mxu0 %v9901
  %11666 = vmatpush.bf16.msra.mxu0 %v9898
  %11667 = vmatpush.bf16.msra.mxu0 %v9895
  %11668 = vmatmul.bf16.gmra.mxu0 %v5486
  %v11669 = vpop.f32.mrf.mxu0
  %v11670 = vadd.f32 %v11657, %v11669
  %v11671 = vpop.f32.mrf.mxu0
  %11672 = vdwg.mxu0
  %11673 = vmatpush.bf16.msra.mxu0 %v9940
  %11674 = vmatpush.bf16.msra.mxu0 %v9937
  %11675 = vmatpush.bf16.msra.mxu0 %v9934
  %11676 = vmatpush.bf16.msra.mxu0 %v9931
  %11677 = vmatpush.bf16.msra.mxu0 %v9928
  %11678 = vmatpush.bf16.msra.mxu0 %v9925
  %11679 = vmatpush.bf16.msra.mxu0 %v9922
  %11680 = vmatpush.bf16.msra.mxu0 %v9919
  %11681 = vmatmul.bf16.gmra.mxu0 %v5487
  %v11682 = vpop.f32.mrf.mxu0
  %v11683 = vadd.f32 %v11670, %v11682
  %v11684 = vpop.f32.mrf.mxu0
  %11685 = vdwg.mxu0
  %11686 = vmatpush.bf16.msra.mxu0 %v9964
  %11687 = vmatpush.bf16.msra.mxu0 %v9961
  %11688 = vmatpush.bf16.msra.mxu0 %v9958
  %11689 = vmatpush.bf16.msra.mxu0 %v9955
  %11690 = vmatpush.bf16.msra.mxu0 %v9952
  %11691 = vmatpush.bf16.msra.mxu0 %v9949
  %11692 = vmatpush.bf16.msra.mxu0 %v9946
  %11693 = vmatpush.bf16.msra.mxu0 %v9943
  %11694 = vmatmul.bf16.gmra.mxu0 %v5488
  %v11695 = vpop.f32.mrf.mxu0
  %v11696 = vadd.f32 %v11683, %v11695
  %v11697 = vpop.f32.mrf.mxu0
  %11698 = vdwg.mxu0
  %11699 = vmatpush.bf16.msra.mxu0 %v9988
  %11700 = vmatpush.bf16.msra.mxu0 %v9985
  %11701 = vmatpush.bf16.msra.mxu0 %v9982
  %11702 = vmatpush.bf16.msra.mxu0 %v9979
  %11703 = vmatpush.bf16.msra.mxu0 %v9976
  %11704 = vmatpush.bf16.msra.mxu0 %v9973
  %11705 = vmatpush.bf16.msra.mxu0 %v9970
  %11706 = vmatpush.bf16.msra.mxu0 %v9967
  %11707 = vmatmul.bf16.gmra.mxu0 %v5489
  %v11708 = vpop.f32.mrf.mxu0
  %v11709 = vadd.f32 %v11696, %v11708
  %v11710 = vpop.f32.mrf.mxu0
  %11711 = vdwg.mxu0
  %11712 = vmatpush.bf16.msra.mxu0 %v10012
  %11713 = vmatpush.bf16.msra.mxu0 %v10009
  %11714 = vmatpush.bf16.msra.mxu0 %v10006
  %11715 = vmatpush.bf16.msra.mxu0 %v10003
  %11716 = vmatpush.bf16.msra.mxu0 %v10000
  %11717 = vmatpush.bf16.msra.mxu0 %v9997
  %11718 = vmatpush.bf16.msra.mxu0 %v9994
  %11719 = vmatpush.bf16.msra.mxu0 %v9991
  %11720 = vmatmul.bf16.gmra.mxu0 %v5490
  %v11721 = vpop.f32.mrf.mxu0
  %v11722 = vadd.f32 %v11709, %v11721
  %v11723 = vpop.f32.mrf.mxu0
  %11724 = vdwg.mxu0
  %11725 = vmatpush.bf16.msra.mxu0 %v10036
  %11726 = vmatpush.bf16.msra.mxu0 %v10033
  %11727 = vmatpush.bf16.msra.mxu0 %v10030
  %11728 = vmatpush.bf16.msra.mxu0 %v10027
  %11729 = vmatpush.bf16.msra.mxu0 %v10024
  %11730 = vmatpush.bf16.msra.mxu0 %v10021
  %11731 = vmatpush.bf16.msra.mxu0 %v10018
  %11732 = vmatpush.bf16.msra.mxu0 %v10015
  %11733 = vmatmul.bf16.gmra.mxu0 %v5491
  %v11734 = vpop.f32.mrf.mxu0
  %v11735 = vadd.f32 %v11722, %v11734
  %v11736 = vpop.f32.mrf.mxu0
  %11737 = vdwg.mxu0
  %11738 = vmatpush.bf16.msra.mxu0 0
  %11739 = vmatpush.bf16.msra.mxu0 0
  %11740 = vmatpush.bf16.msra.mxu0 0
  %11741 = vmatpush.bf16.msra.mxu0 0
  %11742 = vmatpush.bf16.msra.mxu0 %v10862
  %11743 = vmatpush.bf16.msra.mxu0 %v10045
  %11744 = vmatpush.bf16.msra.mxu0 %v10042
  %11745 = vmatpush.bf16.msra.mxu0 %v10039
  %11746 = vmatmul.bf16.gmra.mxu0 %v10853
  %v11747 = vpop.f32.mrf.mxu0
  %v11748 = vadd.f32 %v11735, %v11747
  %v11749 = vpop.f32.mrf.mxu0
  %11750 = vdwg.mxu0
  %11751 = vmatpush.bf16.msra.mxu0 %v9269
  %11752 = vmatpush.bf16.msra.mxu0 %v9266
  %11753 = vmatpush.bf16.msra.mxu0 %v9263
  %11754 = vmatpush.bf16.msra.mxu0 %v9260
  %11755 = vmatpush.bf16.msra.mxu0 %v9257
  %11756 = vmatpush.bf16.msra.mxu0 %v9254
  %11757 = vmatpush.bf16.msra.mxu0 %v9251
  %11758 = vmatpush.bf16.msra.mxu0 %v9248
  %11759 = vmatmul.bf16.gmra.mxu0 %v5459
  %v11760 = vpop.f32.mrf.mxu0
  %v11761 = vadd.f32 %v6567, %v11760
  %v11762 = vpop.f32.mrf.mxu0
  %11763 = vdwg.mxu0
  %11764 = vmatpush.bf16.msra.mxu0 %v9293
  %11765 = vmatpush.bf16.msra.mxu0 %v9290
  %11766 = vmatpush.bf16.msra.mxu0 %v9287
  %11767 = vmatpush.bf16.msra.mxu0 %v9284
  %11768 = vmatpush.bf16.msra.mxu0 %v9281
  %11769 = vmatpush.bf16.msra.mxu0 %v9278
  %11770 = vmatpush.bf16.msra.mxu0 %v9275
  %11771 = vmatpush.bf16.msra.mxu0 %v9272
  %11772 = vmatmul.bf16.gmra.mxu0 %v5460
  %v11773 = vpop.f32.mrf.mxu0
  %v11774 = vadd.f32 %v11761, %v11773
  %v11775 = vpop.f32.mrf.mxu0
  %11776 = vdwg.mxu0
  %11777 = vmatpush.bf16.msra.mxu0 %v9317
  %11778 = vmatpush.bf16.msra.mxu0 %v9314
  %11779 = vmatpush.bf16.msra.mxu0 %v9311
  %11780 = vmatpush.bf16.msra.mxu0 %v9308
  %11781 = vmatpush.bf16.msra.mxu0 %v9305
  %11782 = vmatpush.bf16.msra.mxu0 %v9302
  %11783 = vmatpush.bf16.msra.mxu0 %v9299
  %11784 = vmatpush.bf16.msra.mxu0 %v9296
  %11785 = vmatmul.bf16.gmra.mxu0 %v5461
  %v11786 = vpop.f32.mrf.mxu0
  %v11787 = vadd.f32 %v11774, %v11786
  %v11788 = vpop.f32.mrf.mxu0
  %11789 = vdwg.mxu0
  %11790 = vmatpush.bf16.msra.mxu0 %v9341
  %11791 = vmatpush.bf16.msra.mxu0 %v9338
  %11792 = vmatpush.bf16.msra.mxu0 %v9335
  %11793 = vmatpush.bf16.msra.mxu0 %v9332
  %11794 = vmatpush.bf16.msra.mxu0 %v9329
  %11795 = vmatpush.bf16.msra.mxu0 %v9326
  %11796 = vmatpush.bf16.msra.mxu0 %v9323
  %11797 = vmatpush.bf16.msra.mxu0 %v9320
  %11798 = vmatmul.bf16.gmra.mxu0 %v5462
  %v11799 = vpop.f32.mrf.mxu0
  %v11800 = vadd.f32 %v11787, %v11799
  %v11801 = vpop.f32.mrf.mxu0
  %11802 = vdwg.mxu0
  %11803 = vmatpush.bf16.msra.mxu0 %v9365
  %11804 = vmatpush.bf16.msra.mxu0 %v9362
  %11805 = vmatpush.bf16.msra.mxu0 %v9359
  %11806 = vmatpush.bf16.msra.mxu0 %v9356
  %11807 = vmatpush.bf16.msra.mxu0 %v9353
  %11808 = vmatpush.bf16.msra.mxu0 %v9350
  %11809 = vmatpush.bf16.msra.mxu0 %v9347
  %11810 = vmatpush.bf16.msra.mxu0 %v9344
  %11811 = vmatmul.bf16.gmra.mxu0 %v5463
  %v11812 = vpop.f32.mrf.mxu0
  %v11813 = vadd.f32 %v11800, %v11812
  %v11814 = vpop.f32.mrf.mxu0
  %11815 = vdwg.mxu0
  %11816 = vmatpush.bf16.msra.mxu0 %v9389
  %11817 = vmatpush.bf16.msra.mxu0 %v9386
  %11818 = vmatpush.bf16.msra.mxu0 %v9383
  %11819 = vmatpush.bf16.msra.mxu0 %v9380
  %11820 = vmatpush.bf16.msra.mxu0 %v9377
  %11821 = vmatpush.bf16.msra.mxu0 %v9374
  %11822 = vmatpush.bf16.msra.mxu0 %v9371
  %11823 = vmatpush.bf16.msra.mxu0 %v9368
  %11824 = vmatmul.bf16.gmra.mxu0 %v5464
  %v11825 = vpop.f32.mrf.mxu0
  %v11826 = vadd.f32 %v11813, %v11825
  %v11827 = vpop.f32.mrf.mxu0
  %11828 = vdwg.mxu0
  %11829 = vmatpush.bf16.msra.mxu0 %v9413
  %11830 = vmatpush.bf16.msra.mxu0 %v9410
  %11831 = vmatpush.bf16.msra.mxu0 %v9407
  %11832 = vmatpush.bf16.msra.mxu0 %v9404
  %11833 = vmatpush.bf16.msra.mxu0 %v9401
  %11834 = vmatpush.bf16.msra.mxu0 %v9398
  %11835 = vmatpush.bf16.msra.mxu0 %v9395
  %11836 = vmatpush.bf16.msra.mxu0 %v9392
  %11837 = vmatmul.bf16.gmra.mxu0 %v5465
  %v11838 = vpop.f32.mrf.mxu0
  %v11839 = vadd.f32 %v11826, %v11838
  %v11840 = vpop.f32.mrf.mxu0
  %11841 = vdwg.mxu0
  %11842 = vmatpush.bf16.msra.mxu0 %v9437
  %11843 = vmatpush.bf16.msra.mxu0 %v9434
  %11844 = vmatpush.bf16.msra.mxu0 %v9431
  %11845 = vmatpush.bf16.msra.mxu0 %v9428
  %11846 = vmatpush.bf16.msra.mxu0 %v9425
  %11847 = vmatpush.bf16.msra.mxu0 %v9422
  %11848 = vmatpush.bf16.msra.mxu0 %v9419
  %11849 = vmatpush.bf16.msra.mxu0 %v9416
  %11850 = vmatmul.bf16.gmra.mxu0 %v5466
  %v11851 = vpop.f32.mrf.mxu0
  %v11852 = vadd.f32 %v11839, %v11851
  %v11853 = vpop.f32.mrf.mxu0
  %11854 = vdwg.mxu0
  %11855 = vmatpush.bf16.msra.mxu0 %v9461
  %11856 = vmatpush.bf16.msra.mxu0 %v9458
  %11857 = vmatpush.bf16.msra.mxu0 %v9455
  %11858 = vmatpush.bf16.msra.mxu0 %v9452
  %11859 = vmatpush.bf16.msra.mxu0 %v9449
  %11860 = vmatpush.bf16.msra.mxu0 %v9446
  %11861 = vmatpush.bf16.msra.mxu0 %v9443
  %11862 = vmatpush.bf16.msra.mxu0 %v9440
  %11863 = vmatmul.bf16.gmra.mxu0 %v5467
  %v11864 = vpop.f32.mrf.mxu0
  %v11865 = vadd.f32 %v11852, %v11864
  %v11866 = vpop.f32.mrf.mxu0
  %11867 = vdwg.mxu0
  %11868 = vmatpush.bf16.msra.mxu0 %v9485
  %11869 = vmatpush.bf16.msra.mxu0 %v9482
  %11870 = vmatpush.bf16.msra.mxu0 %v9479
  %11871 = vmatpush.bf16.msra.mxu0 %v9476
  %11872 = vmatpush.bf16.msra.mxu0 %v9473
  %11873 = vmatpush.bf16.msra.mxu0 %v9470
  %11874 = vmatpush.bf16.msra.mxu0 %v9467
  %11875 = vmatpush.bf16.msra.mxu0 %v9464
  %11876 = vmatmul.bf16.gmra.mxu0 %v5468
  %v11877 = vpop.f32.mrf.mxu0
  %v11878 = vadd.f32 %v11865, %v11877
  %v11879 = vpop.f32.mrf.mxu0
  %11880 = vdwg.mxu0
  %11881 = vmatpush.bf16.msra.mxu0 %v9509
  %11882 = vmatpush.bf16.msra.mxu0 %v9506
  %11883 = vmatpush.bf16.msra.mxu0 %v9503
  %11884 = vmatpush.bf16.msra.mxu0 %v9500
  %11885 = vmatpush.bf16.msra.mxu0 %v9497
  %11886 = vmatpush.bf16.msra.mxu0 %v9494
  %11887 = vmatpush.bf16.msra.mxu0 %v9491
  %11888 = vmatpush.bf16.msra.mxu0 %v9488
  %11889 = vmatmul.bf16.gmra.mxu0 %v5469
  %v11890 = vpop.f32.mrf.mxu0
  %v11891 = vadd.f32 %v11878, %v11890
  %v11892 = vpop.f32.mrf.mxu0
  %11893 = vdwg.mxu0
  %11894 = vmatpush.bf16.msra.mxu0 %v9533
  %11895 = vmatpush.bf16.msra.mxu0 %v9530
  %11896 = vmatpush.bf16.msra.mxu0 %v9527
  %11897 = vmatpush.bf16.msra.mxu0 %v9524
  %11898 = vmatpush.bf16.msra.mxu0 %v9521
  %11899 = vmatpush.bf16.msra.mxu0 %v9518
  %11900 = vmatpush.bf16.msra.mxu0 %v9515
  %11901 = vmatpush.bf16.msra.mxu0 %v9512
  %11902 = vmatmul.bf16.gmra.mxu0 %v5470
  %v11903 = vpop.f32.mrf.mxu0
  %v11904 = vadd.f32 %v11891, %v11903
  %v11905 = vpop.f32.mrf.mxu0
  %11906 = vdwg.mxu0
  %11907 = vmatpush.bf16.msra.mxu0 %v9557
  %11908 = vmatpush.bf16.msra.mxu0 %v9554
  %11909 = vmatpush.bf16.msra.mxu0 %v9551
  %11910 = vmatpush.bf16.msra.mxu0 %v9548
  %11911 = vmatpush.bf16.msra.mxu0 %v9545
  %11912 = vmatpush.bf16.msra.mxu0 %v9542
  %11913 = vmatpush.bf16.msra.mxu0 %v9539
  %11914 = vmatpush.bf16.msra.mxu0 %v9536
  %11915 = vmatmul.bf16.gmra.mxu0 %v5471
  %v11916 = vpop.f32.mrf.mxu0
  %v11917 = vadd.f32 %v11904, %v11916
  %v11918 = vpop.f32.mrf.mxu0
  %11919 = vdwg.mxu0
  %11920 = vmatpush.bf16.msra.mxu0 %v9581
  %11921 = vmatpush.bf16.msra.mxu0 %v9578
  %11922 = vmatpush.bf16.msra.mxu0 %v9575
  %11923 = vmatpush.bf16.msra.mxu0 %v9572
  %11924 = vmatpush.bf16.msra.mxu0 %v9569
  %11925 = vmatpush.bf16.msra.mxu0 %v9566
  %11926 = vmatpush.bf16.msra.mxu0 %v9563
  %11927 = vmatpush.bf16.msra.mxu0 %v9560
  %11928 = vmatmul.bf16.gmra.mxu0 %v5472
  %v11929 = vpop.f32.mrf.mxu0
  %v11930 = vadd.f32 %v11917, %v11929
  %v11931 = vpop.f32.mrf.mxu0
  %11932 = vdwg.mxu0
  %11933 = vmatpush.bf16.msra.mxu0 %v9605
  %11934 = vmatpush.bf16.msra.mxu0 %v9602
  %11935 = vmatpush.bf16.msra.mxu0 %v9599
  %11936 = vmatpush.bf16.msra.mxu0 %v9596
  %11937 = vmatpush.bf16.msra.mxu0 %v9593
  %11938 = vmatpush.bf16.msra.mxu0 %v9590
  %11939 = vmatpush.bf16.msra.mxu0 %v9587
  %11940 = vmatpush.bf16.msra.mxu0 %v9584
  %11941 = vmatmul.bf16.gmra.mxu0 %v5473
  %v11942 = vpop.f32.mrf.mxu0
  %v11943 = vadd.f32 %v11930, %v11942
  %v11944 = vpop.f32.mrf.mxu0
  %11945 = vdwg.mxu0
  %11946 = vmatpush.bf16.msra.mxu0 %v9629
  %11947 = vmatpush.bf16.msra.mxu0 %v9626
  %11948 = vmatpush.bf16.msra.mxu0 %v9623
  %11949 = vmatpush.bf16.msra.mxu0 %v9620
  %11950 = vmatpush.bf16.msra.mxu0 %v9617
  %11951 = vmatpush.bf16.msra.mxu0 %v9614
  %11952 = vmatpush.bf16.msra.mxu0 %v9611
  %11953 = vmatpush.bf16.msra.mxu0 %v9608
  %11954 = vmatmul.bf16.gmra.mxu0 %v5474
  %v11955 = vpop.f32.mrf.mxu0
  %v11956 = vadd.f32 %v11943, %v11955
  %v11957 = vpop.f32.mrf.mxu0
  %11958 = vdwg.mxu0
  %11959 = vmatpush.bf16.msra.mxu0 %v9653
  %11960 = vmatpush.bf16.msra.mxu0 %v9650
  %11961 = vmatpush.bf16.msra.mxu0 %v9647
  %11962 = vmatpush.bf16.msra.mxu0 %v9644
  %11963 = vmatpush.bf16.msra.mxu0 %v9641
  %11964 = vmatpush.bf16.msra.mxu0 %v9638
  %11965 = vmatpush.bf16.msra.mxu0 %v9635
  %11966 = vmatpush.bf16.msra.mxu0 %v9632
  %11967 = vmatmul.bf16.gmra.mxu0 %v5475
  %v11968 = vpop.f32.mrf.mxu0
  %v11969 = vadd.f32 %v11956, %v11968
  %v11970 = vpop.f32.mrf.mxu0
  %11971 = vdwg.mxu0
  %11972 = vmatpush.bf16.msra.mxu0 %v9677
  %11973 = vmatpush.bf16.msra.mxu0 %v9674
  %11974 = vmatpush.bf16.msra.mxu0 %v9671
  %11975 = vmatpush.bf16.msra.mxu0 %v9668
  %11976 = vmatpush.bf16.msra.mxu0 %v9665
  %11977 = vmatpush.bf16.msra.mxu0 %v9662
  %11978 = vmatpush.bf16.msra.mxu0 %v9659
  %11979 = vmatpush.bf16.msra.mxu0 %v9656
  %11980 = vmatmul.bf16.gmra.mxu0 %v5476
  %v11981 = vpop.f32.mrf.mxu0
  %v11982 = vadd.f32 %v11969, %v11981
  %v11983 = vpop.f32.mrf.mxu0
  %11984 = vdwg.mxu0
  %11985 = vmatpush.bf16.msra.mxu0 %v9701
  %11986 = vmatpush.bf16.msra.mxu0 %v9698
  %11987 = vmatpush.bf16.msra.mxu0 %v9695
  %11988 = vmatpush.bf16.msra.mxu0 %v9692
  %11989 = vmatpush.bf16.msra.mxu0 %v9689
  %11990 = vmatpush.bf16.msra.mxu0 %v9686
  %11991 = vmatpush.bf16.msra.mxu0 %v9683
  %11992 = vmatpush.bf16.msra.mxu0 %v9680
  %11993 = vmatmul.bf16.gmra.mxu0 %v5477
  %v11994 = vpop.f32.mrf.mxu0
  %v11995 = vadd.f32 %v11982, %v11994
  %v11996 = vpop.f32.mrf.mxu0
  %11997 = vdwg.mxu0
  %11998 = vmatpush.bf16.msra.mxu0 %v9725
  %11999 = vmatpush.bf16.msra.mxu0 %v9722
  %12000 = vmatpush.bf16.msra.mxu0 %v9719
  %12001 = vmatpush.bf16.msra.mxu0 %v9716
  %12002 = vmatpush.bf16.msra.mxu0 %v9713
  %12003 = vmatpush.bf16.msra.mxu0 %v9710
  %12004 = vmatpush.bf16.msra.mxu0 %v9707
  %12005 = vmatpush.bf16.msra.mxu0 %v9704
  %12006 = vmatmul.bf16.gmra.mxu0 %v5478
  %v12007 = vpop.f32.mrf.mxu0
  %v12008 = vadd.f32 %v11995, %v12007
  %v12009 = vpop.f32.mrf.mxu0
  %12010 = vdwg.mxu0
  %12011 = vmatpush.bf16.msra.mxu0 %v9749
  %12012 = vmatpush.bf16.msra.mxu0 %v9746
  %12013 = vmatpush.bf16.msra.mxu0 %v9743
  %12014 = vmatpush.bf16.msra.mxu0 %v9740
  %12015 = vmatpush.bf16.msra.mxu0 %v9737
  %12016 = vmatpush.bf16.msra.mxu0 %v9734
  %12017 = vmatpush.bf16.msra.mxu0 %v9731
  %12018 = vmatpush.bf16.msra.mxu0 %v9728
  %12019 = vmatmul.bf16.gmra.mxu0 %v5479
  %v12020 = vpop.f32.mrf.mxu0
  %v12021 = vadd.f32 %v12008, %v12020
  %v12022 = vpop.f32.mrf.mxu0
  %12023 = vdwg.mxu0
  %12024 = vmatpush.bf16.msra.mxu0 %v9773
  %12025 = vmatpush.bf16.msra.mxu0 %v9770
  %12026 = vmatpush.bf16.msra.mxu0 %v9767
  %12027 = vmatpush.bf16.msra.mxu0 %v9764
  %12028 = vmatpush.bf16.msra.mxu0 %v9761
  %12029 = vmatpush.bf16.msra.mxu0 %v9758
  %12030 = vmatpush.bf16.msra.mxu0 %v9755
  %12031 = vmatpush.bf16.msra.mxu0 %v9752
  %12032 = vmatmul.bf16.gmra.mxu0 %v5480
  %v12033 = vpop.f32.mrf.mxu0
  %v12034 = vadd.f32 %v12021, %v12033
  %v12035 = vpop.f32.mrf.mxu0
  %12036 = vdwg.mxu0
  %12037 = vmatpush.bf16.msra.mxu0 %v9797
  %12038 = vmatpush.bf16.msra.mxu0 %v9794
  %12039 = vmatpush.bf16.msra.mxu0 %v9791
  %12040 = vmatpush.bf16.msra.mxu0 %v9788
  %12041 = vmatpush.bf16.msra.mxu0 %v9785
  %12042 = vmatpush.bf16.msra.mxu0 %v9782
  %12043 = vmatpush.bf16.msra.mxu0 %v9779
  %12044 = vmatpush.bf16.msra.mxu0 %v9776
  %12045 = vmatmul.bf16.gmra.mxu0 %v5481
  %v12046 = vpop.f32.mrf.mxu0
  %v12047 = vadd.f32 %v12034, %v12046
  %v12048 = vpop.f32.mrf.mxu0
  %12049 = vdwg.mxu0
  %12050 = vmatpush.bf16.msra.mxu0 %v9821
  %12051 = vmatpush.bf16.msra.mxu0 %v9818
  %12052 = vmatpush.bf16.msra.mxu0 %v9815
  %12053 = vmatpush.bf16.msra.mxu0 %v9812
  %12054 = vmatpush.bf16.msra.mxu0 %v9809
  %12055 = vmatpush.bf16.msra.mxu0 %v9806
  %12056 = vmatpush.bf16.msra.mxu0 %v9803
  %12057 = vmatpush.bf16.msra.mxu0 %v9800
  %12058 = vmatmul.bf16.gmra.mxu0 %v5482
  %v12059 = vpop.f32.mrf.mxu0
  %v12060 = vadd.f32 %v12047, %v12059
  %v12061 = vpop.f32.mrf.mxu0
  %12062 = vdwg.mxu0
  %12063 = vmatpush.bf16.msra.mxu0 %v9845
  %12064 = vmatpush.bf16.msra.mxu0 %v9842
  %12065 = vmatpush.bf16.msra.mxu0 %v9839
  %12066 = vmatpush.bf16.msra.mxu0 %v9836
  %12067 = vmatpush.bf16.msra.mxu0 %v9833
  %12068 = vmatpush.bf16.msra.mxu0 %v9830
  %12069 = vmatpush.bf16.msra.mxu0 %v9827
  %12070 = vmatpush.bf16.msra.mxu0 %v9824
  %12071 = vmatmul.bf16.gmra.mxu0 %v5483
  %v12072 = vpop.f32.mrf.mxu0
  %v12073 = vadd.f32 %v12060, %v12072
  %v12074 = vpop.f32.mrf.mxu0
  %12075 = vdwg.mxu0
  %12076 = vmatpush.bf16.msra.mxu0 %v9869
  %12077 = vmatpush.bf16.msra.mxu0 %v9866
  %12078 = vmatpush.bf16.msra.mxu0 %v9863
  %12079 = vmatpush.bf16.msra.mxu0 %v9860
  %12080 = vmatpush.bf16.msra.mxu0 %v9857
  %12081 = vmatpush.bf16.msra.mxu0 %v9854
  %12082 = vmatpush.bf16.msra.mxu0 %v9851
  %12083 = vmatpush.bf16.msra.mxu0 %v9848
  %12084 = vmatmul.bf16.gmra.mxu0 %v5484
  %v12085 = vpop.f32.mrf.mxu0
  %v12086 = vadd.f32 %v12073, %v12085
  %v12087 = vpop.f32.mrf.mxu0
  %12088 = vdwg.mxu0
  %12089 = vmatpush.bf16.msra.mxu0 %v9893
  %12090 = vmatpush.bf16.msra.mxu0 %v9890
  %12091 = vmatpush.bf16.msra.mxu0 %v9887
  %12092 = vmatpush.bf16.msra.mxu0 %v9884
  %12093 = vmatpush.bf16.msra.mxu0 %v9881
  %12094 = vmatpush.bf16.msra.mxu0 %v9878
  %12095 = vmatpush.bf16.msra.mxu0 %v9875
  %12096 = vmatpush.bf16.msra.mxu0 %v9872
  %12097 = vmatmul.bf16.gmra.mxu0 %v5485
  %v12098 = vpop.f32.mrf.mxu0
  %v12099 = vadd.f32 %v12086, %v12098
  %v12100 = vpop.f32.mrf.mxu0
  %12101 = vdwg.mxu0
  %12102 = vmatpush.bf16.msra.mxu0 %v9917
  %12103 = vmatpush.bf16.msra.mxu0 %v9914
  %12104 = vmatpush.bf16.msra.mxu0 %v9911
  %12105 = vmatpush.bf16.msra.mxu0 %v9908
  %12106 = vmatpush.bf16.msra.mxu0 %v9905
  %12107 = vmatpush.bf16.msra.mxu0 %v9902
  %12108 = vmatpush.bf16.msra.mxu0 %v9899
  %12109 = vmatpush.bf16.msra.mxu0 %v9896
  %12110 = vmatmul.bf16.gmra.mxu0 %v5486
  %v12111 = vpop.f32.mrf.mxu0
  %v12112 = vadd.f32 %v12099, %v12111
  %v12113 = vpop.f32.mrf.mxu0
  %12114 = vdwg.mxu0
  %12115 = vmatpush.bf16.msra.mxu0 %v9941
  %12116 = vmatpush.bf16.msra.mxu0 %v9938
  %12117 = vmatpush.bf16.msra.mxu0 %v9935
  %12118 = vmatpush.bf16.msra.mxu0 %v9932
  %12119 = vmatpush.bf16.msra.mxu0 %v9929
  %12120 = vmatpush.bf16.msra.mxu0 %v9926
  %12121 = vmatpush.bf16.msra.mxu0 %v9923
  %12122 = vmatpush.bf16.msra.mxu0 %v9920
  %12123 = vmatmul.bf16.gmra.mxu0 %v5487
  %v12124 = vpop.f32.mrf.mxu0
  %v12125 = vadd.f32 %v12112, %v12124
  %v12126 = vpop.f32.mrf.mxu0
  %12127 = vdwg.mxu0
  %12128 = vmatpush.bf16.msra.mxu0 %v9965
  %12129 = vmatpush.bf16.msra.mxu0 %v9962
  %12130 = vmatpush.bf16.msra.mxu0 %v9959
  %12131 = vmatpush.bf16.msra.mxu0 %v9956
  %12132 = vmatpush.bf16.msra.mxu0 %v9953
  %12133 = vmatpush.bf16.msra.mxu0 %v9950
  %12134 = vmatpush.bf16.msra.mxu0 %v9947
  %12135 = vmatpush.bf16.msra.mxu0 %v9944
  %12136 = vmatmul.bf16.gmra.mxu0 %v5488
  %v12137 = vpop.f32.mrf.mxu0
  %v12138 = vadd.f32 %v12125, %v12137
  %v12139 = vpop.f32.mrf.mxu0
  %12140 = vdwg.mxu0
  %12141 = vmatpush.bf16.msra.mxu0 %v9989
  %12142 = vmatpush.bf16.msra.mxu0 %v9986
  %12143 = vmatpush.bf16.msra.mxu0 %v9983
  %12144 = vmatpush.bf16.msra.mxu0 %v9980
  %12145 = vmatpush.bf16.msra.mxu0 %v9977
  %12146 = vmatpush.bf16.msra.mxu0 %v9974
  %12147 = vmatpush.bf16.msra.mxu0 %v9971
  %12148 = vmatpush.bf16.msra.mxu0 %v9968
  %12149 = vmatmul.bf16.gmra.mxu0 %v5489
  %v12150 = vpop.f32.mrf.mxu0
  %v12151 = vadd.f32 %v12138, %v12150
  %v12152 = vpop.f32.mrf.mxu0
  %12153 = vdwg.mxu0
  %12154 = vmatpush.bf16.msra.mxu0 %v10013
  %12155 = vmatpush.bf16.msra.mxu0 %v10010
  %12156 = vmatpush.bf16.msra.mxu0 %v10007
  %12157 = vmatpush.bf16.msra.mxu0 %v10004
  %12158 = vmatpush.bf16.msra.mxu0 %v10001
  %12159 = vmatpush.bf16.msra.mxu0 %v9998
  %12160 = vmatpush.bf16.msra.mxu0 %v9995
  %12161 = vmatpush.bf16.msra.mxu0 %v9992
  %12162 = vmatmul.bf16.gmra.mxu0 %v5490
  %v12163 = vpop.f32.mrf.mxu0
  %v12164 = vadd.f32 %v12151, %v12163
  %v12165 = vpop.f32.mrf.mxu0
  %12166 = vdwg.mxu0
  %12167 = vmatpush.bf16.msra.mxu0 %v10037
  %12168 = vmatpush.bf16.msra.mxu0 %v10034
  %12169 = vmatpush.bf16.msra.mxu0 %v10031
  %12170 = vmatpush.bf16.msra.mxu0 %v10028
  %12171 = vmatpush.bf16.msra.mxu0 %v10025
  %12172 = vmatpush.bf16.msra.mxu0 %v10022
  %12173 = vmatpush.bf16.msra.mxu0 %v10019
  %12174 = vmatpush.bf16.msra.mxu0 %v10016
  %12175 = vmatmul.bf16.gmra.mxu0 %v5491
  %v12176 = vpop.f32.mrf.mxu0
  %v12177 = vadd.f32 %v12164, %v12176
  %v12178 = vpop.f32.mrf.mxu0
  %12179 = vdwg.mxu0
  %12180 = vmatpush.bf16.msra.mxu0 0
  %12181 = vmatpush.bf16.msra.mxu0 0
  %12182 = vmatpush.bf16.msra.mxu0 0
  %12183 = vmatpush.bf16.msra.mxu0 0
  %12184 = vmatpush.bf16.msra.mxu0 %v10865
  %12185 = vmatpush.bf16.msra.mxu0 %v10046
  %12186 = vmatpush.bf16.msra.mxu0 %v10043
  %12187 = vmatpush.bf16.msra.mxu0 %v10040
  %12188 = vmatmul.bf16.gmra.mxu0 %v10853
  %v12189 = vpop.f32.mrf.mxu0
  %v12190 = vadd.f32 %v12177, %v12189
  %v12191 = vpop.f32.mrf.mxu0
  %12192 = vdwg.mxu0
  %v12193 = vmax.f32 %v11306, 0.0
  %v12194 = vmax.f32 %v11748, 0.0
  %v12195 = vmax.f32 %v12190, 0.0
  %v12196 = vpack.c.bf16 %v12193, %v12193
  %v12197 = vpack.c.bf16 %v12194, %v12194
  %v12198 = vpack.c.bf16 %v12195, %v12195
  %v12199 = vld [vmem:[%s7] sm:$0xff]
  %v12200 = vld [vmem:[%s7 + $0x8] sm:$0xff]
  %v12201 = vld [vmem:[%s7 + $0x10] sm:$0xff]
  %v12202 = vld [vmem:[%s7 + $0x18] sm:$0xff]
  %v12203 = vld [vmem:[%s7 + $0x20] sm:$0xf]
  %v12204 = vld [vmem:[%s7 + $0x24] sm:$0xff]
  %v12205 = vld [vmem:[%s7 + $0x2c] sm:$0xff]
  %v12206 = vld [vmem:[%s7 + $0x34] sm:$0xff]
  %v12207 = vld [vmem:[%s7 + $0x3c] sm:$0xff]
  %v12208 = vld [vmem:[%s7 + $0x44] sm:$0xf]
  %v12209 = vld [vmem:[%s7 + $0x48] sm:$0xff]
  %v12210 = vld [vmem:[%s7 + $0x50] sm:$0xff]
  %v12211 = vld [vmem:[%s7 + $0x58] sm:$0xff]
  %v12212 = vld [vmem:[%s7 + $0x60] sm:$0xff]
  %v12213 = vld [vmem:[%s7 + $0x68] sm:$0xf]
  %v12214 = vld [vmem:[%s7 + $0x6c] sm:$0xff]
  %v12215 = vld [vmem:[%s7 + $0x74] sm:$0xff]
  %v12216 = vld [vmem:[%s7 + $0x7c] sm:$0xff]
  %v12217 = vld [vmem:[%s7 + $0x84] sm:$0xff]
  %v12218 = vld [vmem:[%s7 + $0x8c] sm:$0xf]
  %v12219 = vld [vmem:[%s7 + $0x90] sm:$0xff]
  %v12220 = vld [vmem:[%s7 + $0x98] sm:$0xff]
  %v12221 = vld [vmem:[%s7 + $0xa0] sm:$0xff]
  %v12222 = vld [vmem:[%s7 + $0xa8] sm:$0xff]
  %v12223 = vld [vmem:[%s7 + $0xb0] sm:$0xf]
  %v12224 = vld [vmem:[%s7 + $0xb4] sm:$0xff]
  %v12225 = vld [vmem:[%s7 + $0xbc] sm:$0xff]
  %v12226 = vld [vmem:[%s7 + $0xc4] sm:$0xff]
  %v12227 = vld [vmem:[%s7 + $0xcc] sm:$0xff]
  %v12228 = vld [vmem:[%s7 + $0xd4] sm:$0xf]
  %v12229 = vld [vmem:[%s7 + $0xd8] sm:$0xff]
  %v12230 = vld [vmem:[%s7 + $0xe0] sm:$0xff]
  %v12231 = vld [vmem:[%s7 + $0xe8] sm:$0xff]
  %v12232 = vld [vmem:[%s7 + $0xf0] sm:$0xff]
  %v12233 = vld [vmem:[%s7 + $0xf8] sm:$0xf]
  %v12234 = vld [vmem:[%s7 + $0xfc] sm:$0xff]
  %v12235 = vld [vmem:[%s7 + $0x104] sm:$0xff]
  %v12236 = vld [vmem:[%s7 + $0x10c] sm:$0xff]
  %v12237 = vld [vmem:[%s7 + $0x114] sm:$0xff]
  %v12238 = vld [vmem:[%s7 + $0x11c] sm:$0xf]
  %v12239 = vld [vmem:[%s7 + $0x120] sm:$0xff]
  %v12240 = vld [vmem:[%s7 + $0x128] sm:$0xff]
  %v12241 = vld [vmem:[%s7 + $0x130] sm:$0xff]
  %v12242 = vld [vmem:[%s7 + $0x138] sm:$0xff]
  %v12243 = vld [vmem:[%s7 + $0x140] sm:$0xf]
  %v12244 = vld [vmem:[%s7 + $0x144] sm:$0xff]
  %v12245 = vld [vmem:[%s7 + $0x14c] sm:$0xff]
  %v12246 = vld [vmem:[%s7 + $0x154] sm:$0xff]
  %v12247 = vld [vmem:[%s7 + $0x15c] sm:$0xff]
  %v12248 = vld [vmem:[%s7 + $0x164] sm:$0xf]
  %v12249 = vld [vmem:[%s7 + $0x168] sm:$0xff]
  %v12250 = vld [vmem:[%s7 + $0x170] sm:$0xff]
  %v12251 = vld [vmem:[%s7 + $0x178] sm:$0xff]
  %v12252 = vld [vmem:[%s7 + $0x180] sm:$0xff]
  %v12253 = vld [vmem:[%s7 + $0x188] sm:$0xf]
  %v12254 = vld [vmem:[%s7 + $0x18c] sm:$0xff]
  %v12255 = vld [vmem:[%s7 + $0x194] sm:$0xff]
  %v12256 = vld [vmem:[%s7 + $0x19c] sm:$0xff]
  %v12257 = vld [vmem:[%s7 + $0x1a4] sm:$0xff]
  %v12258 = vld [vmem:[%s7 + $0x1ac] sm:$0xf]
  %v12259 = vld [vmem:[%s7 + $0x1b0] sm:$0xff]
  %v12260 = vld [vmem:[%s7 + $0x1b8] sm:$0xff]
  %v12261 = vld [vmem:[%s7 + $0x1c0] sm:$0xff]
  %v12262 = vld [vmem:[%s7 + $0x1c8] sm:$0xff]
  %v12263 = vld [vmem:[%s7 + $0x1d0] sm:$0xf]
  %v12264 = vld [vmem:[%s7 + $0x1d4] sm:$0xff]
  %v12265 = vld [vmem:[%s7 + $0x1dc] sm:$0xff]
  %v12266 = vld [vmem:[%s7 + $0x1e4] sm:$0xff]
  %v12267 = vld [vmem:[%s7 + $0x1ec] sm:$0xff]
  %v12268 = vld [vmem:[%s7 + $0x1f4] sm:$0xf]
  %v12269 = vld [vmem:[%s7 + $0x1f8] sm:$0xff]
  %v12270 = vld [vmem:[%s7 + $0x200] sm:$0xff]
  %v12271 = vld [vmem:[%s7 + $0x208] sm:$0xff]
  %v12272 = vld [vmem:[%s7 + $0x210] sm:$0xff]
  %v12273 = vld [vmem:[%s7 + $0x218] sm:$0xf]
  %v12274 = vld [vmem:[%s7 + $0x21c] sm:$0xff]
  %v12275 = vld [vmem:[%s7 + $0x224] sm:$0xff]
  %v12276 = vld [vmem:[%s7 + $0x22c] sm:$0xff]
  %v12277 = vld [vmem:[%s7 + $0x234] sm:$0xff]
  %v12278 = vld [vmem:[%s7 + $0x23c] sm:$0xf]
  %v12279 = vld [vmem:[%s7 + $0x240] sm:$0xff]
  %v12280 = vld [vmem:[%s7 + $0x248] sm:$0xff]
  %v12281 = vld [vmem:[%s7 + $0x250] sm:$0xff]
  %v12282 = vld [vmem:[%s7 + $0x258] sm:$0xff]
  %v12283 = vld [vmem:[%s7 + $0x260] sm:$0xf]
  %v12284 = vld [vmem:[%s7 + $0x264] sm:$0xff]
  %v12285 = vld [vmem:[%s7 + $0x26c] sm:$0xff]
  %v12286 = vld [vmem:[%s7 + $0x274] sm:$0xff]
  %v12287 = vld [vmem:[%s7 + $0x27c] sm:$0xff]
  %v12288 = vld [vmem:[%s7 + $0x284] sm:$0xf]
  %v12289 = vld [vmem:[%s7 + $0x288] sm:$0xff]
  %v12290 = vld [vmem:[%s7 + $0x290] sm:$0xff]
  %v12291 = vld [vmem:[%s7 + $0x298] sm:$0xff]
  %v12292 = vld [vmem:[%s7 + $0x2a0] sm:$0xff]
  %v12293 = vld [vmem:[%s7 + $0x2a8] sm:$0xf]
  %v12294 = vld [vmem:[%s7 + $0x2ac] sm:$0xff]
  %v12295 = vld [vmem:[%s7 + $0x2b4] sm:$0xff]
  %v12296 = vld [vmem:[%s7 + $0x2bc] sm:$0xff]
  %v12297 = vld [vmem:[%s7 + $0x2c4] sm:$0xff]
  %v12298 = vld [vmem:[%s7 + $0x2cc] sm:$0xf]
  %v12299 = vld [vmem:[%s7 + $0x2d0] sm:$0xff]
  %v12300 = vld [vmem:[%s7 + $0x2d8] sm:$0xff]
  %v12301 = vld [vmem:[%s7 + $0x2e0] sm:$0xff]
  %v12302 = vld [vmem:[%s7 + $0x2e8] sm:$0xff]
  %v12303 = vld [vmem:[%s7 + $0x2f0] sm:$0xf]
  %v12304 = vld [vmem:[%s7 + $0x2f4] sm:$0xff]
  %v12305 = vld [vmem:[%s7 + $0x2fc] sm:$0xff]
  %v12306 = vld [vmem:[%s7 + $0x304] sm:$0xff]
  %v12307 = vld [vmem:[%s7 + $0x30c] sm:$0xff]
  %v12308 = vld [vmem:[%s7 + $0x314] sm:$0xf]
  %v12309 = vld [vmem:[%s7 + $0x318] sm:$0xff]
  %v12310 = vld [vmem:[%s7 + $0x320] sm:$0xff]
  %v12311 = vld [vmem:[%s7 + $0x328] sm:$0xff]
  %v12312 = vld [vmem:[%s7 + $0x330] sm:$0xff]
  %v12313 = vld [vmem:[%s7 + $0x338] sm:$0xf]
  %v12314 = vld [vmem:[%s7 + $0x33c] sm:$0xff]
  %v12315 = vld [vmem:[%s7 + $0x344] sm:$0xff]
  %v12316 = vld [vmem:[%s7 + $0x34c] sm:$0xff]
  %v12317 = vld [vmem:[%s7 + $0x354] sm:$0xff]
  %v12318 = vld [vmem:[%s7 + $0x35c] sm:$0xf]
  %v12319 = vld [vmem:[%s7 + $0x360] sm:$0xff]
  %v12320 = vld [vmem:[%s7 + $0x368] sm:$0xff]
  %v12321 = vld [vmem:[%s7 + $0x370] sm:$0xff]
  %v12322 = vld [vmem:[%s7 + $0x378] sm:$0xff]
  %v12323 = vld [vmem:[%s7 + $0x380] sm:$0xf]
  %v12324 = vld [vmem:[%s7 + $0x384] sm:$0xff]
  %v12325 = vld [vmem:[%s7 + $0x38c] sm:$0xff]
  %v12326 = vld [vmem:[%s7 + $0x394] sm:$0xff]
  %v12327 = vld [vmem:[%s7 + $0x39c] sm:$0xff]
  %v12328 = vld [vmem:[%s7 + $0x3a4] sm:$0xf]
  %v12329 = vld [vmem:[%s7 + $0x3a8] sm:$0xff]
  %v12330 = vld [vmem:[%s7 + $0x3b0] sm:$0xff]
  %v12331 = vld [vmem:[%s7 + $0x3b8] sm:$0xff]
  %v12332 = vld [vmem:[%s7 + $0x3c0] sm:$0xff]
  %v12333 = vld [vmem:[%s7 + $0x3c8] sm:$0xf]
  %v12334 = vld [vmem:[%s7 + $0x3cc] sm:$0xff]
  %v12335 = vld [vmem:[%s7 + $0x3d4] sm:$0xff]
  %v12336 = vld [vmem:[%s7 + $0x3dc] sm:$0xff]
  %v12337 = vld [vmem:[%s7 + $0x3e4] sm:$0xff]
  %v12338 = vld [vmem:[%s7 + $0x3ec] sm:$0xf]
  %v12339 = vld [vmem:[%s7 + $0x3f0] sm:$0xff]
  %v12340 = vld [vmem:[%s7 + $0x3f8] sm:$0xff]
  %v12341 = vld [vmem:[%s7 + $0x400] sm:$0xff]
  %v12342 = vld [vmem:[%s7 + $0x408] sm:$0xff]
  %v12343 = vld [vmem:[%s7 + $0x410] sm:$0xf]
  %v12344 = vld [vmem:[%s7 + $0x414] sm:$0xff]
  %v12345 = vld [vmem:[%s7 + $0x41c] sm:$0xff]
  %v12346 = vld [vmem:[%s7 + $0x424] sm:$0xff]
  %v12347 = vld [vmem:[%s7 + $0x42c] sm:$0xff]
  %v12348 = vld [vmem:[%s7 + $0x434] sm:$0xf]
  %v12349 = vld [vmem:[%s7 + $0x438] sm:$0xff]
  %v12350 = vld [vmem:[%s7 + $0x440] sm:$0xff]
  %v12351 = vld [vmem:[%s7 + $0x448] sm:$0xff]
  %v12352 = vld [vmem:[%s7 + $0x450] sm:$0xff]
  %v12353 = vld [vmem:[%s7 + $0x458] sm:$0xf]
  %v12354 = vld [vmem:[%s7 + $0x45c] sm:$0xff]
  %v12355 = vld [vmem:[%s7 + $0x464] sm:$0xff]
  %v12356 = vld [vmem:[%s7 + $0x46c] sm:$0xff]
  %v12357 = vld [vmem:[%s7 + $0x474] sm:$0xff]
  %v12358 = vld [vmem:[%s7 + $0x47c] sm:$0xf]
  %v12359 = vld [vmem:[%s7 + $0x480] sm:$0xff]
  %v12360 = vld [vmem:[%s7 + $0x488] sm:$0xff]
  %v12361 = vld [vmem:[%s7 + $0x490] sm:$0xff]
  %v12362 = vld [vmem:[%s7 + $0x498] sm:$0xff]
  %v12363 = vld [vmem:[%s7 + $0x4a0] sm:$0xf]
  %v12364 = vld [vmem:[%s7 + $0x4a4] sm:$0xff]
  %v12365 = vld [vmem:[%s7 + $0x4ac] sm:$0xff]
  %v12366 = vld [vmem:[%s7 + $0x4b4] sm:$0xff]
  %v12367 = vld [vmem:[%s7 + $0x4bc] sm:$0xff]
  %v12368 = vld [vmem:[%s7 + $0x4c4] sm:$0xf]
  %v12369 = vld [vmem:[%s7 + $0x4c8] sm:$0xff]
  %v12370 = vld [vmem:[%s7 + $0x4d0] sm:$0xff]
  %v12371 = vld [vmem:[%s7 + $0x4d8] sm:$0xff]
  %v12372 = vld [vmem:[%s7 + $0x4e0] sm:$0xff]
  %v12373 = vld [vmem:[%s7 + $0x4e8] sm:$0xf]
  %v12374 = vld [vmem:[%s7 + $0x4ec] sm:$0xff]
  %v12375 = vld [vmem:[%s7 + $0x4f4] sm:$0xff]
  %v12376 = vld [vmem:[%s7 + $0x4fc] sm:$0xff]
  %v12377 = vld [vmem:[%s7 + $0x504] sm:$0xff]
  %v12378 = vld [vmem:[%s7 + $0x50c] sm:$0xf]
  %v12379 = vld [vmem:[%s7 + $0x510] sm:$0x11]
  %v12380 = vld [vmem:[%s7 + $0x518] sm:$0x11]
  %v12381 = vld [vmem:[%s7 + $0x520] sm:$0x11]
  %v12382 = vld [vmem:[%s7 + $0x528] sm:$0x11]
  %v12383 = vld [vmem:[%s7 + $0x530] sm:$0x1]
  %v12384 = vld [vmem:[%s8] sm:$0xff]
  %v12385 = vld [vmem:[%s8 + $0x8] sm:$0x1]
  %v12388 = vperm.slane %v12384, 0
  %v12389 = vperm.slane %v12384, 1
  %v12390 = vperm.slane %v12384, 2
  %v12391 = vperm.slane %v12384, 3
  %v12392 = vperm.slane %v12384, 4
  %v12393 = vperm.slane %v12384, 5
  %v12394 = vperm.slane %v12384, 6
  %v12395 = vperm.slane %v12384, 7
  %v12396 = vperm.slane %v12385, 0
  %v12591 = vunpack.c.l.b16 %v12199
  %v12592 = vunpack.c.h.b16 %v12199
  %v12593 = vunpack.c.l.b16 %v12200
  %v12594 = vunpack.c.h.b16 %v12200
  %v12595 = vunpack.c.l.b16 %v12201
  %v12596 = vunpack.c.h.b16 %v12201
  %v12597 = vunpack.c.l.b16 %v12202
  %v12598 = vunpack.c.h.b16 %v12202
  %v12599 = vunpack.c.l.b16 %v12203
  %v12600 = vunpack.c.l.b16 %v12204
  %v12601 = vunpack.c.h.b16 %v12204
  %v12602 = vunpack.c.l.b16 %v12205
  %v12603 = vunpack.c.h.b16 %v12205
  %v12604 = vunpack.c.l.b16 %v12206
  %v12605 = vunpack.c.h.b16 %v12206
  %v12606 = vunpack.c.l.b16 %v12207
  %v12607 = vunpack.c.h.b16 %v12207
  %v12608 = vunpack.c.l.b16 %v12208
  %v12609 = vunpack.c.l.b16 %v12209
  %v12610 = vunpack.c.h.b16 %v12209
  %v12611 = vunpack.c.l.b16 %v12210
  %v12612 = vunpack.c.h.b16 %v12210
  %v12613 = vunpack.c.l.b16 %v12211
  %v12614 = vunpack.c.h.b16 %v12211
  %v12615 = vunpack.c.l.b16 %v12212
  %v12616 = vunpack.c.h.b16 %v12212
  %v12617 = vunpack.c.l.b16 %v12213
  %v12618 = vunpack.c.l.b16 %v12214
  %v12619 = vunpack.c.h.b16 %v12214
  %v12620 = vunpack.c.l.b16 %v12215
  %v12621 = vunpack.c.h.b16 %v12215
  %v12622 = vunpack.c.l.b16 %v12216
  %v12623 = vunpack.c.h.b16 %v12216
  %v12624 = vunpack.c.l.b16 %v12217
  %v12625 = vunpack.c.h.b16 %v12217
  %v12626 = vunpack.c.l.b16 %v12218
  %v12627 = vunpack.c.l.b16 %v12219
  %v12628 = vunpack.c.h.b16 %v12219
  %v12629 = vunpack.c.l.b16 %v12220
  %v12630 = vunpack.c.h.b16 %v12220
  %v12631 = vunpack.c.l.b16 %v12221
  %v12632 = vunpack.c.h.b16 %v12221
  %v12633 = vunpack.c.l.b16 %v12222
  %v12634 = vunpack.c.h.b16 %v12222
  %v12635 = vunpack.c.l.b16 %v12223
  %v12636 = vunpack.c.l.b16 %v12224
  %v12637 = vunpack.c.h.b16 %v12224
  %v12638 = vunpack.c.l.b16 %v12225
  %v12639 = vunpack.c.h.b16 %v12225
  %v12640 = vunpack.c.l.b16 %v12226
  %v12641 = vunpack.c.h.b16 %v12226
  %v12642 = vunpack.c.l.b16 %v12227
  %v12643 = vunpack.c.h.b16 %v12227
  %v12644 = vunpack.c.l.b16 %v12228
  %v12645 = vunpack.c.l.b16 %v12229
  %v12646 = vunpack.c.h.b16 %v12229
  %v12647 = vunpack.c.l.b16 %v12230
  %v12648 = vunpack.c.h.b16 %v12230
  %v12649 = vunpack.c.l.b16 %v12231
  %v12650 = vunpack.c.h.b16 %v12231
  %v12651 = vunpack.c.l.b16 %v12232
  %v12652 = vunpack.c.h.b16 %v12232
  %v12653 = vunpack.c.l.b16 %v12233
  %v12654 = vunpack.c.l.b16 %v12234
  %v12655 = vunpack.c.h.b16 %v12234
  %v12656 = vunpack.c.l.b16 %v12235
  %v12657 = vunpack.c.h.b16 %v12235
  %v12658 = vunpack.c.l.b16 %v12236
  %v12659 = vunpack.c.h.b16 %v12236
  %v12660 = vunpack.c.l.b16 %v12237
  %v12661 = vunpack.c.h.b16 %v12237
  %v12662 = vunpack.c.l.b16 %v12238
  %v12663 = vunpack.c.l.b16 %v12239
  %v12664 = vunpack.c.h.b16 %v12239
  %v12665 = vunpack.c.l.b16 %v12240
  %v12666 = vunpack.c.h.b16 %v12240
  %v12667 = vunpack.c.l.b16 %v12241
  %v12668 = vunpack.c.h.b16 %v12241
  %v12669 = vunpack.c.l.b16 %v12242
  %v12670 = vunpack.c.h.b16 %v12242
  %v12671 = vunpack.c.l.b16 %v12243
  %v12672 = vunpack.c.l.b16 %v12244
  %v12673 = vunpack.c.h.b16 %v12244
  %v12674 = vunpack.c.l.b16 %v12245
  %v12675 = vunpack.c.h.b16 %v12245
  %v12676 = vunpack.c.l.b16 %v12246
  %v12677 = vunpack.c.h.b16 %v12246
  %v12678 = vunpack.c.l.b16 %v12247
  %v12679 = vunpack.c.h.b16 %v12247
  %v12680 = vunpack.c.l.b16 %v12248
  %v12681 = vunpack.c.l.b16 %v12249
  %v12682 = vunpack.c.h.b16 %v12249
  %v12683 = vunpack.c.l.b16 %v12250
  %v12684 = vunpack.c.h.b16 %v12250
  %v12685 = vunpack.c.l.b16 %v12251
  %v12686 = vunpack.c.h.b16 %v12251
  %v12687 = vunpack.c.l.b16 %v12252
  %v12688 = vunpack.c.h.b16 %v12252
  %v12689 = vunpack.c.l.b16 %v12253
  %v12690 = vunpack.c.l.b16 %v12254
  %v12691 = vunpack.c.h.b16 %v12254
  %v12692 = vunpack.c.l.b16 %v12255
  %v12693 = vunpack.c.h.b16 %v12255
  %v12694 = vunpack.c.l.b16 %v12256
  %v12695 = vunpack.c.h.b16 %v12256
  %v12696 = vunpack.c.l.b16 %v12257
  %v12697 = vunpack.c.h.b16 %v12257
  %v12698 = vunpack.c.l.b16 %v12258
  %v12699 = vunpack.c.l.b16 %v12259
  %v12700 = vunpack.c.h.b16 %v12259
  %v12701 = vunpack.c.l.b16 %v12260
  %v12702 = vunpack.c.h.b16 %v12260
  %v12703 = vunpack.c.l.b16 %v12261
  %v12704 = vunpack.c.h.b16 %v12261
  %v12705 = vunpack.c.l.b16 %v12262
  %v12706 = vunpack.c.h.b16 %v12262
  %v12707 = vunpack.c.l.b16 %v12263
  %v12708 = vunpack.c.l.b16 %v12264
  %v12709 = vunpack.c.h.b16 %v12264
  %v12710 = vunpack.c.l.b16 %v12265
  %v12711 = vunpack.c.h.b16 %v12265
  %v12712 = vunpack.c.l.b16 %v12266
  %v12713 = vunpack.c.h.b16 %v12266
  %v12714 = vunpack.c.l.b16 %v12267
  %v12715 = vunpack.c.h.b16 %v12267
  %v12716 = vunpack.c.l.b16 %v12268
  %v12717 = vunpack.c.l.b16 %v12269
  %v12718 = vunpack.c.h.b16 %v12269
  %v12719 = vunpack.c.l.b16 %v12270
  %v12720 = vunpack.c.h.b16 %v12270
  %v12721 = vunpack.c.l.b16 %v12271
  %v12722 = vunpack.c.h.b16 %v12271
  %v12723 = vunpack.c.l.b16 %v12272
  %v12724 = vunpack.c.h.b16 %v12272
  %v12725 = vunpack.c.l.b16 %v12273
  %v12726 = vunpack.c.l.b16 %v12274
  %v12727 = vunpack.c.h.b16 %v12274
  %v12728 = vunpack.c.l.b16 %v12275
  %v12729 = vunpack.c.h.b16 %v12275
  %v12730 = vunpack.c.l.b16 %v12276
  %v12731 = vunpack.c.h.b16 %v12276
  %v12732 = vunpack.c.l.b16 %v12277
  %v12733 = vunpack.c.h.b16 %v12277
  %v12734 = vunpack.c.l.b16 %v12278
  %v12735 = vunpack.c.l.b16 %v12279
  %v12736 = vunpack.c.h.b16 %v12279
  %v12737 = vunpack.c.l.b16 %v12280
  %v12738 = vunpack.c.h.b16 %v12280
  %v12739 = vunpack.c.l.b16 %v12281
  %v12740 = vunpack.c.h.b16 %v12281
  %v12741 = vunpack.c.l.b16 %v12282
  %v12742 = vunpack.c.h.b16 %v12282
  %v12743 = vunpack.c.l.b16 %v12283
  %v12744 = vunpack.c.l.b16 %v12284
  %v12745 = vunpack.c.h.b16 %v12284
  %v12746 = vunpack.c.l.b16 %v12285
  %v12747 = vunpack.c.h.b16 %v12285
  %v12748 = vunpack.c.l.b16 %v12286
  %v12749 = vunpack.c.h.b16 %v12286
  %v12750 = vunpack.c.l.b16 %v12287
  %v12751 = vunpack.c.h.b16 %v12287
  %v12752 = vunpack.c.l.b16 %v12288
  %v12753 = vunpack.c.l.b16 %v12289
  %v12754 = vunpack.c.h.b16 %v12289
  %v12755 = vunpack.c.l.b16 %v12290
  %v12756 = vunpack.c.h.b16 %v12290
  %v12757 = vunpack.c.l.b16 %v12291
  %v12758 = vunpack.c.h.b16 %v12291
  %v12759 = vunpack.c.l.b16 %v12292
  %v12760 = vunpack.c.h.b16 %v12292
  %v12761 = vunpack.c.l.b16 %v12293
  %v12762 = vunpack.c.l.b16 %v12294
  %v12763 = vunpack.c.h.b16 %v12294
  %v12764 = vunpack.c.l.b16 %v12295
  %v12765 = vunpack.c.h.b16 %v12295
  %v12766 = vunpack.c.l.b16 %v12296
  %v12767 = vunpack.c.h.b16 %v12296
  %v12768 = vunpack.c.l.b16 %v12297
  %v12769 = vunpack.c.h.b16 %v12297
  %v12770 = vunpack.c.l.b16 %v12298
  %v12771 = vunpack.c.l.b16 %v12299
  %v12772 = vunpack.c.h.b16 %v12299
  %v12773 = vunpack.c.l.b16 %v12300
  %v12774 = vunpack.c.h.b16 %v12300
  %v12775 = vunpack.c.l.b16 %v12301
  %v12776 = vunpack.c.h.b16 %v12301
  %v12777 = vunpack.c.l.b16 %v12302
  %v12778 = vunpack.c.h.b16 %v12302
  %v12779 = vunpack.c.l.b16 %v12303
  %v12780 = vunpack.c.l.b16 %v12304
  %v12781 = vunpack.c.h.b16 %v12304
  %v12782 = vunpack.c.l.b16 %v12305
  %v12783 = vunpack.c.h.b16 %v12305
  %v12784 = vunpack.c.l.b16 %v12306
  %v12785 = vunpack.c.h.b16 %v12306
  %v12786 = vunpack.c.l.b16 %v12307
  %v12787 = vunpack.c.h.b16 %v12307
  %v12788 = vunpack.c.l.b16 %v12308
  %v12789 = vunpack.c.l.b16 %v12309
  %v12790 = vunpack.c.h.b16 %v12309
  %v12791 = vunpack.c.l.b16 %v12310
  %v12792 = vunpack.c.h.b16 %v12310
  %v12793 = vunpack.c.l.b16 %v12311
  %v12794 = vunpack.c.h.b16 %v12311
  %v12795 = vunpack.c.l.b16 %v12312
  %v12796 = vunpack.c.h.b16 %v12312
  %v12797 = vunpack.c.l.b16 %v12313
  %v12798 = vunpack.c.l.b16 %v12314
  %v12799 = vunpack.c.h.b16 %v12314
  %v12800 = vunpack.c.l.b16 %v12315
  %v12801 = vunpack.c.h.b16 %v12315
  %v12802 = vunpack.c.l.b16 %v12316
  %v12803 = vunpack.c.h.b16 %v12316
  %v12804 = vunpack.c.l.b16 %v12317
  %v12805 = vunpack.c.h.b16 %v12317
  %v12806 = vunpack.c.l.b16 %v12318
  %v12807 = vunpack.c.l.b16 %v12319
  %v12808 = vunpack.c.h.b16 %v12319
  %v12809 = vunpack.c.l.b16 %v12320
  %v12810 = vunpack.c.h.b16 %v12320
  %v12811 = vunpack.c.l.b16 %v12321
  %v12812 = vunpack.c.h.b16 %v12321
  %v12813 = vunpack.c.l.b16 %v12322
  %v12814 = vunpack.c.h.b16 %v12322
  %v12815 = vunpack.c.l.b16 %v12323
  %v12816 = vunpack.c.l.b16 %v12324
  %v12817 = vunpack.c.h.b16 %v12324
  %v12818 = vunpack.c.l.b16 %v12325
  %v12819 = vunpack.c.h.b16 %v12325
  %v12820 = vunpack.c.l.b16 %v12326
  %v12821 = vunpack.c.h.b16 %v12326
  %v12822 = vunpack.c.l.b16 %v12327
  %v12823 = vunpack.c.h.b16 %v12327
  %v12824 = vunpack.c.l.b16 %v12328
  %v12825 = vunpack.c.l.b16 %v12329
  %v12826 = vunpack.c.h.b16 %v12329
  %v12827 = vunpack.c.l.b16 %v12330
  %v12828 = vunpack.c.h.b16 %v12330
  %v12829 = vunpack.c.l.b16 %v12331
  %v12830 = vunpack.c.h.b16 %v12331
  %v12831 = vunpack.c.l.b16 %v12332
  %v12832 = vunpack.c.h.b16 %v12332
  %v12833 = vunpack.c.l.b16 %v12333
  %v12834 = vunpack.c.l.b16 %v12334
  %v12835 = vunpack.c.h.b16 %v12334
  %v12836 = vunpack.c.l.b16 %v12335
  %v12837 = vunpack.c.h.b16 %v12335
  %v12838 = vunpack.c.l.b16 %v12336
  %v12839 = vunpack.c.h.b16 %v12336
  %v12840 = vunpack.c.l.b16 %v12337
  %v12841 = vunpack.c.h.b16 %v12337
  %v12842 = vunpack.c.l.b16 %v12338
  %v12843 = vunpack.c.l.b16 %v12339
  %v12844 = vunpack.c.h.b16 %v12339
  %v12845 = vunpack.c.l.b16 %v12340
  %v12846 = vunpack.c.h.b16 %v12340
  %v12847 = vunpack.c.l.b16 %v12341
  %v12848 = vunpack.c.h.b16 %v12341
  %v12849 = vunpack.c.l.b16 %v12342
  %v12850 = vunpack.c.h.b16 %v12342
  %v12851 = vunpack.c.l.b16 %v12343
  %v12852 = vunpack.c.l.b16 %v12344
  %v12853 = vunpack.c.h.b16 %v12344
  %v12854 = vunpack.c.l.b16 %v12345
  %v12855 = vunpack.c.h.b16 %v12345
  %v12856 = vunpack.c.l.b16 %v12346
  %v12857 = vunpack.c.h.b16 %v12346
  %v12858 = vunpack.c.l.b16 %v12347
  %v12859 = vunpack.c.h.b16 %v12347
  %v12860 = vunpack.c.l.b16 %v12348
  %v12861 = vunpack.c.l.b16 %v12349
  %v12862 = vunpack.c.h.b16 %v12349
  %v12863 = vunpack.c.l.b16 %v12350
  %v12864 = vunpack.c.h.b16 %v12350
  %v12865 = vunpack.c.l.b16 %v12351
  %v12866 = vunpack.c.h.b16 %v12351
  %v12867 = vunpack.c.l.b16 %v12352
  %v12868 = vunpack.c.h.b16 %v12352
  %v12869 = vunpack.c.l.b16 %v12353
  %v12870 = vunpack.c.l.b16 %v12354
  %v12871 = vunpack.c.h.b16 %v12354
  %v12872 = vunpack.c.l.b16 %v12355
  %v12873 = vunpack.c.h.b16 %v12355
  %v12874 = vunpack.c.l.b16 %v12356
  %v12875 = vunpack.c.h.b16 %v12356
  %v12876 = vunpack.c.l.b16 %v12357
  %v12877 = vunpack.c.h.b16 %v12357
  %v12878 = vunpack.c.l.b16 %v12358
  %v12879 = vunpack.c.l.b16 %v12359
  %v12880 = vunpack.c.h.b16 %v12359
  %v12881 = vunpack.c.l.b16 %v12360
  %v12882 = vunpack.c.h.b16 %v12360
  %v12883 = vunpack.c.l.b16 %v12361
  %v12884 = vunpack.c.h.b16 %v12361
  %v12885 = vunpack.c.l.b16 %v12362
  %v12886 = vunpack.c.h.b16 %v12362
  %v12887 = vunpack.c.l.b16 %v12363
  %v12888 = vunpack.c.l.b16 %v12364
  %v12889 = vunpack.c.h.b16 %v12364
  %v12890 = vunpack.c.l.b16 %v12365
  %v12891 = vunpack.c.h.b16 %v12365
  %v12892 = vunpack.c.l.b16 %v12366
  %v12893 = vunpack.c.h.b16 %v12366
  %v12894 = vunpack.c.l.b16 %v12367
  %v12895 = vunpack.c.h.b16 %v12367
  %v12896 = vunpack.c.l.b16 %v12368
  %v12897 = vunpack.c.l.b16 %v12369
  %v12898 = vunpack.c.h.b16 %v12369
  %v12899 = vunpack.c.l.b16 %v12370
  %v12900 = vunpack.c.h.b16 %v12370
  %v12901 = vunpack.c.l.b16 %v12371
  %v12902 = vunpack.c.h.b16 %v12371
  %v12903 = vunpack.c.l.b16 %v12372
  %v12904 = vunpack.c.h.b16 %v12372
  %v12905 = vunpack.c.l.b16 %v12373
  %v12906 = vunpack.c.l.b16 %v12374
  %v12907 = vunpack.c.h.b16 %v12374
  %v12908 = vunpack.c.l.b16 %v12375
  %v12909 = vunpack.c.h.b16 %v12375
  %v12910 = vunpack.c.l.b16 %v12376
  %v12911 = vunpack.c.h.b16 %v12376
  %v12912 = vunpack.c.l.b16 %v12377
  %v12913 = vunpack.c.h.b16 %v12377
  %v12914 = vunpack.c.l.b16 %v12378
  %v12915 = vunpack.c.l.b16 %v12379
  %v12916 = vunpack.c.h.b16 %v12379
  %v12917 = vunpack.c.l.b16 %v12380
  %v12918 = vunpack.c.h.b16 %v12380
  %v12919 = vunpack.c.l.b16 %v12381
  %v12920 = vunpack.c.h.b16 %v12381
  %v12921 = vunpack.c.l.b16 %v12382
  %v12922 = vunpack.c.h.b16 %v12382
  %v12923 = vunpack.c.l.b16 %v12383
  %v12924 = vpack.c.b16 %v12600, %v12591
  %v12925 = vpack.c.b16 %v12601, %v12592
  %v12926 = vpack.c.b16 %v12602, %v12593
  %v12927 = vpack.c.b16 %v12603, %v12594
  %v12928 = vpack.c.b16 %v12604, %v12595
  %v12929 = vpack.c.b16 %v12605, %v12596
  %v12930 = vpack.c.b16 %v12606, %v12597
  %v12931 = vpack.c.b16 %v12607, %v12598
  %v12932 = vpack.c.b16 %v12608, %v12599
  %v12933 = vpack.c.b16 %v12618, %v12609
  %v12934 = vpack.c.b16 %v12619, %v12610
  %v12935 = vpack.c.b16 %v12620, %v12611
  %v12936 = vpack.c.b16 %v12621, %v12612
  %v12937 = vpack.c.b16 %v12622, %v12613
  %v12938 = vpack.c.b16 %v12623, %v12614
  %v12939 = vpack.c.b16 %v12624, %v12615
  %v12940 = vpack.c.b16 %v12625, %v12616
  %v12941 = vpack.c.b16 %v12626, %v12617
  %v12942 = vpack.c.b16 %v12636, %v12627
  %v12943 = vpack.c.b16 %v12637, %v12628
  %v12944 = vpack.c.b16 %v12638, %v12629
  %v12945 = vpack.c.b16 %v12639, %v12630
  %v12946 = vpack.c.b16 %v12640, %v12631
  %v12947 = vpack.c.b16 %v12641, %v12632
  %v12948 = vpack.c.b16 %v12642, %v12633
  %v12949 = vpack.c.b16 %v12643, %v12634
  %v12950 = vpack.c.b16 %v12644, %v12635
  %v12951 = vpack.c.b16 %v12654, %v12645
  %v12952 = vpack.c.b16 %v12655, %v12646
  %v12953 = vpack.c.b16 %v12656, %v12647
  %v12954 = vpack.c.b16 %v12657, %v12648
  %v12955 = vpack.c.b16 %v12658, %v12649
  %v12956 = vpack.c.b16 %v12659, %v12650
  %v12957 = vpack.c.b16 %v12660, %v12651
  %v12958 = vpack.c.b16 %v12661, %v12652
  %v12959 = vpack.c.b16 %v12662, %v12653
  %v12960 = vpack.c.b16 %v12672, %v12663
  %v12961 = vpack.c.b16 %v12673, %v12664
  %v12962 = vpack.c.b16 %v12674, %v12665
  %v12963 = vpack.c.b16 %v12675, %v12666
  %v12964 = vpack.c.b16 %v12676, %v12667
  %v12965 = vpack.c.b16 %v12677, %v12668
  %v12966 = vpack.c.b16 %v12678, %v12669
  %v12967 = vpack.c.b16 %v12679, %v12670
  %v12968 = vpack.c.b16 %v12680, %v12671
  %v12969 = vpack.c.b16 %v12690, %v12681
  %v12970 = vpack.c.b16 %v12691, %v12682
  %v12971 = vpack.c.b16 %v12692, %v12683
  %v12972 = vpack.c.b16 %v12693, %v12684
  %v12973 = vpack.c.b16 %v12694, %v12685
  %v12974 = vpack.c.b16 %v12695, %v12686
  %v12975 = vpack.c.b16 %v12696, %v12687
  %v12976 = vpack.c.b16 %v12697, %v12688
  %v12977 = vpack.c.b16 %v12698, %v12689
  %v12978 = vpack.c.b16 %v12708, %v12699
  %v12979 = vpack.c.b16 %v12709, %v12700
  %v12980 = vpack.c.b16 %v12710, %v12701
  %v12981 = vpack.c.b16 %v12711, %v12702
  %v12982 = vpack.c.b16 %v12712, %v12703
  %v12983 = vpack.c.b16 %v12713, %v12704
  %v12984 = vpack.c.b16 %v12714, %v12705
  %v12985 = vpack.c.b16 %v12715, %v12706
  %v12986 = vpack.c.b16 %v12716, %v12707
  %v12987 = vpack.c.b16 %v12726, %v12717
  %v12988 = vpack.c.b16 %v12727, %v12718
  %v12989 = vpack.c.b16 %v12728, %v12719
  %v12990 = vpack.c.b16 %v12729, %v12720
  %v12991 = vpack.c.b16 %v12730, %v12721
  %v12992 = vpack.c.b16 %v12731, %v12722
  %v12993 = vpack.c.b16 %v12732, %v12723
  %v12994 = vpack.c.b16 %v12733, %v12724
  %v12995 = vpack.c.b16 %v12734, %v12725
  %v12996 = vpack.c.b16 %v12744, %v12735
  %v12997 = vpack.c.b16 %v12745, %v12736
  %v12998 = vpack.c.b16 %v12746, %v12737
  %v12999 = vpack.c.b16 %v12747, %v12738
  %v13000 = vpack.c.b16 %v12748, %v12739
  %v13001 = vpack.c.b16 %v12749, %v12740
  %v13002 = vpack.c.b16 %v12750, %v12741
  %v13003 = vpack.c.b16 %v12751, %v12742
  %v13004 = vpack.c.b16 %v12752, %v12743
  %v13005 = vpack.c.b16 %v12762, %v12753
  %v13006 = vpack.c.b16 %v12763, %v12754
  %v13007 = vpack.c.b16 %v12764, %v12755
  %v13008 = vpack.c.b16 %v12765, %v12756
  %v13009 = vpack.c.b16 %v12766, %v12757
  %v13010 = vpack.c.b16 %v12767, %v12758
  %v13011 = vpack.c.b16 %v12768, %v12759
  %v13012 = vpack.c.b16 %v12769, %v12760
  %v13013 = vpack.c.b16 %v12770, %v12761
  %v13014 = vpack.c.b16 %v12780, %v12771
  %v13015 = vpack.c.b16 %v12781, %v12772
  %v13016 = vpack.c.b16 %v12782, %v12773
  %v13017 = vpack.c.b16 %v12783, %v12774
  %v13018 = vpack.c.b16 %v12784, %v12775
  %v13019 = vpack.c.b16 %v12785, %v12776
  %v13020 = vpack.c.b16 %v12786, %v12777
  %v13021 = vpack.c.b16 %v12787, %v12778
  %v13022 = vpack.c.b16 %v12788, %v12779
  %v13023 = vpack.c.b16 %v12798, %v12789
  %v13024 = vpack.c.b16 %v12799, %v12790
  %v13025 = vpack.c.b16 %v12800, %v12791
  %v13026 = vpack.c.b16 %v12801, %v12792
  %v13027 = vpack.c.b16 %v12802, %v12793
  %v13028 = vpack.c.b16 %v12803, %v12794
  %v13029 = vpack.c.b16 %v12804, %v12795
  %v13030 = vpack.c.b16 %v12805, %v12796
  %v13031 = vpack.c.b16 %v12806, %v12797
  %v13032 = vpack.c.b16 %v12816, %v12807
  %v13033 = vpack.c.b16 %v12817, %v12808
  %v13034 = vpack.c.b16 %v12818, %v12809
  %v13035 = vpack.c.b16 %v12819, %v12810
  %v13036 = vpack.c.b16 %v12820, %v12811
  %v13037 = vpack.c.b16 %v12821, %v12812
  %v13038 = vpack.c.b16 %v12822, %v12813
  %v13039 = vpack.c.b16 %v12823, %v12814
  %v13040 = vpack.c.b16 %v12824, %v12815
  %v13041 = vpack.c.b16 %v12834, %v12825
  %v13042 = vpack.c.b16 %v12835, %v12826
  %v13043 = vpack.c.b16 %v12836, %v12827
  %v13044 = vpack.c.b16 %v12837, %v12828
  %v13045 = vpack.c.b16 %v12838, %v12829
  %v13046 = vpack.c.b16 %v12839, %v12830
  %v13047 = vpack.c.b16 %v12840, %v12831
  %v13048 = vpack.c.b16 %v12841, %v12832
  %v13049 = vpack.c.b16 %v12842, %v12833
  %v13050 = vpack.c.b16 %v12852, %v12843
  %v13051 = vpack.c.b16 %v12853, %v12844
  %v13052 = vpack.c.b16 %v12854, %v12845
  %v13053 = vpack.c.b16 %v12855, %v12846
  %v13054 = vpack.c.b16 %v12856, %v12847
  %v13055 = vpack.c.b16 %v12857, %v12848
  %v13056 = vpack.c.b16 %v12858, %v12849
  %v13057 = vpack.c.b16 %v12859, %v12850
  %v13058 = vpack.c.b16 %v12860, %v12851
  %v13059 = vpack.c.b16 %v12870, %v12861
  %v13060 = vpack.c.b16 %v12871, %v12862
  %v13061 = vpack.c.b16 %v12872, %v12863
  %v13062 = vpack.c.b16 %v12873, %v12864
  %v13063 = vpack.c.b16 %v12874, %v12865
  %v13064 = vpack.c.b16 %v12875, %v12866
  %v13065 = vpack.c.b16 %v12876, %v12867
  %v13066 = vpack.c.b16 %v12877, %v12868
  %v13067 = vpack.c.b16 %v12878, %v12869
  %v13068 = vpack.c.b16 %v12888, %v12879
  %v13069 = vpack.c.b16 %v12889, %v12880
  %v13070 = vpack.c.b16 %v12890, %v12881
  %v13071 = vpack.c.b16 %v12891, %v12882
  %v13072 = vpack.c.b16 %v12892, %v12883
  %v13073 = vpack.c.b16 %v12893, %v12884
  %v13074 = vpack.c.b16 %v12894, %v12885
  %v13075 = vpack.c.b16 %v12895, %v12886
  %v13076 = vpack.c.b16 %v12896, %v12887
  %v13077 = vpack.c.b16 %v12906, %v12897
  %v13078 = vpack.c.b16 %v12907, %v12898
  %v13079 = vpack.c.b16 %v12908, %v12899
  %v13080 = vpack.c.b16 %v12909, %v12900
  %v13081 = vpack.c.b16 %v12910, %v12901
  %v13082 = vpack.c.b16 %v12911, %v12902
  %v13083 = vpack.c.b16 %v12912, %v12903
  %v13084 = vpack.c.b16 %v12913, %v12904
  %v13085 = vpack.c.b16 %v12914, %v12905
  %v13086 = vpack.c.b16 %v12915, %v12915
  %v13087 = vpack.c.b16 %v12916, %v12916
  %v13088 = vpack.c.b16 %v12917, %v12917
  %v13089 = vpack.c.b16 %v12918, %v12918
  %v13090 = vpack.c.b16 %v12919, %v12919
  %v13091 = vpack.c.b16 %v12920, %v12920
  %v13092 = vpack.c.b16 %v12921, %v12921
  %v13093 = vpack.c.b16 %v12922, %v12922
  %v13094 = vpack.c.b16 %v12923, %v12923
  %v13258 = vsel %vm3990, %v12198, 0
  %v13261 = vand.u32 %v13086, %v3996
  %v13264 = vand.u32 %v13087, %v3996
  %v13267 = vand.u32 %v13088, %v3996
  %v13270 = vand.u32 %v13089, %v3996
  %v13273 = vand.u32 %v13090, %v3996
  %v13276 = vand.u32 %v13091, %v3996
  %v13279 = vand.u32 %v13092, %v3996
  %v13282 = vand.u32 %v13093, %v3996
  %v13285 = vand.u32 %v13094, %v3996
  %13287 = vmatpush.bf16.msra.mxu0 %v12987
  %13288 = vmatpush.bf16.msra.mxu0 %v12978
  %13289 = vmatpush.bf16.msra.mxu0 %v12969
  %13290 = vmatpush.bf16.msra.mxu0 %v12960
  %13291 = vmatpush.bf16.msra.mxu0 %v12951
  %13292 = vmatpush.bf16.msra.mxu0 %v12942
  %13293 = vmatpush.bf16.msra.mxu0 %v12933
  %13294 = vmatpush.bf16.msra.mxu0 %v12924
  %13295 = vmatmul.bf16.gmra.mxu0 %v12196
  %v13296 = vpop.f32.mrf.mxu0
  %v13297 = vadd.f32 %v12388, %v13296
  %v13298 = vpop.f32.mrf.mxu0
  %13299 = vdwg.mxu0
  %13300 = vmatpush.bf16.msra.mxu0 %v13059
  %13301 = vmatpush.bf16.msra.mxu0 %v13050
  %13302 = vmatpush.bf16.msra.mxu0 %v13041
  %13303 = vmatpush.bf16.msra.mxu0 %v13032
  %13304 = vmatpush.bf16.msra.mxu0 %v13023
  %13305 = vmatpush.bf16.msra.mxu0 %v13014
  %13306 = vmatpush.bf16.msra.mxu0 %v13005
  %13307 = vmatpush.bf16.msra.mxu0 %v12996
  %13308 = vmatmul.bf16.gmra.mxu0 %v12197
  %v13309 = vpop.f32.mrf.mxu0
  %v13310 = vadd.f32 %v13297, %v13309
  %v13311 = vpop.f32.mrf.mxu0
  %13312 = vdwg.mxu0
  %13313 = vmatpush.bf16.msra.mxu0 0
  %13314 = vmatpush.bf16.msra.mxu0 0
  %13315 = vmatpush.bf16.msra.mxu0 0
  %13316 = vmatpush.bf16.msra.mxu0 0
  %13317 = vmatpush.bf16.msra.mxu0 0
  %13318 = vmatpush.bf16.msra.mxu0 %v13261
  %13319 = vmatpush.bf16.msra.mxu0 %v13077
  %13320 = vmatpush.bf16.msra.mxu0 %v13068
  %13321 = vmatmul.bf16.gmra.mxu0 %v13258
  %v13322 = vpop.f32.mrf.mxu0
  %v13323 = vadd.f32 %v13310, %v13322
  %v13324 = vpop.f32.mrf.mxu0
  %13325 = vdwg.mxu0
  %13326 = vmatpush.bf16.msra.mxu0 %v12988
  %13327 = vmatpush.bf16.msra.mxu0 %v12979
  %13328 = vmatpush.bf16.msra.mxu0 %v12970
  %13329 = vmatpush.bf16.msra.mxu0 %v12961
  %13330 = vmatpush.bf16.msra.mxu0 %v12952
  %13331 = vmatpush.bf16.msra.mxu0 %v12943
  %13332 = vmatpush.bf16.msra.mxu0 %v12934
  %13333 = vmatpush.bf16.msra.mxu0 %v12925
  %13334 = vmatmul.bf16.gmra.mxu0 %v12196
  %v13335 = vpop.f32.mrf.mxu0
  %v13336 = vadd.f32 %v12389, %v13335
  %v13337 = vpop.f32.mrf.mxu0
  %13338 = vdwg.mxu0
  %13339 = vmatpush.bf16.msra.mxu0 %v13060
  %13340 = vmatpush.bf16.msra.mxu0 %v13051
  %13341 = vmatpush.bf16.msra.mxu0 %v13042
  %13342 = vmatpush.bf16.msra.mxu0 %v13033
  %13343 = vmatpush.bf16.msra.mxu0 %v13024
  %13344 = vmatpush.bf16.msra.mxu0 %v13015
  %13345 = vmatpush.bf16.msra.mxu0 %v13006
  %13346 = vmatpush.bf16.msra.mxu0 %v12997
  %13347 = vmatmul.bf16.gmra.mxu0 %v12197
  %v13348 = vpop.f32.mrf.mxu0
  %v13349 = vadd.f32 %v13336, %v13348
  %v13350 = vpop.f32.mrf.mxu0
  %13351 = vdwg.mxu0
  %13352 = vmatpush.bf16.msra.mxu0 0
  %13353 = vmatpush.bf16.msra.mxu0 0
  %13354 = vmatpush.bf16.msra.mxu0 0
  %13355 = vmatpush.bf16.msra.mxu0 0
  %13356 = vmatpush.bf16.msra.mxu0 0
  %13357 = vmatpush.bf16.msra.mxu0 %v13264
  %13358 = vmatpush.bf16.msra.mxu0 %v13078
  %13359 = vmatpush.bf16.msra.mxu0 %v13069
  %13360 = vmatmul.bf16.gmra.mxu0 %v13258
  %v13361 = vpop.f32.mrf.mxu0
  %v13362 = vadd.f32 %v13349, %v13361
  %v13363 = vpop.f32.mrf.mxu0
  %13364 = vdwg.mxu0
  %13365 = vmatpush.bf16.msra.mxu0 %v12989
  %13366 = vmatpush.bf16.msra.mxu0 %v12980
  %13367 = vmatpush.bf16.msra.mxu0 %v12971
  %13368 = vmatpush.bf16.msra.mxu0 %v12962
  %13369 = vmatpush.bf16.msra.mxu0 %v12953
  %13370 = vmatpush.bf16.msra.mxu0 %v12944
  %13371 = vmatpush.bf16.msra.mxu0 %v12935
  %13372 = vmatpush.bf16.msra.mxu0 %v12926
  %13373 = vmatmul.bf16.gmra.mxu0 %v12196
  %v13374 = vpop.f32.mrf.mxu0
  %v13375 = vadd.f32 %v12390, %v13374
  %v13376 = vpop.f32.mrf.mxu0
  %13377 = vdwg.mxu0
  %13378 = vmatpush.bf16.msra.mxu0 %v13061
  %13379 = vmatpush.bf16.msra.mxu0 %v13052
  %13380 = vmatpush.bf16.msra.mxu0 %v13043
  %13381 = vmatpush.bf16.msra.mxu0 %v13034
  %13382 = vmatpush.bf16.msra.mxu0 %v13025
  %13383 = vmatpush.bf16.msra.mxu0 %v13016
  %13384 = vmatpush.bf16.msra.mxu0 %v13007
  %13385 = vmatpush.bf16.msra.mxu0 %v12998
  %13386 = vmatmul.bf16.gmra.mxu0 %v12197
  %v13387 = vpop.f32.mrf.mxu0
  %v13388 = vadd.f32 %v13375, %v13387
  %v13389 = vpop.f32.mrf.mxu0
  %13390 = vdwg.mxu0
  %13391 = vmatpush.bf16.msra.mxu0 0
  %13392 = vmatpush.bf16.msra.mxu0 0
  %13393 = vmatpush.bf16.msra.mxu0 0
  %13394 = vmatpush.bf16.msra.mxu0 0
  %13395 = vmatpush.bf16.msra.mxu0 0
  %13396 = vmatpush.bf16.msra.mxu0 %v13267
  %13397 = vmatpush.bf16.msra.mxu0 %v13079
  %13398 = vmatpush.bf16.msra.mxu0 %v13070
  %13399 = vmatmul.bf16.gmra.mxu0 %v13258
  %v13400 = vpop.f32.mrf.mxu0
  %v13401 = vadd.f32 %v13388, %v13400
  %v13402 = vpop.f32.mrf.mxu0
  %13403 = vdwg.mxu0
  %13404 = vmatpush.bf16.msra.mxu0 %v12990
  %13405 = vmatpush.bf16.msra.mxu0 %v12981
  %13406 = vmatpush.bf16.msra.mxu0 %v12972
  %13407 = vmatpush.bf16.msra.mxu0 %v12963
  %13408 = vmatpush.bf16.msra.mxu0 %v12954
  %13409 = vmatpush.bf16.msra.mxu0 %v12945
  %13410 = vmatpush.bf16.msra.mxu0 %v12936
  %13411 = vmatpush.bf16.msra.mxu0 %v12927
  %13412 = vmatmul.bf16.gmra.mxu0 %v12196
  %v13413 = vpop.f32.mrf.mxu0
  %v13414 = vadd.f32 %v12391, %v13413
  %v13415 = vpop.f32.mrf.mxu0
  %13416 = vdwg.mxu0
  %13417 = vmatpush.bf16.msra.mxu0 %v13062
  %13418 = vmatpush.bf16.msra.mxu0 %v13053
  %13419 = vmatpush.bf16.msra.mxu0 %v13044
  %13420 = vmatpush.bf16.msra.mxu0 %v13035
  %13421 = vmatpush.bf16.msra.mxu0 %v13026
  %13422 = vmatpush.bf16.msra.mxu0 %v13017
  %13423 = vmatpush.bf16.msra.mxu0 %v13008
  %13424 = vmatpush.bf16.msra.mxu0 %v12999
  %13425 = vmatmul.bf16.gmra.mxu0 %v12197
  %v13426 = vpop.f32.mrf.mxu0
  %v13427 = vadd.f32 %v13414, %v13426
  %v13428 = vpop.f32.mrf.mxu0
  %13429 = vdwg.mxu0
  %13430 = vmatpush.bf16.msra.mxu0 0
  %13431 = vmatpush.bf16.msra.mxu0 0
  %13432 = vmatpush.bf16.msra.mxu0 0
  %13433 = vmatpush.bf16.msra.mxu0 0
  %13434 = vmatpush.bf16.msra.mxu0 0
  %13435 = vmatpush.bf16.msra.mxu0 %v13270
  %13436 = vmatpush.bf16.msra.mxu0 %v13080
  %13437 = vmatpush.bf16.msra.mxu0 %v13071
  %13438 = vmatmul.bf16.gmra.mxu0 %v13258
  %v13439 = vpop.f32.mrf.mxu0
  %v13440 = vadd.f32 %v13427, %v13439
  %v13441 = vpop.f32.mrf.mxu0
  %13442 = vdwg.mxu0
  %13443 = vmatpush.bf16.msra.mxu0 %v12991
  %13444 = vmatpush.bf16.msra.mxu0 %v12982
  %13445 = vmatpush.bf16.msra.mxu0 %v12973
  %13446 = vmatpush.bf16.msra.mxu0 %v12964
  %13447 = vmatpush.bf16.msra.mxu0 %v12955
  %13448 = vmatpush.bf16.msra.mxu0 %v12946
  %13449 = vmatpush.bf16.msra.mxu0 %v12937
  %13450 = vmatpush.bf16.msra.mxu0 %v12928
  %13451 = vmatmul.bf16.gmra.mxu0 %v12196
  %v13452 = vpop.f32.mrf.mxu0
  %v13453 = vadd.f32 %v12392, %v13452
  %v13454 = vpop.f32.mrf.mxu0
  %13455 = vdwg.mxu0
  %13456 = vmatpush.bf16.msra.mxu0 %v13063
  %13457 = vmatpush.bf16.msra.mxu0 %v13054
  %13458 = vmatpush.bf16.msra.mxu0 %v13045
  %13459 = vmatpush.bf16.msra.mxu0 %v13036
  %13460 = vmatpush.bf16.msra.mxu0 %v13027
  %13461 = vmatpush.bf16.msra.mxu0 %v13018
  %13462 = vmatpush.bf16.msra.mxu0 %v13009
  %13463 = vmatpush.bf16.msra.mxu0 %v13000
  %13464 = vmatmul.bf16.gmra.mxu0 %v12197
  %v13465 = vpop.f32.mrf.mxu0
  %v13466 = vadd.f32 %v13453, %v13465
  %v13467 = vpop.f32.mrf.mxu0
  %13468 = vdwg.mxu0
  %13469 = vmatpush.bf16.msra.mxu0 0
  %13470 = vmatpush.bf16.msra.mxu0 0
  %13471 = vmatpush.bf16.msra.mxu0 0
  %13472 = vmatpush.bf16.msra.mxu0 0
  %13473 = vmatpush.bf16.msra.mxu0 0
  %13474 = vmatpush.bf16.msra.mxu0 %v13273
  %13475 = vmatpush.bf16.msra.mxu0 %v13081
  %13476 = vmatpush.bf16.msra.mxu0 %v13072
  %13477 = vmatmul.bf16.gmra.mxu0 %v13258
  %v13478 = vpop.f32.mrf.mxu0
  %v13479 = vadd.f32 %v13466, %v13478
  %v13480 = vpop.f32.mrf.mxu0
  %13481 = vdwg.mxu0
  %13482 = vmatpush.bf16.msra.mxu0 %v12992
  %13483 = vmatpush.bf16.msra.mxu0 %v12983
  %13484 = vmatpush.bf16.msra.mxu0 %v12974
  %13485 = vmatpush.bf16.msra.mxu0 %v12965
  %13486 = vmatpush.bf16.msra.mxu0 %v12956
  %13487 = vmatpush.bf16.msra.mxu0 %v12947
  %13488 = vmatpush.bf16.msra.mxu0 %v12938
  %13489 = vmatpush.bf16.msra.mxu0 %v12929
  %13490 = vmatmul.bf16.gmra.mxu0 %v12196
  %v13491 = vpop.f32.mrf.mxu0
  %v13492 = vadd.f32 %v12393, %v13491
  %v13493 = vpop.f32.mrf.mxu0
  %13494 = vdwg.mxu0
  %13495 = vmatpush.bf16.msra.mxu0 %v13064
  %13496 = vmatpush.bf16.msra.mxu0 %v13055
  %13497 = vmatpush.bf16.msra.mxu0 %v13046
  %13498 = vmatpush.bf16.msra.mxu0 %v13037
  %13499 = vmatpush.bf16.msra.mxu0 %v13028
  %13500 = vmatpush.bf16.msra.mxu0 %v13019
  %13501 = vmatpush.bf16.msra.mxu0 %v13010
  %13502 = vmatpush.bf16.msra.mxu0 %v13001
  %13503 = vmatmul.bf16.gmra.mxu0 %v12197
  %v13504 = vpop.f32.mrf.mxu0
  %v13505 = vadd.f32 %v13492, %v13504
  %v13506 = vpop.f32.mrf.mxu0
  %13507 = vdwg.mxu0
  %13508 = vmatpush.bf16.msra.mxu0 0
  %13509 = vmatpush.bf16.msra.mxu0 0
  %13510 = vmatpush.bf16.msra.mxu0 0
  %13511 = vmatpush.bf16.msra.mxu0 0
  %13512 = vmatpush.bf16.msra.mxu0 0
  %13513 = vmatpush.bf16.msra.mxu0 %v13276
  %13514 = vmatpush.bf16.msra.mxu0 %v13082
  %13515 = vmatpush.bf16.msra.mxu0 %v13073
  %13516 = vmatmul.bf16.gmra.mxu0 %v13258
  %v13517 = vpop.f32.mrf.mxu0
  %v13518 = vadd.f32 %v13505, %v13517
  %v13519 = vpop.f32.mrf.mxu0
  %13520 = vdwg.mxu0
  %13521 = vmatpush.bf16.msra.mxu0 %v12993
  %13522 = vmatpush.bf16.msra.mxu0 %v12984
  %13523 = vmatpush.bf16.msra.mxu0 %v12975
  %13524 = vmatpush.bf16.msra.mxu0 %v12966
  %13525 = vmatpush.bf16.msra.mxu0 %v12957
  %13526 = vmatpush.bf16.msra.mxu0 %v12948
  %13527 = vmatpush.bf16.msra.mxu0 %v12939
  %13528 = vmatpush.bf16.msra.mxu0 %v12930
  %13529 = vmatmul.bf16.gmra.mxu0 %v12196
  %v13530 = vpop.f32.mrf.mxu0
  %v13531 = vadd.f32 %v12394, %v13530
  %v13532 = vpop.f32.mrf.mxu0
  %13533 = vdwg.mxu0
  %13534 = vmatpush.bf16.msra.mxu0 %v13065
  %13535 = vmatpush.bf16.msra.mxu0 %v13056
  %13536 = vmatpush.bf16.msra.mxu0 %v13047
  %13537 = vmatpush.bf16.msra.mxu0 %v13038
  %13538 = vmatpush.bf16.msra.mxu0 %v13029
  %13539 = vmatpush.bf16.msra.mxu0 %v13020
  %13540 = vmatpush.bf16.msra.mxu0 %v13011
  %13541 = vmatpush.bf16.msra.mxu0 %v13002
  %13542 = vmatmul.bf16.gmra.mxu0 %v12197
  %v13543 = vpop.f32.mrf.mxu0
  %v13544 = vadd.f32 %v13531, %v13543
  %v13545 = vpop.f32.mrf.mxu0
  %13546 = vdwg.mxu0
  %13547 = vmatpush.bf16.msra.mxu0 0
  %13548 = vmatpush.bf16.msra.mxu0 0
  %13549 = vmatpush.bf16.msra.mxu0 0
  %13550 = vmatpush.bf16.msra.mxu0 0
  %13551 = vmatpush.bf16.msra.mxu0 0
  %13552 = vmatpush.bf16.msra.mxu0 %v13279
  %13553 = vmatpush.bf16.msra.mxu0 %v13083
  %13554 = vmatpush.bf16.msra.mxu0 %v13074
  %13555 = vmatmul.bf16.gmra.mxu0 %v13258
  %v13556 = vpop.f32.mrf.mxu0
  %v13557 = vadd.f32 %v13544, %v13556
  %v13558 = vpop.f32.mrf.mxu0
  %13559 = vdwg.mxu0
  %13560 = vmatpush.bf16.msra.mxu0 %v12994
  %13561 = vmatpush.bf16.msra.mxu0 %v12985
  %13562 = vmatpush.bf16.msra.mxu0 %v12976
  %13563 = vmatpush.bf16.msra.mxu0 %v12967
  %13564 = vmatpush.bf16.msra.mxu0 %v12958
  %13565 = vmatpush.bf16.msra.mxu0 %v12949
  %13566 = vmatpush.bf16.msra.mxu0 %v12940
  %13567 = vmatpush.bf16.msra.mxu0 %v12931
  %13568 = vmatmul.bf16.gmra.mxu0 %v12196
  %v13569 = vpop.f32.mrf.mxu0
  %v13570 = vadd.f32 %v12395, %v13569
  %v13571 = vpop.f32.mrf.mxu0
  %13572 = vdwg.mxu0
  %13573 = vmatpush.bf16.msra.mxu0 %v13066
  %13574 = vmatpush.bf16.msra.mxu0 %v13057
  %13575 = vmatpush.bf16.msra.mxu0 %v13048
  %13576 = vmatpush.bf16.msra.mxu0 %v13039
  %13577 = vmatpush.bf16.msra.mxu0 %v13030
  %13578 = vmatpush.bf16.msra.mxu0 %v13021
  %13579 = vmatpush.bf16.msra.mxu0 %v13012
  %13580 = vmatpush.bf16.msra.mxu0 %v13003
  %13581 = vmatmul.bf16.gmra.mxu0 %v12197
  %v13582 = vpop.f32.mrf.mxu0
  %v13583 = vadd.f32 %v13570, %v13582
  %v13584 = vpop.f32.mrf.mxu0
  %13585 = vdwg.mxu0
  %13586 = vmatpush.bf16.msra.mxu0 0
  %13587 = vmatpush.bf16.msra.mxu0 0
  %13588 = vmatpush.bf16.msra.mxu0 0
  %13589 = vmatpush.bf16.msra.mxu0 0
  %13590 = vmatpush.bf16.msra.mxu0 0
  %13591 = vmatpush.bf16.msra.mxu0 %v13282
  %13592 = vmatpush.bf16.msra.mxu0 %v13084
  %13593 = vmatpush.bf16.msra.mxu0 %v13075
  %13594 = vmatmul.bf16.gmra.mxu0 %v13258
  %v13595 = vpop.f32.mrf.mxu0
  %v13596 = vadd.f32 %v13583, %v13595
  %v13597 = vpop.f32.mrf.mxu0
  %13598 = vdwg.mxu0
  %13599 = vmatpush.bf16.msra.mxu0 %v12995
  %13600 = vmatpush.bf16.msra.mxu0 %v12986
  %13601 = vmatpush.bf16.msra.mxu0 %v12977
  %13602 = vmatpush.bf16.msra.mxu0 %v12968
  %13603 = vmatpush.bf16.msra.mxu0 %v12959
  %13604 = vmatpush.bf16.msra.mxu0 %v12950
  %13605 = vmatpush.bf16.msra.mxu0 %v12941
  %13606 = vmatpush.bf16.msra.mxu0 %v12932
  %13607 = vmatmul.bf16.gmra.mxu0 %v12196
  %v13608 = vpop.f32.mrf.mxu0
  %v13609 = vadd.f32 %v12396, %v13608
  %v13610 = vpop.f32.mrf.mxu0
  %13611 = vdwg.mxu0
  %13612 = vmatpush.bf16.msra.mxu0 %v13067
  %13613 = vmatpush.bf16.msra.mxu0 %v13058
  %13614 = vmatpush.bf16.msra.mxu0 %v13049
  %13615 = vmatpush.bf16.msra.mxu0 %v13040
  %13616 = vmatpush.bf16.msra.mxu0 %v13031
  %13617 = vmatpush.bf16.msra.mxu0 %v13022
  %13618 = vmatpush.bf16.msra.mxu0 %v13013
  %13619 = vmatpush.bf16.msra.mxu0 %v13004
  %13620 = vmatmul.bf16.gmra.mxu0 %v12197
  %v13621 = vpop.f32.mrf.mxu0
  %v13622 = vadd.f32 %v13609, %v13621
  %v13623 = vpop.f32.mrf.mxu0
  %13624 = vdwg.mxu0
  %13625 = vmatpush.bf16.msra.mxu0 0
  %13626 = vmatpush.bf16.msra.mxu0 0
  %13627 = vmatpush.bf16.msra.mxu0 0
  %13628 = vmatpush.bf16.msra.mxu0 0
  %13629 = vmatpush.bf16.msra.mxu0 0
  %13630 = vmatpush.bf16.msra.mxu0 %v13285
  %13631 = vmatpush.bf16.msra.mxu0 %v13085
  %13632 = vmatpush.bf16.msra.mxu0 %v13076
  %13633 = vmatmul.bf16.gmra.mxu0 %v13258
  %v13634 = vpop.f32.mrf.mxu0
  %v13635 = vadd.f32 %v13622, %v13634
  %v13636 = vpop.f32.mrf.mxu0
  %13637 = vdwg.mxu0
  %v13638 = vxor.u32 %v13323, 2147483648
  %v13639 = vxor.u32 %v13362, 2147483648
  %v13640 = vxor.u32 %v13401, 2147483648
  %v13641 = vmul.f32 %v13638, 1.442695
  %v13642 = vpow.pop %v13641
  %v13643 = vmul.f32 %v13639, 1.442695
  %v13644 = vpow.pop %v13643
  %v13645 = vmul.f32 %v13640, 1.442695
  %v13646 = vpow.pop %v13645
  %v13647 = vadd.f32 %v13642, 1.0
  %v13648 = vadd.f32 %v13644, 1.0
  %v13649 = vadd.f32 %v13646, 1.0
  %v13650 = vrcp.pop %v13647
  %v13651 = vmul.f32 %v13647, %v13650
  %v13652 = vsub.f32 1.0, %v13651
  %v13653 = vmul.f32 %v13650, %v13652
  %v13654 = vadd.f32 %v13650, %v13653
  %vm13655 = vweird.f32 %v13647
  %vm13656 = vweird.f32 %v13650
  %vm13657 = vmor %vm13655, %vm13656
  %v13658 = vsel %vm13657, %v13650, %v13654
  %v13659 = vand.u32 2147483647, %v13647
  %vm13660 = vcmp.eq.f32.partialorder %v13659, 8.507059e+37
  %v13661 = vand.u32 %v13647, 2147483648
  %v13662 = vor.u32 1.1754944e-38, %v13661
  %v13663 = vsel %vm13660, %v13662, %v13658
  %v13664 = vmul.f32 1.0, %v13663
  %v13665 = vrcp.pop %v13648
  %v13666 = vmul.f32 %v13648, %v13665
  %v13667 = vsub.f32 1.0, %v13666
  %v13668 = vmul.f32 %v13665, %v13667
  %v13669 = vadd.f32 %v13665, %v13668
  %vm13670 = vweird.f32 %v13648
  %vm13671 = vweird.f32 %v13665
  %vm13672 = vmor %vm13670, %vm13671
  %v13673 = vsel %vm13672, %v13665, %v13669
  %v13674 = vand.u32 2147483647, %v13648
  %vm13675 = vcmp.eq.f32.partialorder %v13674, 8.507059e+37
  %v13676 = vand.u32 %v13648, 2147483648
  %v13677 = vor.u32 1.1754944e-38, %v13676
  %v13678 = vsel %vm13675, %v13677, %v13673
  %v13679 = vmul.f32 1.0, %v13678
  %v13680 = vrcp.pop %v13649
  %v13681 = vmul.f32 %v13649, %v13680
  %v13682 = vsub.f32 1.0, %v13681
  %v13683 = vmul.f32 %v13680, %v13682
  %v13684 = vadd.f32 %v13680, %v13683
  %vm13685 = vweird.f32 %v13649
  %vm13686 = vweird.f32 %v13680
  %vm13687 = vmor %vm13685, %vm13686
  %v13688 = vsel %vm13687, %v13680, %v13684
  %v13689 = vand.u32 2147483647, %v13649
  %vm13690 = vcmp.eq.f32.partialorder %v13689, 8.507059e+37
  %v13691 = vand.u32 %v13649, 2147483648
  %v13692 = vor.u32 1.1754944e-38, %v13691
  %v13693 = vsel %vm13690, %v13692, %v13688
  %v13694 = vmul.f32 1.0, %v13693
  %v13695 = vtanh.pop %v13440
  %v13696 = vtanh.pop %v13479
  %v13697 = vtanh.pop %v13518
  %v13698 = vxor.u32 %v13557, 2147483648
  %v13699 = vxor.u32 %v13596, 2147483648
  %v13700 = vxor.u32 %v13635, 2147483648
  %v13701 = vmul.f32 %v13698, 1.442695
  %v13702 = vpow.pop %v13701
  %v13703 = vmul.f32 %v13699, 1.442695
  %v13704 = vpow.pop %v13703
  %v13705 = vmul.f32 %v13700, 1.442695
  %v13706 = vpow.pop %v13705
  %v13707 = vadd.f32 %v13702, 1.0
  %v13708 = vadd.f32 %v13704, 1.0
  %v13709 = vadd.f32 %v13706, 1.0
  %v13710 = vrcp.pop %v13707
  %v13711 = vmul.f32 %v13707, %v13710
  %v13712 = vsub.f32 1.0, %v13711
  %v13713 = vmul.f32 %v13710, %v13712
  %v13714 = vadd.f32 %v13710, %v13713
  %vm13715 = vweird.f32 %v13707
  %vm13716 = vweird.f32 %v13710
  %vm13717 = vmor %vm13715, %vm13716
  %v13718 = vsel %vm13717, %v13710, %v13714
  %v13719 = vand.u32 2147483647, %v13707
  %vm13720 = vcmp.eq.f32.partialorder %v13719, 8.507059e+37
  %v13721 = vand.u32 %v13707, 2147483648
  %v13722 = vor.u32 1.1754944e-38, %v13721
  %v13723 = vsel %vm13720, %v13722, %v13718
  %v13724 = vmul.f32 1.0, %v13723
  %v13725 = vrcp.pop %v13708
  %v13726 = vmul.f32 %v13708, %v13725
  %v13727 = vsub.f32 1.0, %v13726
  %v13728 = vmul.f32 %v13725, %v13727
  %v13729 = vadd.f32 %v13725, %v13728
  %vm13730 = vweird.f32 %v13708
  %vm13731 = vweird.f32 %v13725
  %vm13732 = vmor %vm13730, %vm13731
  %v13733 = vsel %vm13732, %v13725, %v13729
  %v13734 = vand.u32 2147483647, %v13708
  %vm13735 = vcmp.eq.f32.partialorder %v13734, 8.507059e+37
  %v13736 = vand.u32 %v13708, 2147483648
  %v13737 = vor.u32 1.1754944e-38, %v13736
  %v13738 = vsel %vm13735, %v13737, %v13733
  %v13739 = vmul.f32 1.0, %v13738
  %v13740 = vrcp.pop %v13709
  %v13741 = vmul.f32 %v13709, %v13740
  %v13742 = vsub.f32 1.0, %v13741
  %v13743 = vmul.f32 %v13740, %v13742
  %v13744 = vadd.f32 %v13740, %v13743
  %vm13745 = vweird.f32 %v13709
  %vm13746 = vweird.f32 %v13740
  %vm13747 = vmor %vm13745, %vm13746
  %v13748 = vsel %vm13747, %v13740, %v13744
  %v13749 = vand.u32 2147483647, %v13709
  %vm13750 = vcmp.eq.f32.partialorder %v13749, 8.507059e+37
  %v13751 = vand.u32 %v13709, 2147483648
  %v13752 = vor.u32 1.1754944e-38, %v13751
  %v13753 = vsel %vm13750, %v13752, %v13748
  %v13754 = vmul.f32 1.0, %v13753
  %v13755 = vmul.f32 %v13664, %v13695
  %v13756 = vmul.f32 %v13679, %v13696
  %v13757 = vmul.f32 %v13694, %v13697
  %v13758 = vtanh.pop %v13755
  %v13759 = vtanh.pop %v13756
  %v13760 = vtanh.pop %v13757
  %v13761 = vmul.f32 %v13724, %v13758
  %v13762 = vmul.f32 %v13739, %v13759
  %v13763 = vmul.f32 %v13754, %v13760
  %v13764 = vpack.c.bf16 %v13761, %v13761
  %v13765 = vpack.c.bf16 %v13762, %v13762
  %v13766 = vpack.c.bf16 %v13763, %v13763
  %v13767 = vld [vmem:[%s9] sm:$0xf]
  %v13768 = vld [vmem:[%s9 + $0x4] sm:$0xf]
  %v13769 = vld [vmem:[%s9 + $0x8] sm:$0xf]
  %v13770 = vld [vmem:[%s9 + $0xc] sm:$0xf]
  %v13771 = vld [vmem:[%s9 + $0x10] sm:$0xf]
  %v13772 = vld [vmem:[%s9 + $0x14] sm:$0xf]
  %v13773 = vld [vmem:[%s9 + $0x18] sm:$0xf]
  %v13774 = vld [vmem:[%s9 + $0x1c] sm:$0xf]
  %v13775 = vld [vmem:[%s9 + $0x20] sm:$0xf]
  %v13776 = vld [vmem:[%s9 + $0x24] sm:$0xf]
  %v13777 = vld [vmem:[%s9 + $0x28] sm:$0xf]
  %v13778 = vld [vmem:[%s9 + $0x2c] sm:$0xf]
  %v13779 = vld [vmem:[%s9 + $0x30] sm:$0xf]
  %v13780 = vld [vmem:[%s9 + $0x34] sm:$0xf]
  %v13781 = vld [vmem:[%s9 + $0x38] sm:$0xf]
  %v13782 = vld [vmem:[%s9 + $0x3c] sm:$0xf]
  %v13783 = vld [vmem:[%s9 + $0x40] sm:$0xf]
  %v13784 = vld [vmem:[%s9 + $0x44] sm:$0xf]
  %v13785 = vld [vmem:[%s9 + $0x48] sm:$0xf]
  %v13786 = vld [vmem:[%s9 + $0x4c] sm:$0xf]
  %v13787 = vld [vmem:[%s9 + $0x50] sm:$0xf]
  %v13788 = vld [vmem:[%s9 + $0x54] sm:$0xf]
  %v13789 = vld [vmem:[%s9 + $0x58] sm:$0xf]
  %v13790 = vld [vmem:[%s9 + $0x5c] sm:$0xf]
  %v13791 = vld [vmem:[%s9 + $0x60] sm:$0xf]
  %v13792 = vld [vmem:[%s9 + $0x64] sm:$0xf]
  %v13793 = vld [vmem:[%s9 + $0x68] sm:$0xf]
  %v13794 = vld [vmem:[%s9 + $0x6c] sm:$0xf]
  %v13795 = vld [vmem:[%s9 + $0x70] sm:$0xf]
  %v13796 = vld [vmem:[%s9 + $0x74] sm:$0xf]
  %v13797 = vld [vmem:[%s9 + $0x78] sm:$0xf]
  %v13798 = vld [vmem:[%s9 + $0x7c] sm:$0xf]
  %v13799 = vld [vmem:[%s9 + $0x80] sm:$0xf]
  %v13800 = vld [vmem:[%s9 + $0x84] sm:$0xf]
  %v13801 = vld [vmem:[%s9 + $0x88] sm:$0xf]
  %v13802 = vld [vmem:[%s9 + $0x8c] sm:$0xf]
  %v13803 = vld [vmem:[%s9 + $0x90] sm:$0xf]
  %v13804 = vld [vmem:[%s9 + $0x94] sm:$0xf]
  %v13805 = vld [vmem:[%s9 + $0x98] sm:$0xf]
  %v13806 = vld [vmem:[%s9 + $0x9c] sm:$0xf]
  %v13807 = vld [vmem:[%s9 + $0xa0] sm:$0xf]
  %v13808 = vld [vmem:[%s9 + $0xa4] sm:$0xf]
  %v13809 = vld [vmem:[%s9 + $0xa8] sm:$0xf]
  %v13810 = vld [vmem:[%s9 + $0xac] sm:$0xf]
  %v13811 = vld [vmem:[%s9 + $0xb0] sm:$0xf]
  %v13812 = vld [vmem:[%s9 + $0xb4] sm:$0xf]
  %v13813 = vld [vmem:[%s9 + $0xb8] sm:$0xf]
  %v13814 = vld [vmem:[%s9 + $0xbc] sm:$0xf]
  %v13815 = vld [vmem:[%s10] sm:$0x1]
  %v13817 = vperm.slane %v13815, 0
  %v13867 = vunpack.c.l.b16 %v13767
  %v13868 = vunpack.c.l.b16 %v13768
  %v13869 = vunpack.c.l.b16 %v13769
  %v13870 = vunpack.c.l.b16 %v13770
  %v13871 = vunpack.c.l.b16 %v13771
  %v13872 = vunpack.c.l.b16 %v13772
  %v13873 = vunpack.c.l.b16 %v13773
  %v13874 = vunpack.c.l.b16 %v13774
  %v13875 = vunpack.c.l.b16 %v13775
  %v13876 = vunpack.c.l.b16 %v13776
  %v13877 = vunpack.c.l.b16 %v13777
  %v13878 = vunpack.c.l.b16 %v13778
  %v13879 = vunpack.c.l.b16 %v13779
  %v13880 = vunpack.c.l.b16 %v13780
  %v13881 = vunpack.c.l.b16 %v13781
  %v13882 = vunpack.c.l.b16 %v13782
  %v13883 = vunpack.c.l.b16 %v13783
  %v13884 = vunpack.c.l.b16 %v13784
  %v13885 = vunpack.c.l.b16 %v13785
  %v13886 = vunpack.c.l.b16 %v13786
  %v13887 = vunpack.c.l.b16 %v13787
  %v13888 = vunpack.c.l.b16 %v13788
  %v13889 = vunpack.c.l.b16 %v13789
  %v13890 = vunpack.c.l.b16 %v13790
  %v13891 = vunpack.c.l.b16 %v13791
  %v13892 = vunpack.c.l.b16 %v13792
  %v13893 = vunpack.c.l.b16 %v13793
  %v13894 = vunpack.c.l.b16 %v13794
  %v13895 = vunpack.c.l.b16 %v13795
  %v13896 = vunpack.c.l.b16 %v13796
  %v13897 = vunpack.c.l.b16 %v13797
  %v13898 = vunpack.c.l.b16 %v13798
  %v13899 = vunpack.c.l.b16 %v13799
  %v13900 = vunpack.c.l.b16 %v13800
  %v13901 = vunpack.c.l.b16 %v13801
  %v13902 = vunpack.c.l.b16 %v13802
  %v13903 = vunpack.c.l.b16 %v13803
  %v13904 = vunpack.c.l.b16 %v13804
  %v13905 = vunpack.c.l.b16 %v13805
  %v13906 = vunpack.c.l.b16 %v13806
  %v13907 = vunpack.c.l.b16 %v13807
  %v13908 = vunpack.c.l.b16 %v13808
  %v13909 = vunpack.c.l.b16 %v13809
  %v13910 = vunpack.c.l.b16 %v13810
  %v13911 = vunpack.c.l.b16 %v13811
  %v13912 = vunpack.c.l.b16 %v13812
  %v13913 = vunpack.c.l.b16 %v13813
  %v13914 = vunpack.c.l.b16 %v13814
  %v13915 = vpack.c.b16 %v13868, %v13867
  %v13916 = vpack.c.b16 %v13870, %v13869
  %v13917 = vpack.c.b16 %v13872, %v13871
  %v13918 = vpack.c.b16 %v13874, %v13873
  %v13919 = vpack.c.b16 %v13876, %v13875
  %v13920 = vpack.c.b16 %v13878, %v13877
  %v13921 = vpack.c.b16 %v13880, %v13879
  %v13922 = vpack.c.b16 %v13882, %v13881
  %v13923 = vpack.c.b16 %v13884, %v13883
  %v13924 = vpack.c.b16 %v13886, %v13885
  %v13925 = vpack.c.b16 %v13888, %v13887
  %v13926 = vpack.c.b16 %v13890, %v13889
  %v13927 = vpack.c.b16 %v13892, %v13891
  %v13928 = vpack.c.b16 %v13894, %v13893
  %v13929 = vpack.c.b16 %v13896, %v13895
  %v13930 = vpack.c.b16 %v13898, %v13897
  %v13931 = vpack.c.b16 %v13900, %v13899
  %v13932 = vpack.c.b16 %v13902, %v13901
  %v13933 = vpack.c.b16 %v13904, %v13903
  %v13934 = vpack.c.b16 %v13906, %v13905
  %v13935 = vpack.c.b16 %v13908, %v13907
  %v13936 = vpack.c.b16 %v13910, %v13909
  %v13937 = vpack.c.b16 %v13912, %v13911
  %v13938 = vpack.c.b16 %v13914, %v13913
  %13963 = vmatpush.bf16.msra.mxu0 %v13922
  %13964 = vmatpush.bf16.msra.mxu0 %v13921
  %13965 = vmatpush.bf16.msra.mxu0 %v13920
  %13966 = vmatpush.bf16.msra.mxu0 %v13919
  %13967 = vmatpush.bf16.msra.mxu0 %v13918
  %13968 = vmatpush.bf16.msra.mxu0 %v13917
  %13969 = vmatpush.bf16.msra.mxu0 %v13916
  %13970 = vmatpush.bf16.msra.mxu0 %v13915
  %13971 = vmatmul.bf16.gmra.mxu0 %v13764
  %v13972 = vpop.f32.mrf.mxu0
  %v13973 = vadd.f32 %v13817, %v13972
  %v13974 = vpop.f32.mrf.mxu0
  %13975 = vdwg.mxu0
  %13976 = vmatpush.bf16.msra.mxu0 %v13930
  %13977 = vmatpush.bf16.msra.mxu0 %v13929
  %13978 = vmatpush.bf16.msra.mxu0 %v13928
  %13979 = vmatpush.bf16.msra.mxu0 %v13927
  %13980 = vmatpush.bf16.msra.mxu0 %v13926
  %13981 = vmatpush.bf16.msra.mxu0 %v13925
  %13982 = vmatpush.bf16.msra.mxu0 %v13924
  %13983 = vmatpush.bf16.msra.mxu0 %v13923
  %13984 = vmatmul.bf16.gmra.mxu0 %v13765
  %v13985 = vpop.f32.mrf.mxu0
  %v13986 = vadd.f32 %v13973, %v13985
  %v13987 = vpop.f32.mrf.mxu0
  %13988 = vdwg.mxu0
  %13989 = vmatpush.bf16.msra.mxu0 %v13938
  %13990 = vmatpush.bf16.msra.mxu0 %v13937
  %13991 = vmatpush.bf16.msra.mxu0 %v13936
  %13992 = vmatpush.bf16.msra.mxu0 %v13935
  %13993 = vmatpush.bf16.msra.mxu0 %v13934
  %13994 = vmatpush.bf16.msra.mxu0 %v13933
  %13995 = vmatpush.bf16.msra.mxu0 %v13932
  %13996 = vmatpush.bf16.msra.mxu0 %v13931
  %13997 = vmatmul.bf16.gmra.mxu0 %v13766
  %v13998 = vpop.f32.mrf.mxu0
  %v13999 = vadd.f32 %v13986, %v13998
  %v14000 = vpop.f32.mrf.mxu0
  %14001 = vdwg.mxu0
  %14002 = vst [vmem:[%s11] sm:$0xff] %v13999
  // Predicated region
  $region46: #{nn_conv_lstm_forward.1} parent=0 // pred_check
    _
  $region47: #{nn_conv_lstm_forward.1} parent=0 // pred_check_branch
    %14004 = sbr.rel (0) target = $region49
  $region48: #{nn_conv_lstm_forward.1} parent=0 // pred_region
    _
  $region49: #{nn_conv_lstm_forward.1} parent=0 // pred_fallthru
    _
  // Predicated region
  $region50: #{nn_conv_lstm_forward.1} parent=0 // pred_check
    _
  $region51: #{nn_conv_lstm_forward.1} parent=0 // pred_check_branch
    %14006 = sbr.rel (0) target = $region53
  $region52: #{nn_conv_lstm_forward.1} parent=0 // pred_region
    _
  $region53: #{nn_conv_lstm_forward.1} parent=0 // pred_fallthru
    _

</llo_original>
